<compile_context>
chip_gen: v5e
topology: v5e:2x2
jax: 0.10.0
libtpu: 0.0.40
codegen_flags: <defaults>
</compile_context>

<pallas_src>
import functools

import jax
import jax.numpy as jnp
from jax import lax
from jax.experimental import pallas as pl
from jax.experimental.pallas import tpu as pltpu


_COMPILER_PARAMS = pltpu.CompilerParams(
    dimension_semantics=("parallel",),          # batch-halves across v7x cores
    vmem_limit_bytes=32 * 1024 * 1024,
)

# ConvTranspose2d(3x3, stride 2, pad 1, output_padding 1) sub-pixel taps:
# output phase (a, b) at (p, q) sums input[p+dy, q+dx] @ W[:, :, ky, kx].
_DECONV_PHASE_TAPS = {
    (0, 0): (((0, 0), (1, 1)),),
    (0, 1): (((0, 0), (1, 2)), ((0, 1), (1, 0))),
    (1, 0): (((0, 0), (2, 1)), ((1, 0), (0, 1))),
    (1, 1): (((0, 0), (2, 2)), ((0, 1), (2, 0)), ((1, 0), (0, 2)), ((1, 1), (0, 0))),
}


# ----------------------------------------------------------------------------
# In-kernel helpers (all indices static; contiguous slices + concats only)
# ----------------------------------------------------------------------------
def _bn_relu(acc, s_ref, b_ref):
    """Folded-BN affine + ReLU on an f32 accumulator -> bf16 activation."""
    return jnp.maximum(acc * s_ref[...] + b_ref[...], 0.0).astype(jnp.bfloat16)


def _conv_im2col(ph_ref, ho, wo):
    """im2col for Conv2d(3x3, s=2, p=1) from a phase-split padded scratch.

    ph_ref: (4, ho+1, wo+1, cin) with ph[2a+b, u, v] = padded_in[2u+a, 2v+b].
    Returns (ho*wo, 9*cin) bf16, columns ordered (di, dj, cin)."""
    rows = []
    for i in range(ho):
        taps = []
        for di in range(3):
            qi, ri = divmod(di, 2)
            for dj in range(3):
                qj, rj = divmod(dj, 2)
                taps.append(ph_ref[2 * ri + rj, i + qi, qj:qj + wo, :])   # (wo, cin)
        rows.append(jnp.concatenate(taps, axis=-1))                       # (wo, 9cin)
    return jnp.concatenate(rows, axis=0)                                  # (ho*wo, 9cin)


def _deconv_im2col(src_ref, h, w):
    """im2col for the 4-phase sub-pixel ConvTranspose.

    src_ref: (h+1, w+1, cin), zero-padded bottom/right.
    Returns (h*w, 4*cin) bf16, columns ordered (dy, dx, cin)."""
    rows = []
    for p in range(h):
        taps = [src_ref[p + dy, dx:dx + w, :] for dy in (0, 1) for dx in (0, 1)]
        rows.append(jnp.concatenate(taps, axis=-1))                        # (w, 4cin)
    return jnp.concatenate(rows, axis=0)                                   # (h*w, 4cin)


def _scatter_to_phases(ph_ref, y, ho, wo):
    """Stride-2 down-shuffle: write a (ho*wo, C) row-major conv output into the
    next conv's phase-split padded scratch via static VMEM stores."""
    for i in range(ho):
        a, u = (i + 1) % 2, (i + 1) // 2
        for j in range(wo):
            b, v = (j + 1) % 2, (j + 1) // 2
            r = i * wo + j
            ph_ref[2 * a + b, u, v:v + 1, :] = y[r:r + 1, :]


def _scatter_rows(dst_ref, y, h, w):
    """Write a (h*w, C) row-major output into a (h+1, w+1, C) padded scratch."""
    for i in range(h):
        dst_ref[i, 0:w, :] = y[i * w:(i + 1) * w, :]


def _scatter_interleave(dst_ref, y, h, w, cout):
    """Stride-2 up-shuffle: write a (h*w, 4*cout) phase-blocked deconv output
    into the next layer's interleaved (2h+1, 2w+1, cout) padded scratch."""
    for p in range(h):
        for q in range(w):
            r = p * w + q
            for a in (0, 1):
                for b in (0, 1):
                    c0 = (2 * a + b) * cout
                    dst_ref[2 * p + a, 2 * q + b:2 * q + b + 1, :] = y[r:r + 1, c0:c0 + cout]


# ----------------------------------------------------------------------------
# Fused kernel: whole autoencoder for one image per grid step
# ----------------------------------------------------------------------------
def _autoencoder_kernel(
    x_ref,                                     # (1, ho1*wo1, 9*cin0) bf16 im2col
    we1_ref, se1_ref, be1_ref,                 # (9*cin0, 32) bf16, (1, 32) f32 x2
    we2_ref, se2_ref, be2_ref,                 # (288, 64), (1, 64) x2
    we3_ref, se3_ref, be3_ref,                 # (576, 32), (1, 32) x2
    wd1_ref, sd1_ref, bd1_ref,                 # (128, 256), (1, 256) x2
    wd2_ref, sd2_ref, bd2_ref,                 # (256, 128), (1, 128) x2
    wd3_ref, sd3_ref, bd3_ref,                 # (128, 64), (1, 64) x2
    wh_ref, bh_ref,                            # (64, 4*cf) bf16, (1, 4*cf) f32
    o_ref,                                     # (1, ho1*wo1, 4*cf) f32
    ph2, ph3, t1, t2, t3,                      # VMEM scratch activations
    *, H, W):
    ho1, wo1 = H // 2, W // 2
    ho2, wo2 = H // 4, W // 4
    ho3, wo3 = H // 8, W // 8
    f32 = jnp.float32

    # Zero padding borders (and stale data) of this image's scratch buffers.
    for ref in (ph2, ph3, t1, t2, t3):
        ref[...] = jnp.zeros_like(ref)

    # ---- encoder: Conv2d(3x3, s2, p1) + BN + ReLU, one MXU matmul each ----
    a1 = x_ref[0]
    y1 = _bn_relu(jnp.dot(a1, we1_ref[...], preferred_element_type=f32),
                  se1_ref, be1_ref)                                  # (ho1*wo1, 32)
    _scatter_to_phases(ph2, y1, ho1, wo1)

    a2 = _conv_im2col(ph2, ho2, wo2)                                 # (ho2*wo2, 288)
    y2 = _bn_relu(jnp.dot(a2, we2_ref[...], preferred_element_type=f32),
                  se2_ref, be2_ref)                                  # (ho2*wo2, 64)
    _scatter_to_phases(ph3, y2, ho2, wo2)

    a3 = _conv_im2col(ph3, ho3, wo3)                                 # (ho3*wo3, 576)
    y3 = _bn_relu(jnp.dot(a3, we3_ref[...], preferred_element_type=f32),
                  se3_ref, be3_ref)                                  # (ho3*wo3, 32)
    _scatter_rows(t1, y3, ho3, wo3)

    # ---- decoder: ConvTranspose2d(3x3, s2, p1, op1) + BN + ReLU ----
    a4 = _deconv_im2col(t1, ho3, wo3)                                # (ho3*wo3, 128)
    y4 = _bn_relu(jnp.dot(a4, wd1_ref[...], preferred_element_type=f32),
                  sd1_ref, bd1_ref)                                  # (ho3*wo3, 4*64)
    _scatter_interleave(t2, y4, ho3, wo3, 64)

    a5 = _deconv_im2col(t2, ho2, wo2)                                # (ho2*wo2, 256)
    y5 = _bn_relu(jnp.dot(a5, wd2_ref[...], preferred_element_type=f32),
                  sd2_ref, bd2_ref)                                  # (ho2*wo2, 4*32)
    _scatter_interleave(t3, y5, ho2, wo2, 32)

    a6 = _deconv_im2col(t3, ho1, wo1)                                # (ho1*wo1, 128)
    y6 = _bn_relu(jnp.dot(a6, wd3_ref[...], preferred_element_type=f32),
                  sd3_ref, bd3_ref)                                  # (ho1*wo1, 4*16)

    # ---- fused Conv2d(1x1) + Sigmoid head on the phase-major d3 activation ----
    z = jnp.dot(y6, wh_ref[...], preferred_element_type=f32) + bh_ref[...]
    o_ref[0] = 1.0 / (1.0 + jnp.exp(-z))      # exact sigmoid (exp on EUP), <= 1.0


# ----------------------------------------------------------------------------
# Wrapper-side weight packing / BN folding / pallas_call
# ----------------------------------------------------------------------------
def fold_bn(conv_bias, gamma, beta, mean, var, eps=1e-5):
    s = gamma / jnp.sqrt(var + eps)
    t = beta - mean * s + conv_bias * s
    return s, t


def _conv_weight_matrix(w_hwio):
    kh, kw, cin, cout = w_hwio.shape
    return w_hwio.reshape(kh * kw * cin, cout).astype(jnp.bfloat16)


def _deconv_weight_matrix(w_iohw):
    """(Cin, Cout, 3, 3) -> (4*Cin, 4*Cout) phase-blocked tap matrix."""
    cin, cout = w_iohw.shape[0], w_iohw.shape[1]
    wm = jnp.zeros((4 * cin, 4 * cout), jnp.float32)
    for (a, b), taps in _DECONV_PHASE_TAPS.items():
        for (dy, dx), (ky, kx) in taps:
            r0, c0 = (2 * dy + dx) * cin, (2 * a + b) * cout
            wm = wm.at[r0:r0 + cin, c0:c0 + cout].set(w_iohw[:, :, ky, kx])
    return wm.astype(jnp.bfloat16)


def _head_weight_matrix(wf_hwio):
    """(1, 1, C, F) -> (4*C, 4*F) phase-block-diagonal 1x1-conv matrix."""
    c, f = wf_hwio.shape[2], wf_hwio.shape[3]
    wf = wf_hwio.reshape(c, f)
    wm = jnp.zeros((4 * c, 4 * f), jnp.float32)
    for phase in range(4):
        wm = wm.at[phase * c:(phase + 1) * c, phase * f:(phase + 1) * f].set(wf)
    return wm.astype(jnp.bfloat16)


def _input_im2col(x_nhwc):
    """Layer-1 im2col (done once on the raw input, fused with the NCHW->NHWC
    transpose by XLA): (N, H, W, Cin) -> (N, (H/2)*(W/2), 9*Cin) bf16."""
    n, h, w, cin = x_nhwc.shape
    ho, wo = h // 2, w // 2
    xp = jnp.pad(x_nhwc, ((0, 0), (1, 1), (1, 1), (0, 0)))
    cols = []
    for di in range(3):
        for dj in range(3):
            sl = xp[:, di:di + 2 * ho:2, dj:dj + 2 * wo:2, :]
            cols.append(sl.reshape(n, ho * wo, cin))
    return jnp.concatenate(cols, axis=-1).astype(jnp.bfloat16)


def conv_autoencoder_forward(params, x_nchw):
    p = params
    n, cin0, H, W = x_nchw.shape
    assert H % 8 == 0 and W % 8 == 0, (H, W)
    cf = p["f_w"].shape[-1]
    ho1, wo1 = H // 2, W // 2
    ho2, wo2 = H // 4, W // 4
    ho3, wo3 = H // 8, W // 8
    m1 = ho1 * wo1

    x = jnp.transpose(x_nchw, (0, 2, 3, 1))              # NCHW -> NHWC
    x_cols = _input_im2col(x)                            # (N, m1, 9*cin0)

    def enc(name):
        s, t = fold_bn(p[name + "_b"], **p[name + "_bn"])
        c = s.shape[0]
        return (_conv_weight_matrix(p[name + "_w"]),
                s.reshape(1, c).astype(jnp.float32),
                t.reshape(1, c).astype(jnp.float32))

    def dec(name):
        s, t = fold_bn(p[name + "_b"], **p[name + "_bn"])
        c = s.shape[0]
        return (_deconv_weight_matrix(p[name + "_w"]),
                jnp.tile(s, 4).reshape(1, 4 * c).astype(jnp.float32),
                jnp.tile(t, 4).reshape(1, 4 * c).astype(jnp.float32))

    packs = [enc("e1"), enc("e2"), enc("e3"), dec("d1"), dec("d2"), dec("d3")]
    wh = _head_weight_matrix(p["f_w"])
    bh = jnp.tile(p["f_b"], 4).reshape(1, 4 * cf).astype(jnp.float32)

    const2 = lambda i: (0, 0)
    in_specs = [pl.BlockSpec((1, m1, 9 * cin0), lambda i: (i, 0, 0))]
    operands = [x_cols]
    for wsb in packs:
        for a in wsb:
            in_specs.append(pl.BlockSpec(a.shape, const2))   # VMEM-resident
            operands.append(a)
    in_specs += [pl.BlockSpec(wh.shape, const2), pl.BlockSpec(bh.shape, const2)]
    operands += [wh, bh]

    kernel = functools.partial(_autoencoder_kernel, H=H, W=W)
    out4 = pl.pallas_call(
        kernel,
        out_shape=jax.ShapeDtypeStruct((n, m1, 4 * cf), jnp.float32),
        grid=(n,),
        in_specs=in_specs,
        out_specs=pl.BlockSpec((1, m1, 4 * cf), lambda i: (i, 0, 0)),
        scratch_shapes=[
            pltpu.VMEM((4, ho2 + 1, wo2 + 1, 32), jnp.bfloat16),   # e2 input phases
            pltpu.VMEM((4, ho3 + 1, wo3 + 1, 64), jnp.bfloat16),   # e3 input phases
            pltpu.VMEM((ho3 + 1, wo3 + 1, 32), jnp.bfloat16),      # d1 input (padded)
            pltpu.VMEM((ho2 + 1, wo2 + 1, 64), jnp.bfloat16),      # d2 input (padded)
            pltpu.VMEM((ho1 + 1, wo1 + 1, 32), jnp.bfloat16),      # d3 input (padded)
        ],
        compiler_params=_COMPILER_PARAMS,
    )(*operands)

    # Final phase interleave + NHWC->NCHW: a single tiny XLA transpose (<=2 KB/img).
    y = out4.reshape(n, ho1, wo1, 2, 2, cf).transpose(0, 5, 1, 3, 2, 4)
    return y.reshape(n, cf, H, W)


# ----------------------------------------------------------------------------
# Parameters, plain-JAX f32 reference (for the in-script self-check)
# ----------------------------------------------------------------------------
def init_params(key, num_channels=1):
    ks = iter(jax.random.split(key, 64))

    def w(shape, scl=0.1):
        return scl * jax.random.normal(next(ks), shape, jnp.float32)

    def bn(c):
        return dict(gamma=1.0 + 0.1 * jax.random.normal(next(ks), (c,), jnp.float32),
                    beta=0.1 * jax.random.normal(next(ks), (c,), jnp.float32),
                    mean=0.05 * jax.random.normal(next(ks), (c,), jnp.float32),
                    var=0.5 + jax.random.uniform(next(ks), (c,), jnp.float32))

    p = {}
    # encoder convs: HWIO weights
    p["e1_w"] = w((3, 3, num_channels, 32)); p["e1_b"] = w((32,), 0.05); p["e1_bn"] = bn(32)
    p["e2_w"] = w((3, 3, 32, 64));           p["e2_b"] = w((64,), 0.05); p["e2_bn"] = bn(64)
    p["e3_w"] = w((3, 3, 64, 32));           p["e3_b"] = w((32,), 0.05); p["e3_bn"] = bn(32)
    # decoder transposed convs: PyTorch (Cin, Cout, kH, kW) layout
    p["d1_w"] = w((32, 64, 3, 3));           p["d1_b"] = w((64,), 0.05); p["d1_bn"] = bn(64)
    p["d2_w"] = w((64, 32, 3, 3));           p["d2_b"] = w((32,), 0.05); p["d2_bn"] = bn(32)
    p["d3_w"] = w((32, 16, 3, 3));           p["d3_b"] = w((16,), 0.05); p["d3_bn"] = bn(16)
    # final 1x1 conv
    p["f_w"] = w((1, 1, 16, num_channels));  p["f_b"] = w((num_channels,), 0.05)
    return p


def _reference_forward(params, x_nchw):
    p = params
    eps = 1e-5
    dn = ("NHWC", "HWIO", "NHWC")

    def bn(z, q):
        return q["gamma"] * (z - q["mean"]) * lax.rsqrt(q["var"] + eps) + q["beta"]

    def conv(z, w, b, stride):
        z = lax.conv_general_dilated(z, w, (stride, stride), ((1, 1), (1, 1)),
                                     dimension_numbers=dn)
        return z + b

    def deconv(z, w_iohw, b):
        w_eq = jnp.transpose(jnp.flip(w_iohw, (2, 3)), (2, 3, 0, 1))   # -> HWIO
        z = lax.conv_general_dilated(z, w_eq, (1, 1), ((1, 2), (1, 2)),
                                     lhs_dilation=(2, 2), dimension_numbers=dn)
        return z + b

    x = jnp.transpose(x_nchw, (0, 2, 3, 1)).astype(jnp.float32)
    x = jax.nn.relu(bn(conv(x, p["e1_w"], p["e1_b"], 2), p["e1_bn"]))
    x = jax.nn.relu(bn(conv(x, p["e2_w"], p["e2_b"], 2), p["e2_bn"]))
    x = jax.nn.relu(bn(conv(x, p["e3_w"], p["e3_b"], 2), p["e3_bn"]))
    x = jax.nn.relu(bn(deconv(x, p["d1_w"], p["d1_b"]), p["d1_bn"]))
    x = jax.nn.relu(bn(deconv(x, p["d2_w"], p["d2_b"]), p["d2_bn"]))
    x = jax.nn.relu(bn(deconv(x, p["d3_w"], p["d3_b"]), p["d3_bn"]))
    x = lax.conv_general_dilated(x, p["f_w"], (1, 1), ((0, 0), (0, 0)),
                                 dimension_numbers=dn) + p["f_b"]
    x = jax.nn.sigmoid(x)
    return jnp.transpose(x, (0, 3, 1, 2))


if __name__ == "__main__":
    key = jax.random.PRNGKey(0)
    k_param, k_in = jax.random.split(key)

    num_channels = 1
    params = init_params(k_param, num_channels=num_channels)
    x = jax.random.normal(k_in, (2, num_channels, 16, 16), jnp.float32)  # NCHW

    fwd = jax.jit(functools.partial(conv_autoencoder_forward, params))
    y = jax.block_until_ready(fwd(x))

    assert y.shape == (2, num_channels, 16, 16), y.shape
    assert bool(jnp.all((y >= 0.0) & (y <= 1.0))), "sigmoid output out of range"

    # Cross-check the fused Pallas pipeline against a plain-JAX f32 reference;
    # the 5e-2 tolerance covers the intentional bf16 activation/weight casts.
    y_ref = jax.jit(functools.partial(_reference_forward, params))(x)
    err = float(jnp.max(jnp.abs(y - y_ref)))
    assert err < 5e-2, f"max abs error vs reference: {err}"

    print("KERNEL_OK")
</pallas_src>

<mosaic_0001>
module attributes {stable_mosaic.version = 11 : i64} {
  func.func @_autoencoder_kernel(%arg0: i32, %arg1: memref<1x64x9xbf16, #tpu.memory_space<vmem>>, %arg2: memref<9x32xbf16, #tpu.memory_space<vmem>>, %arg3: memref<1x32xf32, #tpu.memory_space<vmem>>, %arg4: memref<1x32xf32, #tpu.memory_space<vmem>>, %arg5: memref<288x64xbf16, #tpu.memory_space<vmem>>, %arg6: memref<1x64xf32, #tpu.memory_space<vmem>>, %arg7: memref<1x64xf32, #tpu.memory_space<vmem>>, %arg8: memref<576x32xbf16, #tpu.memory_space<vmem>>, %arg9: memref<1x32xf32, #tpu.memory_space<vmem>>, %arg10: memref<1x32xf32, #tpu.memory_space<vmem>>, %arg11: memref<128x256xbf16, #tpu.memory_space<vmem>>, %arg12: memref<1x256xf32, #tpu.memory_space<vmem>>, %arg13: memref<1x256xf32, #tpu.memory_space<vmem>>, %arg14: memref<256x128xbf16, #tpu.memory_space<vmem>>, %arg15: memref<1x128xf32, #tpu.memory_space<vmem>>, %arg16: memref<1x128xf32, #tpu.memory_space<vmem>>, %arg17: memref<128x64xbf16, #tpu.memory_space<vmem>>, %arg18: memref<1x64xf32, #tpu.memory_space<vmem>>, %arg19: memref<1x64xf32, #tpu.memory_space<vmem>>, %arg20: memref<64x4xbf16, #tpu.memory_space<vmem>>, %arg21: memref<1x4xf32, #tpu.memory_space<vmem>>, %arg22: memref<1x64x4xf32, #tpu.memory_space<vmem>>, %arg23: memref<4x5x5x32xbf16, #tpu.memory_space<vmem>>, %arg24: memref<4x3x3x64xbf16, #tpu.memory_space<vmem>>, %arg25: memref<3x3x32xbf16, #tpu.memory_space<vmem>>, %arg26: memref<5x5x64xbf16, #tpu.memory_space<vmem>>, %arg27: memref<9x9x32xbf16, #tpu.memory_space<vmem>>) attributes {dimension_semantics = [#tpu.dimension_semantics<parallel>], iteration_bounds = array<i64: 2>, scalar_prefetch = 0 : i64, scratch_operands = 5 : i64, tpu.core_type = #tpu.core_type<tc>, window_params = [{transform_indices = @transform_0, window_bounds = array<i64: 1, 64, 9>}, {pipeline_mode = #tpu.pipeline_mode<synchronous>, transform_indices = @transform_1, window_bounds = array<i64: 9, 32>}, {pipeline_mode = #tpu.pipeline_mode<synchronous>, transform_indices = @transform_2, window_bounds = array<i64: 1, 32>}, {pipeline_mode = #tpu.pipeline_mode<synchronous>, transform_indices = @transform_3, window_bounds = array<i64: 1, 32>}, {pipeline_mode = #tpu.pipeline_mode<synchronous>, transform_indices = @transform_4, window_bounds = array<i64: 288, 64>}, {pipeline_mode = #tpu.pipeline_mode<synchronous>, transform_indices = @transform_5, window_bounds = array<i64: 1, 64>}, {pipeline_mode = #tpu.pipeline_mode<synchronous>, transform_indices = @transform_6, window_bounds = array<i64: 1, 64>}, {pipeline_mode = #tpu.pipeline_mode<synchronous>, transform_indices = @transform_7, window_bounds = array<i64: 576, 32>}, {pipeline_mode = #tpu.pipeline_mode<synchronous>, transform_indices = @transform_8, window_bounds = array<i64: 1, 32>}, {pipeline_mode = #tpu.pipeline_mode<synchronous>, transform_indices = @transform_9, window_bounds = array<i64: 1, 32>}, {pipeline_mode = #tpu.pipeline_mode<synchronous>, transform_indices = @transform_10, window_bounds = array<i64: 128, 256>}, {pipeline_mode = #tpu.pipeline_mode<synchronous>, transform_indices = @transform_11, window_bounds = array<i64: 1, 256>}, {pipeline_mode = #tpu.pipeline_mode<synchronous>, transform_indices = @transform_12, window_bounds = array<i64: 1, 256>}, {pipeline_mode = #tpu.pipeline_mode<synchronous>, transform_indices = @transform_13, window_bounds = array<i64: 256, 128>}, {pipeline_mode = #tpu.pipeline_mode<synchronous>, transform_indices = @transform_14, window_bounds = array<i64: 1, 128>}, {pipeline_mode = #tpu.pipeline_mode<synchronous>, transform_indices = @transform_15, window_bounds = array<i64: 1, 128>}, {pipeline_mode = #tpu.pipeline_mode<synchronous>, transform_indices = @transform_16, window_bounds = array<i64: 128, 64>}, {pipeline_mode = #tpu.pipeline_mode<synchronous>, transform_indices = @transform_17, window_bounds = array<i64: 1, 64>}, {pipeline_mode = #tpu.pipeline_mode<synchronous>, transform_indices = @transform_18, window_bounds = array<i64: 1, 64>}, {pipeline_mode = #tpu.pipeline_mode<synchronous>, transform_indices = @transform_19, window_bounds = array<i64: 64, 4>}, {pipeline_mode = #tpu.pipeline_mode<synchronous>, transform_indices = @transform_20, window_bounds = array<i64: 1, 4>}, {transform_indices = @transform_21, window_bounds = array<i64: 1, 64, 4>}]} {
    %cst = arith.constant 0.000000e+00 : bf16
    %0 = vector.broadcast %cst : bf16 to vector<4x5x5x32xbf16>
    %c0 = arith.constant 0 : index
    %c0_0 = arith.constant 0 : index
    %c0_1 = arith.constant 0 : index
    %c0_2 = arith.constant 0 : index
    %1 = vector.load %arg23[%c0, %c0_0, %c0_1, %c0_2] : memref<4x5x5x32xbf16, #tpu.memory_space<vmem>>, vector<4x5x5x32xbf16>
    tpu.vector_store %arg23[%c0, %c0_0, %c0_1, %c0_2], %0 {strides = array<i32>} : memref<4x5x5x32xbf16, #tpu.memory_space<vmem>>, vector<4x5x5x32xbf16>,
    %cst_3 = arith.constant 0.000000e+00 : bf16
    %2 = vector.broadcast %cst_3 : bf16 to vector<4x3x3x64xbf16>
    %c0_4 = arith.constant 0 : index
    %c0_5 = arith.constant 0 : index
    %c0_6 = arith.constant 0 : index
    %c0_7 = arith.constant 0 : index
    %3 = vector.load %arg24[%c0_4, %c0_5, %c0_6, %c0_7] : memref<4x3x3x64xbf16, #tpu.memory_space<vmem>>, vector<4x3x3x64xbf16>
    tpu.vector_store %arg24[%c0_4, %c0_5, %c0_6, %c0_7], %2 {strides = array<i32>} : memref<4x3x3x64xbf16, #tpu.memory_space<vmem>>, vector<4x3x3x64xbf16>,
    %cst_8 = arith.constant 0.000000e+00 : bf16
    %4 = vector.broadcast %cst_8 : bf16 to vector<3x3x32xbf16>
    %c0_9 = arith.constant 0 : index
    %c0_10 = arith.constant 0 : index
    %c0_11 = arith.constant 0 : index
    %5 = vector.load %arg25[%c0_9, %c0_10, %c0_11] : memref<3x3x32xbf16, #tpu.memory_space<vmem>>, vector<3x3x32xbf16>
    tpu.vector_store %arg25[%c0_9, %c0_10, %c0_11], %4 {strides = array<i32>} : memref<3x3x32xbf16, #tpu.memory_space<vmem>>, vector<3x3x32xbf16>,
    %cst_12 = arith.constant 0.000000e+00 : bf16
    %6 = vector.broadcast %cst_12 : bf16 to vector<5x5x64xbf16>
    %c0_13 = arith.constant 0 : index
    %c0_14 = arith.constant 0 : index
    %c0_15 = arith.constant 0 : index
    %7 = vector.load %arg26[%c0_13, %c0_14, %c0_15] : memref<5x5x64xbf16, #tpu.memory_space<vmem>>, vector<5x5x64xbf16>
    tpu.vector_store %arg26[%c0_13, %c0_14, %c0_15], %6 {strides = array<i32>} : memref<5x5x64xbf16, #tpu.memory_space<vmem>>, vector<5x5x64xbf16>,
    %cst_16 = arith.constant 0.000000e+00 : bf16
    %8 = vector.broadcast %cst_16 : bf16 to vector<9x9x32xbf16>
    %c0_17 = arith.constant 0 : index
    %c0_18 = arith.constant 0 : index
    %c0_19 = arith.constant 0 : index
    %9 = vector.load %arg27[%c0_17, %c0_18, %c0_19] : memref<9x9x32xbf16, #tpu.memory_space<vmem>>, vector<9x9x32xbf16>
    tpu.vector_store %arg27[%c0_17, %c0_18, %c0_19], %8 {strides = array<i32>} : memref<9x9x32xbf16, #tpu.memory_space<vmem>>, vector<9x9x32xbf16>,
    %c0_20 = arith.constant 0 : index
    %c0_21 = arith.constant 0 : index
    %c0_22 = arith.constant 0 : index
    %10 = vector.load %arg1[%c0_20, %c0_21, %c0_22] : memref<1x64x9xbf16, #tpu.memory_space<vmem>>, vector<1x64x9xbf16>
    %11 = vector.shape_cast %10 : vector<1x64x9xbf16> to vector<64x9xbf16>
    %c0_23 = arith.constant 0 : index
    %c0_24 = arith.constant 0 : index
    %12 = vector.load %arg2[%c0_23, %c0_24] : memref<9x32xbf16, #tpu.memory_space<vmem>>, vector<9x32xbf16>
    %cst_25 = arith.constant dense<0.000000e+00> : vector<64x32xf32>
    %13 = tpu.matmul %11, %12, %cst_25 {dimension_numbers = #tpu.dot_dimension_numbers<[1], [0], [0], [1], [0, 0, 1, 1], [], []>} : vector<64x9xbf16>, vector<9x32xbf16>, vector<64x32xf32> -> vector<64x32xf32>
    %c0_26 = arith.constant 0 : index
    %c0_27 = arith.constant 0 : index
    %14 = vector.load %arg3[%c0_26, %c0_27] : memref<1x32xf32, #tpu.memory_space<vmem>>, vector<1x32xf32>
    %15 = vector.broadcast %14 : vector<1x32xf32> to vector<64x32xf32>
    %16 = arith.mulf %13, %15 : vector<64x32xf32>
    %c0_28 = arith.constant 0 : index
    %c0_29 = arith.constant 0 : index
    %17 = vector.load %arg4[%c0_28, %c0_29] : memref<1x32xf32, #tpu.memory_space<vmem>>, vector<1x32xf32>
    %18 = vector.broadcast %17 : vector<1x32xf32> to vector<64x32xf32>
    %19 = arith.addf %16, %18 : vector<64x32xf32>
    %cst_30 = arith.constant 0.000000e+00 : f32
    %20 = vector.broadcast %cst_30 : f32 to vector<64x32xf32>
    %21 = arith.maximumf %19, %20 : vector<64x32xf32>
    %22 = arith.truncf %21 : vector<64x32xf32> to vector<64x32xbf16>
    %23 = vector.extract_strided_slice %22 {offsets = [0, 0], sizes = [1, 32], strides = [1, 1]} : vector<64x32xbf16> to vector<1x32xbf16>
    %c3 = arith.constant 3 : index
    %c0_31 = arith.constant 0 : index
    %c0_32 = arith.constant 0 : index
    %c0_33 = arith.constant 0 : index
    %24 = vector.load %arg23[%c3, %c0_31, %c0_32, %c0_33] : memref<4x5x5x32xbf16, #tpu.memory_space<vmem>>, vector<1x1x1x32xbf16>
    %25 = vector.shape_cast %24 : vector<1x1x1x32xbf16> to vector<1x32xbf16>
    %26 = vector.shape_cast %23 : vector<1x32xbf16> to vector<1x1x1x32xbf16>
    tpu.vector_store %arg23[%c3, %c0_31, %c0_32, %c0_33], %26 {strides = array<i32>} : memref<4x5x5x32xbf16, #tpu.memory_space<vmem>>, vector<1x1x1x32xbf16>,
    %27 = vector.extract_strided_slice %22 {offsets = [1, 0], sizes = [1, 32], strides = [1, 1]} : vector<64x32xbf16> to vector<1x32xbf16>
    %c2 = arith.constant 2 : index
    %c0_34 = arith.constant 0 : index
    %c1 = arith.constant 1 : index
    %c0_35 = arith.constant 0 : index
    %28 = vector.load %arg23[%c2, %c0_34, %c1, %c0_35] : memref<4x5x5x32xbf16, #tpu.memory_space<vmem>>, vector<1x1x1x32xbf16>
    %29 = vector.shape_cast %28 : vector<1x1x1x32xbf16> to vector<1x32xbf16>
    %30 = vector.shape_cast %27 : vector<1x32xbf16> to vector<1x1x1x32xbf16>
    tpu.vector_store %arg23[%c2, %c0_34, %c1, %c0_35], %30 {strides = array<i32>} : memref<4x5x5x32xbf16, #tpu.memory_space<vmem>>, vector<1x1x1x32xbf16>,
    %31 = vector.extract_strided_slice %22 {offsets = [2, 0], sizes = [1, 32], strides = [1, 1]} : vector<64x32xbf16> to vector<1x32xbf16>
    %c3_36 = arith.constant 3 : index
    %c0_37 = arith.constant 0 : index
    %c1_38 = arith.constant 1 : index
    %c0_39 = arith.constant 0 : index
    %32 = vector.load %arg23[%c3_36, %c0_37, %c1_38, %c0_39] : memref<4x5x5x32xbf16, #tpu.memory_space<vmem>>, vector<1x1x1x32xbf16>
    %33 = vector.shape_cast %32 : vector<1x1x1x32xbf16> to vector<1x32xbf16>
    %34 = vector.shape_cast %31 : vector<1x32xbf16> to vector<1x1x1x32xbf16>
    tpu.vector_store %arg23[%c3_36, %c0_37, %c1_38, %c0_39], %34 {strides = array<i32>} : memref<4x5x5x32xbf16, #tpu.memory_space<vmem>>, vector<1x1x1x32xbf16>,
    %35 = vector.extract_strided_slice %22 {offsets = [3, 0], sizes = [1, 32], strides = [1, 1]} : vector<64x32xbf16> to vector<1x32xbf16>
    %c2_40 = arith.constant 2 : index
    %c0_41 = arith.constant 0 : index
    %c2_42 = arith.constant 2 : index
    %c0_43 = arith.constant 0 : index
    %36 = vector.load %arg23[%c2_40, %c0_41, %c2_42, %c0_43] : memref<4x5x5x32xbf16, #tpu.memory_space<vmem>>, vector<1x1x1x32xbf16>
    %37 = vector.shape_cast %36 : vector<1x1x1x32xbf16> to vector<1x32xbf16>
    %38 = vector.shape_cast %35 : vector<1x32xbf16> to vector<1x1x1x32xbf16>
    tpu.vector_store %arg23[%c2_40, %c0_41, %c2_42, %c0_43], %38 {strides = array<i32>} : memref<4x5x5x32xbf16, #tpu.memory_space<vmem>>, vector<1x1x1x32xbf16>,
    %39 = vector.extract_strided_slice %22 {offsets = [4, 0], sizes = [1, 32], strides = [1, 1]} : vector<64x32xbf16> to vector<1x32xbf16>
    %c3_44 = arith.constant 3 : index
    %c0_45 = arith.constant 0 : index
    %c2_46 = arith.constant 2 : index
    %c0_47 = arith.constant 0 : index
    %40 = vector.load %arg23[%c3_44, %c0_45, %c2_46, %c0_47] : memref<4x5x5x32xbf16, #tpu.memory_space<vmem>>, vector<1x1x1x32xbf16>
    %41 = vector.shape_cast %40 : vector<1x1x1x32xbf16> to vector<1x32xbf16>
    %42 = vector.shape_cast %39 : vector<1x32xbf16> to vector<1x1x1x32xbf16>
    tpu.vector_store %arg23[%c3_44, %c0_45, %c2_46, %c0_47], %42 {strides = array<i32>} : memref<4x5x5x32xbf16, #tpu.memory_space<vmem>>, vector<1x1x1x32xbf16>,
    %43 = vector.extract_strided_slice %22 {offsets = [5, 0], sizes = [1, 32], strides = [1, 1]} : vector<64x32xbf16> to vector<1x32xbf16>
    %c2_48 = arith.constant 2 : index
    %c0_49 = arith.constant 0 : index
    %c3_50 = arith.constant 3 : index
    %c0_51 = arith.constant 0 : index
    %44 = vector.load %arg23[%c2_48, %c0_49, %c3_50, %c0_51] : memref<4x5x5x32xbf16, #tpu.memory_space<vmem>>, vector<1x1x1x32xbf16>
    %45 = vector.shape_cast %44 : vector<1x1x1x32xbf16> to vector<1x32xbf16>
    %46 = vector.shape_cast %43 : vector<1x32xbf16> to vector<1x1x1x32xbf16>
    tpu.vector_store %arg23[%c2_48, %c0_49, %c3_50, %c0_51], %46 {strides = array<i32>} : memref<4x5x5x32xbf16, #tpu.memory_space<vmem>>, vector<1x1x1x32xbf16>,
    %47 = vector.extract_strided_slice %22 {offsets = [6, 0], sizes = [1, 32], strides = [1, 1]} : vector<64x32xbf16> to vector<1x32xbf16>
    %c3_52 = arith.constant 3 : index
    %c0_53 = arith.constant 0 : index
    %c3_54 = arith.constant 3 : index
    %c0_55 = arith.constant 0 : index
    %48 = vector.load %arg23[%c3_52, %c0_53, %c3_54, %c0_55] : memref<4x5x5x32xbf16, #tpu.memory_space<vmem>>, vector<1x1x1x32xbf16>
    %49 = vector.shape_cast %48 : vector<1x1x1x32xbf16> to vector<1x32xbf16>
    %50 = vector.shape_cast %47 : vector<1x32xbf16> to vector<1x1x1x32xbf16>
    tpu.vector_store %arg23[%c3_52, %c0_53, %c3_54, %c0_55], %50 {strides = array<i32>} : memref<4x5x5x32xbf16, #tpu.memory_space<vmem>>, vector<1x1x1x32xbf16>,
    %51 = vector.extract_strided_slice %22 {offsets = [7, 0], sizes = [1, 32], strides = [1, 1]} : vector<64x32xbf16> to vector<1x32xbf16>
    %c2_56 = arith.constant 2 : index
    %c0_57 = arith.constant 0 : index
    %c4 = arith.constant 4 : index
    %c0_58 = arith.constant 0 : index
    %52 = vector.load %arg23[%c2_56, %c0_57, %c4, %c0_58] : memref<4x5x5x32xbf16, #tpu.memory_space<vmem>>, vector<1x1x1x32xbf16>
    %53 = vector.shape_cast %52 : vector<1x1x1x32xbf16> to vector<1x32xbf16>
    %54 = vector.shape_cast %51 : vector<1x32xbf16> to vector<1x1x1x32xbf16>
    tpu.vector_store %arg23[%c2_56, %c0_57, %c4, %c0_58], %54 {strides = array<i32>} : memref<4x5x5x32xbf16, #tpu.memory_space<vmem>>, vector<1x1x1x32xbf16>,
    %55 = vector.extract_strided_slice %22 {offsets = [8, 0], sizes = [1, 32], strides = [1, 1]} : vector<64x32xbf16> to vector<1x32xbf16>
    %c1_59 = arith.constant 1 : index
    %c1_60 = arith.constant 1 : index
    %c0_61 = arith.constant 0 : index
    %c0_62 = arith.constant 0 : index
    %56 = vector.load %arg23[%c1_59, %c1_60, %c0_61, %c0_62] : memref<4x5x5x32xbf16, #tpu.memory_space<vmem>>, vector<1x1x1x32xbf16>
    %57 = vector.shape_cast %56 : vector<1x1x1x32xbf16> to vector<1x32xbf16>
    %58 = vector.shape_cast %55 : vector<1x32xbf16> to vector<1x1x1x32xbf16>
    tpu.vector_store %arg23[%c1_59, %c1_60, %c0_61, %c0_62], %58 {strides = array<i32>} : memref<4x5x5x32xbf16, #tpu.memory_space<vmem>>, vector<1x1x1x32xbf16>,
    %59 = vector.extract_strided_slice %22 {offsets = [9, 0], sizes = [1, 32], strides = [1, 1]} : vector<64x32xbf16> to vector<1x32xbf16>
    %c0_63 = arith.constant 0 : index
    %c1_64 = arith.constant 1 : index
    %c1_65 = arith.constant 1 : index
    %c0_66 = arith.constant 0 : index
    %60 = vector.load %arg23[%c0_63, %c1_64, %c1_65, %c0_66] : memref<4x5x5x32xbf16, #tpu.memory_space<vmem>>, vector<1x1x1x32xbf16>
    %61 = vector.shape_cast %60 : vector<1x1x1x32xbf16> to vector<1x32xbf16>
    %62 = vector.shape_cast %59 : vector<1x32xbf16> to vector<1x1x1x32xbf16>
    tpu.vector_store %arg23[%c0_63, %c1_64, %c1_65, %c0_66], %62 {strides = array<i32>} : memref<4x5x5x32xbf16, #tpu.memory_space<vmem>>, vector<1x1x1x32xbf16>,
    %63 = vector.extract_strided_slice %22 {offsets = [10, 0], sizes = [1, 32], strides = [1, 1]} : vector<64x32xbf16> to vector<1x32xbf16>
    %c1_67 = arith.constant 1 : index
    %c1_68 = arith.constant 1 : index
    %c1_69 = arith.constant 1 : index
    %c0_70 = arith.constant 0 : index
    %64 = vector.load %arg23[%c1_67, %c1_68, %c1_69, %c0_70] : memref<4x5x5x32xbf16, #tpu.memory_space<vmem>>, vector<1x1x1x32xbf16>
    %65 = vector.shape_cast %64 : vector<1x1x1x32xbf16> to vector<1x32xbf16>
    %66 = vector.shape_cast %63 : vector<1x32xbf16> to vector<1x1x1x32xbf16>
    tpu.vector_store %arg23[%c1_67, %c1_68, %c1_69, %c0_70], %66 {strides = array<i32>} : memref<4x5x5x32xbf16, #tpu.memory_space<vmem>>, vector<1x1x1x32xbf16>,
    %67 = vector.extract_strided_slice %22 {offsets = [11, 0], sizes = [1, 32], strides = [1, 1]} : vector<64x32xbf16> to vector<1x32xbf16>
    %c0_71 = arith.constant 0 : index
    %c1_72 = arith.constant 1 : index
    %c2_73 = arith.constant 2 : index
    %c0_74 = arith.constant 0 : index
    %68 = vector.load %arg23[%c0_71, %c1_72, %c2_73, %c0_74] : memref<4x5x5x32xbf16, #tpu.memory_space<vmem>>, vector<1x1x1x32xbf16>
    %69 = vector.shape_cast %68 : vector<1x1x1x32xbf16> to vector<1x32xbf16>
    %70 = vector.shape_cast %67 : vector<1x32xbf16> to vector<1x1x1x32xbf16>
    tpu.vector_store %arg23[%c0_71, %c1_72, %c2_73, %c0_74], %70 {strides = array<i32>} : memref<4x5x5x32xbf16, #tpu.memory_space<vmem>>, vector<1x1x1x32xbf16>,
    %71 = vector.extract_strided_slice %22 {offsets = [12, 0], sizes = [1, 32], strides = [1, 1]} : vector<64x32xbf16> to vector<1x32xbf16>
    %c1_75 = arith.constant 1 : index
    %c1_76 = arith.constant 1 : index
    %c2_77 = arith.constant 2 : index
    %c0_78 = arith.constant 0 : index
    %72 = vector.load %arg23[%c1_75, %c1_76, %c2_77, %c0_78] : memref<4x5x5x32xbf16, #tpu.memory_space<vmem>>, vector<1x1x1x32xbf16>
    %73 = vector.shape_cast %72 : vector<1x1x1x32xbf16> to vector<1x32xbf16>
    %74 = vector.shape_cast %71 : vector<1x32xbf16> to vector<1x1x1x32xbf16>
    tpu.vector_store %arg23[%c1_75, %c1_76, %c2_77, %c0_78], %74 {strides = array<i32>} : memref<4x5x5x32xbf16, #tpu.memory_space<vmem>>, vector<1x1x1x32xbf16>,
    %75 = vector.extract_strided_slice %22 {offsets = [13, 0], sizes = [1, 32], strides = [1, 1]} : vector<64x32xbf16> to vector<1x32xbf16>
    %c0_79 = arith.constant 0 : index
    %c1_80 = arith.constant 1 : index
    %c3_81 = arith.constant 3 : index
    %c0_82 = arith.constant 0 : index
    %76 = vector.load %arg23[%c0_79, %c1_80, %c3_81, %c0_82] : memref<4x5x5x32xbf16, #tpu.memory_space<vmem>>, vector<1x1x1x32xbf16>
    %77 = vector.shape_cast %76 : vector<1x1x1x32xbf16> to vector<1x32xbf16>
    %78 = vector.shape_cast %75 : vector<1x32xbf16> to vector<1x1x1x32xbf16>
    tpu.vector_store %arg23[%c0_79, %c1_80, %c3_81, %c0_82], %78 {strides = array<i32>} : memref<4x5x5x32xbf16, #tpu.memory_space<vmem>>, vector<1x1x1x32xbf16>,
    %79 = vector.extract_strided_slice %22 {offsets = [14, 0], sizes = [1, 32], strides = [1, 1]} : vector<64x32xbf16> to vector<1x32xbf16>
    %c1_83 = arith.constant 1 : index
    %c1_84 = arith.constant 1 : index
    %c3_85 = arith.constant 3 : index
    %c0_86 = arith.constant 0 : index
    %80 = vector.load %arg23[%c1_83, %c1_84, %c3_85, %c0_86] : memref<4x5x5x32xbf16, #tpu.memory_space<vmem>>, vector<1x1x1x32xbf16>
    %81 = vector.shape_cast %80 : vector<1x1x1x32xbf16> to vector<1x32xbf16>
    %82 = vector.shape_cast %79 : vector<1x32xbf16> to vector<1x1x1x32xbf16>
    tpu.vector_store %arg23[%c1_83, %c1_84, %c3_85, %c0_86], %82 {strides = array<i32>} : memref<4x5x5x32xbf16, #tpu.memory_space<vmem>>, vector<1x1x1x32xbf16>,
    %83 = vector.extract_strided_slice %22 {offsets = [15, 0], sizes = [1, 32], strides = [1, 1]} : vector<64x32xbf16> to vector<1x32xbf16>
    %c0_87 = arith.constant 0 : index
    %c1_88 = arith.constant 1 : index
    %c4_89 = arith.constant 4 : index
    %c0_90 = arith.constant 0 : index
    %84 = vector.load %arg23[%c0_87, %c1_88, %c4_89, %c0_90] : memref<4x5x5x32xbf16, #tpu.memory_space<vmem>>, vector<1x1x1x32xbf16>
    %85 = vector.shape_cast %84 : vector<1x1x1x32xbf16> to vector<1x32xbf16>
    %86 = vector.shape_cast %83 : vector<1x32xbf16> to vector<1x1x1x32xbf16>
    tpu.vector_store %arg23[%c0_87, %c1_88, %c4_89, %c0_90], %86 {strides = array<i32>} : memref<4x5x5x32xbf16, #tpu.memory_space<vmem>>, vector<1x1x1x32xbf16>,
    %87 = vector.extract_strided_slice %22 {offsets = [16, 0], sizes = [1, 32], strides = [1, 1]} : vector<64x32xbf16> to vector<1x32xbf16>
    %c3_91 = arith.constant 3 : index
    %c1_92 = arith.constant 1 : index
    %c0_93 = arith.constant 0 : index
    %c0_94 = arith.constant 0 : index
    %88 = vector.load %arg23[%c3_91, %c1_92, %c0_93, %c0_94] : memref<4x5x5x32xbf16, #tpu.memory_space<vmem>>, vector<1x1x1x32xbf16>
    %89 = vector.shape_cast %88 : vector<1x1x1x32xbf16> to vector<1x32xbf16>
    %90 = vector.shape_cast %87 : vector<1x32xbf16> to vector<1x1x1x32xbf16>
    tpu.vector_store %arg23[%c3_91, %c1_92, %c0_93, %c0_94], %90 {strides = array<i32>} : memref<4x5x5x32xbf16, #tpu.memory_space<vmem>>, vector<1x1x1x32xbf16>,
    %91 = vector.extract_strided_slice %22 {offsets = [17, 0], sizes = [1, 32], strides = [1, 1]} : vector<64x32xbf16> to vector<1x32xbf16>
    %c2_95 = arith.constant 2 : index
    %c1_96 = arith.constant 1 : index
    %c1_97 = arith.constant 1 : index
    %c0_98 = arith.constant 0 : index
    %92 = vector.load %arg23[%c2_95, %c1_96, %c1_97, %c0_98] : memref<4x5x5x32xbf16, #tpu.memory_space<vmem>>, vector<1x1x1x32xbf16>
    %93 = vector.shape_cast %92 : vector<1x1x1x32xbf16> to vector<1x32xbf16>
    %94 = vector.shape_cast %91 : vector<1x32xbf16> to vector<1x1x1x32xbf16>
    tpu.vector_store %arg23[%c2_95, %c1_96, %c1_97, %c0_98], %94 {strides = array<i32>} : memref<4x5x5x32xbf16, #tpu.memory_space<vmem>>, vector<1x1x1x32xbf16>,
    %95 = vector.extract_strided_slice %22 {offsets = [18, 0], sizes = [1, 32], strides = [1, 1]} : vector<64x32xbf16> to vector<1x32xbf16>
    %c3_99 = arith.constant 3 : index
    %c1_100 = arith.constant 1 : index
    %c1_101 = arith.constant 1 : index
    %c0_102 = arith.constant 0 : index
    %96 = vector.load %arg23[%c3_99, %c1_100, %c1_101, %c0_102] : memref<4x5x5x32xbf16, #tpu.memory_space<vmem>>, vector<1x1x1x32xbf16>
    %97 = vector.shape_cast %96 : vector<1x1x1x32xbf16> to vector<1x32xbf16>
    %98 = vector.shape_cast %95 : vector<1x32xbf16> to vector<1x1x1x32xbf16>
    tpu.vector_store %arg23[%c3_99, %c1_100, %c1_101, %c0_102], %98 {strides = array<i32>} : memref<4x5x5x32xbf16, #tpu.memory_space<vmem>>, vector<1x1x1x32xbf16>,
    %99 = vector.extract_strided_slice %22 {offsets = [19, 0], sizes = [1, 32], strides = [1, 1]} : vector<64x32xbf16> to vector<1x32xbf16>
    %c2_103 = arith.constant 2 : index
    %c1_104 = arith.constant 1 : index
    %c2_105 = arith.constant 2 : index
    %c0_106 = arith.constant 0 : index
    %100 = vector.load %arg23[%c2_103, %c1_104, %c2_105, %c0_106] : memref<4x5x5x32xbf16, #tpu.memory_space<vmem>>, vector<1x1x1x32xbf16>
    %101 = vector.shape_cast %100 : vector<1x1x1x32xbf16> to vector<1x32xbf16>
    %102 = vector.shape_cast %99 : vector<1x32xbf16> to vector<1x1x1x32xbf16>
    tpu.vector_store %arg23[%c2_103, %c1_104, %c2_105, %c0_106], %102 {strides = array<i32>} : memref<4x5x5x32xbf16, #tpu.memory_space<vmem>>, vector<1x1x1x32xbf16>,
    %103 = vector.extract_strided_slice %22 {offsets = [20, 0], sizes = [1, 32], strides = [1, 1]} : vector<64x32xbf16> to vector<1x32xbf16>
    %c3_107 = arith.constant 3 : index
    %c1_108 = arith.constant 1 : index
    %c2_109 = arith.constant 2 : index
    %c0_110 = arith.constant 0 : index
    %104 = vector.load %arg23[%c3_107, %c1_108, %c2_109, %c0_110] : memref<4x5x5x32xbf16, #tpu.memory_space<vmem>>, vector<1x1x1x32xbf16>
    %105 = vector.shape_cast %104 : vector<1x1x1x32xbf16> to vector<1x32xbf16>
    %106 = vector.shape_cast %103 : vector<1x32xbf16> to vector<1x1x1x32xbf16>
    tpu.vector_store %arg23[%c3_107, %c1_108, %c2_109, %c0_110], %106 {strides = array<i32>} : memref<4x5x5x32xbf16, #tpu.memory_space<vmem>>, vector<1x1x1x32xbf16>,
    %107 = vector.extract_strided_slice %22 {offsets = [21, 0], sizes = [1, 32], strides = [1, 1]} : vector<64x32xbf16> to vector<1x32xbf16>
    %c2_111 = arith.constant 2 : index
    %c1_112 = arith.constant 1 : index
    %c3_113 = arith.constant 3 : index
    %c0_114 = arith.constant 0 : index
    %108 = vector.load %arg23[%c2_111, %c1_112, %c3_113, %c0_114] : memref<4x5x5x32xbf16, #tpu.memory_space<vmem>>, vector<1x1x1x32xbf16>
    %109 = vector.shape_cast %108 : vector<1x1x1x32xbf16> to vector<1x32xbf16>
    %110 = vector.shape_cast %107 : vector<1x32xbf16> to vector<1x1x1x32xbf16>
    tpu.vector_store %arg23[%c2_111, %c1_112, %c3_113, %c0_114], %110 {strides = array<i32>} : memref<4x5x5x32xbf16, #tpu.memory_space<vmem>>, vector<1x1x1x32xbf16>,
    %111 = vector.extract_strided_slice %22 {offsets = [22, 0], sizes = [1, 32], strides = [1, 1]} : vector<64x32xbf16> to vector<1x32xbf16>
    %c3_115 = arith.constant 3 : index
    %c1_116 = arith.constant 1 : index
    %c3_117 = arith.constant 3 : index
    %c0_118 = arith.constant 0 : index
    %112 = vector.load %arg23[%c3_115, %c1_116, %c3_117, %c0_118] : memref<4x5x5x32xbf16, #tpu.memory_space<vmem>>, vector<1x1x1x32xbf16>
    %113 = vector.shape_cast %112 : vector<1x1x1x32xbf16> to vector<1x32xbf16>
    %114 = vector.shape_cast %111 : vector<1x32xbf16> to vector<1x1x1x32xbf16>
    tpu.vector_store %arg23[%c3_115, %c1_116, %c3_117, %c0_118], %114 {strides = array<i32>} : memref<4x5x5x32xbf16, #tpu.memory_space<vmem>>, vector<1x1x1x32xbf16>,
    %115 = vector.extract_strided_slice %22 {offsets = [23, 0], sizes = [1, 32], strides = [1, 1]} : vector<64x32xbf16> to vector<1x32xbf16>
    %c2_119 = arith.constant 2 : index
    %c1_120 = arith.constant 1 : index
    %c4_121 = arith.constant 4 : index
    %c0_122 = arith.constant 0 : index
    %116 = vector.load %arg23[%c2_119, %c1_120, %c4_121, %c0_122] : memref<4x5x5x32xbf16, #tpu.memory_space<vmem>>, vector<1x1x1x32xbf16>
    %117 = vector.shape_cast %116 : vector<1x1x1x32xbf16> to vector<1x32xbf16>
    %118 = vector.shape_cast %115 : vector<1x32xbf16> to vector<1x1x1x32xbf16>
    tpu.vector_store %arg23[%c2_119, %c1_120, %c4_121, %c0_122], %118 {strides = array<i32>} : memref<4x5x5x32xbf16, #tpu.memory_space<vmem>>, vector<1x1x1x32xbf16>,
    %119 = vector.extract_strided_slice %22 {offsets = [24, 0], sizes = [1, 32], strides = [1, 1]} : vector<64x32xbf16> to vector<1x32xbf16>
    %c1_123 = arith.constant 1 : index
    %c2_124 = arith.constant 2 : index
    %c0_125 = arith.constant 0 : index
    %c0_126 = arith.constant 0 : index
    %120 = vector.load %arg23[%c1_123, %c2_124, %c0_125, %c0_126] : memref<4x5x5x32xbf16, #tpu.memory_space<vmem>>, vector<1x1x1x32xbf16>
    %121 = vector.shape_cast %120 : vector<1x1x1x32xbf16> to vector<1x32xbf16>
    %122 = vector.shape_cast %119 : vector<1x32xbf16> to vector<1x1x1x32xbf16>
    tpu.vector_store %arg23[%c1_123, %c2_124, %c0_125, %c0_126], %122 {strides = array<i32>} : memref<4x5x5x32xbf16, #tpu.memory_space<vmem>>, vector<1x1x1x32xbf16>,
    %123 = vector.extract_strided_slice %22 {offsets = [25, 0], sizes = [1, 32], strides = [1, 1]} : vector<64x32xbf16> to vector<1x32xbf16>
    %c0_127 = arith.constant 0 : index
    %c2_128 = arith.constant 2 : index
    %c1_129 = arith.constant 1 : index
    %c0_130 = arith.constant 0 : index
    %124 = vector.load %arg23[%c0_127, %c2_128, %c1_129, %c0_130] : memref<4x5x5x32xbf16, #tpu.memory_space<vmem>>, vector<1x1x1x32xbf16>
    %125 = vector.shape_cast %124 : vector<1x1x1x32xbf16> to vector<1x32xbf16>
    %126 = vector.shape_cast %123 : vector<1x32xbf16> to vector<1x1x1x32xbf16>
    tpu.vector_store %arg23[%c0_127, %c2_128, %c1_129, %c0_130], %126 {strides = array<i32>} : memref<4x5x5x32xbf16, #tpu.memory_space<vmem>>, vector<1x1x1x32xbf16>,
    %127 = vector.extract_strided_slice %22 {offsets = [26, 0], sizes = [1, 32], strides = [1, 1]} : vector<64x32xbf16> to vector<1x32xbf16>
    %c1_131 = arith.constant 1 : index
    %c2_132 = arith.constant 2 : index
    %c1_133 = arith.constant 1 : index
    %c0_134 = arith.constant 0 : index
    %128 = vector.load %arg23[%c1_131, %c2_132, %c1_133, %c0_134] : memref<4x5x5x32xbf16, #tpu.memory_space<vmem>>, vector<1x1x1x32xbf16>
    %129 = vector.shape_cast %128 : vector<1x1x1x32xbf16> to vector<1x32xbf16>
    %130 = vector.shape_cast %127 : vector<1x32xbf16> to vector<1x1x1x32xbf16>
    tpu.vector_store %arg23[%c1_131, %c2_132, %c1_133, %c0_134], %130 {strides = array<i32>} : memref<4x5x5x32xbf16, #tpu.memory_space<vmem>>, vector<1x1x1x32xbf16>,
    %131 = vector.extract_strided_slice %22 {offsets = [27, 0], sizes = [1, 32], strides = [1, 1]} : vector<64x32xbf16> to vector<1x32xbf16>
    %c0_135 = arith.constant 0 : index
    %c2_136 = arith.constant 2 : index
    %c2_137 = arith.constant 2 : index
    %c0_138 = arith.constant 0 : index
    %132 = vector.load %arg23[%c0_135, %c2_136, %c2_137, %c0_138] : memref<4x5x5x32xbf16, #tpu.memory_space<vmem>>, vector<1x1x1x32xbf16>
    %133 = vector.shape_cast %132 : vector<1x1x1x32xbf16> to vector<1x32xbf16>
    %134 = vector.shape_cast %131 : vector<1x32xbf16> to vector<1x1x1x32xbf16>
    tpu.vector_store %arg23[%c0_135, %c2_136, %c2_137, %c0_138], %134 {strides = array<i32>} : memref<4x5x5x32xbf16, #tpu.memory_space<vmem>>, vector<1x1x1x32xbf16>,
    %135 = vector.extract_strided_slice %22 {offsets = [28, 0], sizes = [1, 32], strides = [1, 1]} : vector<64x32xbf16> to vector<1x32xbf16>
    %c1_139 = arith.constant 1 : index
    %c2_140 = arith.constant 2 : index
    %c2_141 = arith.constant 2 : index
    %c0_142 = arith.constant 0 : index
    %136 = vector.load %arg23[%c1_139, %c2_140, %c2_141, %c0_142] : memref<4x5x5x32xbf16, #tpu.memory_space<vmem>>, vector<1x1x1x32xbf16>
    %137 = vector.shape_cast %136 : vector<1x1x1x32xbf16> to vector<1x32xbf16>
    %138 = vector.shape_cast %135 : vector<1x32xbf16> to vector<1x1x1x32xbf16>
    tpu.vector_store %arg23[%c1_139, %c2_140, %c2_141, %c0_142], %138 {strides = array<i32>} : memref<4x5x5x32xbf16, #tpu.memory_space<vmem>>, vector<1x1x1x32xbf16>,
    %139 = vector.extract_strided_slice %22 {offsets = [29, 0], sizes = [1, 32], strides = [1, 1]} : vector<64x32xbf16> to vector<1x32xbf16>
    %c0_143 = arith.constant 0 : index
    %c2_144 = arith.constant 2 : index
    %c3_145 = arith.constant 3 : index
    %c0_146 = arith.constant 0 : index
    %140 = vector.load %arg23[%c0_143, %c2_144, %c3_145, %c0_146] : memref<4x5x5x32xbf16, #tpu.memory_space<vmem>>, vector<1x1x1x32xbf16>
    %141 = vector.shape_cast %140 : vector<1x1x1x32xbf16> to vector<1x32xbf16>
    %142 = vector.shape_cast %139 : vector<1x32xbf16> to vector<1x1x1x32xbf16>
    tpu.vector_store %arg23[%c0_143, %c2_144, %c3_145, %c0_146], %142 {strides = array<i32>} : memref<4x5x5x32xbf16, #tpu.memory_space<vmem>>, vector<1x1x1x32xbf16>,
    %143 = vector.extract_strided_slice %22 {offsets = [30, 0], sizes = [1, 32], strides = [1, 1]} : vector<64x32xbf16> to vector<1x32xbf16>
    %c1_147 = arith.constant 1 : index
    %c2_148 = arith.constant 2 : index
    %c3_149 = arith.constant 3 : index
    %c0_150 = arith.constant 0 : index
    %144 = vector.load %arg23[%c1_147, %c2_148, %c3_149, %c0_150] : memref<4x5x5x32xbf16, #tpu.memory_space<vmem>>, vector<1x1x1x32xbf16>
    %145 = vector.shape_cast %144 : vector<1x1x1x32xbf16> to vector<1x32xbf16>
    %146 = vector.shape_cast %143 : vector<1x32xbf16> to vector<1x1x1x32xbf16>
    tpu.vector_store %arg23[%c1_147, %c2_148, %c3_149, %c0_150], %146 {strides = array<i32>} : memref<4x5x5x32xbf16, #tpu.memory_space<vmem>>, vector<1x1x1x32xbf16>,
    %147 = vector.extract_strided_slice %22 {offsets = [31, 0], sizes = [1, 32], strides = [1, 1]} : vector<64x32xbf16> to vector<1x32xbf16>
    %c0_151 = arith.constant 0 : index
    %c2_152 = arith.constant 2 : index
    %c4_153 = arith.constant 4 : index
    %c0_154 = arith.constant 0 : index
    %148 = vector.load %arg23[%c0_151, %c2_152, %c4_153, %c0_154] : memref<4x5x5x32xbf16, #tpu.memory_space<vmem>>, vector<1x1x1x32xbf16>
    %149 = vector.shape_cast %148 : vector<1x1x1x32xbf16> to vector<1x32xbf16>
    %150 = vector.shape_cast %147 : vector<1x32xbf16> to vector<1x1x1x32xbf16>
    tpu.vector_store %arg23[%c0_151, %c2_152, %c4_153, %c0_154], %150 {strides = array<i32>} : memref<4x5x5x32xbf16, #tpu.memory_space<vmem>>, vector<1x1x1x32xbf16>,
    %151 = vector.extract_strided_slice %22 {offsets = [32, 0], sizes = [1, 32], strides = [1, 1]} : vector<64x32xbf16> to vector<1x32xbf16>
    %c3_155 = arith.constant 3 : index
    %c2_156 = arith.constant 2 : index
    %c0_157 = arith.constant 0 : index
    %c0_158 = arith.constant 0 : index
    %152 = vector.load %arg23[%c3_155, %c2_156, %c0_157, %c0_158] : memref<4x5x5x32xbf16, #tpu.memory_space<vmem>>, vector<1x1x1x32xbf16>
    %153 = vector.shape_cast %152 : vector<1x1x1x32xbf16> to vector<1x32xbf16>
    %154 = vector.shape_cast %151 : vector<1x32xbf16> to vector<1x1x1x32xbf16>
    tpu.vector_store %arg23[%c3_155, %c2_156, %c0_157, %c0_158], %154 {strides = array<i32>} : memref<4x5x5x32xbf16, #tpu.memory_space<vmem>>, vector<1x1x1x32xbf16>,
    %155 = vector.extract_strided_slice %22 {offsets = [33, 0], sizes = [1, 32], strides = [1, 1]} : vector<64x32xbf16> to vector<1x32xbf16>
    %c2_159 = arith.constant 2 : index
    %c2_160 = arith.constant 2 : index
    %c1_161 = arith.constant 1 : index
    %c0_162 = arith.constant 0 : index
    %156 = vector.load %arg23[%c2_159, %c2_160, %c1_161, %c0_162] : memref<4x5x5x32xbf16, #tpu.memory_space<vmem>>, vector<1x1x1x32xbf16>
    %157 = vector.shape_cast %156 : vector<1x1x1x32xbf16> to vector<1x32xbf16>
    %158 = vector.shape_cast %155 : vector<1x32xbf16> to vector<1x1x1x32xbf16>
    tpu.vector_store %arg23[%c2_159, %c2_160, %c1_161, %c0_162], %158 {strides = array<i32>} : memref<4x5x5x32xbf16, #tpu.memory_space<vmem>>, vector<1x1x1x32xbf16>,
    %159 = vector.extract_strided_slice %22 {offsets = [34, 0], sizes = [1, 32], strides = [1, 1]} : vector<64x32xbf16> to vector<1x32xbf16>
    %c3_163 = arith.constant 3 : index
    %c2_164 = arith.constant 2 : index
    %c1_165 = arith.constant 1 : index
    %c0_166 = arith.constant 0 : index
    %160 = vector.load %arg23[%c3_163, %c2_164, %c1_165, %c0_166] : memref<4x5x5x32xbf16, #tpu.memory_space<vmem>>, vector<1x1x1x32xbf16>
    %161 = vector.shape_cast %160 : vector<1x1x1x32xbf16> to vector<1x32xbf16>
    %162 = vector.shape_cast %159 : vector<1x32xbf16> to vector<1x1x1x32xbf16>
    tpu.vector_store %arg23[%c3_163, %c2_164, %c1_165, %c0_166], %162 {strides = array<i32>} : memref<4x5x5x32xbf16, #tpu.memory_space<vmem>>, vector<1x1x1x32xbf16>,
    %163 = vector.extract_strided_slice %22 {offsets = [35, 0], sizes = [1, 32], strides = [1, 1]} : vector<64x32xbf16> to vector<1x32xbf16>
    %c2_167 = arith.constant 2 : index
    %c2_168 = arith.constant 2 : index
    %c2_169 = arith.constant 2 : index
    %c0_170 = arith.constant 0 : index
    %164 = vector.load %arg23[%c2_167, %c2_168, %c2_169, %c0_170] : memref<4x5x5x32xbf16, #tpu.memory_space<vmem>>, vector<1x1x1x32xbf16>
    %165 = vector.shape_cast %164 : vector<1x1x1x32xbf16> to vector<1x32xbf16>
    %166 = vector.shape_cast %163 : vector<1x32xbf16> to vector<1x1x1x32xbf16>
    tpu.vector_store %arg23[%c2_167, %c2_168, %c2_169, %c0_170], %166 {strides = array<i32>} : memref<4x5x5x32xbf16, #tpu.memory_space<vmem>>, vector<1x1x1x32xbf16>,
    %167 = vector.extract_strided_slice %22 {offsets = [36, 0], sizes = [1, 32], strides = [1, 1]} : vector<64x32xbf16> to vector<1x32xbf16>
    %c3_171 = arith.constant 3 : index
    %c2_172 = arith.constant 2 : index
    %c2_173 = arith.constant 2 : index
    %c0_174 = arith.constant 0 : index
    %168 = vector.load %arg23[%c3_171, %c2_172, %c2_173, %c0_174] : memref<4x5x5x32xbf16, #tpu.memory_space<vmem>>, vector<1x1x1x32xbf16>
    %169 = vector.shape_cast %168 : vector<1x1x1x32xbf16> to vector<1x32xbf16>
    %170 = vector.shape_cast %167 : vector<1x32xbf16> to vector<1x1x1x32xbf16>
    tpu.vector_store %arg23[%c3_171, %c2_172, %c2_173, %c0_174], %170 {strides = array<i32>} : memref<4x5x5x32xbf16, #tpu.memory_space<vmem>>, vector<1x1x1x32xbf16>,
    %171 = vector.extract_strided_slice %22 {offsets = [37, 0], sizes = [1, 32], strides = [1, 1]} : vector<64x32xbf16> to vector<1x32xbf16>
    %c2_175 = arith.constant 2 : index
    %c2_176 = arith.constant 2 : index
    %c3_177 = arith.constant 3 : index
    %c0_178 = arith.constant 0 : index
    %172 = vector.load %arg23[%c2_175, %c2_176, %c3_177, %c0_178] : memref<4x5x5x32xbf16, #tpu.memory_space<vmem>>, vector<1x1x1x32xbf16>
    %173 = vector.shape_cast %172 : vector<1x1x1x32xbf16> to vector<1x32xbf16>
    %174 = vector.shape_cast %171 : vector<1x32xbf16> to vector<1x1x1x32xbf16>
    tpu.vector_store %arg23[%c2_175, %c2_176, %c3_177, %c0_178], %174 {strides = array<i32>} : memref<4x5x5x32xbf16, #tpu.memory_space<vmem>>, vector<1x1x1x32xbf16>,
    %175 = vector.extract_strided_slice %22 {offsets = [38, 0], sizes = [1, 32], strides = [1, 1]} : vector<64x32xbf16> to vector<1x32xbf16>
    %c3_179 = arith.constant 3 : index
    %c2_180 = arith.constant 2 : index
    %c3_181 = arith.constant 3 : index
    %c0_182 = arith.constant 0 : index
    %176 = vector.load %arg23[%c3_179, %c2_180, %c3_181, %c0_182] : memref<4x5x5x32xbf16, #tpu.memory_space<vmem>>, vector<1x1x1x32xbf16>
    %177 = vector.shape_cast %176 : vector<1x1x1x32xbf16> to vector<1x32xbf16>
    %178 = vector.shape_cast %175 : vector<1x32xbf16> to vector<1x1x1x32xbf16>
    tpu.vector_store %arg23[%c3_179, %c2_180, %c3_181, %c0_182], %178 {strides = array<i32>} : memref<4x5x5x32xbf16, #tpu.memory_space<vmem>>, vector<1x1x1x32xbf16>,
    %179 = vector.extract_strided_slice %22 {offsets = [39, 0], sizes = [1, 32], strides = [1, 1]} : vector<64x32xbf16> to vector<1x32xbf16>
    %c2_183 = arith.constant 2 : index
    %c2_184 = arith.constant 2 : index
    %c4_185 = arith.constant 4 : index
    %c0_186 = arith.constant 0 : index
    %180 = vector.load %arg23[%c2_183, %c2_184, %c4_185, %c0_186] : memref<4x5x5x32xbf16, #tpu.memory_space<vmem>>, vector<1x1x1x32xbf16>
    %181 = vector.shape_cast %180 : vector<1x1x1x32xbf16> to vector<1x32xbf16>
    %182 = vector.shape_cast %179 : vector<1x32xbf16> to vector<1x1x1x32xbf16>
    tpu.vector_store %arg23[%c2_183, %c2_184, %c4_185, %c0_186], %182 {strides = array<i32>} : memref<4x5x5x32xbf16, #tpu.memory_space<vmem>>, vector<1x1x1x32xbf16>,
    %183 = vector.extract_strided_slice %22 {offsets = [40, 0], sizes = [1, 32], strides = [1, 1]} : vector<64x32xbf16> to vector<1x32xbf16>
    %c1_187 = arith.constant 1 : index
    %c3_188 = arith.constant 3 : index
    %c0_189 = arith.constant 0 : index
    %c0_190 = arith.constant 0 : index
    %184 = vector.load %arg23[%c1_187, %c3_188, %c0_189, %c0_190] : memref<4x5x5x32xbf16, #tpu.memory_space<vmem>>, vector<1x1x1x32xbf16>
    %185 = vector.shape_cast %184 : vector<1x1x1x32xbf16> to vector<1x32xbf16>
    %186 = vector.shape_cast %183 : vector<1x32xbf16> to vector<1x1x1x32xbf16>
    tpu.vector_store %arg23[%c1_187, %c3_188, %c0_189, %c0_190], %186 {strides = array<i32>} : memref<4x5x5x32xbf16, #tpu.memory_space<vmem>>, vector<1x1x1x32xbf16>,
    %187 = vector.extract_strided_slice %22 {offsets = [41, 0], sizes = [1, 32], strides = [1, 1]} : vector<64x32xbf16> to vector<1x32xbf16>
    %c0_191 = arith.constant 0 : index
    %c3_192 = arith.constant 3 : index
    %c1_193 = arith.constant 1 : index
    %c0_194 = arith.constant 0 : index
    %188 = vector.load %arg23[%c0_191, %c3_192, %c1_193, %c0_194] : memref<4x5x5x32xbf16, #tpu.memory_space<vmem>>, vector<1x1x1x32xbf16>
    %189 = vector.shape_cast %188 : vector<1x1x1x32xbf16> to vector<1x32xbf16>
    %190 = vector.shape_cast %187 : vector<1x32xbf16> to vector<1x1x1x32xbf16>
    tpu.vector_store %arg23[%c0_191, %c3_192, %c1_193, %c0_194], %190 {strides = array<i32>} : memref<4x5x5x32xbf16, #tpu.memory_space<vmem>>, vector<1x1x1x32xbf16>,
    %191 = vector.extract_strided_slice %22 {offsets = [42, 0], sizes = [1, 32], strides = [1, 1]} : vector<64x32xbf16> to vector<1x32xbf16>
    %c1_195 = arith.constant 1 : index
    %c3_196 = arith.constant 3 : index
    %c1_197 = arith.constant 1 : index
    %c0_198 = arith.constant 0 : index
    %192 = vector.load %arg23[%c1_195, %c3_196, %c1_197, %c0_198] : memref<4x5x5x32xbf16, #tpu.memory_space<vmem>>, vector<1x1x1x32xbf16>
    %193 = vector.shape_cast %192 : vector<1x1x1x32xbf16> to vector<1x32xbf16>
    %194 = vector.shape_cast %191 : vector<1x32xbf16> to vector<1x1x1x32xbf16>
    tpu.vector_store %arg23[%c1_195, %c3_196, %c1_197, %c0_198], %194 {strides = array<i32>} : memref<4x5x5x32xbf16, #tpu.memory_space<vmem>>, vector<1x1x1x32xbf16>,
    %195 = vector.extract_strided_slice %22 {offsets = [43, 0], sizes = [1, 32], strides = [1, 1]} : vector<64x32xbf16> to vector<1x32xbf16>
    %c0_199 = arith.constant 0 : index
    %c3_200 = arith.constant 3 : index
    %c2_201 = arith.constant 2 : index
    %c0_202 = arith.constant 0 : index
    %196 = vector.load %arg23[%c0_199, %c3_200, %c2_201, %c0_202] : memref<4x5x5x32xbf16, #tpu.memory_space<vmem>>, vector<1x1x1x32xbf16>
    %197 = vector.shape_cast %196 : vector<1x1x1x32xbf16> to vector<1x32xbf16>
    %198 = vector.shape_cast %195 : vector<1x32xbf16> to vector<1x1x1x32xbf16>
    tpu.vector_store %arg23[%c0_199, %c3_200, %c2_201, %c0_202], %198 {strides = array<i32>} : memref<4x5x5x32xbf16, #tpu.memory_space<vmem>>, vector<1x1x1x32xbf16>,
    %199 = vector.extract_strided_slice %22 {offsets = [44, 0], sizes = [1, 32], strides = [1, 1]} : vector<64x32xbf16> to vector<1x32xbf16>
    %c1_203 = arith.constant 1 : index
    %c3_204 = arith.constant 3 : index
    %c2_205 = arith.constant 2 : index
    %c0_206 = arith.constant 0 : index
    %200 = vector.load %arg23[%c1_203, %c3_204, %c2_205, %c0_206] : memref<4x5x5x32xbf16, #tpu.memory_space<vmem>>, vector<1x1x1x32xbf16>
    %201 = vector.shape_cast %200 : vector<1x1x1x32xbf16> to vector<1x32xbf16>
    %202 = vector.shape_cast %199 : vector<1x32xbf16> to vector<1x1x1x32xbf16>
    tpu.vector_store %arg23[%c1_203, %c3_204, %c2_205, %c0_206], %202 {strides = array<i32>} : memref<4x5x5x32xbf16, #tpu.memory_space<vmem>>, vector<1x1x1x32xbf16>,
    %203 = vector.extract_strided_slice %22 {offsets = [45, 0], sizes = [1, 32], strides = [1, 1]} : vector<64x32xbf16> to vector<1x32xbf16>
    %c0_207 = arith.constant 0 : index
    %c3_208 = arith.constant 3 : index
    %c3_209 = arith.constant 3 : index
    %c0_210 = arith.constant 0 : index
    %204 = vector.load %arg23[%c0_207, %c3_208, %c3_209, %c0_210] : memref<4x5x5x32xbf16, #tpu.memory_space<vmem>>, vector<1x1x1x32xbf16>
    %205 = vector.shape_cast %204 : vector<1x1x1x32xbf16> to vector<1x32xbf16>
    %206 = vector.shape_cast %203 : vector<1x32xbf16> to vector<1x1x1x32xbf16>
    tpu.vector_store %arg23[%c0_207, %c3_208, %c3_209, %c0_210], %206 {strides = array<i32>} : memref<4x5x5x32xbf16, #tpu.memory_space<vmem>>, vector<1x1x1x32xbf16>,
    %207 = vector.extract_strided_slice %22 {offsets = [46, 0], sizes = [1, 32], strides = [1, 1]} : vector<64x32xbf16> to vector<1x32xbf16>
    %c1_211 = arith.constant 1 : index
    %c3_212 = arith.constant 3 : index
    %c3_213 = arith.constant 3 : index
    %c0_214 = arith.constant 0 : index
    %208 = vector.load %arg23[%c1_211, %c3_212, %c3_213, %c0_214] : memref<4x5x5x32xbf16, #tpu.memory_space<vmem>>, vector<1x1x1x32xbf16>
    %209 = vector.shape_cast %208 : vector<1x1x1x32xbf16> to vector<1x32xbf16>
    %210 = vector.shape_cast %207 : vector<1x32xbf16> to vector<1x1x1x32xbf16>
    tpu.vector_store %arg23[%c1_211, %c3_212, %c3_213, %c0_214], %210 {strides = array<i32>} : memref<4x5x5x32xbf16, #tpu.memory_space<vmem>>, vector<1x1x1x32xbf16>,
    %211 = vector.extract_strided_slice %22 {offsets = [47, 0], sizes = [1, 32], strides = [1, 1]} : vector<64x32xbf16> to vector<1x32xbf16>
    %c0_215 = arith.constant 0 : index
    %c3_216 = arith.constant 3 : index
    %c4_217 = arith.constant 4 : index
    %c0_218 = arith.constant 0 : index
    %212 = vector.load %arg23[%c0_215, %c3_216, %c4_217, %c0_218] : memref<4x5x5x32xbf16, #tpu.memory_space<vmem>>, vector<1x1x1x32xbf16>
    %213 = vector.shape_cast %212 : vector<1x1x1x32xbf16> to vector<1x32xbf16>
    %214 = vector.shape_cast %211 : vector<1x32xbf16> to vector<1x1x1x32xbf16>
    tpu.vector_store %arg23[%c0_215, %c3_216, %c4_217, %c0_218], %214 {strides = array<i32>} : memref<4x5x5x32xbf16, #tpu.memory_space<vmem>>, vector<1x1x1x32xbf16>,
    %215 = vector.extract_strided_slice %22 {offsets = [48, 0], sizes = [1, 32], strides = [1, 1]} : vector<64x32xbf16> to vector<1x32xbf16>
    %c3_219 = arith.constant 3 : index
    %c3_220 = arith.constant 3 : index
    %c0_221 = arith.constant 0 : index
    %c0_222 = arith.constant 0 : index
    %216 = vector.load %arg23[%c3_219, %c3_220, %c0_221, %c0_222] : memref<4x5x5x32xbf16, #tpu.memory_space<vmem>>, vector<1x1x1x32xbf16>
    %217 = vector.shape_cast %216 : vector<1x1x1x32xbf16> to vector<1x32xbf16>
    %218 = vector.shape_cast %215 : vector<1x32xbf16> to vector<1x1x1x32xbf16>
    tpu.vector_store %arg23[%c3_219, %c3_220, %c0_221, %c0_222], %218 {strides = array<i32>} : memref<4x5x5x32xbf16, #tpu.memory_space<vmem>>, vector<1x1x1x32xbf16>,
    %219 = vector.extract_strided_slice %22 {offsets = [49, 0], sizes = [1, 32], strides = [1, 1]} : vector<64x32xbf16> to vector<1x32xbf16>
    %c2_223 = arith.constant 2 : index
    %c3_224 = arith.constant 3 : index
    %c1_225 = arith.constant 1 : index
    %c0_226 = arith.constant 0 : index
    %220 = vector.load %arg23[%c2_223, %c3_224, %c1_225, %c0_226] : memref<4x5x5x32xbf16, #tpu.memory_space<vmem>>, vector<1x1x1x32xbf16>
    %221 = vector.shape_cast %220 : vector<1x1x1x32xbf16> to vector<1x32xbf16>
    %222 = vector.shape_cast %219 : vector<1x32xbf16> to vector<1x1x1x32xbf16>
    tpu.vector_store %arg23[%c2_223, %c3_224, %c1_225, %c0_226], %222 {strides = array<i32>} : memref<4x5x5x32xbf16, #tpu.memory_space<vmem>>, vector<1x1x1x32xbf16>,
    %223 = vector.extract_strided_slice %22 {offsets = [50, 0], sizes = [1, 32], strides = [1, 1]} : vector<64x32xbf16> to vector<1x32xbf16>
    %c3_227 = arith.constant 3 : index
    %c3_228 = arith.constant 3 : index
    %c1_229 = arith.constant 1 : index
    %c0_230 = arith.constant 0 : index
    %224 = vector.load %arg23[%c3_227, %c3_228, %c1_229, %c0_230] : memref<4x5x5x32xbf16, #tpu.memory_space<vmem>>, vector<1x1x1x32xbf16>
    %225 = vector.shape_cast %224 : vector<1x1x1x32xbf16> to vector<1x32xbf16>
    %226 = vector.shape_cast %223 : vector<1x32xbf16> to vector<1x1x1x32xbf16>
    tpu.vector_store %arg23[%c3_227, %c3_228, %c1_229, %c0_230], %226 {strides = array<i32>} : memref<4x5x5x32xbf16, #tpu.memory_space<vmem>>, vector<1x1x1x32xbf16>,
    %227 = vector.extract_strided_slice %22 {offsets = [51, 0], sizes = [1, 32], strides = [1, 1]} : vector<64x32xbf16> to vector<1x32xbf16>
    %c2_231 = arith.constant 2 : index
    %c3_232 = arith.constant 3 : index
    %c2_233 = arith.constant 2 : index
    %c0_234 = arith.constant 0 : index
    %228 = vector.load %arg23[%c2_231, %c3_232, %c2_233, %c0_234] : memref<4x5x5x32xbf16, #tpu.memory_space<vmem>>, vector<1x1x1x32xbf16>
    %229 = vector.shape_cast %228 : vector<1x1x1x32xbf16> to vector<1x32xbf16>
    %230 = vector.shape_cast %227 : vector<1x32xbf16> to vector<1x1x1x32xbf16>
    tpu.vector_store %arg23[%c2_231, %c3_232, %c2_233, %c0_234], %230 {strides = array<i32>} : memref<4x5x5x32xbf16, #tpu.memory_space<vmem>>, vector<1x1x1x32xbf16>,
    %231 = vector.extract_strided_slice %22 {offsets = [52, 0], sizes = [1, 32], strides = [1, 1]} : vector<64x32xbf16> to vector<1x32xbf16>
    %c3_235 = arith.constant 3 : index
    %c3_236 = arith.constant 3 : index
    %c2_237 = arith.constant 2 : index
    %c0_238 = arith.constant 0 : index
    %232 = vector.load %arg23[%c3_235, %c3_236, %c2_237, %c0_238] : memref<4x5x5x32xbf16, #tpu.memory_space<vmem>>, vector<1x1x1x32xbf16>
    %233 = vector.shape_cast %232 : vector<1x1x1x32xbf16> to vector<1x32xbf16>
    %234 = vector.shape_cast %231 : vector<1x32xbf16> to vector<1x1x1x32xbf16>
    tpu.vector_store %arg23[%c3_235, %c3_236, %c2_237, %c0_238], %234 {strides = array<i32>} : memref<4x5x5x32xbf16, #tpu.memory_space<vmem>>, vector<1x1x1x32xbf16>,
    %235 = vector.extract_strided_slice %22 {offsets = [53, 0], sizes = [1, 32], strides = [1, 1]} : vector<64x32xbf16> to vector<1x32xbf16>
    %c2_239 = arith.constant 2 : index
    %c3_240 = arith.constant 3 : index
    %c3_241 = arith.constant 3 : index
    %c0_242 = arith.constant 0 : index
    %236 = vector.load %arg23[%c2_239, %c3_240, %c3_241, %c0_242] : memref<4x5x5x32xbf16, #tpu.memory_space<vmem>>, vector<1x1x1x32xbf16>
    %237 = vector.shape_cast %236 : vector<1x1x1x32xbf16> to vector<1x32xbf16>
    %238 = vector.shape_cast %235 : vector<1x32xbf16> to vector<1x1x1x32xbf16>
    tpu.vector_store %arg23[%c2_239, %c3_240, %c3_241, %c0_242], %238 {strides = array<i32>} : memref<4x5x5x32xbf16, #tpu.memory_space<vmem>>, vector<1x1x1x32xbf16>,
    %239 = vector.extract_strided_slice %22 {offsets = [54, 0], sizes = [1, 32], strides = [1, 1]} : vector<64x32xbf16> to vector<1x32xbf16>
    %c3_243 = arith.constant 3 : index
    %c3_244 = arith.constant 3 : index
    %c3_245 = arith.constant 3 : index
    %c0_246 = arith.constant 0 : index
    %240 = vector.load %arg23[%c3_243, %c3_244, %c3_245, %c0_246] : memref<4x5x5x32xbf16, #tpu.memory_space<vmem>>, vector<1x1x1x32xbf16>
    %241 = vector.shape_cast %240 : vector<1x1x1x32xbf16> to vector<1x32xbf16>
    %242 = vector.shape_cast %239 : vector<1x32xbf16> to vector<1x1x1x32xbf16>
    tpu.vector_store %arg23[%c3_243, %c3_244, %c3_245, %c0_246], %242 {strides = array<i32>} : memref<4x5x5x32xbf16, #tpu.memory_space<vmem>>, vector<1x1x1x32xbf16>,
    %243 = vector.extract_strided_slice %22 {offsets = [55, 0], sizes = [1, 32], strides = [1, 1]} : vector<64x32xbf16> to vector<1x32xbf16>
    %c2_247 = arith.constant 2 : index
    %c3_248 = arith.constant 3 : index
    %c4_249 = arith.constant 4 : index
    %c0_250 = arith.constant 0 : index
    %244 = vector.load %arg23[%c2_247, %c3_248, %c4_249, %c0_250] : memref<4x5x5x32xbf16, #tpu.memory_space<vmem>>, vector<1x1x1x32xbf16>
    %245 = vector.shape_cast %244 : vector<1x1x1x32xbf16> to vector<1x32xbf16>
    %246 = vector.shape_cast %243 : vector<1x32xbf16> to vector<1x1x1x32xbf16>
    tpu.vector_store %arg23[%c2_247, %c3_248, %c4_249, %c0_250], %246 {strides = array<i32>} : memref<4x5x5x32xbf16, #tpu.memory_space<vmem>>, vector<1x1x1x32xbf16>,
    %247 = vector.extract_strided_slice %22 {offsets = [56, 0], sizes = [1, 32], strides = [1, 1]} : vector<64x32xbf16> to vector<1x32xbf16>
    %c1_251 = arith.constant 1 : index
    %c4_252 = arith.constant 4 : index
    %c0_253 = arith.constant 0 : index
    %c0_254 = arith.constant 0 : index
    %248 = vector.load %arg23[%c1_251, %c4_252, %c0_253, %c0_254] : memref<4x5x5x32xbf16, #tpu.memory_space<vmem>>, vector<1x1x1x32xbf16>
    %249 = vector.shape_cast %248 : vector<1x1x1x32xbf16> to vector<1x32xbf16>
    %250 = vector.shape_cast %247 : vector<1x32xbf16> to vector<1x1x1x32xbf16>
    tpu.vector_store %arg23[%c1_251, %c4_252, %c0_253, %c0_254], %250 {strides = array<i32>} : memref<4x5x5x32xbf16, #tpu.memory_space<vmem>>, vector<1x1x1x32xbf16>,
    %251 = vector.extract_strided_slice %22 {offsets = [57, 0], sizes = [1, 32], strides = [1, 1]} : vector<64x32xbf16> to vector<1x32xbf16>
    %c0_255 = arith.constant 0 : index
    %c4_256 = arith.constant 4 : index
    %c1_257 = arith.constant 1 : index
    %c0_258 = arith.constant 0 : index
    %252 = vector.load %arg23[%c0_255, %c4_256, %c1_257, %c0_258] : memref<4x5x5x32xbf16, #tpu.memory_space<vmem>>, vector<1x1x1x32xbf16>
    %253 = vector.shape_cast %252 : vector<1x1x1x32xbf16> to vector<1x32xbf16>
    %254 = vector.shape_cast %251 : vector<1x32xbf16> to vector<1x1x1x32xbf16>
    tpu.vector_store %arg23[%c0_255, %c4_256, %c1_257, %c0_258], %254 {strides = array<i32>} : memref<4x5x5x32xbf16, #tpu.memory_space<vmem>>, vector<1x1x1x32xbf16>,
    %255 = vector.extract_strided_slice %22 {offsets = [58, 0], sizes = [1, 32], strides = [1, 1]} : vector<64x32xbf16> to vector<1x32xbf16>
    %c1_259 = arith.constant 1 : index
    %c4_260 = arith.constant 4 : index
    %c1_261 = arith.constant 1 : index
    %c0_262 = arith.constant 0 : index
    %256 = vector.load %arg23[%c1_259, %c4_260, %c1_261, %c0_262] : memref<4x5x5x32xbf16, #tpu.memory_space<vmem>>, vector<1x1x1x32xbf16>
    %257 = vector.shape_cast %256 : vector<1x1x1x32xbf16> to vector<1x32xbf16>
    %258 = vector.shape_cast %255 : vector<1x32xbf16> to vector<1x1x1x32xbf16>
    tpu.vector_store %arg23[%c1_259, %c4_260, %c1_261, %c0_262], %258 {strides = array<i32>} : memref<4x5x5x32xbf16, #tpu.memory_space<vmem>>, vector<1x1x1x32xbf16>,
    %259 = vector.extract_strided_slice %22 {offsets = [59, 0], sizes = [1, 32], strides = [1, 1]} : vector<64x32xbf16> to vector<1x32xbf16>
    %c0_263 = arith.constant 0 : index
    %c4_264 = arith.constant 4 : index
    %c2_265 = arith.constant 2 : index
    %c0_266 = arith.constant 0 : index
    %260 = vector.load %arg23[%c0_263, %c4_264, %c2_265, %c0_266] : memref<4x5x5x32xbf16, #tpu.memory_space<vmem>>, vector<1x1x1x32xbf16>
    %261 = vector.shape_cast %260 : vector<1x1x1x32xbf16> to vector<1x32xbf16>
    %262 = vector.shape_cast %259 : vector<1x32xbf16> to vector<1x1x1x32xbf16>
    tpu.vector_store %arg23[%c0_263, %c4_264, %c2_265, %c0_266], %262 {strides = array<i32>} : memref<4x5x5x32xbf16, #tpu.memory_space<vmem>>, vector<1x1x1x32xbf16>,
    %263 = vector.extract_strided_slice %22 {offsets = [60, 0], sizes = [1, 32], strides = [1, 1]} : vector<64x32xbf16> to vector<1x32xbf16>
    %c1_267 = arith.constant 1 : index
    %c4_268 = arith.constant 4 : index
    %c2_269 = arith.constant 2 : index
    %c0_270 = arith.constant 0 : index
    %264 = vector.load %arg23[%c1_267, %c4_268, %c2_269, %c0_270] : memref<4x5x5x32xbf16, #tpu.memory_space<vmem>>, vector<1x1x1x32xbf16>
    %265 = vector.shape_cast %264 : vector<1x1x1x32xbf16> to vector<1x32xbf16>
    %266 = vector.shape_cast %263 : vector<1x32xbf16> to vector<1x1x1x32xbf16>
    tpu.vector_store %arg23[%c1_267, %c4_268, %c2_269, %c0_270], %266 {strides = array<i32>} : memref<4x5x5x32xbf16, #tpu.memory_space<vmem>>, vector<1x1x1x32xbf16>,
    %267 = vector.extract_strided_slice %22 {offsets = [61, 0], sizes = [1, 32], strides = [1, 1]} : vector<64x32xbf16> to vector<1x32xbf16>
    %c0_271 = arith.constant 0 : index
    %c4_272 = arith.constant 4 : index
    %c3_273 = arith.constant 3 : index
    %c0_274 = arith.constant 0 : index
    %268 = vector.load %arg23[%c0_271, %c4_272, %c3_273, %c0_274] : memref<4x5x5x32xbf16, #tpu.memory_space<vmem>>, vector<1x1x1x32xbf16>
    %269 = vector.shape_cast %268 : vector<1x1x1x32xbf16> to vector<1x32xbf16>
    %270 = vector.shape_cast %267 : vector<1x32xbf16> to vector<1x1x1x32xbf16>
    tpu.vector_store %arg23[%c0_271, %c4_272, %c3_273, %c0_274], %270 {strides = array<i32>} : memref<4x5x5x32xbf16, #tpu.memory_space<vmem>>, vector<1x1x1x32xbf16>,
    %271 = vector.extract_strided_slice %22 {offsets = [62, 0], sizes = [1, 32], strides = [1, 1]} : vector<64x32xbf16> to vector<1x32xbf16>
    %c1_275 = arith.constant 1 : index
    %c4_276 = arith.constant 4 : index
    %c3_277 = arith.constant 3 : index
    %c0_278 = arith.constant 0 : index
    %272 = vector.load %arg23[%c1_275, %c4_276, %c3_277, %c0_278] : memref<4x5x5x32xbf16, #tpu.memory_space<vmem>>, vector<1x1x1x32xbf16>
    %273 = vector.shape_cast %272 : vector<1x1x1x32xbf16> to vector<1x32xbf16>
    %274 = vector.shape_cast %271 : vector<1x32xbf16> to vector<1x1x1x32xbf16>
    tpu.vector_store %arg23[%c1_275, %c4_276, %c3_277, %c0_278], %274 {strides = array<i32>} : memref<4x5x5x32xbf16, #tpu.memory_space<vmem>>, vector<1x1x1x32xbf16>,
    %275 = vector.extract_strided_slice %22 {offsets = [63, 0], sizes = [1, 32], strides = [1, 1]} : vector<64x32xbf16> to vector<1x32xbf16>
    %c0_279 = arith.constant 0 : index
    %c4_280 = arith.constant 4 : index
    %c4_281 = arith.constant 4 : index
    %c0_282 = arith.constant 0 : index
    %276 = vector.load %arg23[%c0_279, %c4_280, %c4_281, %c0_282] : memref<4x5x5x32xbf16, #tpu.memory_space<vmem>>, vector<1x1x1x32xbf16>
    %277 = vector.shape_cast %276 : vector<1x1x1x32xbf16> to vector<1x32xbf16>
    %278 = vector.shape_cast %275 : vector<1x32xbf16> to vector<1x1x1x32xbf16>
    tpu.vector_store %arg23[%c0_279, %c4_280, %c4_281, %c0_282], %278 {strides = array<i32>} : memref<4x5x5x32xbf16, #tpu.memory_space<vmem>>, vector<1x1x1x32xbf16>,
    %c0_283 = arith.constant 0 : index
    %c0_284 = arith.constant 0 : index
    %c0_285 = arith.constant 0 : index
    %c0_286 = arith.constant 0 : index
    %279 = vector.load %arg23[%c0_283, %c0_284, %c0_285, %c0_286] : memref<4x5x5x32xbf16, #tpu.memory_space<vmem>>, vector<1x1x4x32xbf16>
    %280 = vector.shape_cast %279 : vector<1x1x4x32xbf16> to vector<4x32xbf16>
    %c1_287 = arith.constant 1 : index
    %c0_288 = arith.constant 0 : index
    %c0_289 = arith.constant 0 : index
    %c0_290 = arith.constant 0 : index
    %281 = vector.load %arg23[%c1_287, %c0_288, %c0_289, %c0_290] : memref<4x5x5x32xbf16, #tpu.memory_space<vmem>>, vector<1x1x4x32xbf16>
    %282 = vector.shape_cast %281 : vector<1x1x4x32xbf16> to vector<4x32xbf16>
    %c0_291 = arith.constant 0 : index
    %c0_292 = arith.constant 0 : index
    %c1_293 = arith.constant 1 : index
    %c0_294 = arith.constant 0 : index
    %283 = vector.load %arg23[%c0_291, %c0_292, %c1_293, %c0_294] : memref<4x5x5x32xbf16, #tpu.memory_space<vmem>>, vector<1x1x4x32xbf16>
    %284 = vector.shape_cast %283 : vector<1x1x4x32xbf16> to vector<4x32xbf16>
    %c2_295 = arith.constant 2 : index
    %c0_296 = arith.constant 0 : index
    %c0_297 = arith.constant 0 : index
    %c0_298 = arith.constant 0 : index
    %285 = vector.load %arg23[%c2_295, %c0_296, %c0_297, %c0_298] : memref<4x5x5x32xbf16, #tpu.memory_space<vmem>>, vector<1x1x4x32xbf16>
    %286 = vector.shape_cast %285 : vector<1x1x4x32xbf16> to vector<4x32xbf16>
    %c3_299 = arith.constant 3 : index
    %c0_300 = arith.constant 0 : index
    %c0_301 = arith.constant 0 : index
    %c0_302 = arith.constant 0 : index
    %287 = vector.load %arg23[%c3_299, %c0_300, %c0_301, %c0_302] : memref<4x5x5x32xbf16, #tpu.memory_space<vmem>>, vector<1x1x4x32xbf16>
    %288 = vector.shape_cast %287 : vector<1x1x4x32xbf16> to vector<4x32xbf16>
    %c2_303 = arith.constant 2 : index
    %c0_304 = arith.constant 0 : index
    %c1_305 = arith.constant 1 : index
    %c0_306 = arith.constant 0 : index
    %289 = vector.load %arg23[%c2_303, %c0_304, %c1_305, %c0_306] : memref<4x5x5x32xbf16, #tpu.memory_space<vmem>>, vector<1x1x4x32xbf16>
    %290 = vector.shape_cast %289 : vector<1x1x4x32xbf16> to vector<4x32xbf16>
    %c0_307 = arith.constant 0 : index
    %c1_308 = arith.constant 1 : index
    %c0_309 = arith.constant 0 : index
    %c0_310 = arith.constant 0 : index
    %291 = vector.load %arg23[%c0_307, %c1_308, %c0_309, %c0_310] : memref<4x5x5x32xbf16, #tpu.memory_space<vmem>>, vector<1x1x4x32xbf16>
    %292 = vector.shape_cast %291 : vector<1x1x4x32xbf16> to vector<4x32xbf16>
    %c1_311 = arith.constant 1 : index
    %c1_312 = arith.constant 1 : index
    %c0_313 = arith.constant 0 : index
    %c0_314 = arith.constant 0 : index
    %293 = vector.load %arg23[%c1_311, %c1_312, %c0_313, %c0_314] : memref<4x5x5x32xbf16, #tpu.memory_space<vmem>>, vector<1x1x4x32xbf16>
    %294 = vector.shape_cast %293 : vector<1x1x4x32xbf16> to vector<4x32xbf16>
    %c0_315 = arith.constant 0 : index
    %c1_316 = arith.constant 1 : index
    %c1_317 = arith.constant 1 : index
    %c0_318 = arith.constant 0 : index
    %295 = vector.load %arg23[%c0_315, %c1_316, %c1_317, %c0_318] : memref<4x5x5x32xbf16, #tpu.memory_space<vmem>>, vector<1x1x4x32xbf16>
    %296 = vector.shape_cast %295 : vector<1x1x4x32xbf16> to vector<4x32xbf16>
    %297 = tpu.concatenate %280, %282, %284, %286, %288, %290, %292, %294, %296 in 1 : vector<4x32xbf16>, vector<4x32xbf16>, vector<4x32xbf16>, vector<4x32xbf16>, vector<4x32xbf16>, vector<4x32xbf16>, vector<4x32xbf16>, vector<4x32xbf16>, vector<4x32xbf16> -> vector<4x288xbf16>
    %c0_319 = arith.constant 0 : index
    %c1_320 = arith.constant 1 : index
    %c0_321 = arith.constant 0 : index
    %c0_322 = arith.constant 0 : index
    %298 = vector.load %arg23[%c0_319, %c1_320, %c0_321, %c0_322] : memref<4x5x5x32xbf16, #tpu.memory_space<vmem>>, vector<1x1x4x32xbf16>
    %299 = vector.shape_cast %298 : vector<1x1x4x32xbf16> to vector<4x32xbf16>
    %c1_323 = arith.constant 1 : index
    %c1_324 = arith.constant 1 : index
    %c0_325 = arith.constant 0 : index
    %c0_326 = arith.constant 0 : index
    %300 = vector.load %arg23[%c1_323, %c1_324, %c0_325, %c0_326] : memref<4x5x5x32xbf16, #tpu.memory_space<vmem>>, vector<1x1x4x32xbf16>
    %301 = vector.shape_cast %300 : vector<1x1x4x32xbf16> to vector<4x32xbf16>
    %c0_327 = arith.constant 0 : index
    %c1_328 = arith.constant 1 : index
    %c1_329 = arith.constant 1 : index
    %c0_330 = arith.constant 0 : index
    %302 = vector.load %arg23[%c0_327, %c1_328, %c1_329, %c0_330] : memref<4x5x5x32xbf16, #tpu.memory_space<vmem>>, vector<1x1x4x32xbf16>
    %303 = vector.shape_cast %302 : vector<1x1x4x32xbf16> to vector<4x32xbf16>
    %c2_331 = arith.constant 2 : index
    %c1_332 = arith.constant 1 : index
    %c0_333 = arith.constant 0 : index
    %c0_334 = arith.constant 0 : index
    %304 = vector.load %arg23[%c2_331, %c1_332, %c0_333, %c0_334] : memref<4x5x5x32xbf16, #tpu.memory_space<vmem>>, vector<1x1x4x32xbf16>
    %305 = vector.shape_cast %304 : vector<1x1x4x32xbf16> to vector<4x32xbf16>
    %c3_335 = arith.constant 3 : index
    %c1_336 = arith.constant 1 : index
    %c0_337 = arith.constant 0 : index
    %c0_338 = arith.constant 0 : index
    %306 = vector.load %arg23[%c3_335, %c1_336, %c0_337, %c0_338] : memref<4x5x5x32xbf16, #tpu.memory_space<vmem>>, vector<1x1x4x32xbf16>
    %307 = vector.shape_cast %306 : vector<1x1x4x32xbf16> to vector<4x32xbf16>
    %c2_339 = arith.constant 2 : index
    %c1_340 = arith.constant 1 : index
    %c1_341 = arith.constant 1 : index
    %c0_342 = arith.constant 0 : index
    %308 = vector.load %arg23[%c2_339, %c1_340, %c1_341, %c0_342] : memref<4x5x5x32xbf16, #tpu.memory_space<vmem>>, vector<1x1x4x32xbf16>
    %309 = vector.shape_cast %308 : vector<1x1x4x32xbf16> to vector<4x32xbf16>
    %c0_343 = arith.constant 0 : index
    %c2_344 = arith.constant 2 : index
    %c0_345 = arith.constant 0 : index
    %c0_346 = arith.constant 0 : index
    %310 = vector.load %arg23[%c0_343, %c2_344, %c0_345, %c0_346] : memref<4x5x5x32xbf16, #tpu.memory_space<vmem>>, vector<1x1x4x32xbf16>
    %311 = vector.shape_cast %310 : vector<1x1x4x32xbf16> to vector<4x32xbf16>
    %c1_347 = arith.constant 1 : index
    %c2_348 = arith.constant 2 : index
    %c0_349 = arith.constant 0 : index
    %c0_350 = arith.constant 0 : index
    %312 = vector.load %arg23[%c1_347, %c2_348, %c0_349, %c0_350] : memref<4x5x5x32xbf16, #tpu.memory_space<vmem>>, vector<1x1x4x32xbf16>
    %313 = vector.shape_cast %312 : vector<1x1x4x32xbf16> to vector<4x32xbf16>
    %c0_351 = arith.constant 0 : index
    %c2_352 = arith.constant 2 : index
    %c1_353 = arith.constant 1 : index
    %c0_354 = arith.constant 0 : index
    %314 = vector.load %arg23[%c0_351, %c2_352, %c1_353, %c0_354] : memref<4x5x5x32xbf16, #tpu.memory_space<vmem>>, vector<1x1x4x32xbf16>
    %315 = vector.shape_cast %314 : vector<1x1x4x32xbf16> to vector<4x32xbf16>
    %316 = tpu.concatenate %299, %301, %303, %305, %307, %309, %311, %313, %315 in 1 : vector<4x32xbf16>, vector<4x32xbf16>, vector<4x32xbf16>, vector<4x32xbf16>, vector<4x32xbf16>, vector<4x32xbf16>, vector<4x32xbf16>, vector<4x32xbf16>, vector<4x32xbf16> -> vector<4x288xbf16>
    %c0_355 = arith.constant 0 : index
    %c2_356 = arith.constant 2 : index
    %c0_357 = arith.constant 0 : index
    %c0_358 = arith.constant 0 : index
    %317 = vector.load %arg23[%c0_355, %c2_356, %c0_357, %c0_358] : memref<4x5x5x32xbf16, #tpu.memory_space<vmem>>, vector<1x1x4x32xbf16>
    %318 = vector.shape_cast %317 : vector<1x1x4x32xbf16> to vector<4x32xbf16>
    %c1_359 = arith.constant 1 : index
    %c2_360 = arith.constant 2 : index
    %c0_361 = arith.constant 0 : index
    %c0_362 = arith.constant 0 : index
    %319 = vector.load %arg23[%c1_359, %c2_360, %c0_361, %c0_362] : memref<4x5x5x32xbf16, #tpu.memory_space<vmem>>, vector<1x1x4x32xbf16>
    %320 = vector.shape_cast %319 : vector<1x1x4x32xbf16> to vector<4x32xbf16>
    %c0_363 = arith.constant 0 : index
    %c2_364 = arith.constant 2 : index
    %c1_365 = arith.constant 1 : index
    %c0_366 = arith.constant 0 : index
    %321 = vector.load %arg23[%c0_363, %c2_364, %c1_365, %c0_366] : memref<4x5x5x32xbf16, #tpu.memory_space<vmem>>, vector<1x1x4x32xbf16>
    %322 = vector.shape_cast %321 : vector<1x1x4x32xbf16> to vector<4x32xbf16>
    %c2_367 = arith.constant 2 : index
    %c2_368 = arith.constant 2 : index
    %c0_369 = arith.constant 0 : index
    %c0_370 = arith.constant 0 : index
    %323 = vector.load %arg23[%c2_367, %c2_368, %c0_369, %c0_370] : memref<4x5x5x32xbf16, #tpu.memory_space<vmem>>, vector<1x1x4x32xbf16>
    %324 = vector.shape_cast %323 : vector<1x1x4x32xbf16> to vector<4x32xbf16>
    %c3_371 = arith.constant 3 : index
    %c2_372 = arith.constant 2 : index
    %c0_373 = arith.constant 0 : index
    %c0_374 = arith.constant 0 : index
    %325 = vector.load %arg23[%c3_371, %c2_372, %c0_373, %c0_374] : memref<4x5x5x32xbf16, #tpu.memory_space<vmem>>, vector<1x1x4x32xbf16>
    %326 = vector.shape_cast %325 : vector<1x1x4x32xbf16> to vector<4x32xbf16>
    %c2_375 = arith.constant 2 : index
    %c2_376 = arith.constant 2 : index
    %c1_377 = arith.constant 1 : index
    %c0_378 = arith.constant 0 : index
    %327 = vector.load %arg23[%c2_375, %c2_376, %c1_377, %c0_378] : memref<4x5x5x32xbf16, #tpu.memory_space<vmem>>, vector<1x1x4x32xbf16>
    %328 = vector.shape_cast %327 : vector<1x1x4x32xbf16> to vector<4x32xbf16>
    %c0_379 = arith.constant 0 : index
    %c3_380 = arith.constant 3 : index
    %c0_381 = arith.constant 0 : index
    %c0_382 = arith.constant 0 : index
    %329 = vector.load %arg23[%c0_379, %c3_380, %c0_381, %c0_382] : memref<4x5x5x32xbf16, #tpu.memory_space<vmem>>, vector<1x1x4x32xbf16>
    %330 = vector.shape_cast %329 : vector<1x1x4x32xbf16> to vector<4x32xbf16>
    %c1_383 = arith.constant 1 : index
    %c3_384 = arith.constant 3 : index
    %c0_385 = arith.constant 0 : index
    %c0_386 = arith.constant 0 : index
    %331 = vector.load %arg23[%c1_383, %c3_384, %c0_385, %c0_386] : memref<4x5x5x32xbf16, #tpu.memory_space<vmem>>, vector<1x1x4x32xbf16>
    %332 = vector.shape_cast %331 : vector<1x1x4x32xbf16> to vector<4x32xbf16>
    %c0_387 = arith.constant 0 : index
    %c3_388 = arith.constant 3 : index
    %c1_389 = arith.constant 1 : index
    %c0_390 = arith.constant 0 : index
    %333 = vector.load %arg23[%c0_387, %c3_388, %c1_389, %c0_390] : memref<4x5x5x32xbf16, #tpu.memory_space<vmem>>, vector<1x1x4x32xbf16>
    %334 = vector.shape_cast %333 : vector<1x1x4x32xbf16> to vector<4x32xbf16>
    %335 = tpu.concatenate %318, %320, %322, %324, %326, %328, %330, %332, %334 in 1 : vector<4x32xbf16>, vector<4x32xbf16>, vector<4x32xbf16>, vector<4x32xbf16>, vector<4x32xbf16>, vector<4x32xbf16>, vector<4x32xbf16>, vector<4x32xbf16>, vector<4x32xbf16> -> vector<4x288xbf16>
    %c0_391 = arith.constant 0 : index
    %c3_392 = arith.constant 3 : index
    %c0_393 = arith.constant 0 : index
    %c0_394 = arith.constant 0 : index
    %336 = vector.load %arg23[%c0_391, %c3_392, %c0_393, %c0_394] : memref<4x5x5x32xbf16, #tpu.memory_space<vmem>>, vector<1x1x4x32xbf16>
    %337 = vector.shape_cast %336 : vector<1x1x4x32xbf16> to vector<4x32xbf16>
    %c1_395 = arith.constant 1 : index
    %c3_396 = arith.constant 3 : index
    %c0_397 = arith.constant 0 : index
    %c0_398 = arith.constant 0 : index
    %338 = vector.load %arg23[%c1_395, %c3_396, %c0_397, %c0_398] : memref<4x5x5x32xbf16, #tpu.memory_space<vmem>>, vector<1x1x4x32xbf16>
    %339 = vector.shape_cast %338 : vector<1x1x4x32xbf16> to vector<4x32xbf16>
    %c0_399 = arith.constant 0 : index
    %c3_400 = arith.constant 3 : index
    %c1_401 = arith.constant 1 : index
    %c0_402 = arith.constant 0 : index
    %340 = vector.load %arg23[%c0_399, %c3_400, %c1_401, %c0_402] : memref<4x5x5x32xbf16, #tpu.memory_space<vmem>>, vector<1x1x4x32xbf16>
    %341 = vector.shape_cast %340 : vector<1x1x4x32xbf16> to vector<4x32xbf16>
    %c2_403 = arith.constant 2 : index
    %c3_404 = arith.constant 3 : index
    %c0_405 = arith.constant 0 : index
    %c0_406 = arith.constant 0 : index
    %342 = vector.load %arg23[%c2_403, %c3_404, %c0_405, %c0_406] : memref<4x5x5x32xbf16, #tpu.memory_space<vmem>>, vector<1x1x4x32xbf16>
    %343 = vector.shape_cast %342 : vector<1x1x4x32xbf16> to vector<4x32xbf16>
    %c3_407 = arith.constant 3 : index
    %c3_408 = arith.constant 3 : index
    %c0_409 = arith.constant 0 : index
    %c0_410 = arith.constant 0 : index
    %344 = vector.load %arg23[%c3_407, %c3_408, %c0_409, %c0_410] : memref<4x5x5x32xbf16, #tpu.memory_space<vmem>>, vector<1x1x4x32xbf16>
    %345 = vector.shape_cast %344 : vector<1x1x4x32xbf16> to vector<4x32xbf16>
    %c2_411 = arith.constant 2 : index
    %c3_412 = arith.constant 3 : index
    %c1_413 = arith.constant 1 : index
    %c0_414 = arith.constant 0 : index
    %346 = vector.load %arg23[%c2_411, %c3_412, %c1_413, %c0_414] : memref<4x5x5x32xbf16, #tpu.memory_space<vmem>>, vector<1x1x4x32xbf16>
    %347 = vector.shape_cast %346 : vector<1x1x4x32xbf16> to vector<4x32xbf16>
    %c0_415 = arith.constant 0 : index
    %c4_416 = arith.constant 4 : index
    %c0_417 = arith.constant 0 : index
    %c0_418 = arith.constant 0 : index
    %348 = vector.load %arg23[%c0_415, %c4_416, %c0_417, %c0_418] : memref<4x5x5x32xbf16, #tpu.memory_space<vmem>>, vector<1x1x4x32xbf16>
    %349 = vector.shape_cast %348 : vector<1x1x4x32xbf16> to vector<4x32xbf16>
    %c1_419 = arith.constant 1 : index
    %c4_420 = arith.constant 4 : index
    %c0_421 = arith.constant 0 : index
    %c0_422 = arith.constant 0 : index
    %350 = vector.load %arg23[%c1_419, %c4_420, %c0_421, %c0_422] : memref<4x5x5x32xbf16, #tpu.memory_space<vmem>>, vector<1x1x4x32xbf16>
    %351 = vector.shape_cast %350 : vector<1x1x4x32xbf16> to vector<4x32xbf16>
    %c0_423 = arith.constant 0 : index
    %c4_424 = arith.constant 4 : index
    %c1_425 = arith.constant 1 : index
    %c0_426 = arith.constant 0 : index
    %352 = vector.load %arg23[%c0_423, %c4_424, %c1_425, %c0_426] : memref<4x5x5x32xbf16, #tpu.memory_space<vmem>>, vector<1x1x4x32xbf16>
    %353 = vector.shape_cast %352 : vector<1x1x4x32xbf16> to vector<4x32xbf16>
    %354 = tpu.concatenate %337, %339, %341, %343, %345, %347, %349, %351, %353 in 1 : vector<4x32xbf16>, vector<4x32xbf16>, vector<4x32xbf16>, vector<4x32xbf16>, vector<4x32xbf16>, vector<4x32xbf16>, vector<4x32xbf16>, vector<4x32xbf16>, vector<4x32xbf16> -> vector<4x288xbf16>
    %355 = tpu.concatenate %297, %316, %335, %354 in 0 : vector<4x288xbf16>, vector<4x288xbf16>, vector<4x288xbf16>, vector<4x288xbf16> -> vector<16x288xbf16>
    %c0_427 = arith.constant 0 : index
    %c0_428 = arith.constant 0 : index
    %356 = vector.load %arg5[%c0_427, %c0_428] : memref<288x64xbf16, #tpu.memory_space<vmem>>, vector<288x64xbf16>
    %cst_429 = arith.constant dense<0.000000e+00> : vector<16x64xf32>
    %357 = tpu.matmul %355, %356, %cst_429 {dimension_numbers = #tpu.dot_dimension_numbers<[1], [0], [0], [1], [0, 0, 1, 1], [], []>} : vector<16x288xbf16>, vector<288x64xbf16>, vector<16x64xf32> -> vector<16x64xf32>
    %c0_430 = arith.constant 0 : index
    %c0_431 = arith.constant 0 : index
    %358 = vector.load %arg6[%c0_430, %c0_431] : memref<1x64xf32, #tpu.memory_space<vmem>>, vector<1x64xf32>
    %359 = vector.broadcast %358 : vector<1x64xf32> to vector<16x64xf32>
    %360 = arith.mulf %357, %359 : vector<16x64xf32>
    %c0_432 = arith.constant 0 : index
    %c0_433 = arith.constant 0 : index
    %361 = vector.load %arg7[%c0_432, %c0_433] : memref<1x64xf32, #tpu.memory_space<vmem>>, vector<1x64xf32>
    %362 = vector.broadcast %361 : vector<1x64xf32> to vector<16x64xf32>
    %363 = arith.addf %360, %362 : vector<16x64xf32>
    %cst_434 = arith.constant 0.000000e+00 : f32
    %364 = vector.broadcast %cst_434 : f32 to vector<16x64xf32>
    %365 = arith.maximumf %363, %364 : vector<16x64xf32>
    %366 = arith.truncf %365 : vector<16x64xf32> to vector<16x64xbf16>
    %367 = vector.extract_strided_slice %366 {offsets = [0, 0], sizes = [1, 64], strides = [1, 1]} : vector<16x64xbf16> to vector<1x64xbf16>
    %c3_435 = arith.constant 3 : index
    %c0_436 = arith.constant 0 : index
    %c0_437 = arith.constant 0 : index
    %c0_438 = arith.constant 0 : index
    %368 = vector.load %arg24[%c3_435, %c0_436, %c0_437, %c0_438] : memref<4x3x3x64xbf16, #tpu.memory_space<vmem>>, vector<1x1x1x64xbf16>
    %369 = vector.shape_cast %368 : vector<1x1x1x64xbf16> to vector<1x64xbf16>
    %370 = vector.shape_cast %367 : vector<1x64xbf16> to vector<1x1x1x64xbf16>
    tpu.vector_store %arg24[%c3_435, %c0_436, %c0_437, %c0_438], %370 {strides = array<i32>} : memref<4x3x3x64xbf16, #tpu.memory_space<vmem>>, vector<1x1x1x64xbf16>,
    %371 = vector.extract_strided_slice %366 {offsets = [1, 0], sizes = [1, 64], strides = [1, 1]} : vector<16x64xbf16> to vector<1x64xbf16>
    %c2_439 = arith.constant 2 : index
    %c0_440 = arith.constant 0 : index
    %c1_441 = arith.constant 1 : index
    %c0_442 = arith.constant 0 : index
    %372 = vector.load %arg24[%c2_439, %c0_440, %c1_441, %c0_442] : memref<4x3x3x64xbf16, #tpu.memory_space<vmem>>, vector<1x1x1x64xbf16>
    %373 = vector.shape_cast %372 : vector<1x1x1x64xbf16> to vector<1x64xbf16>
    %374 = vector.shape_cast %371 : vector<1x64xbf16> to vector<1x1x1x64xbf16>
    tpu.vector_store %arg24[%c2_439, %c0_440, %c1_441, %c0_442], %374 {strides = array<i32>} : memref<4x3x3x64xbf16, #tpu.memory_space<vmem>>, vector<1x1x1x64xbf16>,
    %375 = vector.extract_strided_slice %366 {offsets = [2, 0], sizes = [1, 64], strides = [1, 1]} : vector<16x64xbf16> to vector<1x64xbf16>
    %c3_443 = arith.constant 3 : index
    %c0_444 = arith.constant 0 : index
    %c1_445 = arith.constant 1 : index
    %c0_446 = arith.constant 0 : index
    %376 = vector.load %arg24[%c3_443, %c0_444, %c1_445, %c0_446] : memref<4x3x3x64xbf16, #tpu.memory_space<vmem>>, vector<1x1x1x64xbf16>
    %377 = vector.shape_cast %376 : vector<1x1x1x64xbf16> to vector<1x64xbf16>
    %378 = vector.shape_cast %375 : vector<1x64xbf16> to vector<1x1x1x64xbf16>
    tpu.vector_store %arg24[%c3_443, %c0_444, %c1_445, %c0_446], %378 {strides = array<i32>} : memref<4x3x3x64xbf16, #tpu.memory_space<vmem>>, vector<1x1x1x64xbf16>,
    %379 = vector.extract_strided_slice %366 {offsets = [3, 0], sizes = [1, 64], strides = [1, 1]} : vector<16x64xbf16> to vector<1x64xbf16>
    %c2_447 = arith.constant 2 : index
    %c0_448 = arith.constant 0 : index
    %c2_449 = arith.constant 2 : index
    %c0_450 = arith.constant 0 : index
    %380 = vector.load %arg24[%c2_447, %c0_448, %c2_449, %c0_450] : memref<4x3x3x64xbf16, #tpu.memory_space<vmem>>, vector<1x1x1x64xbf16>
    %381 = vector.shape_cast %380 : vector<1x1x1x64xbf16> to vector<1x64xbf16>
    %382 = vector.shape_cast %379 : vector<1x64xbf16> to vector<1x1x1x64xbf16>
    tpu.vector_store %arg24[%c2_447, %c0_448, %c2_449, %c0_450], %382 {strides = array<i32>} : memref<4x3x3x64xbf16, #tpu.memory_space<vmem>>, vector<1x1x1x64xbf16>,
    %383 = vector.extract_strided_slice %366 {offsets = [4, 0], sizes = [1, 64], strides = [1, 1]} : vector<16x64xbf16> to vector<1x64xbf16>
    %c1_451 = arith.constant 1 : index
    %c1_452 = arith.constant 1 : index
    %c0_453 = arith.constant 0 : index
    %c0_454 = arith.constant 0 : index
    %384 = vector.load %arg24[%c1_451, %c1_452, %c0_453, %c0_454] : memref<4x3x3x64xbf16, #tpu.memory_space<vmem>>, vector<1x1x1x64xbf16>
    %385 = vector.shape_cast %384 : vector<1x1x1x64xbf16> to vector<1x64xbf16>
    %386 = vector.shape_cast %383 : vector<1x64xbf16> to vector<1x1x1x64xbf16>
    tpu.vector_store %arg24[%c1_451, %c1_452, %c0_453, %c0_454], %386 {strides = array<i32>} : memref<4x3x3x64xbf16, #tpu.memory_space<vmem>>, vector<1x1x1x64xbf16>,
    %387 = vector.extract_strided_slice %366 {offsets = [5, 0], sizes = [1, 64], strides = [1, 1]} : vector<16x64xbf16> to vector<1x64xbf16>
    %c0_455 = arith.constant 0 : index
    %c1_456 = arith.constant 1 : index
    %c1_457 = arith.constant 1 : index
    %c0_458 = arith.constant 0 : index
    %388 = vector.load %arg24[%c0_455, %c1_456, %c1_457, %c0_458] : memref<4x3x3x64xbf16, #tpu.memory_space<vmem>>, vector<1x1x1x64xbf16>
    %389 = vector.shape_cast %388 : vector<1x1x1x64xbf16> to vector<1x64xbf16>
    %390 = vector.shape_cast %387 : vector<1x64xbf16> to vector<1x1x1x64xbf16>
    tpu.vector_store %arg24[%c0_455, %c1_456, %c1_457, %c0_458], %390 {strides = array<i32>} : memref<4x3x3x64xbf16, #tpu.memory_space<vmem>>, vector<1x1x1x64xbf16>,
    %391 = vector.extract_strided_slice %366 {offsets = [6, 0], sizes = [1, 64], strides = [1, 1]} : vector<16x64xbf16> to vector<1x64xbf16>
    %c1_459 = arith.constant 1 : index
    %c1_460 = arith.constant 1 : index
    %c1_461 = arith.constant 1 : index
    %c0_462 = arith.constant 0 : index
    %392 = vector.load %arg24[%c1_459, %c1_460, %c1_461, %c0_462] : memref<4x3x3x64xbf16, #tpu.memory_space<vmem>>, vector<1x1x1x64xbf16>
    %393 = vector.shape_cast %392 : vector<1x1x1x64xbf16> to vector<1x64xbf16>
    %394 = vector.shape_cast %391 : vector<1x64xbf16> to vector<1x1x1x64xbf16>
    tpu.vector_store %arg24[%c1_459, %c1_460, %c1_461, %c0_462], %394 {strides = array<i32>} : memref<4x3x3x64xbf16, #tpu.memory_space<vmem>>, vector<1x1x1x64xbf16>,
    %395 = vector.extract_strided_slice %366 {offsets = [7, 0], sizes = [1, 64], strides = [1, 1]} : vector<16x64xbf16> to vector<1x64xbf16>
    %c0_463 = arith.constant 0 : index
    %c1_464 = arith.constant 1 : index
    %c2_465 = arith.constant 2 : index
    %c0_466 = arith.constant 0 : index
    %396 = vector.load %arg24[%c0_463, %c1_464, %c2_465, %c0_466] : memref<4x3x3x64xbf16, #tpu.memory_space<vmem>>, vector<1x1x1x64xbf16>
    %397 = vector.shape_cast %396 : vector<1x1x1x64xbf16> to vector<1x64xbf16>
    %398 = vector.shape_cast %395 : vector<1x64xbf16> to vector<1x1x1x64xbf16>
    tpu.vector_store %arg24[%c0_463, %c1_464, %c2_465, %c0_466], %398 {strides = array<i32>} : memref<4x3x3x64xbf16, #tpu.memory_space<vmem>>, vector<1x1x1x64xbf16>,
    %399 = vector.extract_strided_slice %366 {offsets = [8, 0], sizes = [1, 64], strides = [1, 1]} : vector<16x64xbf16> to vector<1x64xbf16>
    %c3_467 = arith.constant 3 : index
    %c1_468 = arith.constant 1 : index
    %c0_469 = arith.constant 0 : index
    %c0_470 = arith.constant 0 : index
    %400 = vector.load %arg24[%c3_467, %c1_468, %c0_469, %c0_470] : memref<4x3x3x64xbf16, #tpu.memory_space<vmem>>, vector<1x1x1x64xbf16>
    %401 = vector.shape_cast %400 : vector<1x1x1x64xbf16> to vector<1x64xbf16>
    %402 = vector.shape_cast %399 : vector<1x64xbf16> to vector<1x1x1x64xbf16>
    tpu.vector_store %arg24[%c3_467, %c1_468, %c0_469, %c0_470], %402 {strides = array<i32>} : memref<4x3x3x64xbf16, #tpu.memory_space<vmem>>, vector<1x1x1x64xbf16>,
    %403 = vector.extract_strided_slice %366 {offsets = [9, 0], sizes = [1, 64], strides = [1, 1]} : vector<16x64xbf16> to vector<1x64xbf16>
    %c2_471 = arith.constant 2 : index
    %c1_472 = arith.constant 1 : index
    %c1_473 = arith.constant 1 : index
    %c0_474 = arith.constant 0 : index
    %404 = vector.load %arg24[%c2_471, %c1_472, %c1_473, %c0_474] : memref<4x3x3x64xbf16, #tpu.memory_space<vmem>>, vector<1x1x1x64xbf16>
    %405 = vector.shape_cast %404 : vector<1x1x1x64xbf16> to vector<1x64xbf16>
    %406 = vector.shape_cast %403 : vector<1x64xbf16> to vector<1x1x1x64xbf16>
    tpu.vector_store %arg24[%c2_471, %c1_472, %c1_473, %c0_474], %406 {strides = array<i32>} : memref<4x3x3x64xbf16, #tpu.memory_space<vmem>>, vector<1x1x1x64xbf16>,
    %407 = vector.extract_strided_slice %366 {offsets = [10, 0], sizes = [1, 64], strides = [1, 1]} : vector<16x64xbf16> to vector<1x64xbf16>
    %c3_475 = arith.constant 3 : index
    %c1_476 = arith.constant 1 : index
    %c1_477 = arith.constant 1 : index
    %c0_478 = arith.constant 0 : index
    %408 = vector.load %arg24[%c3_475, %c1_476, %c1_477, %c0_478] : memref<4x3x3x64xbf16, #tpu.memory_space<vmem>>, vector<1x1x1x64xbf16>
    %409 = vector.shape_cast %408 : vector<1x1x1x64xbf16> to vector<1x64xbf16>
    %410 = vector.shape_cast %407 : vector<1x64xbf16> to vector<1x1x1x64xbf16>
    tpu.vector_store %arg24[%c3_475, %c1_476, %c1_477, %c0_478], %410 {strides = array<i32>} : memref<4x3x3x64xbf16, #tpu.memory_space<vmem>>, vector<1x1x1x64xbf16>,
    %411 = vector.extract_strided_slice %366 {offsets = [11, 0], sizes = [1, 64], strides = [1, 1]} : vector<16x64xbf16> to vector<1x64xbf16>
    %c2_479 = arith.constant 2 : index
    %c1_480 = arith.constant 1 : index
    %c2_481 = arith.constant 2 : index
    %c0_482 = arith.constant 0 : index
    %412 = vector.load %arg24[%c2_479, %c1_480, %c2_481, %c0_482] : memref<4x3x3x64xbf16, #tpu.memory_space<vmem>>, vector<1x1x1x64xbf16>
    %413 = vector.shape_cast %412 : vector<1x1x1x64xbf16> to vector<1x64xbf16>
    %414 = vector.shape_cast %411 : vector<1x64xbf16> to vector<1x1x1x64xbf16>
    tpu.vector_store %arg24[%c2_479, %c1_480, %c2_481, %c0_482], %414 {strides = array<i32>} : memref<4x3x3x64xbf16, #tpu.memory_space<vmem>>, vector<1x1x1x64xbf16>,
    %415 = vector.extract_strided_slice %366 {offsets = [12, 0], sizes = [1, 64], strides = [1, 1]} : vector<16x64xbf16> to vector<1x64xbf16>
    %c1_483 = arith.constant 1 : index
    %c2_484 = arith.constant 2 : index
    %c0_485 = arith.constant 0 : index
    %c0_486 = arith.constant 0 : index
    %416 = vector.load %arg24[%c1_483, %c2_484, %c0_485, %c0_486] : memref<4x3x3x64xbf16, #tpu.memory_space<vmem>>, vector<1x1x1x64xbf16>
    %417 = vector.shape_cast %416 : vector<1x1x1x64xbf16> to vector<1x64xbf16>
    %418 = vector.shape_cast %415 : vector<1x64xbf16> to vector<1x1x1x64xbf16>
    tpu.vector_store %arg24[%c1_483, %c2_484, %c0_485, %c0_486], %418 {strides = array<i32>} : memref<4x3x3x64xbf16, #tpu.memory_space<vmem>>, vector<1x1x1x64xbf16>,
    %419 = vector.extract_strided_slice %366 {offsets = [13, 0], sizes = [1, 64], strides = [1, 1]} : vector<16x64xbf16> to vector<1x64xbf16>
    %c0_487 = arith.constant 0 : index
    %c2_488 = arith.constant 2 : index
    %c1_489 = arith.constant 1 : index
    %c0_490 = arith.constant 0 : index
    %420 = vector.load %arg24[%c0_487, %c2_488, %c1_489, %c0_490] : memref<4x3x3x64xbf16, #tpu.memory_space<vmem>>, vector<1x1x1x64xbf16>
    %421 = vector.shape_cast %420 : vector<1x1x1x64xbf16> to vector<1x64xbf16>
    %422 = vector.shape_cast %419 : vector<1x64xbf16> to vector<1x1x1x64xbf16>
    tpu.vector_store %arg24[%c0_487, %c2_488, %c1_489, %c0_490], %422 {strides = array<i32>} : memref<4x3x3x64xbf16, #tpu.memory_space<vmem>>, vector<1x1x1x64xbf16>,
    %423 = vector.extract_strided_slice %366 {offsets = [14, 0], sizes = [1, 64], strides = [1, 1]} : vector<16x64xbf16> to vector<1x64xbf16>
    %c1_491 = arith.constant 1 : index
    %c2_492 = arith.constant 2 : index
    %c1_493 = arith.constant 1 : index
    %c0_494 = arith.constant 0 : index
    %424 = vector.load %arg24[%c1_491, %c2_492, %c1_493, %c0_494] : memref<4x3x3x64xbf16, #tpu.memory_space<vmem>>, vector<1x1x1x64xbf16>
    %425 = vector.shape_cast %424 : vector<1x1x1x64xbf16> to vector<1x64xbf16>
    %426 = vector.shape_cast %423 : vector<1x64xbf16> to vector<1x1x1x64xbf16>
    tpu.vector_store %arg24[%c1_491, %c2_492, %c1_493, %c0_494], %426 {strides = array<i32>} : memref<4x3x3x64xbf16, #tpu.memory_space<vmem>>, vector<1x1x1x64xbf16>,
    %427 = vector.extract_strided_slice %366 {offsets = [15, 0], sizes = [1, 64], strides = [1, 1]} : vector<16x64xbf16> to vector<1x64xbf16>
    %c0_495 = arith.constant 0 : index
    %c2_496 = arith.constant 2 : index
    %c2_497 = arith.constant 2 : index
    %c0_498 = arith.constant 0 : index
    %428 = vector.load %arg24[%c0_495, %c2_496, %c2_497, %c0_498] : memref<4x3x3x64xbf16, #tpu.memory_space<vmem>>, vector<1x1x1x64xbf16>
    %429 = vector.shape_cast %428 : vector<1x1x1x64xbf16> to vector<1x64xbf16>
    %430 = vector.shape_cast %427 : vector<1x64xbf16> to vector<1x1x1x64xbf16>
    tpu.vector_store %arg24[%c0_495, %c2_496, %c2_497, %c0_498], %430 {strides = array<i32>} : memref<4x3x3x64xbf16, #tpu.memory_space<vmem>>, vector<1x1x1x64xbf16>,
    %c0_499 = arith.constant 0 : index
    %c0_500 = arith.constant 0 : index
    %c0_501 = arith.constant 0 : index
    %c0_502 = arith.constant 0 : index
    %431 = vector.load %arg24[%c0_499, %c0_500, %c0_501, %c0_502] : memref<4x3x3x64xbf16, #tpu.memory_space<vmem>>, vector<1x1x2x64xbf16>
    %432 = vector.shape_cast %431 : vector<1x1x2x64xbf16> to vector<2x64xbf16>
    %c1_503 = arith.constant 1 : index
    %c0_504 = arith.constant 0 : index
    %c0_505 = arith.constant 0 : index
    %c0_506 = arith.constant 0 : index
    %433 = vector.load %arg24[%c1_503, %c0_504, %c0_505, %c0_506] : memref<4x3x3x64xbf16, #tpu.memory_space<vmem>>, vector<1x1x2x64xbf16>
    %434 = vector.shape_cast %433 : vector<1x1x2x64xbf16> to vector<2x64xbf16>
    %c0_507 = arith.constant 0 : index
    %c0_508 = arith.constant 0 : index
    %c1_509 = arith.constant 1 : index
    %c0_510 = arith.constant 0 : index
    %435 = vector.load %arg24[%c0_507, %c0_508, %c1_509, %c0_510] : memref<4x3x3x64xbf16, #tpu.memory_space<vmem>>, vector<1x1x2x64xbf16>
    %436 = vector.shape_cast %435 : vector<1x1x2x64xbf16> to vector<2x64xbf16>
    %c2_511 = arith.constant 2 : index
    %c0_512 = arith.constant 0 : index
    %c0_513 = arith.constant 0 : index
    %c0_514 = arith.constant 0 : index
    %437 = vector.load %arg24[%c2_511, %c0_512, %c0_513, %c0_514] : memref<4x3x3x64xbf16, #tpu.memory_space<vmem>>, vector<1x1x2x64xbf16>
    %438 = vector.shape_cast %437 : vector<1x1x2x64xbf16> to vector<2x64xbf16>
    %c3_515 = arith.constant 3 : index
    %c0_516 = arith.constant 0 : index
    %c0_517 = arith.constant 0 : index
    %c0_518 = arith.constant 0 : index
    %439 = vector.load %arg24[%c3_515, %c0_516, %c0_517, %c0_518] : memref<4x3x3x64xbf16, #tpu.memory_space<vmem>>, vector<1x1x2x64xbf16>
    %440 = vector.shape_cast %439 : vector<1x1x2x64xbf16> to vector<2x64xbf16>
    %c2_519 = arith.constant 2 : index
    %c0_520 = arith.constant 0 : index
    %c1_521 = arith.constant 1 : index
    %c0_522 = arith.constant 0 : index
    %441 = vector.load %arg24[%c2_519, %c0_520, %c1_521, %c0_522] : memref<4x3x3x64xbf16, #tpu.memory_space<vmem>>, vector<1x1x2x64xbf16>
    %442 = vector.shape_cast %441 : vector<1x1x2x64xbf16> to vector<2x64xbf16>
    %c0_523 = arith.constant 0 : index
    %c1_524 = arith.constant 1 : index
    %c0_525 = arith.constant 0 : index
    %c0_526 = arith.constant 0 : index
    %443 = vector.load %arg24[%c0_523, %c1_524, %c0_525, %c0_526] : memref<4x3x3x64xbf16, #tpu.memory_space<vmem>>, vector<1x1x2x64xbf16>
    %444 = vector.shape_cast %443 : vector<1x1x2x64xbf16> to vector<2x64xbf16>
    %c1_527 = arith.constant 1 : index
    %c1_528 = arith.constant 1 : index
    %c0_529 = arith.constant 0 : index
    %c0_530 = arith.constant 0 : index
    %445 = vector.load %arg24[%c1_527, %c1_528, %c0_529, %c0_530] : memref<4x3x3x64xbf16, #tpu.memory_space<vmem>>, vector<1x1x2x64xbf16>
    %446 = vector.shape_cast %445 : vector<1x1x2x64xbf16> to vector<2x64xbf16>
    %c0_531 = arith.constant 0 : index
    %c1_532 = arith.constant 1 : index
    %c1_533 = arith.constant 1 : index
    %c0_534 = arith.constant 0 : index
    %447 = vector.load %arg24[%c0_531, %c1_532, %c1_533, %c0_534] : memref<4x3x3x64xbf16, #tpu.memory_space<vmem>>, vector<1x1x2x64xbf16>
    %448 = vector.shape_cast %447 : vector<1x1x2x64xbf16> to vector<2x64xbf16>
    %449 = tpu.concatenate %432, %434, %436, %438, %440, %442, %444, %446, %448 in 1 : vector<2x64xbf16>, vector<2x64xbf16>, vector<2x64xbf16>, vector<2x64xbf16>, vector<2x64xbf16>, vector<2x64xbf16>, vector<2x64xbf16>, vector<2x64xbf16>, vector<2x64xbf16> -> vector<2x576xbf16>
    %c0_535 = arith.constant 0 : index
    %c1_536 = arith.constant 1 : index
    %c0_537 = arith.constant 0 : index
    %c0_538 = arith.constant 0 : index
    %450 = vector.load %arg24[%c0_535, %c1_536, %c0_537, %c0_538] : memref<4x3x3x64xbf16, #tpu.memory_space<vmem>>, vector<1x1x2x64xbf16>
    %451 = vector.shape_cast %450 : vector<1x1x2x64xbf16> to vector<2x64xbf16>
    %c1_539 = arith.constant 1 : index
    %c1_540 = arith.constant 1 : index
    %c0_541 = arith.constant 0 : index
    %c0_542 = arith.constant 0 : index
    %452 = vector.load %arg24[%c1_539, %c1_540, %c0_541, %c0_542] : memref<4x3x3x64xbf16, #tpu.memory_space<vmem>>, vector<1x1x2x64xbf16>
    %453 = vector.shape_cast %452 : vector<1x1x2x64xbf16> to vector<2x64xbf16>
    %c0_543 = arith.constant 0 : index
    %c1_544 = arith.constant 1 : index
    %c1_545 = arith.constant 1 : index
    %c0_546 = arith.constant 0 : index
    %454 = vector.load %arg24[%c0_543, %c1_544, %c1_545, %c0_546] : memref<4x3x3x64xbf16, #tpu.memory_space<vmem>>, vector<1x1x2x64xbf16>
    %455 = vector.shape_cast %454 : vector<1x1x2x64xbf16> to vector<2x64xbf16>
    %c2_547 = arith.constant 2 : index
    %c1_548 = arith.constant 1 : index
    %c0_549 = arith.constant 0 : index
    %c0_550 = arith.constant 0 : index
    %456 = vector.load %arg24[%c2_547, %c1_548, %c0_549, %c0_550] : memref<4x3x3x64xbf16, #tpu.memory_space<vmem>>, vector<1x1x2x64xbf16>
    %457 = vector.shape_cast %456 : vector<1x1x2x64xbf16> to vector<2x64xbf16>
    %c3_551 = arith.constant 3 : index
    %c1_552 = arith.constant 1 : index
    %c0_553 = arith.constant 0 : index
    %c0_554 = arith.constant 0 : index
    %458 = vector.load %arg24[%c3_551, %c1_552, %c0_553, %c0_554] : memref<4x3x3x64xbf16, #tpu.memory_space<vmem>>, vector<1x1x2x64xbf16>
    %459 = vector.shape_cast %458 : vector<1x1x2x64xbf16> to vector<2x64xbf16>
    %c2_555 = arith.constant 2 : index
    %c1_556 = arith.constant 1 : index
    %c1_557 = arith.constant 1 : index
    %c0_558 = arith.constant 0 : index
    %460 = vector.load %arg24[%c2_555, %c1_556, %c1_557, %c0_558] : memref<4x3x3x64xbf16, #tpu.memory_space<vmem>>, vector<1x1x2x64xbf16>
    %461 = vector.shape_cast %460 : vector<1x1x2x64xbf16> to vector<2x64xbf16>
    %c0_559 = arith.constant 0 : index
    %c2_560 = arith.constant 2 : index
    %c0_561 = arith.constant 0 : index
    %c0_562 = arith.constant 0 : index
    %462 = vector.load %arg24[%c0_559, %c2_560, %c0_561, %c0_562] : memref<4x3x3x64xbf16, #tpu.memory_space<vmem>>, vector<1x1x2x64xbf16>
    %463 = vector.shape_cast %462 : vector<1x1x2x64xbf16> to vector<2x64xbf16>
    %c1_563 = arith.constant 1 : index
    %c2_564 = arith.constant 2 : index
    %c0_565 = arith.constant 0 : index
    %c0_566 = arith.constant 0 : index
    %464 = vector.load %arg24[%c1_563, %c2_564, %c0_565, %c0_566] : memref<4x3x3x64xbf16, #tpu.memory_space<vmem>>, vector<1x1x2x64xbf16>
    %465 = vector.shape_cast %464 : vector<1x1x2x64xbf16> to vector<2x64xbf16>
    %c0_567 = arith.constant 0 : index
    %c2_568 = arith.constant 2 : index
    %c1_569 = arith.constant 1 : index
    %c0_570 = arith.constant 0 : index
    %466 = vector.load %arg24[%c0_567, %c2_568, %c1_569, %c0_570] : memref<4x3x3x64xbf16, #tpu.memory_space<vmem>>, vector<1x1x2x64xbf16>
    %467 = vector.shape_cast %466 : vector<1x1x2x64xbf16> to vector<2x64xbf16>
    %468 = tpu.concatenate %451, %453, %455, %457, %459, %461, %463, %465, %467 in 1 : vector<2x64xbf16>, vector<2x64xbf16>, vector<2x64xbf16>, vector<2x64xbf16>, vector<2x64xbf16>, vector<2x64xbf16>, vector<2x64xbf16>, vector<2x64xbf16>, vector<2x64xbf16> -> vector<2x576xbf16>
    %469 = tpu.concatenate %449, %468 in 0 : vector<2x576xbf16>, vector<2x576xbf16> -> vector<4x576xbf16>
    %c0_571 = arith.constant 0 : index
    %c0_572 = arith.constant 0 : index
    %470 = vector.load %arg8[%c0_571, %c0_572] : memref<576x32xbf16, #tpu.memory_space<vmem>>, vector<576x32xbf16>
    %cst_573 = arith.constant dense<0.000000e+00> : vector<4x32xf32>
    %471 = tpu.matmul %469, %470, %cst_573 {dimension_numbers = #tpu.dot_dimension_numbers<[1], [0], [0], [1], [0, 0, 1, 1], [], []>} : vector<4x576xbf16>, vector<576x32xbf16>, vector<4x32xf32> -> vector<4x32xf32>
    %c0_574 = arith.constant 0 : index
    %c0_575 = arith.constant 0 : index
    %472 = vector.load %arg9[%c0_574, %c0_575] : memref<1x32xf32, #tpu.memory_space<vmem>>, vector<1x32xf32>
    %473 = vector.broadcast %472 : vector<1x32xf32> to vector<4x32xf32>
    %474 = arith.mulf %471, %473 : vector<4x32xf32>
    %c0_576 = arith.constant 0 : index
    %c0_577 = arith.constant 0 : index
    %475 = vector.load %arg10[%c0_576, %c0_577] : memref<1x32xf32, #tpu.memory_space<vmem>>, vector<1x32xf32>
    %476 = vector.broadcast %475 : vector<1x32xf32> to vector<4x32xf32>
    %477 = arith.addf %474, %476 : vector<4x32xf32>
    %cst_578 = arith.constant 0.000000e+00 : f32
    %478 = vector.broadcast %cst_578 : f32 to vector<4x32xf32>
    %479 = arith.maximumf %477, %478 : vector<4x32xf32>
    %480 = arith.truncf %479 : vector<4x32xf32> to vector<4x32xbf16>
    %481 = vector.extract_strided_slice %480 {offsets = [0, 0], sizes = [2, 32], strides = [1, 1]} : vector<4x32xbf16> to vector<2x32xbf16>
    %c0_579 = arith.constant 0 : index
    %c0_580 = arith.constant 0 : index
    %c0_581 = arith.constant 0 : index
    %482 = vector.load %arg25[%c0_579, %c0_580, %c0_581] : memref<3x3x32xbf16, #tpu.memory_space<vmem>>, vector<1x2x32xbf16>
    %483 = vector.shape_cast %482 : vector<1x2x32xbf16> to vector<2x32xbf16>
    %484 = vector.shape_cast %481 : vector<2x32xbf16> to vector<1x2x32xbf16>
    tpu.vector_store %arg25[%c0_579, %c0_580, %c0_581], %484 {strides = array<i32>} : memref<3x3x32xbf16, #tpu.memory_space<vmem>>, vector<1x2x32xbf16>,
    %485 = vector.extract_strided_slice %480 {offsets = [2, 0], sizes = [2, 32], strides = [1, 1]} : vector<4x32xbf16> to vector<2x32xbf16>
    %c1_582 = arith.constant 1 : index
    %c0_583 = arith.constant 0 : index
    %c0_584 = arith.constant 0 : index
    %486 = vector.load %arg25[%c1_582, %c0_583, %c0_584] : memref<3x3x32xbf16, #tpu.memory_space<vmem>>, vector<1x2x32xbf16>
    %487 = vector.shape_cast %486 : vector<1x2x32xbf16> to vector<2x32xbf16>
    %488 = vector.shape_cast %485 : vector<2x32xbf16> to vector<1x2x32xbf16>
    tpu.vector_store %arg25[%c1_582, %c0_583, %c0_584], %488 {strides = array<i32>} : memref<3x3x32xbf16, #tpu.memory_space<vmem>>, vector<1x2x32xbf16>,
    %c0_585 = arith.constant 0 : index
    %c0_586 = arith.constant 0 : index
    %c0_587 = arith.constant 0 : index
    %489 = vector.load %arg25[%c0_585, %c0_586, %c0_587] : memref<3x3x32xbf16, #tpu.memory_space<vmem>>, vector<1x2x32xbf16>
    %490 = vector.shape_cast %489 : vector<1x2x32xbf16> to vector<2x32xbf16>
    %c0_588 = arith.constant 0 : index
    %c1_589 = arith.constant 1 : index
    %c0_590 = arith.constant 0 : index
    %491 = vector.load %arg25[%c0_588, %c1_589, %c0_590] : memref<3x3x32xbf16, #tpu.memory_space<vmem>>, vector<1x2x32xbf16>
    %492 = vector.shape_cast %491 : vector<1x2x32xbf16> to vector<2x32xbf16>
    %c1_591 = arith.constant 1 : index
    %c0_592 = arith.constant 0 : index
    %c0_593 = arith.constant 0 : index
    %493 = vector.load %arg25[%c1_591, %c0_592, %c0_593] : memref<3x3x32xbf16, #tpu.memory_space<vmem>>, vector<1x2x32xbf16>
    %494 = vector.shape_cast %493 : vector<1x2x32xbf16> to vector<2x32xbf16>
    %c1_594 = arith.constant 1 : index
    %c1_595 = arith.constant 1 : index
    %c0_596 = arith.constant 0 : index
    %495 = vector.load %arg25[%c1_594, %c1_595, %c0_596] : memref<3x3x32xbf16, #tpu.memory_space<vmem>>, vector<1x2x32xbf16>
    %496 = vector.shape_cast %495 : vector<1x2x32xbf16> to vector<2x32xbf16>
    %497 = tpu.concatenate %490, %492, %494, %496 in 1 : vector<2x32xbf16>, vector<2x32xbf16>, vector<2x32xbf16>, vector<2x32xbf16> -> vector<2x128xbf16>
    %c1_597 = arith.constant 1 : index
    %c0_598 = arith.constant 0 : index
    %c0_599 = arith.constant 0 : index
    %498 = vector.load %arg25[%c1_597, %c0_598, %c0_599] : memref<3x3x32xbf16, #tpu.memory_space<vmem>>, vector<1x2x32xbf16>
    %499 = vector.shape_cast %498 : vector<1x2x32xbf16> to vector<2x32xbf16>
    %c1_600 = arith.constant 1 : index
    %c1_601 = arith.constant 1 : index
    %c0_602 = arith.constant 0 : index
    %500 = vector.load %arg25[%c1_600, %c1_601, %c0_602] : memref<3x3x32xbf16, #tpu.memory_space<vmem>>, vector<1x2x32xbf16>
    %501 = vector.shape_cast %500 : vector<1x2x32xbf16> to vector<2x32xbf16>
    %c2_603 = arith.constant 2 : index
    %c0_604 = arith.constant 0 : index
    %c0_605 = arith.constant 0 : index
    %502 = vector.load %arg25[%c2_603, %c0_604, %c0_605] : memref<3x3x32xbf16, #tpu.memory_space<vmem>>, vector<1x2x32xbf16>
    %503 = vector.shape_cast %502 : vector<1x2x32xbf16> to vector<2x32xbf16>
    %c2_606 = arith.constant 2 : index
    %c1_607 = arith.constant 1 : index
    %c0_608 = arith.constant 0 : index
    %504 = vector.load %arg25[%c2_606, %c1_607, %c0_608] : memref<3x3x32xbf16, #tpu.memory_space<vmem>>, vector<1x2x32xbf16>
    %505 = vector.shape_cast %504 : vector<1x2x32xbf16> to vector<2x32xbf16>
    %506 = tpu.concatenate %499, %501, %503, %505 in 1 : vector<2x32xbf16>, vector<2x32xbf16>, vector<2x32xbf16>, vector<2x32xbf16> -> vector<2x128xbf16>
    %507 = tpu.concatenate %497, %506 in 0 : vector<2x128xbf16>, vector<2x128xbf16> -> vector<4x128xbf16>
    %c0_609 = arith.constant 0 : index
    %c0_610 = arith.constant 0 : index
    %508 = vector.load %arg11[%c0_609, %c0_610] : memref<128x256xbf16, #tpu.memory_space<vmem>>, vector<128x256xbf16>
    %cst_611 = arith.constant dense<0.000000e+00> : vector<4x256xf32>
    %509 = tpu.matmul %507, %508, %cst_611 {dimension_numbers = #tpu.dot_dimension_numbers<[1], [0], [0], [1], [0, 0, 1, 1], [], []>} : vector<4x128xbf16>, vector<128x256xbf16>, vector<4x256xf32> -> vector<4x256xf32>
    %c0_612 = arith.constant 0 : index
    %c0_613 = arith.constant 0 : index
    %510 = vector.load %arg12[%c0_612, %c0_613] : memref<1x256xf32, #tpu.memory_space<vmem>>, vector<1x256xf32>
    %511 = vector.broadcast %510 : vector<1x256xf32> to vector<4x256xf32>
    %512 = arith.mulf %509, %511 : vector<4x256xf32>
    %c0_614 = arith.constant 0 : index
    %c0_615 = arith.constant 0 : index
    %513 = vector.load %arg13[%c0_614, %c0_615] : memref<1x256xf32, #tpu.memory_space<vmem>>, vector<1x256xf32>
    %514 = vector.broadcast %513 : vector<1x256xf32> to vector<4x256xf32>
    %515 = arith.addf %512, %514 : vector<4x256xf32>
    %cst_616 = arith.constant 0.000000e+00 : f32
    %516 = vector.broadcast %cst_616 : f32 to vector<4x256xf32>
    %517 = arith.maximumf %515, %516 : vector<4x256xf32>
    %518 = arith.truncf %517 : vector<4x256xf32> to vector<4x256xbf16>
    %519 = vector.extract_strided_slice %518 {offsets = [0, 0], sizes = [1, 64], strides = [1, 1]} : vector<4x256xbf16> to vector<1x64xbf16>
    %c0_617 = arith.constant 0 : index
    %c0_618 = arith.constant 0 : index
    %c0_619 = arith.constant 0 : index
    %520 = vector.load %arg26[%c0_617, %c0_618, %c0_619] : memref<5x5x64xbf16, #tpu.memory_space<vmem>>, vector<1x1x64xbf16>
    %521 = vector.shape_cast %520 : vector<1x1x64xbf16> to vector<1x64xbf16>
    %522 = vector.shape_cast %519 : vector<1x64xbf16> to vector<1x1x64xbf16>
    tpu.vector_store %arg26[%c0_617, %c0_618, %c0_619], %522 {strides = array<i32>} : memref<5x5x64xbf16, #tpu.memory_space<vmem>>, vector<1x1x64xbf16>,
    %523 = vector.extract_strided_slice %518 {offsets = [0, 64], sizes = [1, 64], strides = [1, 1]} : vector<4x256xbf16> to vector<1x64xbf16>
    %c0_620 = arith.constant 0 : index
    %c1_621 = arith.constant 1 : index
    %c0_622 = arith.constant 0 : index
    %524 = vector.load %arg26[%c0_620, %c1_621, %c0_622] : memref<5x5x64xbf16, #tpu.memory_space<vmem>>, vector<1x1x64xbf16>
    %525 = vector.shape_cast %524 : vector<1x1x64xbf16> to vector<1x64xbf16>
    %526 = vector.shape_cast %523 : vector<1x64xbf16> to vector<1x1x64xbf16>
    tpu.vector_store %arg26[%c0_620, %c1_621, %c0_622], %526 {strides = array<i32>} : memref<5x5x64xbf16, #tpu.memory_space<vmem>>, vector<1x1x64xbf16>,
    %527 = vector.extract_strided_slice %518 {offsets = [0, 128], sizes = [1, 64], strides = [1, 1]} : vector<4x256xbf16> to vector<1x64xbf16>
    %c1_623 = arith.constant 1 : index
    %c0_624 = arith.constant 0 : index
    %c0_625 = arith.constant 0 : index
    %528 = vector.load %arg26[%c1_623, %c0_624, %c0_625] : memref<5x5x64xbf16, #tpu.memory_space<vmem>>, vector<1x1x64xbf16>
    %529 = vector.shape_cast %528 : vector<1x1x64xbf16> to vector<1x64xbf16>
    %530 = vector.shape_cast %527 : vector<1x64xbf16> to vector<1x1x64xbf16>
    tpu.vector_store %arg26[%c1_623, %c0_624, %c0_625], %530 {strides = array<i32>} : memref<5x5x64xbf16, #tpu.memory_space<vmem>>, vector<1x1x64xbf16>,
    %531 = vector.extract_strided_slice %518 {offsets = [0, 192], sizes = [1, 64], strides = [1, 1]} : vector<4x256xbf16> to vector<1x64xbf16>
    %c1_626 = arith.constant 1 : index
    %c1_627 = arith.constant 1 : index
    %c0_628 = arith.constant 0 : index
    %532 = vector.load %arg26[%c1_626, %c1_627, %c0_628] : memref<5x5x64xbf16, #tpu.memory_space<vmem>>, vector<1x1x64xbf16>
    %533 = vector.shape_cast %532 : vector<1x1x64xbf16> to vector<1x64xbf16>
    %534 = vector.shape_cast %531 : vector<1x64xbf16> to vector<1x1x64xbf16>
    tpu.vector_store %arg26[%c1_626, %c1_627, %c0_628], %534 {strides = array<i32>} : memref<5x5x64xbf16, #tpu.memory_space<vmem>>, vector<1x1x64xbf16>,
    %535 = vector.extract_strided_slice %518 {offsets = [1, 0], sizes = [1, 64], strides = [1, 1]} : vector<4x256xbf16> to vector<1x64xbf16>
    %c0_629 = arith.constant 0 : index
    %c2_630 = arith.constant 2 : index
    %c0_631 = arith.constant 0 : index
    %536 = vector.load %arg26[%c0_629, %c2_630, %c0_631] : memref<5x5x64xbf16, #tpu.memory_space<vmem>>, vector<1x1x64xbf16>
    %537 = vector.shape_cast %536 : vector<1x1x64xbf16> to vector<1x64xbf16>
    %538 = vector.shape_cast %535 : vector<1x64xbf16> to vector<1x1x64xbf16>
    tpu.vector_store %arg26[%c0_629, %c2_630, %c0_631], %538 {strides = array<i32>} : memref<5x5x64xbf16, #tpu.memory_space<vmem>>, vector<1x1x64xbf16>,
    %539 = vector.extract_strided_slice %518 {offsets = [1, 64], sizes = [1, 64], strides = [1, 1]} : vector<4x256xbf16> to vector<1x64xbf16>
    %c0_632 = arith.constant 0 : index
    %c3_633 = arith.constant 3 : index
    %c0_634 = arith.constant 0 : index
    %540 = vector.load %arg26[%c0_632, %c3_633, %c0_634] : memref<5x5x64xbf16, #tpu.memory_space<vmem>>, vector<1x1x64xbf16>
    %541 = vector.shape_cast %540 : vector<1x1x64xbf16> to vector<1x64xbf16>
    %542 = vector.shape_cast %539 : vector<1x64xbf16> to vector<1x1x64xbf16>
    tpu.vector_store %arg26[%c0_632, %c3_633, %c0_634], %542 {strides = array<i32>} : memref<5x5x64xbf16, #tpu.memory_space<vmem>>, vector<1x1x64xbf16>,
    %543 = vector.extract_strided_slice %518 {offsets = [1, 128], sizes = [1, 64], strides = [1, 1]} : vector<4x256xbf16> to vector<1x64xbf16>
    %c1_635 = arith.constant 1 : index
    %c2_636 = arith.constant 2 : index
    %c0_637 = arith.constant 0 : index
    %544 = vector.load %arg26[%c1_635, %c2_636, %c0_637] : memref<5x5x64xbf16, #tpu.memory_space<vmem>>, vector<1x1x64xbf16>
    %545 = vector.shape_cast %544 : vector<1x1x64xbf16> to vector<1x64xbf16>
    %546 = vector.shape_cast %543 : vector<1x64xbf16> to vector<1x1x64xbf16>
    tpu.vector_store %arg26[%c1_635, %c2_636, %c0_637], %546 {strides = array<i32>} : memref<5x5x64xbf16, #tpu.memory_space<vmem>>, vector<1x1x64xbf16>,
    %547 = vector.extract_strided_slice %518 {offsets = [1, 192], sizes = [1, 64], strides = [1, 1]} : vector<4x256xbf16> to vector<1x64xbf16>
    %c1_638 = arith.constant 1 : index
    %c3_639 = arith.constant 3 : index
    %c0_640 = arith.constant 0 : index
    %548 = vector.load %arg26[%c1_638, %c3_639, %c0_640] : memref<5x5x64xbf16, #tpu.memory_space<vmem>>, vector<1x1x64xbf16>
    %549 = vector.shape_cast %548 : vector<1x1x64xbf16> to vector<1x64xbf16>
    %550 = vector.shape_cast %547 : vector<1x64xbf16> to vector<1x1x64xbf16>
    tpu.vector_store %arg26[%c1_638, %c3_639, %c0_640], %550 {strides = array<i32>} : memref<5x5x64xbf16, #tpu.memory_space<vmem>>, vector<1x1x64xbf16>,
    %551 = vector.extract_strided_slice %518 {offsets = [2, 0], sizes = [1, 64], strides = [1, 1]} : vector<4x256xbf16> to vector<1x64xbf16>
    %c2_641 = arith.constant 2 : index
    %c0_642 = arith.constant 0 : index
    %c0_643 = arith.constant 0 : index
    %552 = vector.load %arg26[%c2_641, %c0_642, %c0_643] : memref<5x5x64xbf16, #tpu.memory_space<vmem>>, vector<1x1x64xbf16>
    %553 = vector.shape_cast %552 : vector<1x1x64xbf16> to vector<1x64xbf16>
    %554 = vector.shape_cast %551 : vector<1x64xbf16> to vector<1x1x64xbf16>
    tpu.vector_store %arg26[%c2_641, %c0_642, %c0_643], %554 {strides = array<i32>} : memref<5x5x64xbf16, #tpu.memory_space<vmem>>, vector<1x1x64xbf16>,
    %555 = vector.extract_strided_slice %518 {offsets = [2, 64], sizes = [1, 64], strides = [1, 1]} : vector<4x256xbf16> to vector<1x64xbf16>
    %c2_644 = arith.constant 2 : index
    %c1_645 = arith.constant 1 : index
    %c0_646 = arith.constant 0 : index
    %556 = vector.load %arg26[%c2_644, %c1_645, %c0_646] : memref<5x5x64xbf16, #tpu.memory_space<vmem>>, vector<1x1x64xbf16>
    %557 = vector.shape_cast %556 : vector<1x1x64xbf16> to vector<1x64xbf16>
    %558 = vector.shape_cast %555 : vector<1x64xbf16> to vector<1x1x64xbf16>
    tpu.vector_store %arg26[%c2_644, %c1_645, %c0_646], %558 {strides = array<i32>} : memref<5x5x64xbf16, #tpu.memory_space<vmem>>, vector<1x1x64xbf16>,
    %559 = vector.extract_strided_slice %518 {offsets = [2, 128], sizes = [1, 64], strides = [1, 1]} : vector<4x256xbf16> to vector<1x64xbf16>
    %c3_647 = arith.constant 3 : index
    %c0_648 = arith.constant 0 : index
    %c0_649 = arith.constant 0 : index
    %560 = vector.load %arg26[%c3_647, %c0_648, %c0_649] : memref<5x5x64xbf16, #tpu.memory_space<vmem>>, vector<1x1x64xbf16>
    %561 = vector.shape_cast %560 : vector<1x1x64xbf16> to vector<1x64xbf16>
    %562 = vector.shape_cast %559 : vector<1x64xbf16> to vector<1x1x64xbf16>
    tpu.vector_store %arg26[%c3_647, %c0_648, %c0_649], %562 {strides = array<i32>} : memref<5x5x64xbf16, #tpu.memory_space<vmem>>, vector<1x1x64xbf16>,
    %563 = vector.extract_strided_slice %518 {offsets = [2, 192], sizes = [1, 64], strides = [1, 1]} : vector<4x256xbf16> to vector<1x64xbf16>
    %c3_650 = arith.constant 3 : index
    %c1_651 = arith.constant 1 : index
    %c0_652 = arith.constant 0 : index
    %564 = vector.load %arg26[%c3_650, %c1_651, %c0_652] : memref<5x5x64xbf16, #tpu.memory_space<vmem>>, vector<1x1x64xbf16>
    %565 = vector.shape_cast %564 : vector<1x1x64xbf16> to vector<1x64xbf16>
    %566 = vector.shape_cast %563 : vector<1x64xbf16> to vector<1x1x64xbf16>
    tpu.vector_store %arg26[%c3_650, %c1_651, %c0_652], %566 {strides = array<i32>} : memref<5x5x64xbf16, #tpu.memory_space<vmem>>, vector<1x1x64xbf16>,
    %567 = vector.extract_strided_slice %518 {offsets = [3, 0], sizes = [1, 64], strides = [1, 1]} : vector<4x256xbf16> to vector<1x64xbf16>
    %c2_653 = arith.constant 2 : index
    %c2_654 = arith.constant 2 : index
    %c0_655 = arith.constant 0 : index
    %568 = vector.load %arg26[%c2_653, %c2_654, %c0_655] : memref<5x5x64xbf16, #tpu.memory_space<vmem>>, vector<1x1x64xbf16>
    %569 = vector.shape_cast %568 : vector<1x1x64xbf16> to vector<1x64xbf16>
    %570 = vector.shape_cast %567 : vector<1x64xbf16> to vector<1x1x64xbf16>
    tpu.vector_store %arg26[%c2_653, %c2_654, %c0_655], %570 {strides = array<i32>} : memref<5x5x64xbf16, #tpu.memory_space<vmem>>, vector<1x1x64xbf16>,
    %571 = vector.extract_strided_slice %518 {offsets = [3, 64], sizes = [1, 64], strides = [1, 1]} : vector<4x256xbf16> to vector<1x64xbf16>
    %c2_656 = arith.constant 2 : index
    %c3_657 = arith.constant 3 : index
    %c0_658 = arith.constant 0 : index
    %572 = vector.load %arg26[%c2_656, %c3_657, %c0_658] : memref<5x5x64xbf16, #tpu.memory_space<vmem>>, vector<1x1x64xbf16>
    %573 = vector.shape_cast %572 : vector<1x1x64xbf16> to vector<1x64xbf16>
    %574 = vector.shape_cast %571 : vector<1x64xbf16> to vector<1x1x64xbf16>
    tpu.vector_store %arg26[%c2_656, %c3_657, %c0_658], %574 {strides = array<i32>} : memref<5x5x64xbf16, #tpu.memory_space<vmem>>, vector<1x1x64xbf16>,
    %575 = vector.extract_strided_slice %518 {offsets = [3, 128], sizes = [1, 64], strides = [1, 1]} : vector<4x256xbf16> to vector<1x64xbf16>
    %c3_659 = arith.constant 3 : index
    %c2_660 = arith.constant 2 : index
    %c0_661 = arith.constant 0 : index
    %576 = vector.load %arg26[%c3_659, %c2_660, %c0_661] : memref<5x5x64xbf16, #tpu.memory_space<vmem>>, vector<1x1x64xbf16>
    %577 = vector.shape_cast %576 : vector<1x1x64xbf16> to vector<1x64xbf16>
    %578 = vector.shape_cast %575 : vector<1x64xbf16> to vector<1x1x64xbf16>
    tpu.vector_store %arg26[%c3_659, %c2_660, %c0_661], %578 {strides = array<i32>} : memref<5x5x64xbf16, #tpu.memory_space<vmem>>, vector<1x1x64xbf16>,
    %579 = vector.extract_strided_slice %518 {offsets = [3, 192], sizes = [1, 64], strides = [1, 1]} : vector<4x256xbf16> to vector<1x64xbf16>
    %c3_662 = arith.constant 3 : index
    %c3_663 = arith.constant 3 : index
    %c0_664 = arith.constant 0 : index
    %580 = vector.load %arg26[%c3_662, %c3_663, %c0_664] : memref<5x5x64xbf16, #tpu.memory_space<vmem>>, vector<1x1x64xbf16>
    %581 = vector.shape_cast %580 : vector<1x1x64xbf16> to vector<1x64xbf16>
    %582 = vector.shape_cast %579 : vector<1x64xbf16> to vector<1x1x64xbf16>
    tpu.vector_store %arg26[%c3_662, %c3_663, %c0_664], %582 {strides = array<i32>} : memref<5x5x64xbf16, #tpu.memory_space<vmem>>, vector<1x1x64xbf16>,
    %c0_665 = arith.constant 0 : index
    %c0_666 = arith.constant 0 : index
    %c0_667 = arith.constant 0 : index
    %583 = vector.load %arg26[%c0_665, %c0_666, %c0_667] : memref<5x5x64xbf16, #tpu.memory_space<vmem>>, vector<1x4x64xbf16>
    %584 = vector.shape_cast %583 : vector<1x4x64xbf16> to vector<4x64xbf16>
    %c0_668 = arith.constant 0 : index
    %c1_669 = arith.constant 1 : index
    %c0_670 = arith.constant 0 : index
    %585 = vector.load %arg26[%c0_668, %c1_669, %c0_670] : memref<5x5x64xbf16, #tpu.memory_space<vmem>>, vector<1x4x64xbf16>
    %586 = vector.shape_cast %585 : vector<1x4x64xbf16> to vector<4x64xbf16>
    %c1_671 = arith.constant 1 : index
    %c0_672 = arith.constant 0 : index
    %c0_673 = arith.constant 0 : index
    %587 = vector.load %arg26[%c1_671, %c0_672, %c0_673] : memref<5x5x64xbf16, #tpu.memory_space<vmem>>, vector<1x4x64xbf16>
    %588 = vector.shape_cast %587 : vector<1x4x64xbf16> to vector<4x64xbf16>
    %c1_674 = arith.constant 1 : index
    %c1_675 = arith.constant 1 : index
    %c0_676 = arith.constant 0 : index
    %589 = vector.load %arg26[%c1_674, %c1_675, %c0_676] : memref<5x5x64xbf16, #tpu.memory_space<vmem>>, vector<1x4x64xbf16>
    %590 = vector.shape_cast %589 : vector<1x4x64xbf16> to vector<4x64xbf16>
    %591 = tpu.concatenate %584, %586, %588, %590 in 1 : vector<4x64xbf16>, vector<4x64xbf16>, vector<4x64xbf16>, vector<4x64xbf16> -> vector<4x256xbf16>
    %c1_677 = arith.constant 1 : index
    %c0_678 = arith.constant 0 : index
    %c0_679 = arith.constant 0 : index
    %592 = vector.load %arg26[%c1_677, %c0_678, %c0_679] : memref<5x5x64xbf16, #tpu.memory_space<vmem>>, vector<1x4x64xbf16>
    %593 = vector.shape_cast %592 : vector<1x4x64xbf16> to vector<4x64xbf16>
    %c1_680 = arith.constant 1 : index
    %c1_681 = arith.constant 1 : index
    %c0_682 = arith.constant 0 : index
    %594 = vector.load %arg26[%c1_680, %c1_681, %c0_682] : memref<5x5x64xbf16, #tpu.memory_space<vmem>>, vector<1x4x64xbf16>
    %595 = vector.shape_cast %594 : vector<1x4x64xbf16> to vector<4x64xbf16>
    %c2_683 = arith.constant 2 : index
    %c0_684 = arith.constant 0 : index
    %c0_685 = arith.constant 0 : index
    %596 = vector.load %arg26[%c2_683, %c0_684, %c0_685] : memref<5x5x64xbf16, #tpu.memory_space<vmem>>, vector<1x4x64xbf16>
    %597 = vector.shape_cast %596 : vector<1x4x64xbf16> to vector<4x64xbf16>
    %c2_686 = arith.constant 2 : index
    %c1_687 = arith.constant 1 : index
    %c0_688 = arith.constant 0 : index
    %598 = vector.load %arg26[%c2_686, %c1_687, %c0_688] : memref<5x5x64xbf16, #tpu.memory_space<vmem>>, vector<1x4x64xbf16>
    %599 = vector.shape_cast %598 : vector<1x4x64xbf16> to vector<4x64xbf16>
    %600 = tpu.concatenate %593, %595, %597, %599 in 1 : vector<4x64xbf16>, vector<4x64xbf16>, vector<4x64xbf16>, vector<4x64xbf16> -> vector<4x256xbf16>
    %c2_689 = arith.constant 2 : index
    %c0_690 = arith.constant 0 : index
    %c0_691 = arith.constant 0 : index
    %601 = vector.load %arg26[%c2_689, %c0_690, %c0_691] : memref<5x5x64xbf16, #tpu.memory_space<vmem>>, vector<1x4x64xbf16>
    %602 = vector.shape_cast %601 : vector<1x4x64xbf16> to vector<4x64xbf16>
    %c2_692 = arith.constant 2 : index
    %c1_693 = arith.constant 1 : index
    %c0_694 = arith.constant 0 : index
    %603 = vector.load %arg26[%c2_692, %c1_693, %c0_694] : memref<5x5x64xbf16, #tpu.memory_space<vmem>>, vector<1x4x64xbf16>
    %604 = vector.shape_cast %603 : vector<1x4x64xbf16> to vector<4x64xbf16>
    %c3_695 = arith.constant 3 : index
    %c0_696 = arith.constant 0 : index
    %c0_697 = arith.constant 0 : index
    %605 = vector.load %arg26[%c3_695, %c0_696, %c0_697] : memref<5x5x64xbf16, #tpu.memory_space<vmem>>, vector<1x4x64xbf16>
    %606 = vector.shape_cast %605 : vector<1x4x64xbf16> to vector<4x64xbf16>
    %c3_698 = arith.constant 3 : index
    %c1_699 = arith.constant 1 : index
    %c0_700 = arith.constant 0 : index
    %607 = vector.load %arg26[%c3_698, %c1_699, %c0_700] : memref<5x5x64xbf16, #tpu.memory_space<vmem>>, vector<1x4x64xbf16>
    %608 = vector.shape_cast %607 : vector<1x4x64xbf16> to vector<4x64xbf16>
    %609 = tpu.concatenate %602, %604, %606, %608 in 1 : vector<4x64xbf16>, vector<4x64xbf16>, vector<4x64xbf16>, vector<4x64xbf16> -> vector<4x256xbf16>
    %c3_701 = arith.constant 3 : index
    %c0_702 = arith.constant 0 : index
    %c0_703 = arith.constant 0 : index
    %610 = vector.load %arg26[%c3_701, %c0_702, %c0_703] : memref<5x5x64xbf16, #tpu.memory_space<vmem>>, vector<1x4x64xbf16>
    %611 = vector.shape_cast %610 : vector<1x4x64xbf16> to vector<4x64xbf16>
    %c3_704 = arith.constant 3 : index
    %c1_705 = arith.constant 1 : index
    %c0_706 = arith.constant 0 : index
    %612 = vector.load %arg26[%c3_704, %c1_705, %c0_706] : memref<5x5x64xbf16, #tpu.memory_space<vmem>>, vector<1x4x64xbf16>
    %613 = vector.shape_cast %612 : vector<1x4x64xbf16> to vector<4x64xbf16>
    %c4_707 = arith.constant 4 : index
    %c0_708 = arith.constant 0 : index
    %c0_709 = arith.constant 0 : index
    %614 = vector.load %arg26[%c4_707, %c0_708, %c0_709] : memref<5x5x64xbf16, #tpu.memory_space<vmem>>, vector<1x4x64xbf16>
    %615 = vector.shape_cast %614 : vector<1x4x64xbf16> to vector<4x64xbf16>
    %c4_710 = arith.constant 4 : index
    %c1_711 = arith.constant 1 : index
    %c0_712 = arith.constant 0 : index
    %616 = vector.load %arg26[%c4_710, %c1_711, %c0_712] : memref<5x5x64xbf16, #tpu.memory_space<vmem>>, vector<1x4x64xbf16>
    %617 = vector.shape_cast %616 : vector<1x4x64xbf16> to vector<4x64xbf16>
    %618 = tpu.concatenate %611, %613, %615, %617 in 1 : vector<4x64xbf16>, vector<4x64xbf16>, vector<4x64xbf16>, vector<4x64xbf16> -> vector<4x256xbf16>
    %619 = tpu.concatenate %591, %600, %609, %618 in 0 : vector<4x256xbf16>, vector<4x256xbf16>, vector<4x256xbf16>, vector<4x256xbf16> -> vector<16x256xbf16>
    %c0_713 = arith.constant 0 : index
    %c0_714 = arith.constant 0 : index
    %620 = vector.load %arg14[%c0_713, %c0_714] : memref<256x128xbf16, #tpu.memory_space<vmem>>, vector<256x128xbf16>
    %cst_715 = arith.constant dense<0.000000e+00> : vector<16x128xf32>
    %621 = tpu.matmul %619, %620, %cst_715 {dimension_numbers = #tpu.dot_dimension_numbers<[1], [0], [0], [1], [0, 0, 1, 1], [], []>} : vector<16x256xbf16>, vector<256x128xbf16>, vector<16x128xf32> -> vector<16x128xf32>
    %c0_716 = arith.constant 0 : index
    %c0_717 = arith.constant 0 : index
    %622 = vector.load %arg15[%c0_716, %c0_717] : memref<1x128xf32, #tpu.memory_space<vmem>>, vector<1x128xf32>
    %623 = vector.broadcast %622 : vector<1x128xf32> to vector<16x128xf32>
    %624 = arith.mulf %621, %623 : vector<16x128xf32>
    %c0_718 = arith.constant 0 : index
    %c0_719 = arith.constant 0 : index
    %625 = vector.load %arg16[%c0_718, %c0_719] : memref<1x128xf32, #tpu.memory_space<vmem>>, vector<1x128xf32>
    %626 = vector.broadcast %625 : vector<1x128xf32> to vector<16x128xf32>
    %627 = arith.addf %624, %626 : vector<16x128xf32>
    %cst_720 = arith.constant 0.000000e+00 : f32
    %628 = vector.broadcast %cst_720 : f32 to vector<16x128xf32>
    %629 = arith.maximumf %627, %628 : vector<16x128xf32>
    %630 = arith.truncf %629 : vector<16x128xf32> to vector<16x128xbf16>
    %631 = vector.extract_strided_slice %630 {offsets = [0, 0], sizes = [1, 32], strides = [1, 1]} : vector<16x128xbf16> to vector<1x32xbf16>
    %c0_721 = arith.constant 0 : index
    %c0_722 = arith.constant 0 : index
    %c0_723 = arith.constant 0 : index
    %632 = vector.load %arg27[%c0_721, %c0_722, %c0_723] : memref<9x9x32xbf16, #tpu.memory_space<vmem>>, vector<1x1x32xbf16>
    %633 = vector.shape_cast %632 : vector<1x1x32xbf16> to vector<1x32xbf16>
    %634 = vector.shape_cast %631 : vector<1x32xbf16> to vector<1x1x32xbf16>
    tpu.vector_store %arg27[%c0_721, %c0_722, %c0_723], %634 {strides = array<i32>} : memref<9x9x32xbf16, #tpu.memory_space<vmem>>, vector<1x1x32xbf16>,
    %635 = vector.extract_strided_slice %630 {offsets = [0, 32], sizes = [1, 32], strides = [1, 1]} : vector<16x128xbf16> to vector<1x32xbf16>
    %c0_724 = arith.constant 0 : index
    %c1_725 = arith.constant 1 : index
    %c0_726 = arith.constant 0 : index
    %636 = vector.load %arg27[%c0_724, %c1_725, %c0_726] : memref<9x9x32xbf16, #tpu.memory_space<vmem>>, vector<1x1x32xbf16>
    %637 = vector.shape_cast %636 : vector<1x1x32xbf16> to vector<1x32xbf16>
    %638 = vector.shape_cast %635 : vector<1x32xbf16> to vector<1x1x32xbf16>
    tpu.vector_store %arg27[%c0_724, %c1_725, %c0_726], %638 {strides = array<i32>} : memref<9x9x32xbf16, #tpu.memory_space<vmem>>, vector<1x1x32xbf16>,
    %639 = vector.extract_strided_slice %630 {offsets = [0, 64], sizes = [1, 32], strides = [1, 1]} : vector<16x128xbf16> to vector<1x32xbf16>
    %c1_727 = arith.constant 1 : index
    %c0_728 = arith.constant 0 : index
    %c0_729 = arith.constant 0 : index
    %640 = vector.load %arg27[%c1_727, %c0_728, %c0_729] : memref<9x9x32xbf16, #tpu.memory_space<vmem>>, vector<1x1x32xbf16>
    %641 = vector.shape_cast %640 : vector<1x1x32xbf16> to vector<1x32xbf16>
    %642 = vector.shape_cast %639 : vector<1x32xbf16> to vector<1x1x32xbf16>
    tpu.vector_store %arg27[%c1_727, %c0_728, %c0_729], %642 {strides = array<i32>} : memref<9x9x32xbf16, #tpu.memory_space<vmem>>, vector<1x1x32xbf16>,
    %643 = vector.extract_strided_slice %630 {offsets = [0, 96], sizes = [1, 32], strides = [1, 1]} : vector<16x128xbf16> to vector<1x32xbf16>
    %c1_730 = arith.constant 1 : index
    %c1_731 = arith.constant 1 : index
    %c0_732 = arith.constant 0 : index
    %644 = vector.load %arg27[%c1_730, %c1_731, %c0_732] : memref<9x9x32xbf16, #tpu.memory_space<vmem>>, vector<1x1x32xbf16>
    %645 = vector.shape_cast %644 : vector<1x1x32xbf16> to vector<1x32xbf16>
    %646 = vector.shape_cast %643 : vector<1x32xbf16> to vector<1x1x32xbf16>
    tpu.vector_store %arg27[%c1_730, %c1_731, %c0_732], %646 {strides = array<i32>} : memref<9x9x32xbf16, #tpu.memory_space<vmem>>, vector<1x1x32xbf16>,
    %647 = vector.extract_strided_slice %630 {offsets = [1, 0], sizes = [1, 32], strides = [1, 1]} : vector<16x128xbf16> to vector<1x32xbf16>
    %c0_733 = arith.constant 0 : index
    %c2_734 = arith.constant 2 : index
    %c0_735 = arith.constant 0 : index
    %648 = vector.load %arg27[%c0_733, %c2_734, %c0_735] : memref<9x9x32xbf16, #tpu.memory_space<vmem>>, vector<1x1x32xbf16>
    %649 = vector.shape_cast %648 : vector<1x1x32xbf16> to vector<1x32xbf16>
    %650 = vector.shape_cast %647 : vector<1x32xbf16> to vector<1x1x32xbf16>
    tpu.vector_store %arg27[%c0_733, %c2_734, %c0_735], %650 {strides = array<i32>} : memref<9x9x32xbf16, #tpu.memory_space<vmem>>, vector<1x1x32xbf16>,
    %651 = vector.extract_strided_slice %630 {offsets = [1, 32], sizes = [1, 32], strides = [1, 1]} : vector<16x128xbf16> to vector<1x32xbf16>
    %c0_736 = arith.constant 0 : index
    %c3_737 = arith.constant 3 : index
    %c0_738 = arith.constant 0 : index
    %652 = vector.load %arg27[%c0_736, %c3_737, %c0_738] : memref<9x9x32xbf16, #tpu.memory_space<vmem>>, vector<1x1x32xbf16>
    %653 = vector.shape_cast %652 : vector<1x1x32xbf16> to vector<1x32xbf16>
    %654 = vector.shape_cast %651 : vector<1x32xbf16> to vector<1x1x32xbf16>
    tpu.vector_store %arg27[%c0_736, %c3_737, %c0_738], %654 {strides = array<i32>} : memref<9x9x32xbf16, #tpu.memory_space<vmem>>, vector<1x1x32xbf16>,
    %655 = vector.extract_strided_slice %630 {offsets = [1, 64], sizes = [1, 32], strides = [1, 1]} : vector<16x128xbf16> to vector<1x32xbf16>
    %c1_739 = arith.constant 1 : index
    %c2_740 = arith.constant 2 : index
    %c0_741 = arith.constant 0 : index
    %656 = vector.load %arg27[%c1_739, %c2_740, %c0_741] : memref<9x9x32xbf16, #tpu.memory_space<vmem>>, vector<1x1x32xbf16>
    %657 = vector.shape_cast %656 : vector<1x1x32xbf16> to vector<1x32xbf16>
    %658 = vector.shape_cast %655 : vector<1x32xbf16> to vector<1x1x32xbf16>
    tpu.vector_store %arg27[%c1_739, %c2_740, %c0_741], %658 {strides = array<i32>} : memref<9x9x32xbf16, #tpu.memory_space<vmem>>, vector<1x1x32xbf16>,
    %659 = vector.extract_strided_slice %630 {offsets = [1, 96], sizes = [1, 32], strides = [1, 1]} : vector<16x128xbf16> to vector<1x32xbf16>
    %c1_742 = arith.constant 1 : index
    %c3_743 = arith.constant 3 : index
    %c0_744 = arith.constant 0 : index
    %660 = vector.load %arg27[%c1_742, %c3_743, %c0_744] : memref<9x9x32xbf16, #tpu.memory_space<vmem>>, vector<1x1x32xbf16>
    %661 = vector.shape_cast %660 : vector<1x1x32xbf16> to vector<1x32xbf16>
    %662 = vector.shape_cast %659 : vector<1x32xbf16> to vector<1x1x32xbf16>
    tpu.vector_store %arg27[%c1_742, %c3_743, %c0_744], %662 {strides = array<i32>} : memref<9x9x32xbf16, #tpu.memory_space<vmem>>, vector<1x1x32xbf16>,
    %663 = vector.extract_strided_slice %630 {offsets = [2, 0], sizes = [1, 32], strides = [1, 1]} : vector<16x128xbf16> to vector<1x32xbf16>
    %c0_745 = arith.constant 0 : index
    %c4_746 = arith.constant 4 : index
    %c0_747 = arith.constant 0 : index
    %664 = vector.load %arg27[%c0_745, %c4_746, %c0_747] : memref<9x9x32xbf16, #tpu.memory_space<vmem>>, vector<1x1x32xbf16>
    %665 = vector.shape_cast %664 : vector<1x1x32xbf16> to vector<1x32xbf16>
    %666 = vector.shape_cast %663 : vector<1x32xbf16> to vector<1x1x32xbf16>
    tpu.vector_store %arg27[%c0_745, %c4_746, %c0_747], %666 {strides = array<i32>} : memref<9x9x32xbf16, #tpu.memory_space<vmem>>, vector<1x1x32xbf16>,
    %667 = vector.extract_strided_slice %630 {offsets = [2, 32], sizes = [1, 32], strides = [1, 1]} : vector<16x128xbf16> to vector<1x32xbf16>
    %c0_748 = arith.constant 0 : index
    %c5 = arith.constant 5 : index
    %c0_749 = arith.constant 0 : index
    %668 = vector.load %arg27[%c0_748, %c5, %c0_749] : memref<9x9x32xbf16, #tpu.memory_space<vmem>>, vector<1x1x32xbf16>
    %669 = vector.shape_cast %668 : vector<1x1x32xbf16> to vector<1x32xbf16>
    %670 = vector.shape_cast %667 : vector<1x32xbf16> to vector<1x1x32xbf16>
    tpu.vector_store %arg27[%c0_748, %c5, %c0_749], %670 {strides = array<i32>} : memref<9x9x32xbf16, #tpu.memory_space<vmem>>, vector<1x1x32xbf16>,
    %671 = vector.extract_strided_slice %630 {offsets = [2, 64], sizes = [1, 32], strides = [1, 1]} : vector<16x128xbf16> to vector<1x32xbf16>
    %c1_750 = arith.constant 1 : index
    %c4_751 = arith.constant 4 : index
    %c0_752 = arith.constant 0 : index
    %672 = vector.load %arg27[%c1_750, %c4_751, %c0_752] : memref<9x9x32xbf16, #tpu.memory_space<vmem>>, vector<1x1x32xbf16>
    %673 = vector.shape_cast %672 : vector<1x1x32xbf16> to vector<1x32xbf16>
    %674 = vector.shape_cast %671 : vector<1x32xbf16> to vector<1x1x32xbf16>
    tpu.vector_store %arg27[%c1_750, %c4_751, %c0_752], %674 {strides = array<i32>} : memref<9x9x32xbf16, #tpu.memory_space<vmem>>, vector<1x1x32xbf16>,
    %675 = vector.extract_strided_slice %630 {offsets = [2, 96], sizes = [1, 32], strides = [1, 1]} : vector<16x128xbf16> to vector<1x32xbf16>
    %c1_753 = arith.constant 1 : index
    %c5_754 = arith.constant 5 : index
    %c0_755 = arith.constant 0 : index
    %676 = vector.load %arg27[%c1_753, %c5_754, %c0_755] : memref<9x9x32xbf16, #tpu.memory_space<vmem>>, vector<1x1x32xbf16>
    %677 = vector.shape_cast %676 : vector<1x1x32xbf16> to vector<1x32xbf16>
    %678 = vector.shape_cast %675 : vector<1x32xbf16> to vector<1x1x32xbf16>
    tpu.vector_store %arg27[%c1_753, %c5_754, %c0_755], %678 {strides = array<i32>} : memref<9x9x32xbf16, #tpu.memory_space<vmem>>, vector<1x1x32xbf16>,
    %679 = vector.extract_strided_slice %630 {offsets = [3, 0], sizes = [1, 32], strides = [1, 1]} : vector<16x128xbf16> to vector<1x32xbf16>
    %c0_756 = arith.constant 0 : index
    %c6 = arith.constant 6 : index
    %c0_757 = arith.constant 0 : index
    %680 = vector.load %arg27[%c0_756, %c6, %c0_757] : memref<9x9x32xbf16, #tpu.memory_space<vmem>>, vector<1x1x32xbf16>
    %681 = vector.shape_cast %680 : vector<1x1x32xbf16> to vector<1x32xbf16>
    %682 = vector.shape_cast %679 : vector<1x32xbf16> to vector<1x1x32xbf16>
    tpu.vector_store %arg27[%c0_756, %c6, %c0_757], %682 {strides = array<i32>} : memref<9x9x32xbf16, #tpu.memory_space<vmem>>, vector<1x1x32xbf16>,
    %683 = vector.extract_strided_slice %630 {offsets = [3, 32], sizes = [1, 32], strides = [1, 1]} : vector<16x128xbf16> to vector<1x32xbf16>
    %c0_758 = arith.constant 0 : index
    %c7 = arith.constant 7 : index
    %c0_759 = arith.constant 0 : index
    %684 = vector.load %arg27[%c0_758, %c7, %c0_759] : memref<9x9x32xbf16, #tpu.memory_space<vmem>>, vector<1x1x32xbf16>
    %685 = vector.shape_cast %684 : vector<1x1x32xbf16> to vector<1x32xbf16>
    %686 = vector.shape_cast %683 : vector<1x32xbf16> to vector<1x1x32xbf16>
    tpu.vector_store %arg27[%c0_758, %c7, %c0_759], %686 {strides = array<i32>} : memref<9x9x32xbf16, #tpu.memory_space<vmem>>, vector<1x1x32xbf16>,
    %687 = vector.extract_strided_slice %630 {offsets = [3, 64], sizes = [1, 32], strides = [1, 1]} : vector<16x128xbf16> to vector<1x32xbf16>
    %c1_760 = arith.constant 1 : index
    %c6_761 = arith.constant 6 : index
    %c0_762 = arith.constant 0 : index
    %688 = vector.load %arg27[%c1_760, %c6_761, %c0_762] : memref<9x9x32xbf16, #tpu.memory_space<vmem>>, vector<1x1x32xbf16>
    %689 = vector.shape_cast %688 : vector<1x1x32xbf16> to vector<1x32xbf16>
    %690 = vector.shape_cast %687 : vector<1x32xbf16> to vector<1x1x32xbf16>
    tpu.vector_store %arg27[%c1_760, %c6_761, %c0_762], %690 {strides = array<i32>} : memref<9x9x32xbf16, #tpu.memory_space<vmem>>, vector<1x1x32xbf16>,
    %691 = vector.extract_strided_slice %630 {offsets = [3, 96], sizes = [1, 32], strides = [1, 1]} : vector<16x128xbf16> to vector<1x32xbf16>
    %c1_763 = arith.constant 1 : index
    %c7_764 = arith.constant 7 : index
    %c0_765 = arith.constant 0 : index
    %692 = vector.load %arg27[%c1_763, %c7_764, %c0_765] : memref<9x9x32xbf16, #tpu.memory_space<vmem>>, vector<1x1x32xbf16>
    %693 = vector.shape_cast %692 : vector<1x1x32xbf16> to vector<1x32xbf16>
    %694 = vector.shape_cast %691 : vector<1x32xbf16> to vector<1x1x32xbf16>
    tpu.vector_store %arg27[%c1_763, %c7_764, %c0_765], %694 {strides = array<i32>} : memref<9x9x32xbf16, #tpu.memory_space<vmem>>, vector<1x1x32xbf16>,
    %695 = vector.extract_strided_slice %630 {offsets = [4, 0], sizes = [1, 32], strides = [1, 1]} : vector<16x128xbf16> to vector<1x32xbf16>
    %c2_766 = arith.constant 2 : index
    %c0_767 = arith.constant 0 : index
    %c0_768 = arith.constant 0 : index
    %696 = vector.load %arg27[%c2_766, %c0_767, %c0_768] : memref<9x9x32xbf16, #tpu.memory_space<vmem>>, vector<1x1x32xbf16>
    %697 = vector.shape_cast %696 : vector<1x1x32xbf16> to vector<1x32xbf16>
    %698 = vector.shape_cast %695 : vector<1x32xbf16> to vector<1x1x32xbf16>
    tpu.vector_store %arg27[%c2_766, %c0_767, %c0_768], %698 {strides = array<i32>} : memref<9x9x32xbf16, #tpu.memory_space<vmem>>, vector<1x1x32xbf16>,
    %699 = vector.extract_strided_slice %630 {offsets = [4, 32], sizes = [1, 32], strides = [1, 1]} : vector<16x128xbf16> to vector<1x32xbf16>
    %c2_769 = arith.constant 2 : index
    %c1_770 = arith.constant 1 : index
    %c0_771 = arith.constant 0 : index
    %700 = vector.load %arg27[%c2_769, %c1_770, %c0_771] : memref<9x9x32xbf16, #tpu.memory_space<vmem>>, vector<1x1x32xbf16>
    %701 = vector.shape_cast %700 : vector<1x1x32xbf16> to vector<1x32xbf16>
    %702 = vector.shape_cast %699 : vector<1x32xbf16> to vector<1x1x32xbf16>
    tpu.vector_store %arg27[%c2_769, %c1_770, %c0_771], %702 {strides = array<i32>} : memref<9x9x32xbf16, #tpu.memory_space<vmem>>, vector<1x1x32xbf16>,
    %703 = vector.extract_strided_slice %630 {offsets = [4, 64], sizes = [1, 32], strides = [1, 1]} : vector<16x128xbf16> to vector<1x32xbf16>
    %c3_772 = arith.constant 3 : index
    %c0_773 = arith.constant 0 : index
    %c0_774 = arith.constant 0 : index
    %704 = vector.load %arg27[%c3_772, %c0_773, %c0_774] : memref<9x9x32xbf16, #tpu.memory_space<vmem>>, vector<1x1x32xbf16>
    %705 = vector.shape_cast %704 : vector<1x1x32xbf16> to vector<1x32xbf16>
    %706 = vector.shape_cast %703 : vector<1x32xbf16> to vector<1x1x32xbf16>
    tpu.vector_store %arg27[%c3_772, %c0_773, %c0_774], %706 {strides = array<i32>} : memref<9x9x32xbf16, #tpu.memory_space<vmem>>, vector<1x1x32xbf16>,
    %707 = vector.extract_strided_slice %630 {offsets = [4, 96], sizes = [1, 32], strides = [1, 1]} : vector<16x128xbf16> to vector<1x32xbf16>
    %c3_775 = arith.constant 3 : index
    %c1_776 = arith.constant 1 : index
    %c0_777 = arith.constant 0 : index
    %708 = vector.load %arg27[%c3_775, %c1_776, %c0_777] : memref<9x9x32xbf16, #tpu.memory_space<vmem>>, vector<1x1x32xbf16>
    %709 = vector.shape_cast %708 : vector<1x1x32xbf16> to vector<1x32xbf16>
    %710 = vector.shape_cast %707 : vector<1x32xbf16> to vector<1x1x32xbf16>
    tpu.vector_store %arg27[%c3_775, %c1_776, %c0_777], %710 {strides = array<i32>} : memref<9x9x32xbf16, #tpu.memory_space<vmem>>, vector<1x1x32xbf16>,
    %711 = vector.extract_strided_slice %630 {offsets = [5, 0], sizes = [1, 32], strides = [1, 1]} : vector<16x128xbf16> to vector<1x32xbf16>
    %c2_778 = arith.constant 2 : index
    %c2_779 = arith.constant 2 : index
    %c0_780 = arith.constant 0 : index
    %712 = vector.load %arg27[%c2_778, %c2_779, %c0_780] : memref<9x9x32xbf16, #tpu.memory_space<vmem>>, vector<1x1x32xbf16>
    %713 = vector.shape_cast %712 : vector<1x1x32xbf16> to vector<1x32xbf16>
    %714 = vector.shape_cast %711 : vector<1x32xbf16> to vector<1x1x32xbf16>
    tpu.vector_store %arg27[%c2_778, %c2_779, %c0_780], %714 {strides = array<i32>} : memref<9x9x32xbf16, #tpu.memory_space<vmem>>, vector<1x1x32xbf16>,
    %715 = vector.extract_strided_slice %630 {offsets = [5, 32], sizes = [1, 32], strides = [1, 1]} : vector<16x128xbf16> to vector<1x32xbf16>
    %c2_781 = arith.constant 2 : index
    %c3_782 = arith.constant 3 : index
    %c0_783 = arith.constant 0 : index
    %716 = vector.load %arg27[%c2_781, %c3_782, %c0_783] : memref<9x9x32xbf16, #tpu.memory_space<vmem>>, vector<1x1x32xbf16>
    %717 = vector.shape_cast %716 : vector<1x1x32xbf16> to vector<1x32xbf16>
    %718 = vector.shape_cast %715 : vector<1x32xbf16> to vector<1x1x32xbf16>
    tpu.vector_store %arg27[%c2_781, %c3_782, %c0_783], %718 {strides = array<i32>} : memref<9x9x32xbf16, #tpu.memory_space<vmem>>, vector<1x1x32xbf16>,
    %719 = vector.extract_strided_slice %630 {offsets = [5, 64], sizes = [1, 32], strides = [1, 1]} : vector<16x128xbf16> to vector<1x32xbf16>
    %c3_784 = arith.constant 3 : index
    %c2_785 = arith.constant 2 : index
    %c0_786 = arith.constant 0 : index
    %720 = vector.load %arg27[%c3_784, %c2_785, %c0_786] : memref<9x9x32xbf16, #tpu.memory_space<vmem>>, vector<1x1x32xbf16>
    %721 = vector.shape_cast %720 : vector<1x1x32xbf16> to vector<1x32xbf16>
    %722 = vector.shape_cast %719 : vector<1x32xbf16> to vector<1x1x32xbf16>
    tpu.vector_store %arg27[%c3_784, %c2_785, %c0_786], %722 {strides = array<i32>} : memref<9x9x32xbf16, #tpu.memory_space<vmem>>, vector<1x1x32xbf16>,
    %723 = vector.extract_strided_slice %630 {offsets = [5, 96], sizes = [1, 32], strides = [1, 1]} : vector<16x128xbf16> to vector<1x32xbf16>
    %c3_787 = arith.constant 3 : index
    %c3_788 = arith.constant 3 : index
    %c0_789 = arith.constant 0 : index
    %724 = vector.load %arg27[%c3_787, %c3_788, %c0_789] : memref<9x9x32xbf16, #tpu.memory_space<vmem>>, vector<1x1x32xbf16>
    %725 = vector.shape_cast %724 : vector<1x1x32xbf16> to vector<1x32xbf16>
    %726 = vector.shape_cast %723 : vector<1x32xbf16> to vector<1x1x32xbf16>
    tpu.vector_store %arg27[%c3_787, %c3_788, %c0_789], %726 {strides = array<i32>} : memref<9x9x32xbf16, #tpu.memory_space<vmem>>, vector<1x1x32xbf16>,
    %727 = vector.extract_strided_slice %630 {offsets = [6, 0], sizes = [1, 32], strides = [1, 1]} : vector<16x128xbf16> to vector<1x32xbf16>
    %c2_790 = arith.constant 2 : index
    %c4_791 = arith.constant 4 : index
    %c0_792 = arith.constant 0 : index
    %728 = vector.load %arg27[%c2_790, %c4_791, %c0_792] : memref<9x9x32xbf16, #tpu.memory_space<vmem>>, vector<1x1x32xbf16>
    %729 = vector.shape_cast %728 : vector<1x1x32xbf16> to vector<1x32xbf16>
    %730 = vector.shape_cast %727 : vector<1x32xbf16> to vector<1x1x32xbf16>
    tpu.vector_store %arg27[%c2_790, %c4_791, %c0_792], %730 {strides = array<i32>} : memref<9x9x32xbf16, #tpu.memory_space<vmem>>, vector<1x1x32xbf16>,
    %731 = vector.extract_strided_slice %630 {offsets = [6, 32], sizes = [1, 32], strides = [1, 1]} : vector<16x128xbf16> to vector<1x32xbf16>
    %c2_793 = arith.constant 2 : index
    %c5_794 = arith.constant 5 : index
    %c0_795 = arith.constant 0 : index
    %732 = vector.load %arg27[%c2_793, %c5_794, %c0_795] : memref<9x9x32xbf16, #tpu.memory_space<vmem>>, vector<1x1x32xbf16>
    %733 = vector.shape_cast %732 : vector<1x1x32xbf16> to vector<1x32xbf16>
    %734 = vector.shape_cast %731 : vector<1x32xbf16> to vector<1x1x32xbf16>
    tpu.vector_store %arg27[%c2_793, %c5_794, %c0_795], %734 {strides = array<i32>} : memref<9x9x32xbf16, #tpu.memory_space<vmem>>, vector<1x1x32xbf16>,
    %735 = vector.extract_strided_slice %630 {offsets = [6, 64], sizes = [1, 32], strides = [1, 1]} : vector<16x128xbf16> to vector<1x32xbf16>
    %c3_796 = arith.constant 3 : index
    %c4_797 = arith.constant 4 : index
    %c0_798 = arith.constant 0 : index
    %736 = vector.load %arg27[%c3_796, %c4_797, %c0_798] : memref<9x9x32xbf16, #tpu.memory_space<vmem>>, vector<1x1x32xbf16>
    %737 = vector.shape_cast %736 : vector<1x1x32xbf16> to vector<1x32xbf16>
    %738 = vector.shape_cast %735 : vector<1x32xbf16> to vector<1x1x32xbf16>
    tpu.vector_store %arg27[%c3_796, %c4_797, %c0_798], %738 {strides = array<i32>} : memref<9x9x32xbf16, #tpu.memory_space<vmem>>, vector<1x1x32xbf16>,
    %739 = vector.extract_strided_slice %630 {offsets = [6, 96], sizes = [1, 32], strides = [1, 1]} : vector<16x128xbf16> to vector<1x32xbf16>
    %c3_799 = arith.constant 3 : index
    %c5_800 = arith.constant 5 : index
    %c0_801 = arith.constant 0 : index
    %740 = vector.load %arg27[%c3_799, %c5_800, %c0_801] : memref<9x9x32xbf16, #tpu.memory_space<vmem>>, vector<1x1x32xbf16>
    %741 = vector.shape_cast %740 : vector<1x1x32xbf16> to vector<1x32xbf16>
    %742 = vector.shape_cast %739 : vector<1x32xbf16> to vector<1x1x32xbf16>
    tpu.vector_store %arg27[%c3_799, %c5_800, %c0_801], %742 {strides = array<i32>} : memref<9x9x32xbf16, #tpu.memory_space<vmem>>, vector<1x1x32xbf16>,
    %743 = vector.extract_strided_slice %630 {offsets = [7, 0], sizes = [1, 32], strides = [1, 1]} : vector<16x128xbf16> to vector<1x32xbf16>
    %c2_802 = arith.constant 2 : index
    %c6_803 = arith.constant 6 : index
    %c0_804 = arith.constant 0 : index
    %744 = vector.load %arg27[%c2_802, %c6_803, %c0_804] : memref<9x9x32xbf16, #tpu.memory_space<vmem>>, vector<1x1x32xbf16>
    %745 = vector.shape_cast %744 : vector<1x1x32xbf16> to vector<1x32xbf16>
    %746 = vector.shape_cast %743 : vector<1x32xbf16> to vector<1x1x32xbf16>
    tpu.vector_store %arg27[%c2_802, %c6_803, %c0_804], %746 {strides = array<i32>} : memref<9x9x32xbf16, #tpu.memory_space<vmem>>, vector<1x1x32xbf16>,
    %747 = vector.extract_strided_slice %630 {offsets = [7, 32], sizes = [1, 32], strides = [1, 1]} : vector<16x128xbf16> to vector<1x32xbf16>
    %c2_805 = arith.constant 2 : index
    %c7_806 = arith.constant 7 : index
    %c0_807 = arith.constant 0 : index
    %748 = vector.load %arg27[%c2_805, %c7_806, %c0_807] : memref<9x9x32xbf16, #tpu.memory_space<vmem>>, vector<1x1x32xbf16>
    %749 = vector.shape_cast %748 : vector<1x1x32xbf16> to vector<1x32xbf16>
    %750 = vector.shape_cast %747 : vector<1x32xbf16> to vector<1x1x32xbf16>
    tpu.vector_store %arg27[%c2_805, %c7_806, %c0_807], %750 {strides = array<i32>} : memref<9x9x32xbf16, #tpu.memory_space<vmem>>, vector<1x1x32xbf16>,
    %751 = vector.extract_strided_slice %630 {offsets = [7, 64], sizes = [1, 32], strides = [1, 1]} : vector<16x128xbf16> to vector<1x32xbf16>
    %c3_808 = arith.constant 3 : index
    %c6_809 = arith.constant 6 : index
    %c0_810 = arith.constant 0 : index
    %752 = vector.load %arg27[%c3_808, %c6_809, %c0_810] : memref<9x9x32xbf16, #tpu.memory_space<vmem>>, vector<1x1x32xbf16>
    %753 = vector.shape_cast %752 : vector<1x1x32xbf16> to vector<1x32xbf16>
    %754 = vector.shape_cast %751 : vector<1x32xbf16> to vector<1x1x32xbf16>
    tpu.vector_store %arg27[%c3_808, %c6_809, %c0_810], %754 {strides = array<i32>} : memref<9x9x32xbf16, #tpu.memory_space<vmem>>, vector<1x1x32xbf16>,
    %755 = vector.extract_strided_slice %630 {offsets = [7, 96], sizes = [1, 32], strides = [1, 1]} : vector<16x128xbf16> to vector<1x32xbf16>
    %c3_811 = arith.constant 3 : index
    %c7_812 = arith.constant 7 : index
    %c0_813 = arith.constant 0 : index
    %756 = vector.load %arg27[%c3_811, %c7_812, %c0_813] : memref<9x9x32xbf16, #tpu.memory_space<vmem>>, vector<1x1x32xbf16>
    %757 = vector.shape_cast %756 : vector<1x1x32xbf16> to vector<1x32xbf16>
    %758 = vector.shape_cast %755 : vector<1x32xbf16> to vector<1x1x32xbf16>
    tpu.vector_store %arg27[%c3_811, %c7_812, %c0_813], %758 {strides = array<i32>} : memref<9x9x32xbf16, #tpu.memory_space<vmem>>, vector<1x1x32xbf16>,
    %759 = vector.extract_strided_slice %630 {offsets = [8, 0], sizes = [1, 32], strides = [1, 1]} : vector<16x128xbf16> to vector<1x32xbf16>
    %c4_814 = arith.constant 4 : index
    %c0_815 = arith.constant 0 : index
    %c0_816 = arith.constant 0 : index
    %760 = vector.load %arg27[%c4_814, %c0_815, %c0_816] : memref<9x9x32xbf16, #tpu.memory_space<vmem>>, vector<1x1x32xbf16>
    %761 = vector.shape_cast %760 : vector<1x1x32xbf16> to vector<1x32xbf16>
    %762 = vector.shape_cast %759 : vector<1x32xbf16> to vector<1x1x32xbf16>
    tpu.vector_store %arg27[%c4_814, %c0_815, %c0_816], %762 {strides = array<i32>} : memref<9x9x32xbf16, #tpu.memory_space<vmem>>, vector<1x1x32xbf16>,
    %763 = vector.extract_strided_slice %630 {offsets = [8, 32], sizes = [1, 32], strides = [1, 1]} : vector<16x128xbf16> to vector<1x32xbf16>
    %c4_817 = arith.constant 4 : index
    %c1_818 = arith.constant 1 : index
    %c0_819 = arith.constant 0 : index
    %764 = vector.load %arg27[%c4_817, %c1_818, %c0_819] : memref<9x9x32xbf16, #tpu.memory_space<vmem>>, vector<1x1x32xbf16>
    %765 = vector.shape_cast %764 : vector<1x1x32xbf16> to vector<1x32xbf16>
    %766 = vector.shape_cast %763 : vector<1x32xbf16> to vector<1x1x32xbf16>
    tpu.vector_store %arg27[%c4_817, %c1_818, %c0_819], %766 {strides = array<i32>} : memref<9x9x32xbf16, #tpu.memory_space<vmem>>, vector<1x1x32xbf16>,
    %767 = vector.extract_strided_slice %630 {offsets = [8, 64], sizes = [1, 32], strides = [1, 1]} : vector<16x128xbf16> to vector<1x32xbf16>
    %c5_820 = arith.constant 5 : index
    %c0_821 = arith.constant 0 : index
    %c0_822 = arith.constant 0 : index
    %768 = vector.load %arg27[%c5_820, %c0_821, %c0_822] : memref<9x9x32xbf16, #tpu.memory_space<vmem>>, vector<1x1x32xbf16>
    %769 = vector.shape_cast %768 : vector<1x1x32xbf16> to vector<1x32xbf16>
    %770 = vector.shape_cast %767 : vector<1x32xbf16> to vector<1x1x32xbf16>
    tpu.vector_store %arg27[%c5_820, %c0_821, %c0_822], %770 {strides = array<i32>} : memref<9x9x32xbf16, #tpu.memory_space<vmem>>, vector<1x1x32xbf16>,
    %771 = vector.extract_strided_slice %630 {offsets = [8, 96], sizes = [1, 32], strides = [1, 1]} : vector<16x128xbf16> to vector<1x32xbf16>
    %c5_823 = arith.constant 5 : index
    %c1_824 = arith.constant 1 : index
    %c0_825 = arith.constant 0 : index
    %772 = vector.load %arg27[%c5_823, %c1_824, %c0_825] : memref<9x9x32xbf16, #tpu.memory_space<vmem>>, vector<1x1x32xbf16>
    %773 = vector.shape_cast %772 : vector<1x1x32xbf16> to vector<1x32xbf16>
    %774 = vector.shape_cast %771 : vector<1x32xbf16> to vector<1x1x32xbf16>
    tpu.vector_store %arg27[%c5_823, %c1_824, %c0_825], %774 {strides = array<i32>} : memref<9x9x32xbf16, #tpu.memory_space<vmem>>, vector<1x1x32xbf16>,
    %775 = vector.extract_strided_slice %630 {offsets = [9, 0], sizes = [1, 32], strides = [1, 1]} : vector<16x128xbf16> to vector<1x32xbf16>
    %c4_826 = arith.constant 4 : index
    %c2_827 = arith.constant 2 : index
    %c0_828 = arith.constant 0 : index
    %776 = vector.load %arg27[%c4_826, %c2_827, %c0_828] : memref<9x9x32xbf16, #tpu.memory_space<vmem>>, vector<1x1x32xbf16>
    %777 = vector.shape_cast %776 : vector<1x1x32xbf16> to vector<1x32xbf16>
    %778 = vector.shape_cast %775 : vector<1x32xbf16> to vector<1x1x32xbf16>
    tpu.vector_store %arg27[%c4_826, %c2_827, %c0_828], %778 {strides = array<i32>} : memref<9x9x32xbf16, #tpu.memory_space<vmem>>, vector<1x1x32xbf16>,
    %779 = vector.extract_strided_slice %630 {offsets = [9, 32], sizes = [1, 32], strides = [1, 1]} : vector<16x128xbf16> to vector<1x32xbf16>
    %c4_829 = arith.constant 4 : index
    %c3_830 = arith.constant 3 : index
    %c0_831 = arith.constant 0 : index
    %780 = vector.load %arg27[%c4_829, %c3_830, %c0_831] : memref<9x9x32xbf16, #tpu.memory_space<vmem>>, vector<1x1x32xbf16>
    %781 = vector.shape_cast %780 : vector<1x1x32xbf16> to vector<1x32xbf16>
    %782 = vector.shape_cast %779 : vector<1x32xbf16> to vector<1x1x32xbf16>
    tpu.vector_store %arg27[%c4_829, %c3_830, %c0_831], %782 {strides = array<i32>} : memref<9x9x32xbf16, #tpu.memory_space<vmem>>, vector<1x1x32xbf16>,
    %783 = vector.extract_strided_slice %630 {offsets = [9, 64], sizes = [1, 32], strides = [1, 1]} : vector<16x128xbf16> to vector<1x32xbf16>
    %c5_832 = arith.constant 5 : index
    %c2_833 = arith.constant 2 : index
    %c0_834 = arith.constant 0 : index
    %784 = vector.load %arg27[%c5_832, %c2_833, %c0_834] : memref<9x9x32xbf16, #tpu.memory_space<vmem>>, vector<1x1x32xbf16>
    %785 = vector.shape_cast %784 : vector<1x1x32xbf16> to vector<1x32xbf16>
    %786 = vector.shape_cast %783 : vector<1x32xbf16> to vector<1x1x32xbf16>
    tpu.vector_store %arg27[%c5_832, %c2_833, %c0_834], %786 {strides = array<i32>} : memref<9x9x32xbf16, #tpu.memory_space<vmem>>, vector<1x1x32xbf16>,
    %787 = vector.extract_strided_slice %630 {offsets = [9, 96], sizes = [1, 32], strides = [1, 1]} : vector<16x128xbf16> to vector<1x32xbf16>
    %c5_835 = arith.constant 5 : index
    %c3_836 = arith.constant 3 : index
    %c0_837 = arith.constant 0 : index
    %788 = vector.load %arg27[%c5_835, %c3_836, %c0_837] : memref<9x9x32xbf16, #tpu.memory_space<vmem>>, vector<1x1x32xbf16>
    %789 = vector.shape_cast %788 : vector<1x1x32xbf16> to vector<1x32xbf16>
    %790 = vector.shape_cast %787 : vector<1x32xbf16> to vector<1x1x32xbf16>
    tpu.vector_store %arg27[%c5_835, %c3_836, %c0_837], %790 {strides = array<i32>} : memref<9x9x32xbf16, #tpu.memory_space<vmem>>, vector<1x1x32xbf16>,
    %791 = vector.extract_strided_slice %630 {offsets = [10, 0], sizes = [1, 32], strides = [1, 1]} : vector<16x128xbf16> to vector<1x32xbf16>
    %c4_838 = arith.constant 4 : index
    %c4_839 = arith.constant 4 : index
    %c0_840 = arith.constant 0 : index
    %792 = vector.load %arg27[%c4_838, %c4_839, %c0_840] : memref<9x9x32xbf16, #tpu.memory_space<vmem>>, vector<1x1x32xbf16>
    %793 = vector.shape_cast %792 : vector<1x1x32xbf16> to vector<1x32xbf16>
    %794 = vector.shape_cast %791 : vector<1x32xbf16> to vector<1x1x32xbf16>
    tpu.vector_store %arg27[%c4_838, %c4_839, %c0_840], %794 {strides = array<i32>} : memref<9x9x32xbf16, #tpu.memory_space<vmem>>, vector<1x1x32xbf16>,
    %795 = vector.extract_strided_slice %630 {offsets = [10, 32], sizes = [1, 32], strides = [1, 1]} : vector<16x128xbf16> to vector<1x32xbf16>
    %c4_841 = arith.constant 4 : index
    %c5_842 = arith.constant 5 : index
    %c0_843 = arith.constant 0 : index
    %796 = vector.load %arg27[%c4_841, %c5_842, %c0_843] : memref<9x9x32xbf16, #tpu.memory_space<vmem>>, vector<1x1x32xbf16>
    %797 = vector.shape_cast %796 : vector<1x1x32xbf16> to vector<1x32xbf16>
    %798 = vector.shape_cast %795 : vector<1x32xbf16> to vector<1x1x32xbf16>
    tpu.vector_store %arg27[%c4_841, %c5_842, %c0_843], %798 {strides = array<i32>} : memref<9x9x32xbf16, #tpu.memory_space<vmem>>, vector<1x1x32xbf16>,
    %799 = vector.extract_strided_slice %630 {offsets = [10, 64], sizes = [1, 32], strides = [1, 1]} : vector<16x128xbf16> to vector<1x32xbf16>
    %c5_844 = arith.constant 5 : index
    %c4_845 = arith.constant 4 : index
    %c0_846 = arith.constant 0 : index
    %800 = vector.load %arg27[%c5_844, %c4_845, %c0_846] : memref<9x9x32xbf16, #tpu.memory_space<vmem>>, vector<1x1x32xbf16>
    %801 = vector.shape_cast %800 : vector<1x1x32xbf16> to vector<1x32xbf16>
    %802 = vector.shape_cast %799 : vector<1x32xbf16> to vector<1x1x32xbf16>
    tpu.vector_store %arg27[%c5_844, %c4_845, %c0_846], %802 {strides = array<i32>} : memref<9x9x32xbf16, #tpu.memory_space<vmem>>, vector<1x1x32xbf16>,
    %803 = vector.extract_strided_slice %630 {offsets = [10, 96], sizes = [1, 32], strides = [1, 1]} : vector<16x128xbf16> to vector<1x32xbf16>
    %c5_847 = arith.constant 5 : index
    %c5_848 = arith.constant 5 : index
    %c0_849 = arith.constant 0 : index
    %804 = vector.load %arg27[%c5_847, %c5_848, %c0_849] : memref<9x9x32xbf16, #tpu.memory_space<vmem>>, vector<1x1x32xbf16>
    %805 = vector.shape_cast %804 : vector<1x1x32xbf16> to vector<1x32xbf16>
    %806 = vector.shape_cast %803 : vector<1x32xbf16> to vector<1x1x32xbf16>
    tpu.vector_store %arg27[%c5_847, %c5_848, %c0_849], %806 {strides = array<i32>} : memref<9x9x32xbf16, #tpu.memory_space<vmem>>, vector<1x1x32xbf16>,
    %807 = vector.extract_strided_slice %630 {offsets = [11, 0], sizes = [1, 32], strides = [1, 1]} : vector<16x128xbf16> to vector<1x32xbf16>
    %c4_850 = arith.constant 4 : index
    %c6_851 = arith.constant 6 : index
    %c0_852 = arith.constant 0 : index
    %808 = vector.load %arg27[%c4_850, %c6_851, %c0_852] : memref<9x9x32xbf16, #tpu.memory_space<vmem>>, vector<1x1x32xbf16>
    %809 = vector.shape_cast %808 : vector<1x1x32xbf16> to vector<1x32xbf16>
    %810 = vector.shape_cast %807 : vector<1x32xbf16> to vector<1x1x32xbf16>
    tpu.vector_store %arg27[%c4_850, %c6_851, %c0_852], %810 {strides = array<i32>} : memref<9x9x32xbf16, #tpu.memory_space<vmem>>, vector<1x1x32xbf16>,
    %811 = vector.extract_strided_slice %630 {offsets = [11, 32], sizes = [1, 32], strides = [1, 1]} : vector<16x128xbf16> to vector<1x32xbf16>
    %c4_853 = arith.constant 4 : index
    %c7_854 = arith.constant 7 : index
    %c0_855 = arith.constant 0 : index
    %812 = vector.load %arg27[%c4_853, %c7_854, %c0_855] : memref<9x9x32xbf16, #tpu.memory_space<vmem>>, vector<1x1x32xbf16>
    %813 = vector.shape_cast %812 : vector<1x1x32xbf16> to vector<1x32xbf16>
    %814 = vector.shape_cast %811 : vector<1x32xbf16> to vector<1x1x32xbf16>
    tpu.vector_store %arg27[%c4_853, %c7_854, %c0_855], %814 {strides = array<i32>} : memref<9x9x32xbf16, #tpu.memory_space<vmem>>, vector<1x1x32xbf16>,
    %815 = vector.extract_strided_slice %630 {offsets = [11, 64], sizes = [1, 32], strides = [1, 1]} : vector<16x128xbf16> to vector<1x32xbf16>
    %c5_856 = arith.constant 5 : index
    %c6_857 = arith.constant 6 : index
    %c0_858 = arith.constant 0 : index
    %816 = vector.load %arg27[%c5_856, %c6_857, %c0_858] : memref<9x9x32xbf16, #tpu.memory_space<vmem>>, vector<1x1x32xbf16>
    %817 = vector.shape_cast %816 : vector<1x1x32xbf16> to vector<1x32xbf16>
    %818 = vector.shape_cast %815 : vector<1x32xbf16> to vector<1x1x32xbf16>
    tpu.vector_store %arg27[%c5_856, %c6_857, %c0_858], %818 {strides = array<i32>} : memref<9x9x32xbf16, #tpu.memory_space<vmem>>, vector<1x1x32xbf16>,
    %819 = vector.extract_strided_slice %630 {offsets = [11, 96], sizes = [1, 32], strides = [1, 1]} : vector<16x128xbf16> to vector<1x32xbf16>
    %c5_859 = arith.constant 5 : index
    %c7_860 = arith.constant 7 : index
    %c0_861 = arith.constant 0 : index
    %820 = vector.load %arg27[%c5_859, %c7_860, %c0_861] : memref<9x9x32xbf16, #tpu.memory_space<vmem>>, vector<1x1x32xbf16>
    %821 = vector.shape_cast %820 : vector<1x1x32xbf16> to vector<1x32xbf16>
    %822 = vector.shape_cast %819 : vector<1x32xbf16> to vector<1x1x32xbf16>
    tpu.vector_store %arg27[%c5_859, %c7_860, %c0_861], %822 {strides = array<i32>} : memref<9x9x32xbf16, #tpu.memory_space<vmem>>, vector<1x1x32xbf16>,
    %823 = vector.extract_strided_slice %630 {offsets = [12, 0], sizes = [1, 32], strides = [1, 1]} : vector<16x128xbf16> to vector<1x32xbf16>
    %c6_862 = arith.constant 6 : index
    %c0_863 = arith.constant 0 : index
    %c0_864 = arith.constant 0 : index
    %824 = vector.load %arg27[%c6_862, %c0_863, %c0_864] : memref<9x9x32xbf16, #tpu.memory_space<vmem>>, vector<1x1x32xbf16>
    %825 = vector.shape_cast %824 : vector<1x1x32xbf16> to vector<1x32xbf16>
    %826 = vector.shape_cast %823 : vector<1x32xbf16> to vector<1x1x32xbf16>
    tpu.vector_store %arg27[%c6_862, %c0_863, %c0_864], %826 {strides = array<i32>} : memref<9x9x32xbf16, #tpu.memory_space<vmem>>, vector<1x1x32xbf16>,
    %827 = vector.extract_strided_slice %630 {offsets = [12, 32], sizes = [1, 32], strides = [1, 1]} : vector<16x128xbf16> to vector<1x32xbf16>
    %c6_865 = arith.constant 6 : index
    %c1_866 = arith.constant 1 : index
    %c0_867 = arith.constant 0 : index
    %828 = vector.load %arg27[%c6_865, %c1_866, %c0_867] : memref<9x9x32xbf16, #tpu.memory_space<vmem>>, vector<1x1x32xbf16>
    %829 = vector.shape_cast %828 : vector<1x1x32xbf16> to vector<1x32xbf16>
    %830 = vector.shape_cast %827 : vector<1x32xbf16> to vector<1x1x32xbf16>
    tpu.vector_store %arg27[%c6_865, %c1_866, %c0_867], %830 {strides = array<i32>} : memref<9x9x32xbf16, #tpu.memory_space<vmem>>, vector<1x1x32xbf16>,
    %831 = vector.extract_strided_slice %630 {offsets = [12, 64], sizes = [1, 32], strides = [1, 1]} : vector<16x128xbf16> to vector<1x32xbf16>
    %c7_868 = arith.constant 7 : index
    %c0_869 = arith.constant 0 : index
    %c0_870 = arith.constant 0 : index
    %832 = vector.load %arg27[%c7_868, %c0_869, %c0_870] : memref<9x9x32xbf16, #tpu.memory_space<vmem>>, vector<1x1x32xbf16>
    %833 = vector.shape_cast %832 : vector<1x1x32xbf16> to vector<1x32xbf16>
    %834 = vector.shape_cast %831 : vector<1x32xbf16> to vector<1x1x32xbf16>
    tpu.vector_store %arg27[%c7_868, %c0_869, %c0_870], %834 {strides = array<i32>} : memref<9x9x32xbf16, #tpu.memory_space<vmem>>, vector<1x1x32xbf16>,
    %835 = vector.extract_strided_slice %630 {offsets = [12, 96], sizes = [1, 32], strides = [1, 1]} : vector<16x128xbf16> to vector<1x32xbf16>
    %c7_871 = arith.constant 7 : index
    %c1_872 = arith.constant 1 : index
    %c0_873 = arith.constant 0 : index
    %836 = vector.load %arg27[%c7_871, %c1_872, %c0_873] : memref<9x9x32xbf16, #tpu.memory_space<vmem>>, vector<1x1x32xbf16>
    %837 = vector.shape_cast %836 : vector<1x1x32xbf16> to vector<1x32xbf16>
    %838 = vector.shape_cast %835 : vector<1x32xbf16> to vector<1x1x32xbf16>
    tpu.vector_store %arg27[%c7_871, %c1_872, %c0_873], %838 {strides = array<i32>} : memref<9x9x32xbf16, #tpu.memory_space<vmem>>, vector<1x1x32xbf16>,
    %839 = vector.extract_strided_slice %630 {offsets = [13, 0], sizes = [1, 32], strides = [1, 1]} : vector<16x128xbf16> to vector<1x32xbf16>
    %c6_874 = arith.constant 6 : index
    %c2_875 = arith.constant 2 : index
    %c0_876 = arith.constant 0 : index
    %840 = vector.load %arg27[%c6_874, %c2_875, %c0_876] : memref<9x9x32xbf16, #tpu.memory_space<vmem>>, vector<1x1x32xbf16>
    %841 = vector.shape_cast %840 : vector<1x1x32xbf16> to vector<1x32xbf16>
    %842 = vector.shape_cast %839 : vector<1x32xbf16> to vector<1x1x32xbf16>
    tpu.vector_store %arg27[%c6_874, %c2_875, %c0_876], %842 {strides = array<i32>} : memref<9x9x32xbf16, #tpu.memory_space<vmem>>, vector<1x1x32xbf16>,
    %843 = vector.extract_strided_slice %630 {offsets = [13, 32], sizes = [1, 32], strides = [1, 1]} : vector<16x128xbf16> to vector<1x32xbf16>
    %c6_877 = arith.constant 6 : index
    %c3_878 = arith.constant 3 : index
    %c0_879 = arith.constant 0 : index
    %844 = vector.load %arg27[%c6_877, %c3_878, %c0_879] : memref<9x9x32xbf16, #tpu.memory_space<vmem>>, vector<1x1x32xbf16>
    %845 = vector.shape_cast %844 : vector<1x1x32xbf16> to vector<1x32xbf16>
    %846 = vector.shape_cast %843 : vector<1x32xbf16> to vector<1x1x32xbf16>
    tpu.vector_store %arg27[%c6_877, %c3_878, %c0_879], %846 {strides = array<i32>} : memref<9x9x32xbf16, #tpu.memory_space<vmem>>, vector<1x1x32xbf16>,
    %847 = vector.extract_strided_slice %630 {offsets = [13, 64], sizes = [1, 32], strides = [1, 1]} : vector<16x128xbf16> to vector<1x32xbf16>
    %c7_880 = arith.constant 7 : index
    %c2_881 = arith.constant 2 : index
    %c0_882 = arith.constant 0 : index
    %848 = vector.load %arg27[%c7_880, %c2_881, %c0_882] : memref<9x9x32xbf16, #tpu.memory_space<vmem>>, vector<1x1x32xbf16>
    %849 = vector.shape_cast %848 : vector<1x1x32xbf16> to vector<1x32xbf16>
    %850 = vector.shape_cast %847 : vector<1x32xbf16> to vector<1x1x32xbf16>
    tpu.vector_store %arg27[%c7_880, %c2_881, %c0_882], %850 {strides = array<i32>} : memref<9x9x32xbf16, #tpu.memory_space<vmem>>, vector<1x1x32xbf16>,
    %851 = vector.extract_strided_slice %630 {offsets = [13, 96], sizes = [1, 32], strides = [1, 1]} : vector<16x128xbf16> to vector<1x32xbf16>
    %c7_883 = arith.constant 7 : index
    %c3_884 = arith.constant 3 : index
    %c0_885 = arith.constant 0 : index
    %852 = vector.load %arg27[%c7_883, %c3_884, %c0_885] : memref<9x9x32xbf16, #tpu.memory_space<vmem>>, vector<1x1x32xbf16>
    %853 = vector.shape_cast %852 : vector<1x1x32xbf16> to vector<1x32xbf16>
    %854 = vector.shape_cast %851 : vector<1x32xbf16> to vector<1x1x32xbf16>
    tpu.vector_store %arg27[%c7_883, %c3_884, %c0_885], %854 {strides = array<i32>} : memref<9x9x32xbf16, #tpu.memory_space<vmem>>, vector<1x1x32xbf16>,
    %855 = vector.extract_strided_slice %630 {offsets = [14, 0], sizes = [1, 32], strides = [1, 1]} : vector<16x128xbf16> to vector<1x32xbf16>
    %c6_886 = arith.constant 6 : index
    %c4_887 = arith.constant 4 : index
    %c0_888 = arith.constant 0 : index
    %856 = vector.load %arg27[%c6_886, %c4_887, %c0_888] : memref<9x9x32xbf16, #tpu.memory_space<vmem>>, vector<1x1x32xbf16>
    %857 = vector.shape_cast %856 : vector<1x1x32xbf16> to vector<1x32xbf16>
    %858 = vector.shape_cast %855 : vector<1x32xbf16> to vector<1x1x32xbf16>
    tpu.vector_store %arg27[%c6_886, %c4_887, %c0_888], %858 {strides = array<i32>} : memref<9x9x32xbf16, #tpu.memory_space<vmem>>, vector<1x1x32xbf16>,
    %859 = vector.extract_strided_slice %630 {offsets = [14, 32], sizes = [1, 32], strides = [1, 1]} : vector<16x128xbf16> to vector<1x32xbf16>
    %c6_889 = arith.constant 6 : index
    %c5_890 = arith.constant 5 : index
    %c0_891 = arith.constant 0 : index
    %860 = vector.load %arg27[%c6_889, %c5_890, %c0_891] : memref<9x9x32xbf16, #tpu.memory_space<vmem>>, vector<1x1x32xbf16>
    %861 = vector.shape_cast %860 : vector<1x1x32xbf16> to vector<1x32xbf16>
    %862 = vector.shape_cast %859 : vector<1x32xbf16> to vector<1x1x32xbf16>
    tpu.vector_store %arg27[%c6_889, %c5_890, %c0_891], %862 {strides = array<i32>} : memref<9x9x32xbf16, #tpu.memory_space<vmem>>, vector<1x1x32xbf16>,
    %863 = vector.extract_strided_slice %630 {offsets = [14, 64], sizes = [1, 32], strides = [1, 1]} : vector<16x128xbf16> to vector<1x32xbf16>
    %c7_892 = arith.constant 7 : index
    %c4_893 = arith.constant 4 : index
    %c0_894 = arith.constant 0 : index
    %864 = vector.load %arg27[%c7_892, %c4_893, %c0_894] : memref<9x9x32xbf16, #tpu.memory_space<vmem>>, vector<1x1x32xbf16>
    %865 = vector.shape_cast %864 : vector<1x1x32xbf16> to vector<1x32xbf16>
    %866 = vector.shape_cast %863 : vector<1x32xbf16> to vector<1x1x32xbf16>
    tpu.vector_store %arg27[%c7_892, %c4_893, %c0_894], %866 {strides = array<i32>} : memref<9x9x32xbf16, #tpu.memory_space<vmem>>, vector<1x1x32xbf16>,
    %867 = vector.extract_strided_slice %630 {offsets = [14, 96], sizes = [1, 32], strides = [1, 1]} : vector<16x128xbf16> to vector<1x32xbf16>
    %c7_895 = arith.constant 7 : index
    %c5_896 = arith.constant 5 : index
    %c0_897 = arith.constant 0 : index
    %868 = vector.load %arg27[%c7_895, %c5_896, %c0_897] : memref<9x9x32xbf16, #tpu.memory_space<vmem>>, vector<1x1x32xbf16>
    %869 = vector.shape_cast %868 : vector<1x1x32xbf16> to vector<1x32xbf16>
    %870 = vector.shape_cast %867 : vector<1x32xbf16> to vector<1x1x32xbf16>
    tpu.vector_store %arg27[%c7_895, %c5_896, %c0_897], %870 {strides = array<i32>} : memref<9x9x32xbf16, #tpu.memory_space<vmem>>, vector<1x1x32xbf16>,
    %871 = vector.extract_strided_slice %630 {offsets = [15, 0], sizes = [1, 32], strides = [1, 1]} : vector<16x128xbf16> to vector<1x32xbf16>
    %c6_898 = arith.constant 6 : index
    %c6_899 = arith.constant 6 : index
    %c0_900 = arith.constant 0 : index
    %872 = vector.load %arg27[%c6_898, %c6_899, %c0_900] : memref<9x9x32xbf16, #tpu.memory_space<vmem>>, vector<1x1x32xbf16>
    %873 = vector.shape_cast %872 : vector<1x1x32xbf16> to vector<1x32xbf16>
    %874 = vector.shape_cast %871 : vector<1x32xbf16> to vector<1x1x32xbf16>
    tpu.vector_store %arg27[%c6_898, %c6_899, %c0_900], %874 {strides = array<i32>} : memref<9x9x32xbf16, #tpu.memory_space<vmem>>, vector<1x1x32xbf16>,
    %875 = vector.extract_strided_slice %630 {offsets = [15, 32], sizes = [1, 32], strides = [1, 1]} : vector<16x128xbf16> to vector<1x32xbf16>
    %c6_901 = arith.constant 6 : index
    %c7_902 = arith.constant 7 : index
    %c0_903 = arith.constant 0 : index
    %876 = vector.load %arg27[%c6_901, %c7_902, %c0_903] : memref<9x9x32xbf16, #tpu.memory_space<vmem>>, vector<1x1x32xbf16>
    %877 = vector.shape_cast %876 : vector<1x1x32xbf16> to vector<1x32xbf16>
    %878 = vector.shape_cast %875 : vector<1x32xbf16> to vector<1x1x32xbf16>
    tpu.vector_store %arg27[%c6_901, %c7_902, %c0_903], %878 {strides = array<i32>} : memref<9x9x32xbf16, #tpu.memory_space<vmem>>, vector<1x1x32xbf16>,
    %879 = vector.extract_strided_slice %630 {offsets = [15, 64], sizes = [1, 32], strides = [1, 1]} : vector<16x128xbf16> to vector<1x32xbf16>
    %c7_904 = arith.constant 7 : index
    %c6_905 = arith.constant 6 : index
    %c0_906 = arith.constant 0 : index
    %880 = vector.load %arg27[%c7_904, %c6_905, %c0_906] : memref<9x9x32xbf16, #tpu.memory_space<vmem>>, vector<1x1x32xbf16>
    %881 = vector.shape_cast %880 : vector<1x1x32xbf16> to vector<1x32xbf16>
    %882 = vector.shape_cast %879 : vector<1x32xbf16> to vector<1x1x32xbf16>
    tpu.vector_store %arg27[%c7_904, %c6_905, %c0_906], %882 {strides = array<i32>} : memref<9x9x32xbf16, #tpu.memory_space<vmem>>, vector<1x1x32xbf16>,
    %883 = vector.extract_strided_slice %630 {offsets = [15, 96], sizes = [1, 32], strides = [1, 1]} : vector<16x128xbf16> to vector<1x32xbf16>
    %c7_907 = arith.constant 7 : index
    %c7_908 = arith.constant 7 : index
    %c0_909 = arith.constant 0 : index
    %884 = vector.load %arg27[%c7_907, %c7_908, %c0_909] : memref<9x9x32xbf16, #tpu.memory_space<vmem>>, vector<1x1x32xbf16>
    %885 = vector.shape_cast %884 : vector<1x1x32xbf16> to vector<1x32xbf16>
    %886 = vector.shape_cast %883 : vector<1x32xbf16> to vector<1x1x32xbf16>
    tpu.vector_store %arg27[%c7_907, %c7_908, %c0_909], %886 {strides = array<i32>} : memref<9x9x32xbf16, #tpu.memory_space<vmem>>, vector<1x1x32xbf16>,
    %c0_910 = arith.constant 0 : index
    %c0_911 = arith.constant 0 : index
    %c0_912 = arith.constant 0 : index
    %887 = vector.load %arg27[%c0_910, %c0_911, %c0_912] : memref<9x9x32xbf16, #tpu.memory_space<vmem>>, vector<1x8x32xbf16>
    %888 = vector.shape_cast %887 : vector<1x8x32xbf16> to vector<8x32xbf16>
    %c0_913 = arith.constant 0 : index
    %c1_914 = arith.constant 1 : index
    %c0_915 = arith.constant 0 : index
    %889 = vector.load %arg27[%c0_913, %c1_914, %c0_915] : memref<9x9x32xbf16, #tpu.memory_space<vmem>>, vector<1x8x32xbf16>
    %890 = vector.shape_cast %889 : vector<1x8x32xbf16> to vector<8x32xbf16>
    %c1_916 = arith.constant 1 : index
    %c0_917 = arith.constant 0 : index
    %c0_918 = arith.constant 0 : index
    %891 = vector.load %arg27[%c1_916, %c0_917, %c0_918] : memref<9x9x32xbf16, #tpu.memory_space<vmem>>, vector<1x8x32xbf16>
    %892 = vector.shape_cast %891 : vector<1x8x32xbf16> to vector<8x32xbf16>
    %c1_919 = arith.constant 1 : index
    %c1_920 = arith.constant 1 : index
    %c0_921 = arith.constant 0 : index
    %893 = vector.load %arg27[%c1_919, %c1_920, %c0_921] : memref<9x9x32xbf16, #tpu.memory_space<vmem>>, vector<1x8x32xbf16>
    %894 = vector.shape_cast %893 : vector<1x8x32xbf16> to vector<8x32xbf16>
    %895 = tpu.concatenate %888, %890, %892, %894 in 1 : vector<8x32xbf16>, vector<8x32xbf16>, vector<8x32xbf16>, vector<8x32xbf16> -> vector<8x128xbf16>
    %c1_922 = arith.constant 1 : index
    %c0_923 = arith.constant 0 : index
    %c0_924 = arith.constant 0 : index
    %896 = vector.load %arg27[%c1_922, %c0_923, %c0_924] : memref<9x9x32xbf16, #tpu.memory_space<vmem>>, vector<1x8x32xbf16>
    %897 = vector.shape_cast %896 : vector<1x8x32xbf16> to vector<8x32xbf16>
    %c1_925 = arith.constant 1 : index
    %c1_926 = arith.constant 1 : index
    %c0_927 = arith.constant 0 : index
    %898 = vector.load %arg27[%c1_925, %c1_926, %c0_927] : memref<9x9x32xbf16, #tpu.memory_space<vmem>>, vector<1x8x32xbf16>
    %899 = vector.shape_cast %898 : vector<1x8x32xbf16> to vector<8x32xbf16>
    %c2_928 = arith.constant 2 : index
    %c0_929 = arith.constant 0 : index
    %c0_930 = arith.constant 0 : index
    %900 = vector.load %arg27[%c2_928, %c0_929, %c0_930] : memref<9x9x32xbf16, #tpu.memory_space<vmem>>, vector<1x8x32xbf16>
    %901 = vector.shape_cast %900 : vector<1x8x32xbf16> to vector<8x32xbf16>
    %c2_931 = arith.constant 2 : index
    %c1_932 = arith.constant 1 : index
    %c0_933 = arith.constant 0 : index
    %902 = vector.load %arg27[%c2_931, %c1_932, %c0_933] : memref<9x9x32xbf16, #tpu.memory_space<vmem>>, vector<1x8x32xbf16>
    %903 = vector.shape_cast %902 : vector<1x8x32xbf16> to vector<8x32xbf16>
    %904 = tpu.concatenate %897, %899, %901, %903 in 1 : vector<8x32xbf16>, vector<8x32xbf16>, vector<8x32xbf16>, vector<8x32xbf16> -> vector<8x128xbf16>
    %c2_934 = arith.constant 2 : index
    %c0_935 = arith.constant 0 : index
    %c0_936 = arith.constant 0 : index
    %905 = vector.load %arg27[%c2_934, %c0_935, %c0_936] : memref<9x9x32xbf16, #tpu.memory_space<vmem>>, vector<1x8x32xbf16>
    %906 = vector.shape_cast %905 : vector<1x8x32xbf16> to vector<8x32xbf16>
    %c2_937 = arith.constant 2 : index
    %c1_938 = arith.constant 1 : index
    %c0_939 = arith.constant 0 : index
    %907 = vector.load %arg27[%c2_937, %c1_938, %c0_939] : memref<9x9x32xbf16, #tpu.memory_space<vmem>>, vector<1x8x32xbf16>
    %908 = vector.shape_cast %907 : vector<1x8x32xbf16> to vector<8x32xbf16>
    %c3_940 = arith.constant 3 : index
    %c0_941 = arith.constant 0 : index
    %c0_942 = arith.constant 0 : index
    %909 = vector.load %arg27[%c3_940, %c0_941, %c0_942] : memref<9x9x32xbf16, #tpu.memory_space<vmem>>, vector<1x8x32xbf16>
    %910 = vector.shape_cast %909 : vector<1x8x32xbf16> to vector<8x32xbf16>
    %c3_943 = arith.constant 3 : index
    %c1_944 = arith.constant 1 : index
    %c0_945 = arith.constant 0 : index
    %911 = vector.load %arg27[%c3_943, %c1_944, %c0_945] : memref<9x9x32xbf16, #tpu.memory_space<vmem>>, vector<1x8x32xbf16>
    %912 = vector.shape_cast %911 : vector<1x8x32xbf16> to vector<8x32xbf16>
    %913 = tpu.concatenate %906, %908, %910, %912 in 1 : vector<8x32xbf16>, vector<8x32xbf16>, vector<8x32xbf16>, vector<8x32xbf16> -> vector<8x128xbf16>
    %c3_946 = arith.constant 3 : index
    %c0_947 = arith.constant 0 : index
    %c0_948 = arith.constant 0 : index
    %914 = vector.load %arg27[%c3_946, %c0_947, %c0_948] : memref<9x9x32xbf16, #tpu.memory_space<vmem>>, vector<1x8x32xbf16>
    %915 = vector.shape_cast %914 : vector<1x8x32xbf16> to vector<8x32xbf16>
    %c3_949 = arith.constant 3 : index
    %c1_950 = arith.constant 1 : index
    %c0_951 = arith.constant 0 : index
    %916 = vector.load %arg27[%c3_949, %c1_950, %c0_951] : memref<9x9x32xbf16, #tpu.memory_space<vmem>>, vector<1x8x32xbf16>
    %917 = vector.shape_cast %916 : vector<1x8x32xbf16> to vector<8x32xbf16>
    %c4_952 = arith.constant 4 : index
    %c0_953 = arith.constant 0 : index
    %c0_954 = arith.constant 0 : index
    %918 = vector.load %arg27[%c4_952, %c0_953, %c0_954] : memref<9x9x32xbf16, #tpu.memory_space<vmem>>, vector<1x8x32xbf16>
    %919 = vector.shape_cast %918 : vector<1x8x32xbf16> to vector<8x32xbf16>
    %c4_955 = arith.constant 4 : index
    %c1_956 = arith.constant 1 : index
    %c0_957 = arith.constant 0 : index
    %920 = vector.load %arg27[%c4_955, %c1_956, %c0_957] : memref<9x9x32xbf16, #tpu.memory_space<vmem>>, vector<1x8x32xbf16>
    %921 = vector.shape_cast %920 : vector<1x8x32xbf16> to vector<8x32xbf16>
    %922 = tpu.concatenate %915, %917, %919, %921 in 1 : vector<8x32xbf16>, vector<8x32xbf16>, vector<8x32xbf16>, vector<8x32xbf16> -> vector<8x128xbf16>
    %c4_958 = arith.constant 4 : index
    %c0_959 = arith.constant 0 : index
    %c0_960 = arith.constant 0 : index
    %923 = vector.load %arg27[%c4_958, %c0_959, %c0_960] : memref<9x9x32xbf16, #tpu.memory_space<vmem>>, vector<1x8x32xbf16>
    %924 = vector.shape_cast %923 : vector<1x8x32xbf16> to vector<8x32xbf16>
    %c4_961 = arith.constant 4 : index
    %c1_962 = arith.constant 1 : index
    %c0_963 = arith.constant 0 : index
    %925 = vector.load %arg27[%c4_961, %c1_962, %c0_963] : memref<9x9x32xbf16, #tpu.memory_space<vmem>>, vector<1x8x32xbf16>
    %926 = vector.shape_cast %925 : vector<1x8x32xbf16> to vector<8x32xbf16>
    %c5_964 = arith.constant 5 : index
    %c0_965 = arith.constant 0 : index
    %c0_966 = arith.constant 0 : index
    %927 = vector.load %arg27[%c5_964, %c0_965, %c0_966] : memref<9x9x32xbf16, #tpu.memory_space<vmem>>, vector<1x8x32xbf16>
    %928 = vector.shape_cast %927 : vector<1x8x32xbf16> to vector<8x32xbf16>
    %c5_967 = arith.constant 5 : index
    %c1_968 = arith.constant 1 : index
    %c0_969 = arith.constant 0 : index
    %929 = vector.load %arg27[%c5_967, %c1_968, %c0_969] : memref<9x9x32xbf16, #tpu.memory_space<vmem>>, vector<1x8x32xbf16>
    %930 = vector.shape_cast %929 : vector<1x8x32xbf16> to vector<8x32xbf16>
    %931 = tpu.concatenate %924, %926, %928, %930 in 1 : vector<8x32xbf16>, vector<8x32xbf16>, vector<8x32xbf16>, vector<8x32xbf16> -> vector<8x128xbf16>
    %c5_970 = arith.constant 5 : index
    %c0_971 = arith.constant 0 : index
    %c0_972 = arith.constant 0 : index
    %932 = vector.load %arg27[%c5_970, %c0_971, %c0_972] : memref<9x9x32xbf16, #tpu.memory_space<vmem>>, vector<1x8x32xbf16>
    %933 = vector.shape_cast %932 : vector<1x8x32xbf16> to vector<8x32xbf16>
    %c5_973 = arith.constant 5 : index
    %c1_974 = arith.constant 1 : index
    %c0_975 = arith.constant 0 : index
    %934 = vector.load %arg27[%c5_973, %c1_974, %c0_975] : memref<9x9x32xbf16, #tpu.memory_space<vmem>>, vector<1x8x32xbf16>
    %935 = vector.shape_cast %934 : vector<1x8x32xbf16> to vector<8x32xbf16>
    %c6_976 = arith.constant 6 : index
    %c0_977 = arith.constant 0 : index
    %c0_978 = arith.constant 0 : index
    %936 = vector.load %arg27[%c6_976, %c0_977, %c0_978] : memref<9x9x32xbf16, #tpu.memory_space<vmem>>, vector<1x8x32xbf16>
    %937 = vector.shape_cast %936 : vector<1x8x32xbf16> to vector<8x32xbf16>
    %c6_979 = arith.constant 6 : index
    %c1_980 = arith.constant 1 : index
    %c0_981 = arith.constant 0 : index
    %938 = vector.load %arg27[%c6_979, %c1_980, %c0_981] : memref<9x9x32xbf16, #tpu.memory_space<vmem>>, vector<1x8x32xbf16>
    %939 = vector.shape_cast %938 : vector<1x8x32xbf16> to vector<8x32xbf16>
    %940 = tpu.concatenate %933, %935, %937, %939 in 1 : vector<8x32xbf16>, vector<8x32xbf16>, vector<8x32xbf16>, vector<8x32xbf16> -> vector<8x128xbf16>
    %c6_982 = arith.constant 6 : index
    %c0_983 = arith.constant 0 : index
    %c0_984 = arith.constant 0 : index
    %941 = vector.load %arg27[%c6_982, %c0_983, %c0_984] : memref<9x9x32xbf16, #tpu.memory_space<vmem>>, vector<1x8x32xbf16>
    %942 = vector.shape_cast %941 : vector<1x8x32xbf16> to vector<8x32xbf16>
    %c6_985 = arith.constant 6 : index
    %c1_986 = arith.constant 1 : index
    %c0_987 = arith.constant 0 : index
    %943 = vector.load %arg27[%c6_985, %c1_986, %c0_987] : memref<9x9x32xbf16, #tpu.memory_space<vmem>>, vector<1x8x32xbf16>
    %944 = vector.shape_cast %943 : vector<1x8x32xbf16> to vector<8x32xbf16>
    %c7_988 = arith.constant 7 : index
    %c0_989 = arith.constant 0 : index
    %c0_990 = arith.constant 0 : index
    %945 = vector.load %arg27[%c7_988, %c0_989, %c0_990] : memref<9x9x32xbf16, #tpu.memory_space<vmem>>, vector<1x8x32xbf16>
    %946 = vector.shape_cast %945 : vector<1x8x32xbf16> to vector<8x32xbf16>
    %c7_991 = arith.constant 7 : index
    %c1_992 = arith.constant 1 : index
    %c0_993 = arith.constant 0 : index
    %947 = vector.load %arg27[%c7_991, %c1_992, %c0_993] : memref<9x9x32xbf16, #tpu.memory_space<vmem>>, vector<1x8x32xbf16>
    %948 = vector.shape_cast %947 : vector<1x8x32xbf16> to vector<8x32xbf16>
    %949 = tpu.concatenate %942, %944, %946, %948 in 1 : vector<8x32xbf16>, vector<8x32xbf16>, vector<8x32xbf16>, vector<8x32xbf16> -> vector<8x128xbf16>
    %c7_994 = arith.constant 7 : index
    %c0_995 = arith.constant 0 : index
    %c0_996 = arith.constant 0 : index
    %950 = vector.load %arg27[%c7_994, %c0_995, %c0_996] : memref<9x9x32xbf16, #tpu.memory_space<vmem>>, vector<1x8x32xbf16>
    %951 = vector.shape_cast %950 : vector<1x8x32xbf16> to vector<8x32xbf16>
    %c7_997 = arith.constant 7 : index
    %c1_998 = arith.constant 1 : index
    %c0_999 = arith.constant 0 : index
    %952 = vector.load %arg27[%c7_997, %c1_998, %c0_999] : memref<9x9x32xbf16, #tpu.memory_space<vmem>>, vector<1x8x32xbf16>
    %953 = vector.shape_cast %952 : vector<1x8x32xbf16> to vector<8x32xbf16>
    %c8 = arith.constant 8 : index
    %c0_1000 = arith.constant 0 : index
    %c0_1001 = arith.constant 0 : index
    %954 = vector.load %arg27[%c8, %c0_1000, %c0_1001] : memref<9x9x32xbf16, #tpu.memory_space<vmem>>, vector<1x8x32xbf16>
    %955 = vector.shape_cast %954 : vector<1x8x32xbf16> to vector<8x32xbf16>
    %c8_1002 = arith.constant 8 : index
    %c1_1003 = arith.constant 1 : index
    %c0_1004 = arith.constant 0 : index
    %956 = vector.load %arg27[%c8_1002, %c1_1003, %c0_1004] : memref<9x9x32xbf16, #tpu.memory_space<vmem>>, vector<1x8x32xbf16>
    %957 = vector.shape_cast %956 : vector<1x8x32xbf16> to vector<8x32xbf16>
    %958 = tpu.concatenate %951, %953, %955, %957 in 1 : vector<8x32xbf16>, vector<8x32xbf16>, vector<8x32xbf16>, vector<8x32xbf16> -> vector<8x128xbf16>
    %959 = tpu.concatenate %895, %904, %913, %922, %931, %940, %949, %958 in 0 : vector<8x128xbf16>, vector<8x128xbf16>, vector<8x128xbf16>, vector<8x128xbf16>, vector<8x128xbf16>, vector<8x128xbf16>, vector<8x128xbf16>, vector<8x128xbf16> -> vector<64x128xbf16>
    %c0_1005 = arith.constant 0 : index
    %c0_1006 = arith.constant 0 : index
    %960 = vector.load %arg17[%c0_1005, %c0_1006] : memref<128x64xbf16, #tpu.memory_space<vmem>>, vector<128x64xbf16>
    %cst_1007 = arith.constant dense<0.000000e+00> : vector<64x64xf32>
    %961 = tpu.matmul %959, %960, %cst_1007 {dimension_numbers = #tpu.dot_dimension_numbers<[1], [0], [0], [1], [0, 0, 1, 1], [], []>} : vector<64x128xbf16>, vector<128x64xbf16>, vector<64x64xf32> -> vector<64x64xf32>
    %c0_1008 = arith.constant 0 : index
    %c0_1009 = arith.constant 0 : index
    %962 = vector.load %arg18[%c0_1008, %c0_1009] : memref<1x64xf32, #tpu.memory_space<vmem>>, vector<1x64xf32>
    %963 = vector.broadcast %962 : vector<1x64xf32> to vector<64x64xf32>
    %964 = arith.mulf %961, %963 : vector<64x64xf32>
    %c0_1010 = arith.constant 0 : index
    %c0_1011 = arith.constant 0 : index
    %965 = vector.load %arg19[%c0_1010, %c0_1011] : memref<1x64xf32, #tpu.memory_space<vmem>>, vector<1x64xf32>
    %966 = vector.broadcast %965 : vector<1x64xf32> to vector<64x64xf32>
    %967 = arith.addf %964, %966 : vector<64x64xf32>
    %cst_1012 = arith.constant 0.000000e+00 : f32
    %968 = vector.broadcast %cst_1012 : f32 to vector<64x64xf32>
    %969 = arith.maximumf %967, %968 : vector<64x64xf32>
    %970 = arith.truncf %969 : vector<64x64xf32> to vector<64x64xbf16>
    %c0_1013 = arith.constant 0 : index
    %c0_1014 = arith.constant 0 : index
    %971 = vector.load %arg20[%c0_1013, %c0_1014] : memref<64x4xbf16, #tpu.memory_space<vmem>>, vector<64x4xbf16>
    %cst_1015 = arith.constant dense<0.000000e+00> : vector<64x4xf32>
    %972 = tpu.matmul %970, %971, %cst_1015 {dimension_numbers = #tpu.dot_dimension_numbers<[1], [0], [0], [1], [0, 0, 1, 1], [], []>} : vector<64x64xbf16>, vector<64x4xbf16>, vector<64x4xf32> -> vector<64x4xf32>
    %c0_1016 = arith.constant 0 : index
    %c0_1017 = arith.constant 0 : index
    %973 = vector.load %arg21[%c0_1016, %c0_1017] : memref<1x4xf32, #tpu.memory_space<vmem>>, vector<1x4xf32>
    %974 = vector.broadcast %973 : vector<1x4xf32> to vector<64x4xf32>
    %975 = arith.addf %972, %974 : vector<64x4xf32>
    %cst_1018 = arith.constant 0.000000e+00 : f32
    %976 = vector.broadcast %cst_1018 : f32 to vector<64x4xf32>
    %977 = arith.subf %976, %975 : vector<64x4xf32>
    %978 = math.exp %977 : vector<64x4xf32>
    %cst_1019 = arith.constant 1.000000e+00 : f32
    %979 = vector.broadcast %cst_1019 : f32 to vector<64x4xf32>
    %980 = arith.addf %979, %978 : vector<64x4xf32>
    %cst_1020 = arith.constant 1.000000e+00 : f32
    %981 = vector.broadcast %cst_1020 : f32 to vector<64x4xf32>
    %982 = arith.divf %981, %980 : vector<64x4xf32>
    %c0_1021 = arith.constant 0 : index
    %c0_1022 = arith.constant 0 : index
    %c0_1023 = arith.constant 0 : index
    %983 = vector.load %arg22[%c0_1021, %c0_1022, %c0_1023] : memref<1x64x4xf32, #tpu.memory_space<vmem>>, vector<1x64x4xf32>
    %984 = vector.shape_cast %983 : vector<1x64x4xf32> to vector<64x4xf32>
    %985 = vector.shape_cast %982 : vector<64x4xf32> to vector<1x64x4xf32>
    tpu.vector_store %arg22[%c0_1021, %c0_1022, %c0_1023], %985 {strides = array<i32>} : memref<1x64x4xf32, #tpu.memory_space<vmem>>, vector<1x64x4xf32>,
    return
  }
  func.func @transform_0(%arg0: i32) -> (i32, i32, i32) {
    %c0_i32 = arith.constant 0 : i32
    %c0_i32_0 = arith.constant 0 : i32
    %c0_i32_1 = arith.constant 0 : i32
    return %arg0, %c0_i32, %c0_i32_0 : i32, i32, i32
  }
  func.func @transform_1(%arg0: i32) -> (i32, i32) {
    %c0_i32 = arith.constant 0 : i32
    %c0_i32_0 = arith.constant 0 : i32
    %c0_i32_1 = arith.constant 0 : i32
    return %c0_i32, %c0_i32_0 : i32, i32
  }
  func.func @transform_2(%arg0: i32) -> (i32, i32) {
    %c0_i32 = arith.constant 0 : i32
    %c0_i32_0 = arith.constant 0 : i32
    %c0_i32_1 = arith.constant 0 : i32
    return %c0_i32, %c0_i32_0 : i32, i32
  }
  func.func @transform_3(%arg0: i32) -> (i32, i32) {
    %c0_i32 = arith.constant 0 : i32
    %c0_i32_0 = arith.constant 0 : i32
    %c0_i32_1 = arith.constant 0 : i32
    return %c0_i32, %c0_i32_0 : i32, i32
  }
  func.func @transform_4(%arg0: i32) -> (i32, i32) {
    %c0_i32 = arith.constant 0 : i32
    %c0_i32_0 = arith.constant 0 : i32
    %c0_i32_1 = arith.constant 0 : i32
    return %c0_i32, %c0_i32_0 : i32, i32
  }
  func.func @transform_5(%arg0: i32) -> (i32, i32) {
    %c0_i32 = arith.constant 0 : i32
    %c0_i32_0 = arith.constant 0 : i32
    %c0_i32_1 = arith.constant 0 : i32
    return %c0_i32, %c0_i32_0 : i32, i32
  }
  func.func @transform_6(%arg0: i32) -> (i32, i32) {
    %c0_i32 = arith.constant 0 : i32
    %c0_i32_0 = arith.constant 0 : i32
    %c0_i32_1 = arith.constant 0 : i32
    return %c0_i32, %c0_i32_0 : i32, i32
  }
  func.func @transform_7(%arg0: i32) -> (i32, i32) {
    %c0_i32 = arith.constant 0 : i32
    %c0_i32_0 = arith.constant 0 : i32
    %c0_i32_1 = arith.constant 0 : i32
    return %c0_i32, %c0_i32_0 : i32, i32
  }
  func.func @transform_8(%arg0: i32) -> (i32, i32) {
    %c0_i32 = arith.constant 0 : i32
    %c0_i32_0 = arith.constant 0 : i32
    %c0_i32_1 = arith.constant 0 : i32
    return %c0_i32, %c0_i32_0 : i32, i32
  }
  func.func @transform_9(%arg0: i32) -> (i32, i32) {
    %c0_i32 = arith.constant 0 : i32
    %c0_i32_0 = arith.constant 0 : i32
    %c0_i32_1 = arith.constant 0 : i32
    return %c0_i32, %c0_i32_0 : i32, i32
  }
  func.func @transform_10(%arg0: i32) -> (i32, i32) {
    %c0_i32 = arith.constant 0 : i32
    %c0_i32_0 = arith.constant 0 : i32
    %c0_i32_1 = arith.constant 0 : i32
    return %c0_i32, %c0_i32_0 : i32, i32
  }
  func.func @transform_11(%arg0: i32) -> (i32, i32) {
    %c0_i32 = arith.constant 0 : i32
    %c0_i32_0 = arith.constant 0 : i32
    %c0_i32_1 = arith.constant 0 : i32
    return %c0_i32, %c0_i32_0 : i32, i32
  }
  func.func @transform_12(%arg0: i32) -> (i32, i32) {
    %c0_i32 = arith.constant 0 : i32
    %c0_i32_0 = arith.constant 0 : i32
    %c0_i32_1 = arith.constant 0 : i32
    return %c0_i32, %c0_i32_0 : i32, i32
  }
  func.func @transform_13(%arg0: i32) -> (i32, i32) {
    %c0_i32 = arith.constant 0 : i32
    %c0_i32_0 = arith.constant 0 : i32
    %c0_i32_1 = arith.constant 0 : i32
    return %c0_i32, %c0_i32_0 : i32, i32
  }
  func.func @transform_14(%arg0: i32) -> (i32, i32) {
    %c0_i32 = arith.constant 0 : i32
    %c0_i32_0 = arith.constant 0 : i32
    %c0_i32_1 = arith.constant 0 : i32
    return %c0_i32, %c0_i32_0 : i32, i32
  }
  func.func @transform_15(%arg0: i32) -> (i32, i32) {
    %c0_i32 = arith.constant 0 : i32
    %c0_i32_0 = arith.constant 0 : i32
    %c0_i32_1 = arith.constant 0 : i32
    return %c0_i32, %c0_i32_0 : i32, i32
  }
  func.func @transform_16(%arg0: i32) -> (i32, i32) {
    %c0_i32 = arith.constant 0 : i32
    %c0_i32_0 = arith.constant 0 : i32
    %c0_i32_1 = arith.constant 0 : i32
    return %c0_i32, %c0_i32_0 : i32, i32
  }
  func.func @transform_17(%arg0: i32) -> (i32, i32) {
    %c0_i32 = arith.constant 0 : i32
    %c0_i32_0 = arith.constant 0 : i32
    %c0_i32_1 = arith.constant 0 : i32
    return %c0_i32, %c0_i32_0 : i32, i32
  }
  func.func @transform_18(%arg0: i32) -> (i32, i32) {
    %c0_i32 = arith.constant 0 : i32
    %c0_i32_0 = arith.constant 0 : i32
    %c0_i32_1 = arith.constant 0 : i32
    return %c0_i32, %c0_i32_0 : i32, i32
  }
  func.func @transform_19(%arg0: i32) -> (i32, i32) {
    %c0_i32 = arith.constant 0 : i32
    %c0_i32_0 = arith.constant 0 : i32
    %c0_i32_1 = arith.constant 0 : i32
    return %c0_i32, %c0_i32_0 : i32, i32
  }
  func.func @transform_20(%arg0: i32) -> (i32, i32) {
    %c0_i32 = arith.constant 0 : i32
    %c0_i32_0 = arith.constant 0 : i32
    %c0_i32_1 = arith.constant 0 : i32
    return %c0_i32, %c0_i32_0 : i32, i32
  }
  func.func @transform_21(%arg0: i32) -> (i32, i32, i32) {
    %c0_i32 = arith.constant 0 : i32
    %c0_i32_0 = arith.constant 0 : i32
    %c0_i32_1 = arith.constant 0 : i32
    return %arg0, %c0_i32, %c0_i32_0 : i32, i32, i32
  }
}

</mosaic_0001>

<llo_original>
// kernel: tile.26
$region0: #{tile.26}
  #allocation0 [shape = 's32[1]{0}', space=sflag, size = 0x4, scoped, tag = 'scoped memory for tile.26']
  %s0 = inlined_call_operand.vmem [shape: f32[64], index: 0, kind: input, shape index: {}]
  %s1 = inlined_call_operand.vmem [shape: f32[4,64], index: 1, kind: output, shape index: {}]
  // Predicated region
  $region2: #{tile.26} parent=0 // pred_check
    _
  $region3: #{tile.26} parent=0 // pred_check_branch
    %3 = sbr.rel (0) target = $region5
  $region4: #{tile.26} parent=0 // pred_region
    _
  $region5: #{tile.26} parent=0 // pred_fallthru
    _
  %v4 = vld [vmem:[%s0] ss:$0 sm:$0xff]
  %5 = vst [vmem:[%s1] sm:$0xf] %v4

// kernel: tile.27
$region0: #{tile.27}
  %s0 = inlined_call_operand.vmem [shape: f32[4,64], index: 0, kind: input, shape index: {}]
  %s1 = inlined_call_operand.vmem [shape: f32[1,256], index: 1, kind: output, shape index: {}]
  $region1: #{tile.27} parent=0
    #allocation0 [shape = 'u8[8192]{0}', space=vmem, size = 0x2000, scoped, tag = 'scoped mem for output reshape']
    #allocation1 [shape = 'u8[4096]{0}', space=vmem, size = 0x1000, scoped, tag = 'scoped mem for input reshape']
    %s3 = ssub.s32 16, 1
    %v4 = vld [vmem:[%s0] sm:%s3]
    %5 = vst [vmem:[#allocation1] sm:%s3] %v4
    %s6 = smov 3
    %v7 = vld [vmem:[#allocation1] ss:$2 sm:%s6]
    %vm8 = vcmask 523264
    %9 = vst.msk [vmem:[#allocation0] ss:$8 sm:$0x3] %vm8, %v7
    %s10 = scalar_lea.vmem [#allocation1], 1
    %s11 = smov 3
    %v12 = vld [vmem:[%s10] ss:$2 sm:%s11]
    %13 = vrot.lane.b32.xlu0 %v12, 64
    %v14 = vpop.permute.xlu0 %13
    %vm15 = vcmask 1048064
    %16 = vst.msk [vmem:[#allocation0] ss:$8 sm:$0x3] %vm15, %v14
    %s18 = ssub.s32 2, 1
    %v19 = vld [vmem:[#allocation0] sm:%s18]
    %s21 = ssub.s32 2, 1
    %22 = vst [vmem:[%s1] sm:%s21] %v19
    %s23 = scalar_lea.vmem [#allocation0], 8
    %v24 = vld [vmem:[%s23] sm:%s18]
    %s26 = ssub.s32 2, 1
    %s27 = scalar_lea.vmem %s1, 1
    %28 = vst [vmem:[%s27] sm:%s26] %v24

// kernel: tile.34
$region0: #{tile.34}
  #allocation0 [shape = 's32[1]{0}', space=sflag, size = 0x4, scoped, tag = 'scoped memory for tile.34']
  %s0 = inlined_call_operand.vmem [shape: f32[32], index: 0, kind: input, shape index: {}]
  %s1 = inlined_call_operand.vmem [shape: f32[4,32], index: 1, kind: output, shape index: {}]
  // Predicated region
  $region2: #{tile.34} parent=0 // pred_check
    _
  $region3: #{tile.34} parent=0 // pred_check_branch
    %3 = sbr.rel (0) target = $region5
  $region4: #{tile.34} parent=0 // pred_region
    _
  $region5: #{tile.34} parent=0 // pred_fallthru
    _
  %v4 = vld [vmem:[%s0] ss:$0 sm:$0xff]
  %5 = vst [vmem:[%s1] sm:$0xf] %v4

// kernel: tile.35
$region0: #{tile.35}
  %s0 = inlined_call_operand.vmem [shape: f32[4,32], index: 0, kind: input, shape index: {}]
  %s1 = inlined_call_operand.vmem [shape: f32[1,128], index: 1, kind: output, shape index: {}]
  $region1: #{tile.35} parent=0
    #allocation0 [shape = 'u8[4096]{0}', space=vmem, size = 0x1000, scoped, tag = 'scoped mem for output reshape']
    #allocation1 [shape = 'u8[4096]{0}', space=vmem, size = 0x1000, scoped, tag = 'scoped mem for input reshape']
    %s3 = ssub.s32 16, 1
    %v4 = vld [vmem:[%s0] sm:%s3]
    %5 = vst [vmem:[#allocation1] sm:%s3] %v4
    %v6 = vld [vmem:[#allocation1] sm:$0x1]
    %vm7 = vcmask 261120
    %8 = vst.msk [vmem:[#allocation0] sm:$0x1] %vm7, %v6
    %s9 = scalar_lea.vmem [#allocation1], 3
    %v10 = vld [vmem:[%s9] sm:$0x1]
    %11 = vrot.lane.b32.xlu0 %v10, 96
    %v12 = vpop.permute.xlu0 %11
    %vm13 = vcmask 1048320
    %14 = vst.msk [vmem:[#allocation0] sm:$0x1] %vm13, %v12
    %s15 = scalar_lea.vmem [#allocation1], 2
    %v16 = vld [vmem:[%s15] sm:$0x1]
    %17 = vrot.lane.b32.xlu0 %v16, 64
    %v18 = vpop.permute.xlu0 %17
    %vm19 = vcmask 785920
    %20 = vst.msk [vmem:[#allocation0] sm:$0x1] %vm19, %v18
    %s21 = scalar_lea.vmem [#allocation1], 1
    %v22 = vld [vmem:[%s21] sm:$0x1]
    %23 = vrot.lane.b32.xlu0 %v22, 32
    %v24 = vpop.permute.xlu0 %23
    %vm25 = vcmask 523520
    %26 = vst.msk [vmem:[#allocation0] sm:$0x1] %vm25, %v24
    %s28 = ssub.s32 2, 1
    %v29 = vld [vmem:[#allocation0] sm:%s28]
    %s31 = ssub.s32 2, 1
    %32 = vst [vmem:[%s1] sm:%s31] %v29

// kernel: tile.42
$region0: #{tile.42}
  #allocation0 [shape = 's32[1]{0}', space=sflag, size = 0x4, scoped, tag = 'scoped memory for tile.42']
  %s0 = inlined_call_operand.vmem [shape: f32[16], index: 0, kind: input, shape index: {}]
  %s1 = inlined_call_operand.vmem [shape: f32[4,16], index: 1, kind: output, shape index: {}]
  // Predicated region
  $region2: #{tile.42} parent=0 // pred_check
    _
  $region3: #{tile.42} parent=0 // pred_check_branch
    %3 = sbr.rel (0) target = $region5
  $region4: #{tile.42} parent=0 // pred_region
    _
  $region5: #{tile.42} parent=0 // pred_fallthru
    _
  %v4 = vld [vmem:[%s0] ss:$0 sm:$0xff]
  %5 = vst [vmem:[%s1] sm:$0xf] %v4

// kernel: tile.43
$region0: #{tile.43}
  %s0 = inlined_call_operand.vmem [shape: f32[4,16], index: 0, kind: input, shape index: {}]
  %s1 = inlined_call_operand.vmem [shape: f32[1,64], index: 1, kind: output, shape index: {}]
  $region1: #{tile.43} parent=0
    #allocation0 [shape = 'u8[4096]{0}', space=vmem, size = 0x1000, scoped, tag = 'scoped mem for output reshape']
    #allocation1 [shape = 'u8[4096]{0}', space=vmem, size = 0x1000, scoped, tag = 'scoped mem for input reshape']
    %s3 = ssub.s32 16, 1
    %v4 = vld [vmem:[%s0] sm:%s3]
    %5 = vst [vmem:[#allocation1] sm:%s3] %v4
    %v6 = vld [vmem:[#allocation1] sm:$0x1]
    %vm7 = vcmask 130048
    %8 = vst.msk [vmem:[#allocation0] sm:$0x1] %vm7, %v6
    %s9 = scalar_lea.vmem [#allocation1], 3
    %v10 = vld [vmem:[%s9] sm:$0x1]
    %11 = vrot.lane.b32.xlu0 %v10, 48
    %v12 = vpop.permute.xlu0 %11
    %vm13 = vcmask 523648
    %14 = vst.msk [vmem:[#allocation0] sm:$0x1] %vm13, %v12
    %s15 = scalar_lea.vmem [#allocation1], 2
    %v16 = vld [vmem:[%s15] sm:$0x1]
    %17 = vrot.lane.b32.xlu0 %v16, 32
    %v18 = vpop.permute.xlu0 %17
    %vm19 = vcmask 392448
    %20 = vst.msk [vmem:[#allocation0] sm:$0x1] %vm19, %v18
    %s21 = scalar_lea.vmem [#allocation1], 1
    %v22 = vld [vmem:[%s21] sm:$0x1]
    %23 = vrot.lane.b32.xlu0 %v22, 16
    %v24 = vpop.permute.xlu0 %23
    %vm25 = vcmask 261248
    %26 = vst.msk [vmem:[#allocation0] sm:$0x1] %vm25, %v24
    %s28 = ssub.s32 2, 1
    %v29 = vld [vmem:[#allocation0] sm:%s28]
    %s31 = ssub.s32 2, 1
    %32 = vst [vmem:[%s1] sm:%s31] %v29

// kernel: conv_autoencoder_forward.1
$region0: #{conv_autoencoder_forward.1}
  #allocation0 [shape = 'u32[]', space=smem, size = 0x4, offset = 0x4, fixed_abs, tag = 'smem constant byte address 0x4 - core index']
  #allocation1 [shape = 'u32[72,128]{1,0:T(1,128)}', space=vmem, size = 0x9000, scoped, tag = 'internal scratch']
  #allocation2 [shape = 'bf16[4,5,5,32]{3,2,1,0:T(8,128)(2,1)}', space=vmem, size = 0xa000, scoped, tag = 'scratch operand']
  #allocation3 [shape = 'bf16[4,3,3,64]{3,2,1,0:T(4,128)(2,1)}', space=vmem, size = 0x3000, scoped, tag = 'scratch operand']
  #allocation4 [shape = 'bf16[3,3,32]{2,1,0:T(4,128)(2,1)}', space=vmem, size = 0xc00, scoped, tag = 'scratch operand']
  #allocation5 [shape = 'bf16[5,5,64]{2,1,0:T(8,128)(2,1)}', space=vmem, size = 0x2800, scoped, tag = 'scratch operand']
  #allocation6 [shape = 'bf16[9,9,32]{2,1,0:T(8,128)(2,1)}', space=vmem, size = 0x9000, scoped, tag = 'scratch operand']
  %s0 = inlined_call_operand.vmem [shape: bf16[2,64,9], index: 0, kind: input, shape index: {}]
  %s1 = inlined_call_operand.vmem [shape: bf16[9,32], index: 1, kind: input, shape index: {}]
  %s2 = inlined_call_operand.vmem [shape: f32[1,32], index: 2, kind: input, shape index: {}]
  %s3 = inlined_call_operand.vmem [shape: f32[1,32], index: 3, kind: input, shape index: {}]
  %s4 = inlined_call_operand.vmem [shape: bf16[288,64], index: 4, kind: input, shape index: {}]
  %s5 = inlined_call_operand.vmem [shape: f32[1,64], index: 5, kind: input, shape index: {}]
  %s6 = inlined_call_operand.vmem [shape: f32[1,64], index: 6, kind: input, shape index: {}]
  %s7 = inlined_call_operand.vmem [shape: bf16[576,32], index: 7, kind: input, shape index: {}]
  %s8 = inlined_call_operand.vmem [shape: f32[1,32], index: 8, kind: input, shape index: {}]
  %s9 = inlined_call_operand.vmem [shape: f32[1,32], index: 9, kind: input, shape index: {}]
  %s10 = inlined_call_operand.vmem [shape: bf16[128,256], index: 10, kind: input, shape index: {}]
  %s11 = inlined_call_operand.vmem [shape: f32[1,256], index: 11, kind: input, shape index: {}]
  %s12 = inlined_call_operand.vmem [shape: f32[1,256], index: 12, kind: input, shape index: {}]
  %s13 = inlined_call_operand.vmem [shape: bf16[256,128], index: 13, kind: input, shape index: {}]
  %s14 = inlined_call_operand.vmem [shape: f32[1,128], index: 14, kind: input, shape index: {}]
  %s15 = inlined_call_operand.vmem [shape: f32[1,128], index: 15, kind: input, shape index: {}]
  %s16 = inlined_call_operand.vmem [shape: bf16[128,64], index: 16, kind: input, shape index: {}]
  %s17 = inlined_call_operand.vmem [shape: f32[1,64], index: 17, kind: input, shape index: {}]
  %s18 = inlined_call_operand.vmem [shape: f32[1,64], index: 18, kind: input, shape index: {}]
  %s19 = inlined_call_operand.vmem [shape: bf16[64,4], index: 19, kind: input, shape index: {}]
  %s20 = inlined_call_operand.vmem [shape: f32[1,4], index: 20, kind: input, shape index: {}]
  %s21 = inlined_call_operand.vmem [shape: f32[2,64,4], index: 21, kind: output, shape index: {}]
  %s22 = sld [smem:[#allocation0]]
  $region117: #{conv_autoencoder_forward.1} parent=0
    _
  %s24 = ssub.s32 1, %s22
  %s25 = scalar_select 0, %s24, %s22
  loop: start=0, step=1, limit=4
  $region2: #{conv_autoencoder_forward.1} parent=0 // loop_pre_header
    _
  $region3: #{conv_autoencoder_forward.1} parent=0 // loop_header
    %s27 = sphi 0, %s31
    %p28 = scmp.ge.s32.totalorder %s27, 4
    %s37 = sphi 0, %s39
    %s40 = sphi 0, %s37
    %s41 = sphi 0, %s40
    %s57 = sphi 0, %s41
    %s61 = sphi 0, %s61
    %s63 = sphi 0, %s61
    %s64 = sphi 0, %s63
    %s78 = sphi 0, %s64
    %s82 = sphi 0, %s82
    %s84 = sphi 0, %s82
    %s85 = sphi 0, %s84
    %s99 = sphi 0, %s85
    %s103 = sphi 0, %s103
    %s105 = sphi 0, %s103
    %s106 = sphi 0, %s105
    %s120 = sphi 0, %s106
    %s124 = sphi 0, %s124
    %s126 = sphi 0, %s124
    %s127 = sphi 0, %s126
    %s141 = sphi 0, %s127
    %s145 = sphi 0, %s145
    %s147 = sphi 0, %s145
    %s148 = sphi 0, %s147
    %s162 = sphi 0, %s148
    %s166 = sphi 0, %s166
    %s168 = sphi 0, %s166
    %s169 = sphi 0, %s168
    %s183 = sphi 0, %s169
    %s187 = sphi 0, %s187
    %s189 = sphi 0, %s187
    %s190 = sphi 0, %s189
    %s204 = sphi 0, %s190
    %s208 = sphi 0, %s208
    %s210 = sphi 0, %s208
    %s211 = sphi 0, %s210
    %s225 = sphi 0, %s211
    %s229 = sphi 0, %s229
    %s231 = sphi 0, %s229
    %s232 = sphi 0, %s231
    %s246 = sphi 0, %s232
    %s250 = sphi 0, %s250
    %s252 = sphi 0, %s250
    %s253 = sphi 0, %s252
    %s267 = sphi 0, %s253
    %s271 = sphi 0, %s271
    %s273 = sphi 0, %s271
    %s274 = sphi 0, %s273
    %s288 = sphi 0, %s274
    %s292 = sphi 0, %s292
    %s294 = sphi 0, %s292
    %s295 = sphi 0, %s294
    %s309 = sphi 0, %s295
    %s313 = sphi 0, %s313
    %s315 = sphi 0, %s313
    %s316 = sphi 0, %s315
    %s330 = sphi 0, %s316
    %s334 = sphi 0, %s334
    %s336 = sphi 0, %s334
    %s337 = sphi 0, %s336
    %s351 = sphi 0, %s337
    %s355 = sphi 0, %s355
    %s357 = sphi 0, %s355
    %s358 = sphi 0, %s357
    %s372 = sphi 0, %s358
    %s376 = sphi 0, %s376
    %s378 = sphi 0, %s376
    %s379 = sphi 0, %s378
    %s393 = sphi 0, %s379
    %s397 = sphi 0, %s397
    %s399 = sphi 0, %s397
    %s400 = sphi 0, %s399
    %s414 = sphi 0, %s400
    %s418 = sphi 0, %s418
    %s420 = sphi 0, %s418
    %s421 = sphi 0, %s420
    %s435 = sphi 0, %s421
    %s439 = sphi 0, %s439
    %s441 = sphi 0, %s439
    %s442 = sphi 0, %s441
    %s456 = sphi 0, %s442
    %s460 = sphi 0, %s460
    %s462 = sphi 0, %s460
    %s463 = sphi 0, %s462
    %s477 = sphi 0, %s463
    %s483 = sphi 0, %s485
    %s486 = sphi 0, %s483
    %s487 = sphi 0, %s486
    %s503 = sphi 0, %s487
  $region4: #{conv_autoencoder_forward.1} parent=0 // loop_header_branch
    %30 = sbr.rel (%p28) target = $region8
  $region5: #{conv_autoencoder_forward.1} parent=0 // loop_body
    %s32 = ssub.s32 %s27, 1
    %s33 = ssub.s32 %s27, 2
    %s34 = sadd.s32 %s27, 1
    %s35 = ssub.s32 %s27, %s34
    %p36 = scmp.eq.s32.totalorder %s35, 0
    %s38 = sadd.s32 %s37, 1
    %s39 = scalar_select %p36, %s37, %s38
    %p42 = pneg %p36
    %p43 = scmp.eq.s32.totalorder %s27, 1
    %p44 = por %p42, %p43
    %p45 = scmp.ne.s32.totalorder %s37, %s40
    %p46 = scmp.eq.s32.totalorder %s27, 0
    %p47 = por %p45, %p46
    %p48 = scmp.ne.s32.totalorder %s37, %s40
    %p49 = scmp.eq.s32.totalorder %s32, 1
    %p50 = por %p48, %p49
    %p51 = scmp.ne.s32.totalorder %s40, %s41
    %p52 = scmp.eq.s32.totalorder %s32, 0
    %p53 = por %p51, %p52
    %p54 = scmp.ne.s32.totalorder %s40, %s41
    %p55 = scmp.eq.s32.totalorder %s33, 1
    %p56 = por %p54, %p55
    %p58 = scmp.ne.s32.totalorder %s41, %s57
    %p59 = scmp.eq.s32.totalorder %s33, 0
    %p60 = por %p58, %p59
    %s62 = sadd.s32 %s61, 1
    %p65 = scmp.eq.s32.totalorder %s27, 1
    %p66 = scmp.ne.s32.totalorder %s61, %s63
    %p67 = scmp.eq.s32.totalorder %s27, 0
    %p68 = por %p66, %p67
    %p69 = scmp.ne.s32.totalorder %s61, %s63
    %p70 = scmp.eq.s32.totalorder %s32, 1
    %p71 = por %p69, %p70
    %p72 = scmp.ne.s32.totalorder %s63, %s64
    %p73 = scmp.eq.s32.totalorder %s32, 0
    %p74 = por %p72, %p73
    %p75 = scmp.ne.s32.totalorder %s63, %s64
    %p76 = scmp.eq.s32.totalorder %s33, 1
    %p77 = por %p75, %p76
    %p79 = scmp.ne.s32.totalorder %s64, %s78
    %p80 = scmp.eq.s32.totalorder %s33, 0
    %p81 = por %p79, %p80
    %s83 = sadd.s32 %s82, 1
    %p86 = scmp.eq.s32.totalorder %s27, 1
    %p87 = scmp.ne.s32.totalorder %s82, %s84
    %p88 = scmp.eq.s32.totalorder %s27, 0
    %p89 = por %p87, %p88
    %p90 = scmp.ne.s32.totalorder %s82, %s84
    %p91 = scmp.eq.s32.totalorder %s32, 1
    %p92 = por %p90, %p91
    %p93 = scmp.ne.s32.totalorder %s84, %s85
    %p94 = scmp.eq.s32.totalorder %s32, 0
    %p95 = por %p93, %p94
    %p96 = scmp.ne.s32.totalorder %s84, %s85
    %p97 = scmp.eq.s32.totalorder %s33, 1
    %p98 = por %p96, %p97
    %p100 = scmp.ne.s32.totalorder %s85, %s99
    %p101 = scmp.eq.s32.totalorder %s33, 0
    %p102 = por %p100, %p101
    %s104 = sadd.s32 %s103, 1
    %p107 = scmp.eq.s32.totalorder %s27, 1
    %p108 = scmp.ne.s32.totalorder %s103, %s105
    %p109 = scmp.eq.s32.totalorder %s27, 0
    %p110 = por %p108, %p109
    %p111 = scmp.ne.s32.totalorder %s103, %s105
    %p112 = scmp.eq.s32.totalorder %s32, 1
    %p113 = por %p111, %p112
    %p114 = scmp.ne.s32.totalorder %s105, %s106
    %p115 = scmp.eq.s32.totalorder %s32, 0
    %p116 = por %p114, %p115
    %p117 = scmp.ne.s32.totalorder %s105, %s106
    %p118 = scmp.eq.s32.totalorder %s33, 1
    %p119 = por %p117, %p118
    %p121 = scmp.ne.s32.totalorder %s106, %s120
    %p122 = scmp.eq.s32.totalorder %s33, 0
    %p123 = por %p121, %p122
    %s125 = sadd.s32 %s124, 1
    %p128 = scmp.eq.s32.totalorder %s27, 1
    %p129 = scmp.ne.s32.totalorder %s124, %s126
    %p130 = scmp.eq.s32.totalorder %s27, 0
    %p131 = por %p129, %p130
    %p132 = scmp.ne.s32.totalorder %s124, %s126
    %p133 = scmp.eq.s32.totalorder %s32, 1
    %p134 = por %p132, %p133
    %p135 = scmp.ne.s32.totalorder %s126, %s127
    %p136 = scmp.eq.s32.totalorder %s32, 0
    %p137 = por %p135, %p136
    %p138 = scmp.ne.s32.totalorder %s126, %s127
    %p139 = scmp.eq.s32.totalorder %s33, 1
    %p140 = por %p138, %p139
    %p142 = scmp.ne.s32.totalorder %s127, %s141
    %p143 = scmp.eq.s32.totalorder %s33, 0
    %p144 = por %p142, %p143
    %s146 = sadd.s32 %s145, 1
    %p149 = scmp.eq.s32.totalorder %s27, 1
    %p150 = scmp.ne.s32.totalorder %s145, %s147
    %p151 = scmp.eq.s32.totalorder %s27, 0
    %p152 = por %p150, %p151
    %p153 = scmp.ne.s32.totalorder %s145, %s147
    %p154 = scmp.eq.s32.totalorder %s32, 1
    %p155 = por %p153, %p154
    %p156 = scmp.ne.s32.totalorder %s147, %s148
    %p157 = scmp.eq.s32.totalorder %s32, 0
    %p158 = por %p156, %p157
    %p159 = scmp.ne.s32.totalorder %s147, %s148
    %p160 = scmp.eq.s32.totalorder %s33, 1
    %p161 = por %p159, %p160
    %p163 = scmp.ne.s32.totalorder %s148, %s162
    %p164 = scmp.eq.s32.totalorder %s33, 0
    %p165 = por %p163, %p164
    %s167 = sadd.s32 %s166, 1
    %p170 = scmp.eq.s32.totalorder %s27, 1
    %p171 = scmp.ne.s32.totalorder %s166, %s168
    %p172 = scmp.eq.s32.totalorder %s27, 0
    %p173 = por %p171, %p172
    %p174 = scmp.ne.s32.totalorder %s166, %s168
    %p175 = scmp.eq.s32.totalorder %s32, 1
    %p176 = por %p174, %p175
    %p177 = scmp.ne.s32.totalorder %s168, %s169
    %p178 = scmp.eq.s32.totalorder %s32, 0
    %p179 = por %p177, %p178
    %p180 = scmp.ne.s32.totalorder %s168, %s169
    %p181 = scmp.eq.s32.totalorder %s33, 1
    %p182 = por %p180, %p181
    %p184 = scmp.ne.s32.totalorder %s169, %s183
    %p185 = scmp.eq.s32.totalorder %s33, 0
    %p186 = por %p184, %p185
    %s188 = sadd.s32 %s187, 1
    %p191 = scmp.eq.s32.totalorder %s27, 1
    %p192 = scmp.ne.s32.totalorder %s187, %s189
    %p193 = scmp.eq.s32.totalorder %s27, 0
    %p194 = por %p192, %p193
    %p195 = scmp.ne.s32.totalorder %s187, %s189
    %p196 = scmp.eq.s32.totalorder %s32, 1
    %p197 = por %p195, %p196
    %p198 = scmp.ne.s32.totalorder %s189, %s190
    %p199 = scmp.eq.s32.totalorder %s32, 0
    %p200 = por %p198, %p199
    %p201 = scmp.ne.s32.totalorder %s189, %s190
    %p202 = scmp.eq.s32.totalorder %s33, 1
    %p203 = por %p201, %p202
    %p205 = scmp.ne.s32.totalorder %s190, %s204
    %p206 = scmp.eq.s32.totalorder %s33, 0
    %p207 = por %p205, %p206
    %s209 = sadd.s32 %s208, 1
    %p212 = scmp.eq.s32.totalorder %s27, 1
    %p213 = scmp.ne.s32.totalorder %s208, %s210
    %p214 = scmp.eq.s32.totalorder %s27, 0
    %p215 = por %p213, %p214
    %p216 = scmp.ne.s32.totalorder %s208, %s210
    %p217 = scmp.eq.s32.totalorder %s32, 1
    %p218 = por %p216, %p217
    %p219 = scmp.ne.s32.totalorder %s210, %s211
    %p220 = scmp.eq.s32.totalorder %s32, 0
    %p221 = por %p219, %p220
    %p222 = scmp.ne.s32.totalorder %s210, %s211
    %p223 = scmp.eq.s32.totalorder %s33, 1
    %p224 = por %p222, %p223
    %p226 = scmp.ne.s32.totalorder %s211, %s225
    %p227 = scmp.eq.s32.totalorder %s33, 0
    %p228 = por %p226, %p227
    %s230 = sadd.s32 %s229, 1
    %p233 = scmp.eq.s32.totalorder %s27, 1
    %p234 = scmp.ne.s32.totalorder %s229, %s231
    %p235 = scmp.eq.s32.totalorder %s27, 0
    %p236 = por %p234, %p235
    %p237 = scmp.ne.s32.totalorder %s229, %s231
    %p238 = scmp.eq.s32.totalorder %s32, 1
    %p239 = por %p237, %p238
    %p240 = scmp.ne.s32.totalorder %s231, %s232
    %p241 = scmp.eq.s32.totalorder %s32, 0
    %p242 = por %p240, %p241
    %p243 = scmp.ne.s32.totalorder %s231, %s232
    %p244 = scmp.eq.s32.totalorder %s33, 1
    %p245 = por %p243, %p244
    %p247 = scmp.ne.s32.totalorder %s232, %s246
    %p248 = scmp.eq.s32.totalorder %s33, 0
    %p249 = por %p247, %p248
    %s251 = sadd.s32 %s250, 1
    %p254 = scmp.eq.s32.totalorder %s27, 1
    %p255 = scmp.ne.s32.totalorder %s250, %s252
    %p256 = scmp.eq.s32.totalorder %s27, 0
    %p257 = por %p255, %p256
    %p258 = scmp.ne.s32.totalorder %s250, %s252
    %p259 = scmp.eq.s32.totalorder %s32, 1
    %p260 = por %p258, %p259
    %p261 = scmp.ne.s32.totalorder %s252, %s253
    %p262 = scmp.eq.s32.totalorder %s32, 0
    %p263 = por %p261, %p262
    %p264 = scmp.ne.s32.totalorder %s252, %s253
    %p265 = scmp.eq.s32.totalorder %s33, 1
    %p266 = por %p264, %p265
    %p268 = scmp.ne.s32.totalorder %s253, %s267
    %p269 = scmp.eq.s32.totalorder %s33, 0
    %p270 = por %p268, %p269
    %s272 = sadd.s32 %s271, 1
    %p275 = scmp.eq.s32.totalorder %s27, 1
    %p276 = scmp.ne.s32.totalorder %s271, %s273
    %p277 = scmp.eq.s32.totalorder %s27, 0
    %p278 = por %p276, %p277
    %p279 = scmp.ne.s32.totalorder %s271, %s273
    %p280 = scmp.eq.s32.totalorder %s32, 1
    %p281 = por %p279, %p280
    %p282 = scmp.ne.s32.totalorder %s273, %s274
    %p283 = scmp.eq.s32.totalorder %s32, 0
    %p284 = por %p282, %p283
    %p285 = scmp.ne.s32.totalorder %s273, %s274
    %p286 = scmp.eq.s32.totalorder %s33, 1
    %p287 = por %p285, %p286
    %p289 = scmp.ne.s32.totalorder %s274, %s288
    %p290 = scmp.eq.s32.totalorder %s33, 0
    %p291 = por %p289, %p290
    %s293 = sadd.s32 %s292, 1
    %p296 = scmp.eq.s32.totalorder %s27, 1
    %p297 = scmp.ne.s32.totalorder %s292, %s294
    %p298 = scmp.eq.s32.totalorder %s27, 0
    %p299 = por %p297, %p298
    %p300 = scmp.ne.s32.totalorder %s292, %s294
    %p301 = scmp.eq.s32.totalorder %s32, 1
    %p302 = por %p300, %p301
    %p303 = scmp.ne.s32.totalorder %s294, %s295
    %p304 = scmp.eq.s32.totalorder %s32, 0
    %p305 = por %p303, %p304
    %p306 = scmp.ne.s32.totalorder %s294, %s295
    %p307 = scmp.eq.s32.totalorder %s33, 1
    %p308 = por %p306, %p307
    %p310 = scmp.ne.s32.totalorder %s295, %s309
    %p311 = scmp.eq.s32.totalorder %s33, 0
    %p312 = por %p310, %p311
    %s314 = sadd.s32 %s313, 1
    %p317 = scmp.eq.s32.totalorder %s27, 1
    %p318 = scmp.ne.s32.totalorder %s313, %s315
    %p319 = scmp.eq.s32.totalorder %s27, 0
    %p320 = por %p318, %p319
    %p321 = scmp.ne.s32.totalorder %s313, %s315
    %p322 = scmp.eq.s32.totalorder %s32, 1
    %p323 = por %p321, %p322
    %p324 = scmp.ne.s32.totalorder %s315, %s316
    %p325 = scmp.eq.s32.totalorder %s32, 0
    %p326 = por %p324, %p325
    %p327 = scmp.ne.s32.totalorder %s315, %s316
    %p328 = scmp.eq.s32.totalorder %s33, 1
    %p329 = por %p327, %p328
    %p331 = scmp.ne.s32.totalorder %s316, %s330
    %p332 = scmp.eq.s32.totalorder %s33, 0
    %p333 = por %p331, %p332
    %s335 = sadd.s32 %s334, 1
    %p338 = scmp.eq.s32.totalorder %s27, 1
    %p339 = scmp.ne.s32.totalorder %s334, %s336
    %p340 = scmp.eq.s32.totalorder %s27, 0
    %p341 = por %p339, %p340
    %p342 = scmp.ne.s32.totalorder %s334, %s336
    %p343 = scmp.eq.s32.totalorder %s32, 1
    %p344 = por %p342, %p343
    %p345 = scmp.ne.s32.totalorder %s336, %s337
    %p346 = scmp.eq.s32.totalorder %s32, 0
    %p347 = por %p345, %p346
    %p348 = scmp.ne.s32.totalorder %s336, %s337
    %p349 = scmp.eq.s32.totalorder %s33, 1
    %p350 = por %p348, %p349
    %p352 = scmp.ne.s32.totalorder %s337, %s351
    %p353 = scmp.eq.s32.totalorder %s33, 0
    %p354 = por %p352, %p353
    %s356 = sadd.s32 %s355, 1
    %p359 = scmp.eq.s32.totalorder %s27, 1
    %p360 = scmp.ne.s32.totalorder %s355, %s357
    %p361 = scmp.eq.s32.totalorder %s27, 0
    %p362 = por %p360, %p361
    %p363 = scmp.ne.s32.totalorder %s355, %s357
    %p364 = scmp.eq.s32.totalorder %s32, 1
    %p365 = por %p363, %p364
    %p366 = scmp.ne.s32.totalorder %s357, %s358
    %p367 = scmp.eq.s32.totalorder %s32, 0
    %p368 = por %p366, %p367
    %p369 = scmp.ne.s32.totalorder %s357, %s358
    %p370 = scmp.eq.s32.totalorder %s33, 1
    %p371 = por %p369, %p370
    %p373 = scmp.ne.s32.totalorder %s358, %s372
    %p374 = scmp.eq.s32.totalorder %s33, 0
    %p375 = por %p373, %p374
    %s377 = sadd.s32 %s376, 1
    %p380 = scmp.eq.s32.totalorder %s27, 1
    %p381 = scmp.ne.s32.totalorder %s376, %s378
    %p382 = scmp.eq.s32.totalorder %s27, 0
    %p383 = por %p381, %p382
    %p384 = scmp.ne.s32.totalorder %s376, %s378
    %p385 = scmp.eq.s32.totalorder %s32, 1
    %p386 = por %p384, %p385
    %p387 = scmp.ne.s32.totalorder %s378, %s379
    %p388 = scmp.eq.s32.totalorder %s32, 0
    %p389 = por %p387, %p388
    %p390 = scmp.ne.s32.totalorder %s378, %s379
    %p391 = scmp.eq.s32.totalorder %s33, 1
    %p392 = por %p390, %p391
    %p394 = scmp.ne.s32.totalorder %s379, %s393
    %p395 = scmp.eq.s32.totalorder %s33, 0
    %p396 = por %p394, %p395
    %s398 = sadd.s32 %s397, 1
    %p401 = scmp.eq.s32.totalorder %s27, 1
    %p402 = scmp.ne.s32.totalorder %s397, %s399
    %p403 = scmp.eq.s32.totalorder %s27, 0
    %p404 = por %p402, %p403
    %p405 = scmp.ne.s32.totalorder %s397, %s399
    %p406 = scmp.eq.s32.totalorder %s32, 1
    %p407 = por %p405, %p406
    %p408 = scmp.ne.s32.totalorder %s399, %s400
    %p409 = scmp.eq.s32.totalorder %s32, 0
    %p410 = por %p408, %p409
    %p411 = scmp.ne.s32.totalorder %s399, %s400
    %p412 = scmp.eq.s32.totalorder %s33, 1
    %p413 = por %p411, %p412
    %p415 = scmp.ne.s32.totalorder %s400, %s414
    %p416 = scmp.eq.s32.totalorder %s33, 0
    %p417 = por %p415, %p416
    %s419 = sadd.s32 %s418, 1
    %p422 = scmp.eq.s32.totalorder %s27, 1
    %p423 = scmp.ne.s32.totalorder %s418, %s420
    %p424 = scmp.eq.s32.totalorder %s27, 0
    %p425 = por %p423, %p424
    %p426 = scmp.ne.s32.totalorder %s418, %s420
    %p427 = scmp.eq.s32.totalorder %s32, 1
    %p428 = por %p426, %p427
    %p429 = scmp.ne.s32.totalorder %s420, %s421
    %p430 = scmp.eq.s32.totalorder %s32, 0
    %p431 = por %p429, %p430
    %p432 = scmp.ne.s32.totalorder %s420, %s421
    %p433 = scmp.eq.s32.totalorder %s33, 1
    %p434 = por %p432, %p433
    %p436 = scmp.ne.s32.totalorder %s421, %s435
    %p437 = scmp.eq.s32.totalorder %s33, 0
    %p438 = por %p436, %p437
    %s440 = sadd.s32 %s439, 1
    %p443 = scmp.eq.s32.totalorder %s27, 1
    %p444 = scmp.ne.s32.totalorder %s439, %s441
    %p445 = scmp.eq.s32.totalorder %s27, 0
    %p446 = por %p444, %p445
    %p447 = scmp.ne.s32.totalorder %s439, %s441
    %p448 = scmp.eq.s32.totalorder %s32, 1
    %p449 = por %p447, %p448
    %p450 = scmp.ne.s32.totalorder %s441, %s442
    %p451 = scmp.eq.s32.totalorder %s32, 0
    %p452 = por %p450, %p451
    %p453 = scmp.ne.s32.totalorder %s441, %s442
    %p454 = scmp.eq.s32.totalorder %s33, 1
    %p455 = por %p453, %p454
    %p457 = scmp.ne.s32.totalorder %s442, %s456
    %p458 = scmp.eq.s32.totalorder %s33, 0
    %p459 = por %p457, %p458
    %s461 = sadd.s32 %s460, 1
    %p464 = scmp.eq.s32.totalorder %s27, 1
    %p465 = scmp.ne.s32.totalorder %s460, %s462
    %p466 = scmp.eq.s32.totalorder %s27, 0
    %p467 = por %p465, %p466
    %p468 = scmp.ne.s32.totalorder %s460, %s462
    %p469 = scmp.eq.s32.totalorder %s32, 1
    %p470 = por %p468, %p469
    %p471 = scmp.ne.s32.totalorder %s462, %s463
    %p472 = scmp.eq.s32.totalorder %s32, 0
    %p473 = por %p471, %p472
    %p474 = scmp.ne.s32.totalorder %s462, %s463
    %p475 = scmp.eq.s32.totalorder %s33, 1
    %p476 = por %p474, %p475
    %p478 = scmp.ne.s32.totalorder %s463, %s477
    %p479 = scmp.eq.s32.totalorder %s33, 0
    %p480 = por %p478, %p479
    %s481 = ssub.s32 %s27, %s34
    %p482 = scmp.eq.s32.totalorder %s481, 0
    %s484 = sadd.s32 %s483, 1
    %s485 = scalar_select %p482, %s483, %s484
    %p488 = pneg %p482
    %p489 = scmp.eq.s32.totalorder %s27, 1
    %p490 = por %p488, %p489
    %p491 = scmp.ne.s32.totalorder %s483, %s486
    %p492 = scmp.eq.s32.totalorder %s27, 0
    %p493 = por %p491, %p492
    %p494 = scmp.ne.s32.totalorder %s483, %s486
    %p495 = scmp.eq.s32.totalorder %s32, 1
    %p496 = por %p494, %p495
    %p497 = scmp.ne.s32.totalorder %s486, %s487
    %p498 = scmp.eq.s32.totalorder %s32, 0
    %p499 = por %p497, %p498
    %p500 = scmp.ne.s32.totalorder %s486, %s487
    %p501 = scmp.eq.s32.totalorder %s33, 1
    %p502 = por %p500, %p501
    %p504 = scmp.ne.s32.totalorder %s487, %s503
    %p505 = scmp.eq.s32.totalorder %s33, 0
    %p506 = por %p504, %p505
    %p507 = scmp.le.s32.totalorder 1, %s27
    %p508 = scmp.lt.s32.totalorder %s27, 3
    %p509 = pnand %p507, %p508
    %p510 = pneg %p509
    // Predicated region
    $region9: #{conv_autoencoder_forward.1} parent=5 // pred_check
      _
    $region10: #{conv_autoencoder_forward.1} parent=5 // pred_check_branch
      %512 = sbr.rel (%p509) target = $region12
    $region11: #{conv_autoencoder_forward.1} parent=5 // pred_region
      %s513 = ssub.s32 %s27, 1
      // Predicated region
      $region13: #{conv_autoencoder_forward.1} parent=11 // pred_check
        %p514 = pneg %p74
      $region14: #{conv_autoencoder_forward.1} parent=11 // pred_check_branch
        %516 = sbr.rel (%p514) target = $region16
      $region15: #{conv_autoencoder_forward.1} parent=11 // pred_region
        _
      $region16: #{conv_autoencoder_forward.1} parent=11 // pred_fallthru
        _
      // Predicated region
      $region17: #{conv_autoencoder_forward.1} parent=11 // pred_check
        %p517 = pneg %p95
      $region18: #{conv_autoencoder_forward.1} parent=11 // pred_check_branch
        %519 = sbr.rel (%p517) target = $region20
      $region19: #{conv_autoencoder_forward.1} parent=11 // pred_region
        _
      $region20: #{conv_autoencoder_forward.1} parent=11 // pred_fallthru
        _
      // Predicated region
      $region21: #{conv_autoencoder_forward.1} parent=11 // pred_check
        %p520 = pneg %p116
      $region22: #{conv_autoencoder_forward.1} parent=11 // pred_check_branch
        %522 = sbr.rel (%p520) target = $region24
      $region23: #{conv_autoencoder_forward.1} parent=11 // pred_region
        _
      $region24: #{conv_autoencoder_forward.1} parent=11 // pred_fallthru
        _
      // Predicated region
      $region25: #{conv_autoencoder_forward.1} parent=11 // pred_check
        %p523 = pneg %p137
      $region26: #{conv_autoencoder_forward.1} parent=11 // pred_check_branch
        %525 = sbr.rel (%p523) target = $region28
      $region27: #{conv_autoencoder_forward.1} parent=11 // pred_region
        _
      $region28: #{conv_autoencoder_forward.1} parent=11 // pred_fallthru
        _
      // Predicated region
      $region29: #{conv_autoencoder_forward.1} parent=11 // pred_check
        %p526 = pneg %p158
      $region30: #{conv_autoencoder_forward.1} parent=11 // pred_check_branch
        %528 = sbr.rel (%p526) target = $region32
      $region31: #{conv_autoencoder_forward.1} parent=11 // pred_region
        _
      $region32: #{conv_autoencoder_forward.1} parent=11 // pred_fallthru
        _
      // Predicated region
      $region33: #{conv_autoencoder_forward.1} parent=11 // pred_check
        %p529 = pneg %p179
      $region34: #{conv_autoencoder_forward.1} parent=11 // pred_check_branch
        %531 = sbr.rel (%p529) target = $region36
      $region35: #{conv_autoencoder_forward.1} parent=11 // pred_region
        _
      $region36: #{conv_autoencoder_forward.1} parent=11 // pred_fallthru
        _
      // Predicated region
      $region37: #{conv_autoencoder_forward.1} parent=11 // pred_check
        %p532 = pneg %p200
      $region38: #{conv_autoencoder_forward.1} parent=11 // pred_check_branch
        %534 = sbr.rel (%p532) target = $region40
      $region39: #{conv_autoencoder_forward.1} parent=11 // pred_region
        _
      $region40: #{conv_autoencoder_forward.1} parent=11 // pred_fallthru
        _
      // Predicated region
      $region41: #{conv_autoencoder_forward.1} parent=11 // pred_check
        %p535 = pneg %p221
      $region42: #{conv_autoencoder_forward.1} parent=11 // pred_check_branch
        %537 = sbr.rel (%p535) target = $region44
      $region43: #{conv_autoencoder_forward.1} parent=11 // pred_region
        _
      $region44: #{conv_autoencoder_forward.1} parent=11 // pred_fallthru
        _
      // Predicated region
      $region45: #{conv_autoencoder_forward.1} parent=11 // pred_check
        %p538 = pneg %p242
      $region46: #{conv_autoencoder_forward.1} parent=11 // pred_check_branch
        %540 = sbr.rel (%p538) target = $region48
      $region47: #{conv_autoencoder_forward.1} parent=11 // pred_region
        _
      $region48: #{conv_autoencoder_forward.1} parent=11 // pred_fallthru
        _
      // Predicated region
      $region49: #{conv_autoencoder_forward.1} parent=11 // pred_check
        %p541 = pneg %p263
      $region50: #{conv_autoencoder_forward.1} parent=11 // pred_check_branch
        %543 = sbr.rel (%p541) target = $region52
      $region51: #{conv_autoencoder_forward.1} parent=11 // pred_region
        _
      $region52: #{conv_autoencoder_forward.1} parent=11 // pred_fallthru
        _
      // Predicated region
      $region53: #{conv_autoencoder_forward.1} parent=11 // pred_check
        %p544 = pneg %p284
      $region54: #{conv_autoencoder_forward.1} parent=11 // pred_check_branch
        %546 = sbr.rel (%p544) target = $region56
      $region55: #{conv_autoencoder_forward.1} parent=11 // pred_region
        _
      $region56: #{conv_autoencoder_forward.1} parent=11 // pred_fallthru
        _
      // Predicated region
      $region57: #{conv_autoencoder_forward.1} parent=11 // pred_check
        %p547 = pneg %p305
      $region58: #{conv_autoencoder_forward.1} parent=11 // pred_check_branch
        %549 = sbr.rel (%p547) target = $region60
      $region59: #{conv_autoencoder_forward.1} parent=11 // pred_region
        _
      $region60: #{conv_autoencoder_forward.1} parent=11 // pred_fallthru
        _
      // Predicated region
      $region61: #{conv_autoencoder_forward.1} parent=11 // pred_check
        %p550 = pneg %p326
      $region62: #{conv_autoencoder_forward.1} parent=11 // pred_check_branch
        %552 = sbr.rel (%p550) target = $region64
      $region63: #{conv_autoencoder_forward.1} parent=11 // pred_region
        _
      $region64: #{conv_autoencoder_forward.1} parent=11 // pred_fallthru
        _
      // Predicated region
      $region65: #{conv_autoencoder_forward.1} parent=11 // pred_check
        %p553 = pneg %p347
      $region66: #{conv_autoencoder_forward.1} parent=11 // pred_check_branch
        %555 = sbr.rel (%p553) target = $region68
      $region67: #{conv_autoencoder_forward.1} parent=11 // pred_region
        _
      $region68: #{conv_autoencoder_forward.1} parent=11 // pred_fallthru
        _
      // Predicated region
      $region69: #{conv_autoencoder_forward.1} parent=11 // pred_check
        %p556 = pneg %p368
      $region70: #{conv_autoencoder_forward.1} parent=11 // pred_check_branch
        %558 = sbr.rel (%p556) target = $region72
      $region71: #{conv_autoencoder_forward.1} parent=11 // pred_region
        _
      $region72: #{conv_autoencoder_forward.1} parent=11 // pred_fallthru
        _
      // Predicated region
      $region73: #{conv_autoencoder_forward.1} parent=11 // pred_check
        %p559 = pneg %p389
      $region74: #{conv_autoencoder_forward.1} parent=11 // pred_check_branch
        %561 = sbr.rel (%p559) target = $region76
      $region75: #{conv_autoencoder_forward.1} parent=11 // pred_region
        _
      $region76: #{conv_autoencoder_forward.1} parent=11 // pred_fallthru
        _
      // Predicated region
      $region77: #{conv_autoencoder_forward.1} parent=11 // pred_check
        %p562 = pneg %p410
      $region78: #{conv_autoencoder_forward.1} parent=11 // pred_check_branch
        %564 = sbr.rel (%p562) target = $region80
      $region79: #{conv_autoencoder_forward.1} parent=11 // pred_region
        _
      $region80: #{conv_autoencoder_forward.1} parent=11 // pred_fallthru
        _
      // Predicated region
      $region81: #{conv_autoencoder_forward.1} parent=11 // pred_check
        %p565 = pneg %p431
      $region82: #{conv_autoencoder_forward.1} parent=11 // pred_check_branch
        %567 = sbr.rel (%p565) target = $region84
      $region83: #{conv_autoencoder_forward.1} parent=11 // pred_region
        _
      $region84: #{conv_autoencoder_forward.1} parent=11 // pred_fallthru
        _
      // Predicated region
      $region85: #{conv_autoencoder_forward.1} parent=11 // pred_check
        %p568 = pneg %p452
      $region86: #{conv_autoencoder_forward.1} parent=11 // pred_check_branch
        %570 = sbr.rel (%p568) target = $region88
      $region87: #{conv_autoencoder_forward.1} parent=11 // pred_region
        _
      $region88: #{conv_autoencoder_forward.1} parent=11 // pred_fallthru
        _
      // Predicated region
      $region89: #{conv_autoencoder_forward.1} parent=11 // pred_check
        %p571 = pneg %p473
      $region90: #{conv_autoencoder_forward.1} parent=11 // pred_check_branch
        %573 = sbr.rel (%p571) target = $region92
      $region91: #{conv_autoencoder_forward.1} parent=11 // pred_region
        _
      $region92: #{conv_autoencoder_forward.1} parent=11 // pred_fallthru
        _
    $region12: #{conv_autoencoder_forward.1} parent=5 // pred_fallthru
      _
    %p574 = scmp.lt.s32.totalorder %s27, 2
    // Predicated region
    $region93: #{conv_autoencoder_forward.1} parent=5 // pred_check
      %p575 = pneg %p574
    $region94: #{conv_autoencoder_forward.1} parent=5 // pred_check_branch
      %577 = sbr.rel (%p575) target = $region96
    $region95: #{conv_autoencoder_forward.1} parent=5 // pred_region
      // Predicated region
      $region97: #{conv_autoencoder_forward.1} parent=95 // pred_check
        %p578 = pneg %p47
      $region98: #{conv_autoencoder_forward.1} parent=95 // pred_check_branch
        %580 = sbr.rel (%p578) target = $region100
      $region99: #{conv_autoencoder_forward.1} parent=95 // pred_region
        %p581 = scmp.lt.s32.totalorder %s27, 1
        %s582 = scalar_select %p581, %s27, 1
        %s583 = smul.addr %s582, 8
        %s584 = smul.addr %s583, 4
        %s585 = scalar_lea.vmem %s0, %s584
      $region100: #{conv_autoencoder_forward.1} parent=95 // pred_fallthru
        _
    $region96: #{conv_autoencoder_forward.1} parent=5 // pred_fallthru
      _
    %p586 = scmp.le.s32.totalorder 1, %s27
    %p587 = scmp.lt.s32.totalorder %s27, 3
    %p588 = pnand %p586, %p587
    %p589 = pneg %p588
    // Predicated region
    $region101: #{conv_autoencoder_forward.1} parent=5 // pred_check
      _
    $region102: #{conv_autoencoder_forward.1} parent=5 // pred_check_branch
      %591 = sbr.rel (%p588) target = $region104
    $region103: #{conv_autoencoder_forward.1} parent=5 // pred_region
      %s592 = ssub.s32 %s27, 1
      %p593 = scmp.lt.s32.totalorder %s32, 1
      %s594 = scalar_select %p593, %s32, 1
      %s595 = smul.addr %s594, 8
      %s596 = smul.addr %s595, 4
      %s597 = scalar_lea.vmem %s0, %s596
      %p598 = pneg %p53
      %p599 = pneg %p50
      %p600 = pneg %p74
      %p601 = pneg %p71
      %p602 = pneg %p95
      %p603 = pneg %p92
      %p604 = pneg %p116
      %p605 = pneg %p113
      %p606 = pneg %p137
      %p607 = pneg %p134
      %p608 = pneg %p158
      %p609 = pneg %p155
      %p610 = pneg %p179
      %p611 = pneg %p176
      %p612 = pneg %p200
      %p613 = pneg %p197
      %p614 = pneg %p221
      %p615 = pneg %p218
      %p616 = pneg %p242
      %p617 = pneg %p239
      %p618 = pneg %p263
      %p619 = pneg %p260
      %p620 = pneg %p284
      %p621 = pneg %p281
      %p622 = pneg %p305
      %p623 = pneg %p302
      %p624 = pneg %p326
      %p625 = pneg %p323
      %p626 = pneg %p347
      %p627 = pneg %p344
      %p628 = pneg %p368
      %p629 = pneg %p365
      %p630 = pneg %p389
      %p631 = pneg %p386
      %p632 = pneg %p410
      %p633 = pneg %p407
      %p634 = pneg %p431
      %p635 = pneg %p428
      %p636 = pneg %p452
      %p637 = pneg %p449
      %p638 = pneg %p473
      %p639 = pneg %p470
      %p640 = pneg %p499
      %p641 = pneg %p496
      %p642 = scmp.lt.s32.totalorder %s32, 1
      %s643 = scalar_select %p642, %s32, 1
      %s644 = smul.addr %s643, 8
      %s645 = smul.addr %s644, 8
      %s646 = scalar_lea.vmem %s21, %s645
      %p647 = scmp.lt.s32.totalorder %s32, 1
      %s648 = scalar_select %p647, %s32, 1
      %s649 = smul.addr %s648, 8
      %s650 = smul.addr %s649, 4
      %s651 = scalar_lea.vmem %s0, %s650
      %p652 = scmp.lt.s32.totalorder %s32, 1
      %s653 = scalar_select %p652, %s32, 1
      %s654 = smul.addr %s653, 8
      %s655 = smul.addr %s654, 8
      %s656 = scalar_lea.vmem %s21, %s655
      %vm658 = vcmask 256000
      %vm659 = vsmask.f32 2304
      %vm660 = vmand %vm658, %vm659
      %v661 = vld [vmem:[#allocation2] sm:$0x7]
      %v662 = vsel %vm660, 0, %v661
      %663 = vst [vmem:[#allocation2] sm:$0x7] %v662
      %v664 = vld [vmem:[#allocation2 + $0x4] sm:$0x7]
      %v665 = vsel %vm660, 0, %v664
      %666 = vst [vmem:[#allocation2 + $0x4] sm:$0x7] %v665
      %v667 = vld [vmem:[#allocation2 + $0x8] sm:$0x7]
      %v668 = vsel %vm660, 0, %v667
      %669 = vst [vmem:[#allocation2 + $0x8] sm:$0x7] %v668
      %v670 = vld [vmem:[#allocation2 + $0xc] sm:$0x7]
      %v671 = vsel %vm660, 0, %v670
      %672 = vst [vmem:[#allocation2 + $0xc] sm:$0x7] %v671
      %v673 = vld [vmem:[#allocation2 + $0x10] sm:$0x7]
      %v674 = vsel %vm660, 0, %v673
      %675 = vst [vmem:[#allocation2 + $0x10] sm:$0x7] %v674
      %v676 = vld [vmem:[#allocation2 + $0x14] sm:$0x7]
      %v677 = vsel %vm660, 0, %v676
      %678 = vst [vmem:[#allocation2 + $0x14] sm:$0x7] %v677
      %v679 = vld [vmem:[#allocation2 + $0x18] sm:$0x7]
      %v680 = vsel %vm660, 0, %v679
      %681 = vst [vmem:[#allocation2 + $0x18] sm:$0x7] %v680
      %v682 = vld [vmem:[#allocation2 + $0x1c] sm:$0x7]
      %v683 = vsel %vm660, 0, %v682
      %684 = vst [vmem:[#allocation2 + $0x1c] sm:$0x7] %v683
      %v685 = vld [vmem:[#allocation2 + $0x20] sm:$0x7]
      %v686 = vsel %vm660, 0, %v685
      %687 = vst [vmem:[#allocation2 + $0x20] sm:$0x7] %v686
      %v688 = vld [vmem:[#allocation2 + $0x24] sm:$0x7]
      %v689 = vsel %vm660, 0, %v688
      %690 = vst [vmem:[#allocation2 + $0x24] sm:$0x7] %v689
      %v691 = vld [vmem:[#allocation2 + $0x28] sm:$0x7]
      %v692 = vsel %vm660, 0, %v691
      %693 = vst [vmem:[#allocation2 + $0x28] sm:$0x7] %v692
      %v694 = vld [vmem:[#allocation2 + $0x2c] sm:$0x7]
      %v695 = vsel %vm660, 0, %v694
      %696 = vst [vmem:[#allocation2 + $0x2c] sm:$0x7] %v695
      %v697 = vld [vmem:[#allocation2 + $0x30] sm:$0x7]
      %v698 = vsel %vm660, 0, %v697
      %699 = vst [vmem:[#allocation2 + $0x30] sm:$0x7] %v698
      %v700 = vld [vmem:[#allocation2 + $0x34] sm:$0x7]
      %v701 = vsel %vm660, 0, %v700
      %702 = vst [vmem:[#allocation2 + $0x34] sm:$0x7] %v701
      %v703 = vld [vmem:[#allocation2 + $0x38] sm:$0x7]
      %v704 = vsel %vm660, 0, %v703
      %705 = vst [vmem:[#allocation2 + $0x38] sm:$0x7] %v704
      %v706 = vld [vmem:[#allocation2 + $0x3c] sm:$0x7]
      %v707 = vsel %vm660, 0, %v706
      %708 = vst [vmem:[#allocation2 + $0x3c] sm:$0x7] %v707
      %v709 = vld [vmem:[#allocation2 + $0x40] sm:$0x7]
      %v710 = vsel %vm660, 0, %v709
      %711 = vst [vmem:[#allocation2 + $0x40] sm:$0x7] %v710
      %v712 = vld [vmem:[#allocation2 + $0x44] sm:$0x7]
      %v713 = vsel %vm660, 0, %v712
      %714 = vst [vmem:[#allocation2 + $0x44] sm:$0x7] %v713
      %v715 = vld [vmem:[#allocation2 + $0x48] sm:$0x7]
      %v716 = vsel %vm660, 0, %v715
      %717 = vst [vmem:[#allocation2 + $0x48] sm:$0x7] %v716
      %v718 = vld [vmem:[#allocation2 + $0x4c] sm:$0x7]
      %v719 = vsel %vm660, 0, %v718
      %720 = vst [vmem:[#allocation2 + $0x4c] sm:$0x7] %v719
      %vm721 = vcmask 517120
      %vm722 = vsmask.f32 1280
      %vm723 = vmand %vm721, %vm722
      %v724 = vld [vmem:[#allocation3] sm:$0x3]
      %v725 = vsel %vm723, 0, %v724
      %726 = vst [vmem:[#allocation3] sm:$0x3] %v725
      %v727 = vld [vmem:[#allocation3 + $0x2] sm:$0x3]
      %v728 = vsel %vm723, 0, %v727
      %729 = vst [vmem:[#allocation3 + $0x2] sm:$0x3] %v728
      %v730 = vld [vmem:[#allocation3 + $0x4] sm:$0x3]
      %v731 = vsel %vm723, 0, %v730
      %732 = vst [vmem:[#allocation3 + $0x4] sm:$0x3] %v731
      %v733 = vld [vmem:[#allocation3 + $0x6] sm:$0x3]
      %v734 = vsel %vm723, 0, %v733
      %735 = vst [vmem:[#allocation3 + $0x6] sm:$0x3] %v734
      %v736 = vld [vmem:[#allocation3 + $0x8] sm:$0x3]
      %v737 = vsel %vm723, 0, %v736
      %738 = vst [vmem:[#allocation3 + $0x8] sm:$0x3] %v737
      %v739 = vld [vmem:[#allocation3 + $0xa] sm:$0x3]
      %v740 = vsel %vm723, 0, %v739
      %741 = vst [vmem:[#allocation3 + $0xa] sm:$0x3] %v740
      %v742 = vld [vmem:[#allocation3 + $0xc] sm:$0x3]
      %v743 = vsel %vm723, 0, %v742
      %744 = vst [vmem:[#allocation3 + $0xc] sm:$0x3] %v743
      %v745 = vld [vmem:[#allocation3 + $0xe] sm:$0x3]
      %v746 = vsel %vm723, 0, %v745
      %747 = vst [vmem:[#allocation3 + $0xe] sm:$0x3] %v746
      %v748 = vld [vmem:[#allocation3 + $0x10] sm:$0x3]
      %v749 = vsel %vm723, 0, %v748
      %750 = vst [vmem:[#allocation3 + $0x10] sm:$0x3] %v749
      %v751 = vld [vmem:[#allocation3 + $0x12] sm:$0x3]
      %v752 = vsel %vm723, 0, %v751
      %753 = vst [vmem:[#allocation3 + $0x12] sm:$0x3] %v752
      %v754 = vld [vmem:[#allocation3 + $0x14] sm:$0x3]
      %v755 = vsel %vm723, 0, %v754
      %756 = vst [vmem:[#allocation3 + $0x14] sm:$0x3] %v755
      %v757 = vld [vmem:[#allocation3 + $0x16] sm:$0x3]
      %v758 = vsel %vm723, 0, %v757
      %759 = vst [vmem:[#allocation3 + $0x16] sm:$0x3] %v758
      %vm760 = vcmask 254976
      %vm761 = vmand %vm760, %vm722
      %v762 = vld [vmem:[#allocation4] sm:$0x3]
      %v763 = vsel %vm761, 0, %v762
      %764 = vst [vmem:[#allocation4] sm:$0x3] %v763
      %v765 = vld [vmem:[#allocation4 + $0x2] sm:$0x3]
      %v766 = vsel %vm761, 0, %v765
      %767 = vst [vmem:[#allocation4 + $0x2] sm:$0x3] %v766
      %v768 = vld [vmem:[#allocation4 + $0x4] sm:$0x3]
      %v769 = vsel %vm761, 0, %v768
      %770 = vst [vmem:[#allocation4 + $0x4] sm:$0x3] %v769
      %vm771 = vcmask 518144
      %vm772 = vmand %vm771, %vm659
      %v773 = vld [vmem:[#allocation5] sm:$0x7]
      %v774 = vsel %vm772, 0, %v773
      %775 = vst [vmem:[#allocation5] sm:$0x7] %v774
      %v776 = vld [vmem:[#allocation5 + $0x4] sm:$0x7]
      %v777 = vsel %vm772, 0, %v776
      %778 = vst [vmem:[#allocation5 + $0x4] sm:$0x7] %v777
      %v779 = vld [vmem:[#allocation5 + $0x8] sm:$0x7]
      %v780 = vsel %vm772, 0, %v779
      %781 = vst [vmem:[#allocation5 + $0x8] sm:$0x7] %v780
      %v782 = vld [vmem:[#allocation5 + $0xc] sm:$0x7]
      %v783 = vsel %vm772, 0, %v782
      %784 = vst [vmem:[#allocation5 + $0xc] sm:$0x7] %v783
      %v785 = vld [vmem:[#allocation5 + $0x10] sm:$0x7]
      %v786 = vsel %vm772, 0, %v785
      %787 = vst [vmem:[#allocation5 + $0x10] sm:$0x7] %v786
      %vm788 = vcmask 257024
      %789 = vst.msk [vmem:[#allocation6] sm:$0xf] %vm788, 0
      %vm790 = vcmask 253952
      %vm791 = vsmask.f32 256
      %vm792 = vmand %vm790, %vm791
      %v793 = vld [vmem:[#allocation6 + $0x4] sm:$0x1]
      %v794 = vsel %vm792, 0, %v793
      %795 = vst [vmem:[#allocation6 + $0x4] sm:$0x1] %v794
      %796 = vst.msk [vmem:[#allocation6 + $0x8] sm:$0xf] %vm788, 0
      %v797 = vld [vmem:[#allocation6 + $0xc] sm:$0x1]
      %v798 = vsel %vm792, 0, %v797
      %799 = vst [vmem:[#allocation6 + $0xc] sm:$0x1] %v798
      %800 = vst.msk [vmem:[#allocation6 + $0x10] sm:$0xf] %vm788, 0
      %v801 = vld [vmem:[#allocation6 + $0x14] sm:$0x1]
      %v802 = vsel %vm792, 0, %v801
      %803 = vst [vmem:[#allocation6 + $0x14] sm:$0x1] %v802
      %804 = vst.msk [vmem:[#allocation6 + $0x18] sm:$0xf] %vm788, 0
      %v805 = vld [vmem:[#allocation6 + $0x1c] sm:$0x1]
      %v806 = vsel %vm792, 0, %v805
      %807 = vst [vmem:[#allocation6 + $0x1c] sm:$0x1] %v806
      %808 = vst.msk [vmem:[#allocation6 + $0x20] sm:$0xf] %vm788, 0
      %v809 = vld [vmem:[#allocation6 + $0x24] sm:$0x1]
      %v810 = vsel %vm792, 0, %v809
      %811 = vst [vmem:[#allocation6 + $0x24] sm:$0x1] %v810
      %812 = vst.msk [vmem:[#allocation6 + $0x28] sm:$0xf] %vm788, 0
      %v813 = vld [vmem:[#allocation6 + $0x2c] sm:$0x1]
      %v814 = vsel %vm792, 0, %v813
      %815 = vst [vmem:[#allocation6 + $0x2c] sm:$0x1] %v814
      %816 = vst.msk [vmem:[#allocation6 + $0x30] sm:$0xf] %vm788, 0
      %v817 = vld [vmem:[#allocation6 + $0x34] sm:$0x1]
      %v818 = vsel %vm792, 0, %v817
      %819 = vst [vmem:[#allocation6 + $0x34] sm:$0x1] %v818
      %820 = vst.msk [vmem:[#allocation6 + $0x38] sm:$0xf] %vm788, 0
      %v821 = vld [vmem:[#allocation6 + $0x3c] sm:$0x1]
      %v822 = vsel %vm792, 0, %v821
      %823 = vst [vmem:[#allocation6 + $0x3c] sm:$0x1] %v822
      %824 = vst.msk [vmem:[#allocation6 + $0x40] sm:$0xf] %vm788, 0
      %v825 = vld [vmem:[#allocation6 + $0x44] sm:$0x1]
      %v826 = vsel %vm792, 0, %v825
      %827 = vst [vmem:[#allocation6 + $0x44] sm:$0x1] %v826
      %v828 = vld [vmem:[%s651] sm:$0xf]
      %v829 = vld [vmem:[%s651 + $0x4] sm:$0xf]
      %v830 = vld [vmem:[%s651 + $0x8] sm:$0xf]
      %v831 = vld [vmem:[%s651 + $0xc] sm:$0xf]
      %v832 = vld [vmem:[%s651 + $0x10] sm:$0xf]
      %v833 = vld [vmem:[%s651 + $0x14] sm:$0xf]
      %v834 = vld [vmem:[%s651 + $0x18] sm:$0xf]
      %v835 = vld [vmem:[%s651 + $0x1c] sm:$0xf]
      %v836 = vld [vmem:[%s1] sm:$0xf]
      %v837 = vld [vmem:[%s1 + $0x4] sm:$0x1]
      %v846 = vunpack.c.l.b16 %v828
      %v847 = vunpack.c.l.b16 %v829
      %v848 = vunpack.c.l.b16 %v830
      %v849 = vunpack.c.l.b16 %v831
      %v850 = vunpack.c.l.b16 %v832
      %v851 = vunpack.c.l.b16 %v833
      %v852 = vunpack.c.l.b16 %v834
      %v853 = vunpack.c.l.b16 %v835
      %v854 = vpack.c.b16 %v847, %v846
      %v855 = vpack.c.b16 %v849, %v848
      %v856 = vpack.c.b16 %v851, %v850
      %v857 = vpack.c.b16 %v853, %v852
      %v860 = vunpack.c.l.b16 %v836
      %v861 = vunpack.c.l.b16 %v837
      %v862 = vpack.c.b16 %v861, %v860
      %vm863 = vcmask 72704
      %v865 = vsel %vm863, %v854, 0
      %v868 = vsel %vm863, %v855, 0
      %v871 = vsel %vm863, %v856, 0
      %v874 = vsel %vm863, %v857, 0
      %vm876 = vcmask 1043456
      %vm877 = vcmask 1044480
      %v878 = vsel %vm876, 4294967295, 65535
      %v879 = vsel %vm877, %v878, 0
      %v881 = vand.u32 %v862, %v879
      %883 = vmatpush.bf16.msra.mxu0 0
      %884 = vmatpush.bf16.msra.mxu0 0
      %885 = vmatpush.bf16.msra.mxu0 0
      %886 = vmatpush.bf16.msra.mxu0 0
      %887 = vmatpush.bf16.msra.mxu0 0
      %888 = vmatpush.bf16.msra.mxu0 0
      %889 = vmatpush.bf16.msra.mxu0 0
      %890 = vmatpush.bf16.msra.mxu0 %v881
      %891 = vmatmul.bf16.gmra.mxu0 %v865
      %v892 = vpop.f32.mrf.mxu0
      %v893 = vadd.f32 0.0, %v892
      %v894 = vpop.f32.mrf.mxu0
      %v895 = vadd.f32 0.0, %v894
      %896 = vmatmul.bf16.gmra.mxu0 %v868
      %v897 = vpop.f32.mrf.mxu0
      %v898 = vadd.f32 0.0, %v897
      %v899 = vpop.f32.mrf.mxu0
      %v900 = vadd.f32 0.0, %v899
      %901 = vmatmul.bf16.gmra.mxu0 %v871
      %v902 = vpop.f32.mrf.mxu0
      %v903 = vadd.f32 0.0, %v902
      %v904 = vpop.f32.mrf.mxu0
      %v905 = vadd.f32 0.0, %v904
      %906 = vmatmul.bf16.gmra.mxu0 %v874
      %v907 = vpop.f32.mrf.mxu0
      %v908 = vadd.f32 0.0, %v907
      %v909 = vpop.f32.mrf.mxu0
      %v910 = vadd.f32 0.0, %v909
      %911 = vdwg.mxu0
      %v912 = vld [vmem:[%s2] sm:$0x1]
      %v914 = vperm.slane %v912, 0
      %v916 = vmul.f32 %v893, %v914
      %v917 = vmul.f32 %v895, %v914
      %v918 = vmul.f32 %v898, %v914
      %v919 = vmul.f32 %v900, %v914
      %v920 = vmul.f32 %v903, %v914
      %v921 = vmul.f32 %v905, %v914
      %v922 = vmul.f32 %v908, %v914
      %v923 = vmul.f32 %v910, %v914
      %v924 = vld [vmem:[%s3] sm:$0x1]
      %v926 = vperm.slane %v924, 0
      %v928 = vadd.f32 %v916, %v926
      %v929 = vadd.f32 %v917, %v926
      %v930 = vadd.f32 %v918, %v926
      %v931 = vadd.f32 %v919, %v926
      %v932 = vadd.f32 %v920, %v926
      %v933 = vadd.f32 %v921, %v926
      %v934 = vadd.f32 %v922, %v926
      %v935 = vadd.f32 %v923, %v926
      %v936 = vmax.f32 %v928, 0.0
      %v937 = vmax.f32 %v929, 0.0
      %v938 = vmax.f32 %v930, 0.0
      %v939 = vmax.f32 %v931, 0.0
      %v940 = vmax.f32 %v932, 0.0
      %v941 = vmax.f32 %v933, 0.0
      %v942 = vmax.f32 %v934, 0.0
      %v943 = vmax.f32 %v935, 0.0
      %v944 = vpack.c.bf16 %v936, %v936
      %v945 = vpack.c.bf16 %v937, %v937
      %v946 = vpack.c.bf16 %v938, %v938
      %v947 = vpack.c.bf16 %v939, %v939
      %v948 = vpack.c.bf16 %v940, %v940
      %v949 = vpack.c.bf16 %v941, %v941
      %v950 = vpack.c.bf16 %v942, %v942
      %v951 = vpack.c.bf16 %v943, %v943
      %s952 = scalar_lea.vmem [#allocation2], 60
      %v953 = vld [vmem:[%s952] sm:$0x1]
      %v954 = vsel %vm792, %v944, %v953
      %955 = vst [vmem:[%s952] sm:$0x1] %v954
      %s956 = scalar_lea.vmem [#allocation2], 40
      %vm957 = vsmask.f32 7938
      %vm958 = vmand %vm790, %vm957
      %v959 = vld [vmem:[%s956] sm:$0x1]
      %v960 = vsel %vm958, %v944, %v959
      %961 = vst [vmem:[%s956] sm:$0x1] %v960
      %v963 = vshll.u32 %v944, 16
      %v965 = vrot.slane %v963, 5
      %v966 = vrot.slane %v965, 4
      %v968 = vld [vmem:[%s952] sm:$0x1]
      %v969 = vsel %vm958, %v966, %v968
      %970 = vst [vmem:[%s952] sm:$0x1] %v969
      %v971 = vshrl.u32 %v944, 16
      %v973 = vrot.slane %v971, 4
      %v974 = vrot.slane %v973, 4
      %vm976 = vcmask 254977
      %vm977 = vmand %vm976, %vm722
      %v978 = vld [vmem:[%s956] sm:$0x2]
      %v979 = vsel %vm977, %v974, %v978
      %980 = vst [vmem:[%s956] sm:$0x2] %v979
      %v982 = vrot.slane %v944, 5
      %v983 = vrot.slane %v982, 4
      %v985 = vld [vmem:[%s952] sm:$0x2]
      %v986 = vsel %vm977, %v983, %v985
      %987 = vst [vmem:[%s952] sm:$0x2] %v986
      %vm988 = vsmask.f32 7942
      %vm989 = vmand %vm976, %vm988
      %v990 = vld [vmem:[%s956] sm:$0x2]
      %v991 = vsel %vm989, %v983, %v990
      %992 = vst [vmem:[%s956] sm:$0x2] %v991
      %v993 = vrot.slane %v963, 6
      %v994 = vrot.slane %v993, 4
      %v996 = vld [vmem:[%s952] sm:$0x2]
      %v997 = vsel %vm989, %v994, %v996
      %998 = vst [vmem:[%s952] sm:$0x2] %v997
      %v999 = vrot.slane %v971, 5
      %v1000 = vrot.slane %v999, 4
      %vm1002 = vcmask 256002
      %vm1003 = vmand %vm1002, %vm659
      %v1004 = vld [vmem:[%s956] sm:$0x4]
      %v1005 = vsel %vm1003, %v1000, %v1004
      %1006 = vst [vmem:[%s956] sm:$0x4] %v1005
      %s1007 = scalar_lea.vmem [#allocation2], 24
      %v1008 = vld [vmem:[%s1007] sm:$0x1]
      %v1009 = vsel %vm792, %v945, %v1008
      %1010 = vst [vmem:[%s1007] sm:$0x1] %v1009
      %s1011 = scalar_lea.vmem [#allocation2], 4
      %v1012 = vld [vmem:[%s1011] sm:$0x1]
      %v1013 = vsel %vm958, %v945, %v1012
      %1014 = vst [vmem:[%s1011] sm:$0x1] %v1013
      %v1016 = vshll.u32 %v945, 16
      %v1018 = vrot.slane %v1016, 5
      %v1019 = vrot.slane %v1018, 4
      %v1021 = vld [vmem:[%s1007] sm:$0x1]
      %v1022 = vsel %vm958, %v1019, %v1021
      %1023 = vst [vmem:[%s1007] sm:$0x1] %v1022
      %v1024 = vshrl.u32 %v945, 16
      %v1026 = vrot.slane %v1024, 4
      %v1027 = vrot.slane %v1026, 4
      %v1029 = vld [vmem:[%s1011] sm:$0x2]
      %v1030 = vsel %vm977, %v1027, %v1029
      %1031 = vst [vmem:[%s1011] sm:$0x2] %v1030
      %v1033 = vrot.slane %v945, 5
      %v1034 = vrot.slane %v1033, 4
      %v1036 = vld [vmem:[%s1007] sm:$0x2]
      %v1037 = vsel %vm977, %v1034, %v1036
      %1038 = vst [vmem:[%s1007] sm:$0x2] %v1037
      %v1039 = vld [vmem:[%s1011] sm:$0x2]
      %v1040 = vsel %vm989, %v1034, %v1039
      %1041 = vst [vmem:[%s1011] sm:$0x2] %v1040
      %v1042 = vrot.slane %v1016, 6
      %v1043 = vrot.slane %v1042, 4
      %v1045 = vld [vmem:[%s1007] sm:$0x2]
      %v1046 = vsel %vm989, %v1043, %v1045
      %1047 = vst [vmem:[%s1007] sm:$0x2] %v1046
      %v1048 = vrot.slane %v1024, 5
      %v1049 = vrot.slane %v1048, 4
      %v1051 = vld [vmem:[%s1011] sm:$0x4]
      %v1052 = vsel %vm1003, %v1049, %v1051
      %1053 = vst [vmem:[%s1011] sm:$0x4] %v1052
      %s1054 = scalar_lea.vmem [#allocation2], 64
      %v1055 = vld [vmem:[%s1054] sm:$0x1]
      %v1056 = vsel %vm792, %v946, %v1055
      %1057 = vst [vmem:[%s1054] sm:$0x1] %v1056
      %s1058 = scalar_lea.vmem [#allocation2], 44
      %v1059 = vld [vmem:[%s1058] sm:$0x1]
      %v1060 = vsel %vm958, %v946, %v1059
      %1061 = vst [vmem:[%s1058] sm:$0x1] %v1060
      %v1063 = vshll.u32 %v946, 16
      %v1065 = vrot.slane %v1063, 5
      %v1066 = vrot.slane %v1065, 4
      %v1068 = vld [vmem:[%s1054] sm:$0x1]
      %v1069 = vsel %vm958, %v1066, %v1068
      %1070 = vst [vmem:[%s1054] sm:$0x1] %v1069
      %v1071 = vshrl.u32 %v946, 16
      %v1073 = vrot.slane %v1071, 4
      %v1074 = vrot.slane %v1073, 4
      %v1076 = vld [vmem:[%s1058] sm:$0x2]
      %v1077 = vsel %vm977, %v1074, %v1076
      %1078 = vst [vmem:[%s1058] sm:$0x2] %v1077
      %v1080 = vrot.slane %v946, 5
      %v1081 = vrot.slane %v1080, 4
      %v1083 = vld [vmem:[%s1054] sm:$0x2]
      %v1084 = vsel %vm977, %v1081, %v1083
      %1085 = vst [vmem:[%s1054] sm:$0x2] %v1084
      %v1086 = vld [vmem:[%s1058] sm:$0x2]
      %v1087 = vsel %vm989, %v1081, %v1086
      %1088 = vst [vmem:[%s1058] sm:$0x2] %v1087
      %v1089 = vrot.slane %v1063, 6
      %v1090 = vrot.slane %v1089, 4
      %v1092 = vld [vmem:[%s1054] sm:$0x2]
      %v1093 = vsel %vm989, %v1090, %v1092
      %1094 = vst [vmem:[%s1054] sm:$0x2] %v1093
      %v1095 = vrot.slane %v1071, 5
      %v1096 = vrot.slane %v1095, 4
      %v1098 = vld [vmem:[%s1058] sm:$0x4]
      %v1099 = vsel %vm1003, %v1096, %v1098
      %1100 = vst [vmem:[%s1058] sm:$0x4] %v1099
      %s1101 = scalar_lea.vmem [#allocation2], 28
      %v1102 = vld [vmem:[%s1101] sm:$0x1]
      %v1103 = vsel %vm792, %v947, %v1102
      %1104 = vst [vmem:[%s1101] sm:$0x1] %v1103
      %s1105 = scalar_lea.vmem [#allocation2], 8
      %v1106 = vld [vmem:[%s1105] sm:$0x1]
      %v1107 = vsel %vm958, %v947, %v1106
      %1108 = vst [vmem:[%s1105] sm:$0x1] %v1107
      %v1110 = vshll.u32 %v947, 16
      %v1112 = vrot.slane %v1110, 5
      %v1113 = vrot.slane %v1112, 4
      %v1115 = vld [vmem:[%s1101] sm:$0x1]
      %v1116 = vsel %vm958, %v1113, %v1115
      %1117 = vst [vmem:[%s1101] sm:$0x1] %v1116
      %v1118 = vshrl.u32 %v947, 16
      %v1120 = vrot.slane %v1118, 4
      %v1121 = vrot.slane %v1120, 4
      %v1123 = vld [vmem:[%s1105] sm:$0x2]
      %v1124 = vsel %vm977, %v1121, %v1123
      %1125 = vst [vmem:[%s1105] sm:$0x2] %v1124
      %v1127 = vrot.slane %v947, 5
      %v1128 = vrot.slane %v1127, 4
      %v1130 = vld [vmem:[%s1101] sm:$0x2]
      %v1131 = vsel %vm977, %v1128, %v1130
      %1132 = vst [vmem:[%s1101] sm:$0x2] %v1131
      %v1133 = vld [vmem:[%s1105] sm:$0x2]
      %v1134 = vsel %vm989, %v1128, %v1133
      %1135 = vst [vmem:[%s1105] sm:$0x2] %v1134
      %v1136 = vrot.slane %v1110, 6
      %v1137 = vrot.slane %v1136, 4
      %v1139 = vld [vmem:[%s1101] sm:$0x2]
      %v1140 = vsel %vm989, %v1137, %v1139
      %1141 = vst [vmem:[%s1101] sm:$0x2] %v1140
      %v1142 = vrot.slane %v1118, 5
      %v1143 = vrot.slane %v1142, 4
      %v1145 = vld [vmem:[%s1105] sm:$0x4]
      %v1146 = vsel %vm1003, %v1143, %v1145
      %1147 = vst [vmem:[%s1105] sm:$0x4] %v1146
      %s1148 = scalar_lea.vmem [#allocation2], 68
      %v1149 = vld [vmem:[%s1148] sm:$0x1]
      %v1150 = vsel %vm792, %v948, %v1149
      %1151 = vst [vmem:[%s1148] sm:$0x1] %v1150
      %s1152 = scalar_lea.vmem [#allocation2], 48
      %v1153 = vld [vmem:[%s1152] sm:$0x1]
      %v1154 = vsel %vm958, %v948, %v1153
      %1155 = vst [vmem:[%s1152] sm:$0x1] %v1154
      %v1157 = vshll.u32 %v948, 16
      %v1159 = vrot.slane %v1157, 5
      %v1160 = vrot.slane %v1159, 4
      %v1162 = vld [vmem:[%s1148] sm:$0x1]
      %v1163 = vsel %vm958, %v1160, %v1162
      %1164 = vst [vmem:[%s1148] sm:$0x1] %v1163
      %v1165 = vshrl.u32 %v948, 16
      %v1167 = vrot.slane %v1165, 4
      %v1168 = vrot.slane %v1167, 4
      %v1170 = vld [vmem:[%s1152] sm:$0x2]
      %v1171 = vsel %vm977, %v1168, %v1170
      %1172 = vst [vmem:[%s1152] sm:$0x2] %v1171
      %v1174 = vrot.slane %v948, 5
      %v1175 = vrot.slane %v1174, 4
      %v1177 = vld [vmem:[%s1148] sm:$0x2]
      %v1178 = vsel %vm977, %v1175, %v1177
      %1179 = vst [vmem:[%s1148] sm:$0x2] %v1178
      %v1180 = vld [vmem:[%s1152] sm:$0x2]
      %v1181 = vsel %vm989, %v1175, %v1180
      %1182 = vst [vmem:[%s1152] sm:$0x2] %v1181
      %v1183 = vrot.slane %v1157, 6
      %v1184 = vrot.slane %v1183, 4
      %v1186 = vld [vmem:[%s1148] sm:$0x2]
      %v1187 = vsel %vm989, %v1184, %v1186
      %1188 = vst [vmem:[%s1148] sm:$0x2] %v1187
      %v1189 = vrot.slane %v1165, 5
      %v1190 = vrot.slane %v1189, 4
      %v1192 = vld [vmem:[%s1152] sm:$0x4]
      %v1193 = vsel %vm1003, %v1190, %v1192
      %1194 = vst [vmem:[%s1152] sm:$0x4] %v1193
      %s1195 = scalar_lea.vmem [#allocation2], 32
      %v1196 = vld [vmem:[%s1195] sm:$0x1]
      %v1197 = vsel %vm792, %v949, %v1196
      %1198 = vst [vmem:[%s1195] sm:$0x1] %v1197
      %s1199 = scalar_lea.vmem [#allocation2], 12
      %v1200 = vld [vmem:[%s1199] sm:$0x1]
      %v1201 = vsel %vm958, %v949, %v1200
      %1202 = vst [vmem:[%s1199] sm:$0x1] %v1201
      %v1204 = vshll.u32 %v949, 16
      %v1206 = vrot.slane %v1204, 5
      %v1207 = vrot.slane %v1206, 4
      %v1209 = vld [vmem:[%s1195] sm:$0x1]
      %v1210 = vsel %vm958, %v1207, %v1209
      %1211 = vst [vmem:[%s1195] sm:$0x1] %v1210
      %v1212 = vshrl.u32 %v949, 16
      %v1214 = vrot.slane %v1212, 4
      %v1215 = vrot.slane %v1214, 4
      %v1217 = vld [vmem:[%s1199] sm:$0x2]
      %v1218 = vsel %vm977, %v1215, %v1217
      %1219 = vst [vmem:[%s1199] sm:$0x2] %v1218
      %v1221 = vrot.slane %v949, 5
      %v1222 = vrot.slane %v1221, 4
      %v1224 = vld [vmem:[%s1195] sm:$0x2]
      %v1225 = vsel %vm977, %v1222, %v1224
      %1226 = vst [vmem:[%s1195] sm:$0x2] %v1225
      %v1227 = vld [vmem:[%s1199] sm:$0x2]
      %v1228 = vsel %vm989, %v1222, %v1227
      %1229 = vst [vmem:[%s1199] sm:$0x2] %v1228
      %v1230 = vrot.slane %v1204, 6
      %v1231 = vrot.slane %v1230, 4
      %v1233 = vld [vmem:[%s1195] sm:$0x2]
      %v1234 = vsel %vm989, %v1231, %v1233
      %1235 = vst [vmem:[%s1195] sm:$0x2] %v1234
      %v1236 = vrot.slane %v1212, 5
      %v1237 = vrot.slane %v1236, 4
      %v1239 = vld [vmem:[%s1199] sm:$0x4]
      %v1240 = vsel %vm1003, %v1237, %v1239
      %1241 = vst [vmem:[%s1199] sm:$0x4] %v1240
      %s1242 = scalar_lea.vmem [#allocation2], 72
      %v1243 = vld [vmem:[%s1242] sm:$0x1]
      %v1244 = vsel %vm792, %v950, %v1243
      %1245 = vst [vmem:[%s1242] sm:$0x1] %v1244
      %s1246 = scalar_lea.vmem [#allocation2], 52
      %v1247 = vld [vmem:[%s1246] sm:$0x1]
      %v1248 = vsel %vm958, %v950, %v1247
      %1249 = vst [vmem:[%s1246] sm:$0x1] %v1248
      %v1251 = vshll.u32 %v950, 16
      %v1253 = vrot.slane %v1251, 5
      %v1254 = vrot.slane %v1253, 4
      %v1256 = vld [vmem:[%s1242] sm:$0x1]
      %v1257 = vsel %vm958, %v1254, %v1256
      %1258 = vst [vmem:[%s1242] sm:$0x1] %v1257
      %v1259 = vshrl.u32 %v950, 16
      %v1261 = vrot.slane %v1259, 4
      %v1262 = vrot.slane %v1261, 4
      %v1264 = vld [vmem:[%s1246] sm:$0x2]
      %v1265 = vsel %vm977, %v1262, %v1264
      %1266 = vst [vmem:[%s1246] sm:$0x2] %v1265
      %v1268 = vrot.slane %v950, 5
      %v1269 = vrot.slane %v1268, 4
      %v1271 = vld [vmem:[%s1242] sm:$0x2]
      %v1272 = vsel %vm977, %v1269, %v1271
      %1273 = vst [vmem:[%s1242] sm:$0x2] %v1272
      %v1274 = vld [vmem:[%s1246] sm:$0x2]
      %v1275 = vsel %vm989, %v1269, %v1274
      %1276 = vst [vmem:[%s1246] sm:$0x2] %v1275
      %v1277 = vrot.slane %v1251, 6
      %v1278 = vrot.slane %v1277, 4
      %v1280 = vld [vmem:[%s1242] sm:$0x2]
      %v1281 = vsel %vm989, %v1278, %v1280
      %1282 = vst [vmem:[%s1242] sm:$0x2] %v1281
      %v1283 = vrot.slane %v1259, 5
      %v1284 = vrot.slane %v1283, 4
      %v1286 = vld [vmem:[%s1246] sm:$0x4]
      %v1287 = vsel %vm1003, %v1284, %v1286
      %1288 = vst [vmem:[%s1246] sm:$0x4] %v1287
      %s1289 = scalar_lea.vmem [#allocation2], 36
      %v1290 = vld [vmem:[%s1289] sm:$0x1]
      %v1291 = vsel %vm792, %v951, %v1290
      %1292 = vst [vmem:[%s1289] sm:$0x1] %v1291
      %s1293 = scalar_lea.vmem [#allocation2], 16
      %v1294 = vld [vmem:[%s1293] sm:$0x1]
      %v1295 = vsel %vm958, %v951, %v1294
      %1296 = vst [vmem:[%s1293] sm:$0x1] %v1295
      %v1298 = vshll.u32 %v951, 16
      %v1300 = vrot.slane %v1298, 5
      %v1301 = vrot.slane %v1300, 4
      %v1303 = vld [vmem:[%s1289] sm:$0x1]
      %v1304 = vsel %vm958, %v1301, %v1303
      %1305 = vst [vmem:[%s1289] sm:$0x1] %v1304
      %v1306 = vshrl.u32 %v951, 16
      %v1308 = vrot.slane %v1306, 4
      %v1309 = vrot.slane %v1308, 4
      %v1311 = vld [vmem:[%s1293] sm:$0x2]
      %v1312 = vsel %vm977, %v1309, %v1311
      %1313 = vst [vmem:[%s1293] sm:$0x2] %v1312
      %v1315 = vrot.slane %v951, 5
      %v1316 = vrot.slane %v1315, 4
      %v1318 = vld [vmem:[%s1289] sm:$0x2]
      %v1319 = vsel %vm977, %v1316, %v1318
      %1320 = vst [vmem:[%s1289] sm:$0x2] %v1319
      %v1321 = vld [vmem:[%s1293] sm:$0x2]
      %v1322 = vsel %vm989, %v1316, %v1321
      %1323 = vst [vmem:[%s1293] sm:$0x2] %v1322
      %v1324 = vrot.slane %v1298, 6
      %v1325 = vrot.slane %v1324, 4
      %v1327 = vld [vmem:[%s1289] sm:$0x2]
      %v1328 = vsel %vm989, %v1325, %v1327
      %1329 = vst [vmem:[%s1289] sm:$0x2] %v1328
      %v1330 = vrot.slane %v1306, 5
      %v1331 = vrot.slane %v1330, 4
      %v1333 = vld [vmem:[%s1293] sm:$0x4]
      %v1334 = vsel %vm1003, %v1331, %v1333
      %1335 = vst [vmem:[%s1293] sm:$0x4] %v1334
      %v1336 = vld [vmem:[#allocation2] sm:$0x3]
      %s1337 = scalar_lea.vmem [#allocation2], 20
      %v1338 = vld [vmem:[%s1337] sm:$0x3]
      %v1339 = vld [vmem:[#allocation2] sm:$0x7]
      %v1340 = vld [vmem:[%s956] sm:$0x3]
      %v1341 = vld [vmem:[%s952] sm:$0x3]
      %v1342 = vld [vmem:[%s956] sm:$0x7]
      %v1343 = vld [vmem:[%s1011] sm:$0x3]
      %v1344 = vld [vmem:[%s1007] sm:$0x3]
      %v1345 = vld [vmem:[%s1011] sm:$0x7]
      %v1347 = vunpack.c.l.b16 %v1338
      %v1348 = vpack.c.b16 %v1347, %v1347
      %1349 = vrot.lane.b32.xlu0 %v1348, 32
      %v1350 = vpop.permute.xlu0 %1349
      %v1352 = vunpack.c.l.b16 %v1339
      %v1353 = vpack.c.b16 %v1352, %v1352
      %v1355 = vshrl.u32 %v1353, 16
      %v1357 = vshll.u32 %v1353, 16
      %v1359 = vrot.slane %v1357, 1
      %v1360 = vor.u32 %v1355, %v1359
      %1361 = vrot.lane.b32.xlu0 %v1360, 64
      %v1362 = vpop.permute.xlu0 %1361
      %v1364 = vunpack.c.l.b16 %v1340
      %v1365 = vpack.c.b16 %v1364, %v1364
      %1366 = vrot.lane.b32.xlu0 %v1365, 96
      %v1367 = vpop.permute.xlu0 %1366
      %v1369 = vunpack.c.l.b16 %v1342
      %v1370 = vpack.c.b16 %v1369, %v1369
      %v1372 = vshrl.u32 %v1370, 16
      %v1374 = vshll.u32 %v1370, 16
      %v1376 = vrot.slane %v1374, 1
      %v1377 = vor.u32 %v1372, %v1376
      %1378 = vrot.lane.b32.xlu0 %v1377, 32
      %v1379 = vpop.permute.xlu0 %1378
      %v1381 = vunpack.c.l.b16 %v1343
      %v1382 = vpack.c.b16 %v1381, %v1381
      %1383 = vrot.lane.b32.xlu0 %v1382, 64
      %v1384 = vpop.permute.xlu0 %1383
      %v1386 = vunpack.c.l.b16 %v1344
      %v1387 = vpack.c.b16 %v1386, %v1386
      %1388 = vrot.lane.b32.xlu0 %v1387, 96
      %v1389 = vpop.permute.xlu0 %1388
      %v1391 = vunpack.c.l.b16 %v1345
      %v1392 = vpack.c.b16 %v1391, %v1391
      %v1394 = vshrl.u32 %v1392, 16
      %v1396 = vshll.u32 %v1392, 16
      %v1398 = vrot.slane %v1396, 1
      %v1399 = vor.u32 %v1394, %v1398
      %vm1400 = vcmask 261120
      %v1403 = vsel %vm1400, %v1336, %v1350
      %vm1404 = vcmask 523264
      %v1406 = vsel %vm1404, %v1403, %v1362
      %vm1407 = vcmask 785408
      %v1409 = vsel %vm1407, %v1406, %v1367
      %v1412 = vsel %vm1400, %v1341, %v1379
      %v1414 = vsel %vm1404, %v1412, %v1384
      %v1416 = vsel %vm1407, %v1414, %v1389
      %v1417 = vld [vmem:[%s1058] sm:$0x3]
      %v1418 = vld [vmem:[%s1054] sm:$0x3]
      %v1419 = vld [vmem:[%s1058] sm:$0x7]
      %v1420 = vld [vmem:[%s1105] sm:$0x3]
      %v1421 = vld [vmem:[%s1101] sm:$0x3]
      %v1422 = vld [vmem:[%s1105] sm:$0x7]
      %1423 = vrot.lane.b32.xlu0 %v1387, 32
      %v1424 = vpop.permute.xlu0 %1423
      %1425 = vrot.lane.b32.xlu0 %v1399, 64
      %v1426 = vpop.permute.xlu0 %1425
      %v1428 = vunpack.c.l.b16 %v1417
      %v1429 = vpack.c.b16 %v1428, %v1428
      %1430 = vrot.lane.b32.xlu0 %v1429, 96
      %v1431 = vpop.permute.xlu0 %1430
      %v1433 = vunpack.c.l.b16 %v1419
      %v1434 = vpack.c.b16 %v1433, %v1433
      %v1436 = vshrl.u32 %v1434, 16
      %v1438 = vshll.u32 %v1434, 16
      %v1440 = vrot.slane %v1438, 1
      %v1441 = vor.u32 %v1436, %v1440
      %1442 = vrot.lane.b32.xlu0 %v1441, 32
      %v1443 = vpop.permute.xlu0 %1442
      %v1445 = vunpack.c.l.b16 %v1420
      %v1446 = vpack.c.b16 %v1445, %v1445
      %1447 = vrot.lane.b32.xlu0 %v1446, 64
      %v1448 = vpop.permute.xlu0 %1447
      %v1450 = vunpack.c.l.b16 %v1421
      %v1451 = vpack.c.b16 %v1450, %v1450
      %1452 = vrot.lane.b32.xlu0 %v1451, 96
      %v1453 = vpop.permute.xlu0 %1452
      %v1455 = vunpack.c.l.b16 %v1422
      %v1456 = vpack.c.b16 %v1455, %v1455
      %v1458 = vshrl.u32 %v1456, 16
      %v1460 = vshll.u32 %v1456, 16
      %v1462 = vrot.slane %v1460, 1
      %v1463 = vor.u32 %v1458, %v1462
      %v1466 = vsel %vm1400, %v1343, %v1424
      %v1468 = vsel %vm1404, %v1466, %v1426
      %v1470 = vsel %vm1407, %v1468, %v1431
      %v1473 = vsel %vm1400, %v1418, %v1443
      %v1475 = vsel %vm1404, %v1473, %v1448
      %v1477 = vsel %vm1407, %v1475, %v1453
      %v1478 = vld [vmem:[%s1152] sm:$0x3]
      %v1479 = vld [vmem:[%s1148] sm:$0x3]
      %v1480 = vld [vmem:[%s1152] sm:$0x7]
      %v1481 = vld [vmem:[%s1199] sm:$0x3]
      %v1482 = vld [vmem:[%s1195] sm:$0x3]
      %v1483 = vld [vmem:[%s1199] sm:$0x7]
      %1484 = vrot.lane.b32.xlu0 %v1451, 32
      %v1485 = vpop.permute.xlu0 %1484
      %1486 = vrot.lane.b32.xlu0 %v1463, 64
      %v1487 = vpop.permute.xlu0 %1486
      %v1489 = vunpack.c.l.b16 %v1478
      %v1490 = vpack.c.b16 %v1489, %v1489
      %1491 = vrot.lane.b32.xlu0 %v1490, 96
      %v1492 = vpop.permute.xlu0 %1491
      %v1494 = vunpack.c.l.b16 %v1480
      %v1495 = vpack.c.b16 %v1494, %v1494
      %v1497 = vshrl.u32 %v1495, 16
      %v1499 = vshll.u32 %v1495, 16
      %v1501 = vrot.slane %v1499, 1
      %v1502 = vor.u32 %v1497, %v1501
      %1503 = vrot.lane.b32.xlu0 %v1502, 32
      %v1504 = vpop.permute.xlu0 %1503
      %v1506 = vunpack.c.l.b16 %v1481
      %v1507 = vpack.c.b16 %v1506, %v1506
      %1508 = vrot.lane.b32.xlu0 %v1507, 64
      %v1509 = vpop.permute.xlu0 %1508
      %v1511 = vunpack.c.l.b16 %v1482
      %v1512 = vpack.c.b16 %v1511, %v1511
      %1513 = vrot.lane.b32.xlu0 %v1512, 96
      %v1514 = vpop.permute.xlu0 %1513
      %v1516 = vunpack.c.l.b16 %v1483
      %v1517 = vpack.c.b16 %v1516, %v1516
      %v1519 = vshrl.u32 %v1517, 16
      %v1521 = vshll.u32 %v1517, 16
      %v1523 = vrot.slane %v1521, 1
      %v1524 = vor.u32 %v1519, %v1523
      %v1527 = vsel %vm1400, %v1420, %v1485
      %v1529 = vsel %vm1404, %v1527, %v1487
      %v1531 = vsel %vm1407, %v1529, %v1492
      %v1534 = vsel %vm1400, %v1479, %v1504
      %v1536 = vsel %vm1404, %v1534, %v1509
      %v1538 = vsel %vm1407, %v1536, %v1514
      %v1539 = vld [vmem:[%s1246] sm:$0x3]
      %v1540 = vld [vmem:[%s1242] sm:$0x3]
      %v1541 = vld [vmem:[%s1246] sm:$0x7]
      %v1542 = vld [vmem:[%s1293] sm:$0x3]
      %v1543 = vld [vmem:[%s1289] sm:$0x3]
      %v1544 = vld [vmem:[%s1293] sm:$0x7]
      %1545 = vrot.lane.b32.xlu0 %v1512, 32
      %v1546 = vpop.permute.xlu0 %1545
      %1547 = vrot.lane.b32.xlu0 %v1524, 64
      %v1548 = vpop.permute.xlu0 %1547
      %v1550 = vunpack.c.l.b16 %v1539
      %v1551 = vpack.c.b16 %v1550, %v1550
      %1552 = vrot.lane.b32.xlu0 %v1551, 96
      %v1553 = vpop.permute.xlu0 %1552
      %v1555 = vunpack.c.l.b16 %v1541
      %v1556 = vpack.c.b16 %v1555, %v1555
      %v1558 = vshrl.u32 %v1556, 16
      %v1560 = vshll.u32 %v1556, 16
      %v1562 = vrot.slane %v1560, 1
      %v1563 = vor.u32 %v1558, %v1562
      %1564 = vrot.lane.b32.xlu0 %v1563, 32
      %v1565 = vpop.permute.xlu0 %1564
      %v1567 = vunpack.c.l.b16 %v1542
      %v1568 = vpack.c.b16 %v1567, %v1567
      %1569 = vrot.lane.b32.xlu0 %v1568, 64
      %v1570 = vpop.permute.xlu0 %1569
      %v1572 = vunpack.c.l.b16 %v1543
      %v1573 = vpack.c.b16 %v1572, %v1572
      %1574 = vrot.lane.b32.xlu0 %v1573, 96
      %v1575 = vpop.permute.xlu0 %1574
      %v1577 = vunpack.c.l.b16 %v1544
      %v1578 = vpack.c.b16 %v1577, %v1577
      %v1580 = vshrl.u32 %v1578, 16
      %v1582 = vshll.u32 %v1578, 16
      %v1584 = vrot.slane %v1582, 1
      %v1585 = vor.u32 %v1580, %v1584
      %v1588 = vsel %vm1400, %v1481, %v1546
      %v1590 = vsel %vm1404, %v1588, %v1548
      %v1592 = vsel %vm1407, %v1590, %v1553
      %v1595 = vsel %vm1400, %v1540, %v1565
      %v1597 = vsel %vm1404, %v1595, %v1570
      %v1599 = vsel %vm1407, %v1597, %v1575
      %v1602 = vrot.slane %v1470, 6
      %v1603 = vrot.slane %v1477, 6
      %v1604 = vrot.slane %v1463, 6
      %v1607 = vrot.slane %v1531, 4
      %v1608 = vrot.slane %v1538, 4
      %v1609 = vrot.slane %v1524, 4
      %v1612 = vrot.slane %v1592, 2
      %v1613 = vrot.slane %v1599, 2
      %v1614 = vrot.slane %v1585, 2
      %vm1615 = vcmask 1041408
      %v1617 = vsel %vm1615, %v1409, %v1602
      %v1619 = vsel %vm1615, %v1416, %v1603
      %v1622 = vsel %vm1615, %v1399, %v1604
      %v1624 = vsel %vm876, %v1617, %v1607
      %v1626 = vsel %vm876, %v1619, %v1608
      %v1628 = vsel %vm876, %v1622, %v1609
      %vm1629 = vcmask 1045504
      %v1631 = vsel %vm1629, %v1624, %v1612
      %v1634 = vsel %vm1629, %v1626, %v1613
      %v1637 = vsel %vm1629, %v1628, %v1614
      %v1638 = vld [vmem:[%s4] sm:$0xf]
      %v1639 = vld [vmem:[%s4 + $0x4] sm:$0xf]
      %v1640 = vld [vmem:[%s4 + $0x8] sm:$0xf]
      %v1641 = vld [vmem:[%s4 + $0xc] sm:$0xf]
      %v1642 = vld [vmem:[%s4 + $0x10] sm:$0xf]
      %v1643 = vld [vmem:[%s4 + $0x14] sm:$0xf]
      %v1644 = vld [vmem:[%s4 + $0x18] sm:$0xf]
      %v1645 = vld [vmem:[%s4 + $0x1c] sm:$0xf]
      %v1646 = vld [vmem:[%s4 + $0x20] sm:$0xf]
      %v1647 = vld [vmem:[%s4 + $0x24] sm:$0xf]
      %v1648 = vld [vmem:[%s4 + $0x28] sm:$0xf]
      %v1649 = vld [vmem:[%s4 + $0x2c] sm:$0xf]
      %v1650 = vld [vmem:[%s4 + $0x30] sm:$0xf]
      %v1651 = vld [vmem:[%s4 + $0x34] sm:$0xf]
      %v1652 = vld [vmem:[%s4 + $0x38] sm:$0xf]
      %v1653 = vld [vmem:[%s4 + $0x3c] sm:$0xf]
      %v1654 = vld [vmem:[%s4 + $0x40] sm:$0xf]
      %v1655 = vld [vmem:[%s4 + $0x44] sm:$0xf]
      %v1656 = vld [vmem:[%s4 + $0x48] sm:$0xf]
      %v1657 = vld [vmem:[%s4 + $0x4c] sm:$0xf]
      %v1658 = vld [vmem:[%s4 + $0x50] sm:$0xf]
      %v1659 = vld [vmem:[%s4 + $0x54] sm:$0xf]
      %v1660 = vld [vmem:[%s4 + $0x58] sm:$0xf]
      %v1661 = vld [vmem:[%s4 + $0x5c] sm:$0xf]
      %v1662 = vld [vmem:[%s4 + $0x60] sm:$0xf]
      %v1663 = vld [vmem:[%s4 + $0x64] sm:$0xf]
      %v1664 = vld [vmem:[%s4 + $0x68] sm:$0xf]
      %v1665 = vld [vmem:[%s4 + $0x6c] sm:$0xf]
      %v1666 = vld [vmem:[%s4 + $0x70] sm:$0xf]
      %v1667 = vld [vmem:[%s4 + $0x74] sm:$0xf]
      %v1668 = vld [vmem:[%s4 + $0x78] sm:$0xf]
      %v1669 = vld [vmem:[%s4 + $0x7c] sm:$0xf]
      %v1670 = vld [vmem:[%s4 + $0x80] sm:$0xf]
      %v1671 = vld [vmem:[%s4 + $0x84] sm:$0xf]
      %v1672 = vld [vmem:[%s4 + $0x88] sm:$0xf]
      %v1673 = vld [vmem:[%s4 + $0x8c] sm:$0xf]
      %v1710 = vunpack.c.l.b16 %v1638
      %v1711 = vunpack.c.l.b16 %v1639
      %v1712 = vunpack.c.l.b16 %v1640
      %v1713 = vunpack.c.l.b16 %v1641
      %v1714 = vunpack.c.l.b16 %v1642
      %v1715 = vunpack.c.l.b16 %v1643
      %v1716 = vunpack.c.l.b16 %v1644
      %v1717 = vunpack.c.l.b16 %v1645
      %v1718 = vunpack.c.l.b16 %v1646
      %v1719 = vunpack.c.l.b16 %v1647
      %v1720 = vunpack.c.l.b16 %v1648
      %v1721 = vunpack.c.l.b16 %v1649
      %v1722 = vunpack.c.l.b16 %v1650
      %v1723 = vunpack.c.l.b16 %v1651
      %v1724 = vunpack.c.l.b16 %v1652
      %v1725 = vunpack.c.l.b16 %v1653
      %v1726 = vunpack.c.l.b16 %v1654
      %v1727 = vunpack.c.l.b16 %v1655
      %v1728 = vunpack.c.l.b16 %v1656
      %v1729 = vunpack.c.l.b16 %v1657
      %v1730 = vunpack.c.l.b16 %v1658
      %v1731 = vunpack.c.l.b16 %v1659
      %v1732 = vunpack.c.l.b16 %v1660
      %v1733 = vunpack.c.l.b16 %v1661
      %v1734 = vunpack.c.l.b16 %v1662
      %v1735 = vunpack.c.l.b16 %v1663
      %v1736 = vunpack.c.l.b16 %v1664
      %v1737 = vunpack.c.l.b16 %v1665
      %v1738 = vunpack.c.l.b16 %v1666
      %v1739 = vunpack.c.l.b16 %v1667
      %v1740 = vunpack.c.l.b16 %v1668
      %v1741 = vunpack.c.l.b16 %v1669
      %v1742 = vunpack.c.l.b16 %v1670
      %v1743 = vunpack.c.l.b16 %v1671
      %v1744 = vunpack.c.l.b16 %v1672
      %v1745 = vunpack.c.l.b16 %v1673
      %v1746 = vpack.c.b16 %v1711, %v1710
      %v1747 = vpack.c.b16 %v1713, %v1712
      %v1748 = vpack.c.b16 %v1715, %v1714
      %v1749 = vpack.c.b16 %v1717, %v1716
      %v1750 = vpack.c.b16 %v1719, %v1718
      %v1751 = vpack.c.b16 %v1721, %v1720
      %v1752 = vpack.c.b16 %v1723, %v1722
      %v1753 = vpack.c.b16 %v1725, %v1724
      %v1754 = vpack.c.b16 %v1727, %v1726
      %v1755 = vpack.c.b16 %v1729, %v1728
      %v1756 = vpack.c.b16 %v1731, %v1730
      %v1757 = vpack.c.b16 %v1733, %v1732
      %v1758 = vpack.c.b16 %v1735, %v1734
      %v1759 = vpack.c.b16 %v1737, %v1736
      %v1760 = vpack.c.b16 %v1739, %v1738
      %v1761 = vpack.c.b16 %v1741, %v1740
      %v1762 = vpack.c.b16 %v1743, %v1742
      %v1763 = vpack.c.b16 %v1745, %v1744
      %v1782 = vsel %vm1400, %v1637, 0
      %1784 = vmatpush.bf16.msra.mxu0 %v1753
      %1785 = vmatpush.bf16.msra.mxu0 %v1752
      %1786 = vmatpush.bf16.msra.mxu0 %v1751
      %1787 = vmatpush.bf16.msra.mxu0 %v1750
      %1788 = vmatpush.bf16.msra.mxu0 %v1749
      %1789 = vmatpush.bf16.msra.mxu0 %v1748
      %1790 = vmatpush.bf16.msra.mxu0 %v1747
      %1791 = vmatpush.bf16.msra.mxu0 %v1746
      %1792 = vmatmul.bf16.gmra.mxu0 %v1631
      %v1793 = vpop.f32.mrf.mxu0
      %v1794 = vadd.f32 0.0, %v1793
      %v1795 = vpop.f32.mrf.mxu0
      %v1796 = vadd.f32 0.0, %v1795
      %1797 = vdwg.mxu0
      %1798 = vmatpush.bf16.msra.mxu0 %v1761
      %1799 = vmatpush.bf16.msra.mxu0 %v1760
      %1800 = vmatpush.bf16.msra.mxu0 %v1759
      %1801 = vmatpush.bf16.msra.mxu0 %v1758
      %1802 = vmatpush.bf16.msra.mxu0 %v1757
      %1803 = vmatpush.bf16.msra.mxu0 %v1756
      %1804 = vmatpush.bf16.msra.mxu0 %v1755
      %1805 = vmatpush.bf16.msra.mxu0 %v1754
      %1806 = vmatmul.bf16.gmra.mxu0 %v1634
      %v1807 = vpop.f32.mrf.mxu0
      %v1808 = vadd.f32 %v1794, %v1807
      %v1809 = vpop.f32.mrf.mxu0
      %v1810 = vadd.f32 %v1796, %v1809
      %1811 = vdwg.mxu0
      %1812 = vmatpush.bf16.msra.mxu0 0
      %1813 = vmatpush.bf16.msra.mxu0 0
      %1814 = vmatpush.bf16.msra.mxu0 0
      %1815 = vmatpush.bf16.msra.mxu0 0
      %1816 = vmatpush.bf16.msra.mxu0 0
      %1817 = vmatpush.bf16.msra.mxu0 0
      %1818 = vmatpush.bf16.msra.mxu0 %v1763
      %1819 = vmatpush.bf16.msra.mxu0 %v1762
      %1820 = vmatmul.bf16.gmra.mxu0 %v1782
      %v1821 = vpop.f32.mrf.mxu0
      %v1822 = vadd.f32 %v1808, %v1821
      %v1823 = vpop.f32.mrf.mxu0
      %v1824 = vadd.f32 %v1810, %v1823
      %1825 = vdwg.mxu0
      %v1826 = vld [vmem:[%s5] sm:$0x1]
      %v1828 = vperm.slane %v1826, 0
      %v1830 = vmul.f32 %v1822, %v1828
      %v1831 = vmul.f32 %v1824, %v1828
      %v1832 = vld [vmem:[%s6] sm:$0x1]
      %v1834 = vperm.slane %v1832, 0
      %v1836 = vadd.f32 %v1830, %v1834
      %v1837 = vadd.f32 %v1831, %v1834
      %v1838 = vmax.f32 %v1836, 0.0
      %v1839 = vmax.f32 %v1837, 0.0
      %v1840 = vpack.c.bf16 %v1838, %v1838
      %v1841 = vpack.c.bf16 %v1839, %v1839
      %s1842 = scalar_lea.vmem [#allocation3], 18
      %vm1843 = vcmask 516096
      %vm1844 = vmand %vm1843, %vm791
      %v1845 = vld [vmem:[%s1842] sm:$0x1]
      %v1846 = vsel %vm1844, %v1840, %v1845
      %1847 = vst [vmem:[%s1842] sm:$0x1] %v1846
      %s1848 = scalar_lea.vmem [#allocation3], 12
      %vm1849 = vmand %vm1843, %vm957
      %v1850 = vld [vmem:[%s1848] sm:$0x1]
      %v1851 = vsel %vm1849, %v1840, %v1850
      %1852 = vst [vmem:[%s1848] sm:$0x1] %v1851
      %v1854 = vrot.slane %v1840, 2
      %v1857 = vsel %vm1615, %v1840, %v1854
      %v1858 = vshll.u32 %v1857, 16
      %v1860 = vrot.slane %v1858, 7
      %v1861 = vrot.slane %v1860, 2
      %v1863 = vld [vmem:[%s1842] sm:$0x1]
      %v1864 = vsel %vm1849, %v1861, %v1863
      %1865 = vst [vmem:[%s1842] sm:$0x1] %v1864
      %v1866 = vshrl.u32 %v1857, 16
      %v1868 = vrot.slane %v1866, 6
      %v1869 = vrot.slane %v1868, 2
      %vm1871 = vcmask 517121
      %vm1872 = vmand %vm1871, %vm722
      %v1873 = vld [vmem:[%s1848] sm:$0x2]
      %v1874 = vsel %vm1872, %v1869, %v1873
      %1875 = vst [vmem:[%s1848] sm:$0x2] %v1874
      %1876 = vst.sshfl [vmem:[#allocation1] sm:$0xff pattern:$0x75643120] %v1840
      %s1877 = scalar_lea.vmem [#allocation1], 1
      %v1878 = vld [vmem:[%s1877] ss:$2 sm:$0xff]
      %s1880 = scalar_lea.vmem [#allocation3], 8
      %v1881 = vld [vmem:[%s1880] sm:$0x1]
      %v1882 = vsel %vm1844, %v1878, %v1881
      %1883 = vst [vmem:[%s1880] sm:$0x1] %v1882
      %1884 = vst.sshfl [vmem:[#allocation1] sm:$0xff pattern:$0x75643120] %v1840
      %s1885 = scalar_lea.vmem [#allocation1], 1
      %v1886 = vld [vmem:[%s1885] ss:$2 sm:$0xff]
      %s1888 = scalar_lea.vmem [#allocation3], 2
      %v1889 = vld [vmem:[%s1888] sm:$0x1]
      %v1890 = vsel %vm1849, %v1886, %v1889
      %1891 = vst [vmem:[%s1888] sm:$0x1] %v1890
      %1892 = vst.sshfl [vmem:[#allocation1] sm:$0xff pattern:$0x75643120] %v1840
      %s1893 = scalar_lea.vmem [#allocation1], 1
      %v1894 = vld [vmem:[%s1893] ss:$2 sm:$0xff]
      %v1895 = vshll.u32 %v1894, 16
      %v1897 = vrot.slane %v1895, 7
      %v1898 = vrot.slane %v1897, 2
      %v1900 = vld [vmem:[%s1880] sm:$0x1]
      %v1901 = vsel %vm1849, %v1898, %v1900
      %1902 = vst [vmem:[%s1880] sm:$0x1] %v1901
      %1903 = vst.sshfl [vmem:[#allocation1] sm:$0xff pattern:$0x75643120] %v1840
      %s1904 = scalar_lea.vmem [#allocation1], 1
      %v1905 = vld [vmem:[%s1904] ss:$2 sm:$0xff]
      %v1906 = vshrl.u32 %v1905, 16
      %v1908 = vrot.slane %v1906, 6
      %v1909 = vrot.slane %v1908, 2
      %v1911 = vld [vmem:[%s1888] sm:$0x2]
      %v1912 = vsel %vm1872, %v1909, %v1911
      %1913 = vst [vmem:[%s1888] sm:$0x2] %v1912
      %s1914 = scalar_lea.vmem [#allocation3], 20
      %v1915 = vld [vmem:[%s1914] sm:$0x1]
      %v1916 = vsel %vm1844, %v1841, %v1915
      %1917 = vst [vmem:[%s1914] sm:$0x1] %v1916
      %s1918 = scalar_lea.vmem [#allocation3], 14
      %v1919 = vld [vmem:[%s1918] sm:$0x1]
      %v1920 = vsel %vm1849, %v1841, %v1919
      %1921 = vst [vmem:[%s1918] sm:$0x1] %v1920
      %v1923 = vrot.slane %v1841, 2
      %v1926 = vsel %vm1615, %v1841, %v1923
      %v1927 = vshll.u32 %v1926, 16
      %v1929 = vrot.slane %v1927, 7
      %v1930 = vrot.slane %v1929, 2
      %v1932 = vld [vmem:[%s1914] sm:$0x1]
      %v1933 = vsel %vm1849, %v1930, %v1932
      %1934 = vst [vmem:[%s1914] sm:$0x1] %v1933
      %v1935 = vshrl.u32 %v1926, 16
      %v1937 = vrot.slane %v1935, 6
      %v1938 = vrot.slane %v1937, 2
      %v1940 = vld [vmem:[%s1918] sm:$0x2]
      %v1941 = vsel %vm1872, %v1938, %v1940
      %1942 = vst [vmem:[%s1918] sm:$0x2] %v1941
      %1943 = vst.sshfl [vmem:[#allocation1] sm:$0xff pattern:$0x75643120] %v1841
      %s1944 = scalar_lea.vmem [#allocation1], 1
      %v1945 = vld [vmem:[%s1944] ss:$2 sm:$0xff]
      %s1947 = scalar_lea.vmem [#allocation3], 10
      %v1948 = vld [vmem:[%s1947] sm:$0x1]
      %v1949 = vsel %vm1844, %v1945, %v1948
      %1950 = vst [vmem:[%s1947] sm:$0x1] %v1949
      %1951 = vst.sshfl [vmem:[#allocation1] sm:$0xff pattern:$0x75643120] %v1841
      %s1952 = scalar_lea.vmem [#allocation1], 1
      %v1953 = vld [vmem:[%s1952] ss:$2 sm:$0xff]
      %s1955 = scalar_lea.vmem [#allocation3], 4
      %v1956 = vld [vmem:[%s1955] sm:$0x1]
      %v1957 = vsel %vm1849, %v1953, %v1956
      %1958 = vst [vmem:[%s1955] sm:$0x1] %v1957
      %1959 = vst.sshfl [vmem:[#allocation1] sm:$0xff pattern:$0x75643120] %v1841
      %s1960 = scalar_lea.vmem [#allocation1], 1
      %v1961 = vld [vmem:[%s1960] ss:$2 sm:$0xff]
      %v1962 = vshll.u32 %v1961, 16
      %v1964 = vrot.slane %v1962, 7
      %v1965 = vrot.slane %v1964, 2
      %v1967 = vld [vmem:[%s1947] sm:$0x1]
      %v1968 = vsel %vm1849, %v1965, %v1967
      %1969 = vst [vmem:[%s1947] sm:$0x1] %v1968
      %1970 = vst.sshfl [vmem:[#allocation1] sm:$0xff pattern:$0x75643120] %v1841
      %s1971 = scalar_lea.vmem [#allocation1], 1
      %v1972 = vld [vmem:[%s1971] ss:$2 sm:$0xff]
      %v1973 = vshrl.u32 %v1972, 16
      %v1975 = vrot.slane %v1973, 6
      %v1976 = vrot.slane %v1975, 2
      %v1978 = vld [vmem:[%s1955] sm:$0x2]
      %v1979 = vsel %vm1872, %v1976, %v1978
      %1980 = vst [vmem:[%s1955] sm:$0x2] %v1979
      %v1981 = vld [vmem:[#allocation3] sm:$0x1]
      %s1982 = scalar_lea.vmem [#allocation3], 6
      %v1983 = vld [vmem:[%s1982] sm:$0x1]
      %v1984 = vld [vmem:[#allocation3] sm:$0x3]
      %v1985 = vld [vmem:[%s1848] sm:$0x1]
      %v1986 = vld [vmem:[%s1842] sm:$0x1]
      %v1987 = vld [vmem:[%s1848] sm:$0x3]
      %v1988 = vld [vmem:[%s1888] sm:$0x1]
      %v1989 = vld [vmem:[%s1880] sm:$0x1]
      %v1990 = vld [vmem:[%s1888] sm:$0x3]
      %1992 = vst [vmem:[#allocation1] ss:$4 sm:$0xff] %v1983
      %v1993 = vld.sshfl [vmem:[#allocation1] sm:$0xff pattern:$0x73625140]
      %1995 = vrot.lane.b32.xlu0 %v1993, 64
      %v1996 = vpop.permute.xlu0 %1995
      %1998 = vst [vmem:[#allocation1] ss:$4 sm:$0xff] %v1984
      %v1999 = vld.sshfl [vmem:[#allocation1] sm:$0xff pattern:$0x73625140]
      %v2000 = vshrl.u32 %v1999, 16
      %v2002 = vshll.u32 %v1999, 16
      %v2004 = vrot.slane %v2002, 1
      %v2005 = vor.u32 %v2000, %v2004
      %2007 = vst [vmem:[#allocation1] ss:$4 sm:$0xff] %v1985
      %v2008 = vld.sshfl [vmem:[#allocation1] sm:$0xff pattern:$0x73625140]
      %2010 = vrot.lane.b32.xlu0 %v2008, 64
      %v2011 = vpop.permute.xlu0 %2010
      %2013 = vst [vmem:[#allocation1] ss:$4 sm:$0xff] %v1987
      %v2014 = vld.sshfl [vmem:[#allocation1] sm:$0xff pattern:$0x73625140]
      %v2015 = vshrl.u32 %v2014, 16
      %v2017 = vshll.u32 %v2014, 16
      %v2019 = vrot.slane %v2017, 1
      %v2020 = vor.u32 %v2015, %v2019
      %2021 = vrot.lane.b32.xlu0 %v2020, 64
      %v2022 = vpop.permute.xlu0 %2021
      %2024 = vst [vmem:[#allocation1] ss:$4 sm:$0xff] %v1989
      %v2025 = vld.sshfl [vmem:[#allocation1] sm:$0xff pattern:$0x73625140]
      %2027 = vrot.lane.b32.xlu0 %v2025, 64
      %v2028 = vpop.permute.xlu0 %2027
      %2030 = vst [vmem:[#allocation1] ss:$4 sm:$0xff] %v1990
      %v2031 = vld.sshfl [vmem:[#allocation1] sm:$0xff pattern:$0x73625140]
      %v2032 = vshrl.u32 %v2031, 16
      %v2034 = vshll.u32 %v2031, 16
      %v2036 = vrot.slane %v2034, 1
      %v2037 = vor.u32 %v2032, %v2036
      %v2040 = vsel %vm1404, %v1981, %v1996
      %v2043 = vsel %vm1404, %v2005, %v2011
      %v2046 = vsel %vm1404, %v1986, %v2022
      %v2049 = vsel %vm1404, %v1988, %v2028
      %v2050 = vld [vmem:[%s1918] sm:$0x1]
      %v2051 = vld [vmem:[%s1914] sm:$0x1]
      %v2052 = vld [vmem:[%s1918] sm:$0x3]
      %v2053 = vld [vmem:[%s1955] sm:$0x1]
      %v2054 = vld [vmem:[%s1947] sm:$0x1]
      %v2055 = vld [vmem:[%s1955] sm:$0x3]
      %2056 = vst [vmem:[#allocation1] ss:$4 sm:$0xff] %v1989
      %v2057 = vld.sshfl [vmem:[#allocation1] sm:$0xff pattern:$0x73625140]
      %2059 = vrot.lane.b32.xlu0 %v2057, 64
      %v2060 = vpop.permute.xlu0 %2059
      %2061 = vst [vmem:[#allocation1] ss:$4 sm:$0xff] %v1990
      %v2062 = vld.sshfl [vmem:[#allocation1] sm:$0xff pattern:$0x73625140]
      %v2063 = vshrl.u32 %v2062, 16
      %v2065 = vshll.u32 %v2062, 16
      %v2067 = vrot.slane %v2065, 1
      %v2068 = vor.u32 %v2063, %v2067
      %2070 = vst [vmem:[#allocation1] ss:$4 sm:$0xff] %v2050
      %v2071 = vld.sshfl [vmem:[#allocation1] sm:$0xff pattern:$0x73625140]
      %2073 = vrot.lane.b32.xlu0 %v2071, 64
      %v2074 = vpop.permute.xlu0 %2073
      %2076 = vst [vmem:[#allocation1] ss:$4 sm:$0xff] %v2052
      %v2077 = vld.sshfl [vmem:[#allocation1] sm:$0xff pattern:$0x73625140]
      %v2078 = vshrl.u32 %v2077, 16
      %v2080 = vshll.u32 %v2077, 16
      %v2082 = vrot.slane %v2080, 1
      %v2083 = vor.u32 %v2078, %v2082
      %2084 = vrot.lane.b32.xlu0 %v2083, 64
      %v2085 = vpop.permute.xlu0 %2084
      %2087 = vst [vmem:[#allocation1] ss:$4 sm:$0xff] %v2054
      %v2088 = vld.sshfl [vmem:[#allocation1] sm:$0xff pattern:$0x73625140]
      %2090 = vrot.lane.b32.xlu0 %v2088, 64
      %v2091 = vpop.permute.xlu0 %2090
      %2093 = vst [vmem:[#allocation1] ss:$4 sm:$0xff] %v2055
      %v2094 = vld.sshfl [vmem:[#allocation1] sm:$0xff pattern:$0x73625140]
      %v2095 = vshrl.u32 %v2094, 16
      %v2097 = vshll.u32 %v2094, 16
      %v2099 = vrot.slane %v2097, 1
      %v2100 = vor.u32 %v2095, %v2099
      %v2102 = vsel %vm1404, %v1988, %v2060
      %v2105 = vsel %vm1404, %v2068, %v2074
      %v2108 = vsel %vm1404, %v2051, %v2085
      %v2111 = vsel %vm1404, %v2053, %v2091
      %v2116 = vrot.slane %v2102, 7
      %v2117 = vrot.slane %v2105, 7
      %v2118 = vrot.slane %v2108, 7
      %v2119 = vrot.slane %v2111, 7
      %v2120 = vrot.slane %v2100, 7
      %vm2121 = vcmask 1040384
      %v2123 = vsel %vm2121, %v2040, %v2116
      %v2126 = vsel %vm2121, %v2043, %v2117
      %v2129 = vsel %vm2121, %v2046, %v2118
      %v2132 = vsel %vm2121, %v2049, %v2119
      %v2136 = vsel %vm2121, %v2037, %v2120
      %v2137 = vld [vmem:[%s7] sm:$0xf]
      %v2138 = vld [vmem:[%s7 + $0x4] sm:$0xf]
      %v2139 = vld [vmem:[%s7 + $0x8] sm:$0xf]
      %v2140 = vld [vmem:[%s7 + $0xc] sm:$0xf]
      %v2141 = vld [vmem:[%s7 + $0x10] sm:$0xf]
      %v2142 = vld [vmem:[%s7 + $0x14] sm:$0xf]
      %v2143 = vld [vmem:[%s7 + $0x18] sm:$0xf]
      %v2144 = vld [vmem:[%s7 + $0x1c] sm:$0xf]
      %v2145 = vld [vmem:[%s7 + $0x20] sm:$0xf]
      %v2146 = vld [vmem:[%s7 + $0x24] sm:$0xf]
      %v2147 = vld [vmem:[%s7 + $0x28] sm:$0xf]
      %v2148 = vld [vmem:[%s7 + $0x2c] sm:$0xf]
      %v2149 = vld [vmem:[%s7 + $0x30] sm:$0xf]
      %v2150 = vld [vmem:[%s7 + $0x34] sm:$0xf]
      %v2151 = vld [vmem:[%s7 + $0x38] sm:$0xf]
      %v2152 = vld [vmem:[%s7 + $0x3c] sm:$0xf]
      %v2153 = vld [vmem:[%s7 + $0x40] sm:$0xf]
      %v2154 = vld [vmem:[%s7 + $0x44] sm:$0xf]
      %v2155 = vld [vmem:[%s7 + $0x48] sm:$0xf]
      %v2156 = vld [vmem:[%s7 + $0x4c] sm:$0xf]
      %v2157 = vld [vmem:[%s7 + $0x50] sm:$0xf]
      %v2158 = vld [vmem:[%s7 + $0x54] sm:$0xf]
      %v2159 = vld [vmem:[%s7 + $0x58] sm:$0xf]
      %v2160 = vld [vmem:[%s7 + $0x5c] sm:$0xf]
      %v2161 = vld [vmem:[%s7 + $0x60] sm:$0xf]
      %v2162 = vld [vmem:[%s7 + $0x64] sm:$0xf]
      %v2163 = vld [vmem:[%s7 + $0x68] sm:$0xf]
      %v2164 = vld [vmem:[%s7 + $0x6c] sm:$0xf]
      %v2165 = vld [vmem:[%s7 + $0x70] sm:$0xf]
      %v2166 = vld [vmem:[%s7 + $0x74] sm:$0xf]
      %v2167 = vld [vmem:[%s7 + $0x78] sm:$0xf]
      %v2168 = vld [vmem:[%s7 + $0x7c] sm:$0xf]
      %v2169 = vld [vmem:[%s7 + $0x80] sm:$0xf]
      %v2170 = vld [vmem:[%s7 + $0x84] sm:$0xf]
      %v2171 = vld [vmem:[%s7 + $0x88] sm:$0xf]
      %v2172 = vld [vmem:[%s7 + $0x8c] sm:$0xf]
      %v2173 = vld [vmem:[%s7 + $0x90] sm:$0xf]
      %v2174 = vld [vmem:[%s7 + $0x94] sm:$0xf]
      %v2175 = vld [vmem:[%s7 + $0x98] sm:$0xf]
      %v2176 = vld [vmem:[%s7 + $0x9c] sm:$0xf]
      %v2177 = vld [vmem:[%s7 + $0xa0] sm:$0xf]
      %v2178 = vld [vmem:[%s7 + $0xa4] sm:$0xf]
      %v2179 = vld [vmem:[%s7 + $0xa8] sm:$0xf]
      %v2180 = vld [vmem:[%s7 + $0xac] sm:$0xf]
      %v2181 = vld [vmem:[%s7 + $0xb0] sm:$0xf]
      %v2182 = vld [vmem:[%s7 + $0xb4] sm:$0xf]
      %v2183 = vld [vmem:[%s7 + $0xb8] sm:$0xf]
      %v2184 = vld [vmem:[%s7 + $0xbc] sm:$0xf]
      %v2185 = vld [vmem:[%s7 + $0xc0] sm:$0xf]
      %v2186 = vld [vmem:[%s7 + $0xc4] sm:$0xf]
      %v2187 = vld [vmem:[%s7 + $0xc8] sm:$0xf]
      %v2188 = vld [vmem:[%s7 + $0xcc] sm:$0xf]
      %v2189 = vld [vmem:[%s7 + $0xd0] sm:$0xf]
      %v2190 = vld [vmem:[%s7 + $0xd4] sm:$0xf]
      %v2191 = vld [vmem:[%s7 + $0xd8] sm:$0xf]
      %v2192 = vld [vmem:[%s7 + $0xdc] sm:$0xf]
      %v2193 = vld [vmem:[%s7 + $0xe0] sm:$0xf]
      %v2194 = vld [vmem:[%s7 + $0xe4] sm:$0xf]
      %v2195 = vld [vmem:[%s7 + $0xe8] sm:$0xf]
      %v2196 = vld [vmem:[%s7 + $0xec] sm:$0xf]
      %v2197 = vld [vmem:[%s7 + $0xf0] sm:$0xf]
      %v2198 = vld [vmem:[%s7 + $0xf4] sm:$0xf]
      %v2199 = vld [vmem:[%s7 + $0xf8] sm:$0xf]
      %v2200 = vld [vmem:[%s7 + $0xfc] sm:$0xf]
      %v2201 = vld [vmem:[%s7 + $0x100] sm:$0xf]
      %v2202 = vld [vmem:[%s7 + $0x104] sm:$0xf]
      %v2203 = vld [vmem:[%s7 + $0x108] sm:$0xf]
      %v2204 = vld [vmem:[%s7 + $0x10c] sm:$0xf]
      %v2205 = vld [vmem:[%s7 + $0x110] sm:$0xf]
      %v2206 = vld [vmem:[%s7 + $0x114] sm:$0xf]
      %v2207 = vld [vmem:[%s7 + $0x118] sm:$0xf]
      %v2208 = vld [vmem:[%s7 + $0x11c] sm:$0xf]
      %v2281 = vunpack.c.l.b16 %v2137
      %v2282 = vunpack.c.l.b16 %v2138
      %v2283 = vunpack.c.l.b16 %v2139
      %v2284 = vunpack.c.l.b16 %v2140
      %v2285 = vunpack.c.l.b16 %v2141
      %v2286 = vunpack.c.l.b16 %v2142
      %v2287 = vunpack.c.l.b16 %v2143
      %v2288 = vunpack.c.l.b16 %v2144
      %v2289 = vunpack.c.l.b16 %v2145
      %v2290 = vunpack.c.l.b16 %v2146
      %v2291 = vunpack.c.l.b16 %v2147
      %v2292 = vunpack.c.l.b16 %v2148
      %v2293 = vunpack.c.l.b16 %v2149
      %v2294 = vunpack.c.l.b16 %v2150
      %v2295 = vunpack.c.l.b16 %v2151
      %v2296 = vunpack.c.l.b16 %v2152
      %v2297 = vunpack.c.l.b16 %v2153
      %v2298 = vunpack.c.l.b16 %v2154
      %v2299 = vunpack.c.l.b16 %v2155
      %v2300 = vunpack.c.l.b16 %v2156
      %v2301 = vunpack.c.l.b16 %v2157
      %v2302 = vunpack.c.l.b16 %v2158
      %v2303 = vunpack.c.l.b16 %v2159
      %v2304 = vunpack.c.l.b16 %v2160
      %v2305 = vunpack.c.l.b16 %v2161
      %v2306 = vunpack.c.l.b16 %v2162
      %v2307 = vunpack.c.l.b16 %v2163
      %v2308 = vunpack.c.l.b16 %v2164
      %v2309 = vunpack.c.l.b16 %v2165
      %v2310 = vunpack.c.l.b16 %v2166
      %v2311 = vunpack.c.l.b16 %v2167
      %v2312 = vunpack.c.l.b16 %v2168
      %v2313 = vunpack.c.l.b16 %v2169
      %v2314 = vunpack.c.l.b16 %v2170
      %v2315 = vunpack.c.l.b16 %v2171
      %v2316 = vunpack.c.l.b16 %v2172
      %v2317 = vunpack.c.l.b16 %v2173
      %v2318 = vunpack.c.l.b16 %v2174
      %v2319 = vunpack.c.l.b16 %v2175
      %v2320 = vunpack.c.l.b16 %v2176
      %v2321 = vunpack.c.l.b16 %v2177
      %v2322 = vunpack.c.l.b16 %v2178
      %v2323 = vunpack.c.l.b16 %v2179
      %v2324 = vunpack.c.l.b16 %v2180
      %v2325 = vunpack.c.l.b16 %v2181
      %v2326 = vunpack.c.l.b16 %v2182
      %v2327 = vunpack.c.l.b16 %v2183
      %v2328 = vunpack.c.l.b16 %v2184
      %v2329 = vunpack.c.l.b16 %v2185
      %v2330 = vunpack.c.l.b16 %v2186
      %v2331 = vunpack.c.l.b16 %v2187
      %v2332 = vunpack.c.l.b16 %v2188
      %v2333 = vunpack.c.l.b16 %v2189
      %v2334 = vunpack.c.l.b16 %v2190
      %v2335 = vunpack.c.l.b16 %v2191
      %v2336 = vunpack.c.l.b16 %v2192
      %v2337 = vunpack.c.l.b16 %v2193
      %v2338 = vunpack.c.l.b16 %v2194
      %v2339 = vunpack.c.l.b16 %v2195
      %v2340 = vunpack.c.l.b16 %v2196
      %v2341 = vunpack.c.l.b16 %v2197
      %v2342 = vunpack.c.l.b16 %v2198
      %v2343 = vunpack.c.l.b16 %v2199
      %v2344 = vunpack.c.l.b16 %v2200
      %v2345 = vunpack.c.l.b16 %v2201
      %v2346 = vunpack.c.l.b16 %v2202
      %v2347 = vunpack.c.l.b16 %v2203
      %v2348 = vunpack.c.l.b16 %v2204
      %v2349 = vunpack.c.l.b16 %v2205
      %v2350 = vunpack.c.l.b16 %v2206
      %v2351 = vunpack.c.l.b16 %v2207
      %v2352 = vunpack.c.l.b16 %v2208
      %v2353 = vpack.c.b16 %v2282, %v2281
      %v2354 = vpack.c.b16 %v2284, %v2283
      %v2355 = vpack.c.b16 %v2286, %v2285
      %v2356 = vpack.c.b16 %v2288, %v2287
      %v2357 = vpack.c.b16 %v2290, %v2289
      %v2358 = vpack.c.b16 %v2292, %v2291
      %v2359 = vpack.c.b16 %v2294, %v2293
      %v2360 = vpack.c.b16 %v2296, %v2295
      %v2361 = vpack.c.b16 %v2298, %v2297
      %v2362 = vpack.c.b16 %v2300, %v2299
      %v2363 = vpack.c.b16 %v2302, %v2301
      %v2364 = vpack.c.b16 %v2304, %v2303
      %v2365 = vpack.c.b16 %v2306, %v2305
      %v2366 = vpack.c.b16 %v2308, %v2307
      %v2367 = vpack.c.b16 %v2310, %v2309
      %v2368 = vpack.c.b16 %v2312, %v2311
      %v2369 = vpack.c.b16 %v2314, %v2313
      %v2370 = vpack.c.b16 %v2316, %v2315
      %v2371 = vpack.c.b16 %v2318, %v2317
      %v2372 = vpack.c.b16 %v2320, %v2319
      %v2373 = vpack.c.b16 %v2322, %v2321
      %v2374 = vpack.c.b16 %v2324, %v2323
      %v2375 = vpack.c.b16 %v2326, %v2325
      %v2376 = vpack.c.b16 %v2328, %v2327
      %v2377 = vpack.c.b16 %v2330, %v2329
      %v2378 = vpack.c.b16 %v2332, %v2331
      %v2379 = vpack.c.b16 %v2334, %v2333
      %v2380 = vpack.c.b16 %v2336, %v2335
      %v2381 = vpack.c.b16 %v2338, %v2337
      %v2382 = vpack.c.b16 %v2340, %v2339
      %v2383 = vpack.c.b16 %v2342, %v2341
      %v2384 = vpack.c.b16 %v2344, %v2343
      %v2385 = vpack.c.b16 %v2346, %v2345
      %v2386 = vpack.c.b16 %v2348, %v2347
      %v2387 = vpack.c.b16 %v2350, %v2349
      %v2388 = vpack.c.b16 %v2352, %v2351
      %v2425 = vsel %vm1404, %v2136, 0
      %2427 = vmatpush.bf16.msra.mxu0 %v2360
      %2428 = vmatpush.bf16.msra.mxu0 %v2359
      %2429 = vmatpush.bf16.msra.mxu0 %v2358
      %2430 = vmatpush.bf16.msra.mxu0 %v2357
      %2431 = vmatpush.bf16.msra.mxu0 %v2356
      %2432 = vmatpush.bf16.msra.mxu0 %v2355
      %2433 = vmatpush.bf16.msra.mxu0 %v2354
      %2434 = vmatpush.bf16.msra.mxu0 %v2353
      %2435 = vmatmul.bf16.gmra.mxu0 %v2123
      %v2436 = vpop.f32.mrf.mxu0
      %v2437 = vadd.f32 0.0, %v2436
      %v2438 = vpop.f32.mrf.mxu0
      %2439 = vdwg.mxu0
      %2440 = vmatpush.bf16.msra.mxu0 %v2368
      %2441 = vmatpush.bf16.msra.mxu0 %v2367
      %2442 = vmatpush.bf16.msra.mxu0 %v2366
      %2443 = vmatpush.bf16.msra.mxu0 %v2365
      %2444 = vmatpush.bf16.msra.mxu0 %v2364
      %2445 = vmatpush.bf16.msra.mxu0 %v2363
      %2446 = vmatpush.bf16.msra.mxu0 %v2362
      %2447 = vmatpush.bf16.msra.mxu0 %v2361
      %2448 = vmatmul.bf16.gmra.mxu0 %v2126
      %v2449 = vpop.f32.mrf.mxu0
      %v2450 = vadd.f32 %v2437, %v2449
      %v2451 = vpop.f32.mrf.mxu0
      %2452 = vdwg.mxu0
      %2453 = vmatpush.bf16.msra.mxu0 %v2376
      %2454 = vmatpush.bf16.msra.mxu0 %v2375
      %2455 = vmatpush.bf16.msra.mxu0 %v2374
      %2456 = vmatpush.bf16.msra.mxu0 %v2373
      %2457 = vmatpush.bf16.msra.mxu0 %v2372
      %2458 = vmatpush.bf16.msra.mxu0 %v2371
      %2459 = vmatpush.bf16.msra.mxu0 %v2370
      %2460 = vmatpush.bf16.msra.mxu0 %v2369
      %2461 = vmatmul.bf16.gmra.mxu0 %v2129
      %v2462 = vpop.f32.mrf.mxu0
      %v2463 = vadd.f32 %v2450, %v2462
      %v2464 = vpop.f32.mrf.mxu0
      %2465 = vdwg.mxu0
      %2466 = vmatpush.bf16.msra.mxu0 %v2384
      %2467 = vmatpush.bf16.msra.mxu0 %v2383
      %2468 = vmatpush.bf16.msra.mxu0 %v2382
      %2469 = vmatpush.bf16.msra.mxu0 %v2381
      %2470 = vmatpush.bf16.msra.mxu0 %v2380
      %2471 = vmatpush.bf16.msra.mxu0 %v2379
      %2472 = vmatpush.bf16.msra.mxu0 %v2378
      %2473 = vmatpush.bf16.msra.mxu0 %v2377
      %2474 = vmatmul.bf16.gmra.mxu0 %v2132
      %v2475 = vpop.f32.mrf.mxu0
      %v2476 = vadd.f32 %v2463, %v2475
      %v2477 = vpop.f32.mrf.mxu0
      %2478 = vdwg.mxu0
      %2479 = vmatpush.bf16.msra.mxu0 0
      %2480 = vmatpush.bf16.msra.mxu0 0
      %2481 = vmatpush.bf16.msra.mxu0 0
      %2482 = vmatpush.bf16.msra.mxu0 0
      %2483 = vmatpush.bf16.msra.mxu0 %v2388
      %2484 = vmatpush.bf16.msra.mxu0 %v2387
      %2485 = vmatpush.bf16.msra.mxu0 %v2386
      %2486 = vmatpush.bf16.msra.mxu0 %v2385
      %2487 = vmatmul.bf16.gmra.mxu0 %v2425
      %v2488 = vpop.f32.mrf.mxu0
      %v2489 = vadd.f32 %v2476, %v2488
      %v2490 = vpop.f32.mrf.mxu0
      %2491 = vdwg.mxu0
      %v2492 = vld [vmem:[%s8] sm:$0x1]
      %v2494 = vperm.slane %v2492, 0
      %v2496 = vmul.f32 %v2489, %v2494
      %v2497 = vld [vmem:[%s9] sm:$0x1]
      %v2499 = vperm.slane %v2497, 0
      %v2501 = vadd.f32 %v2496, %v2499
      %v2502 = vmax.f32 %v2501, 0.0
      %v2503 = vpack.c.bf16 %v2502, %v2502
      %vm2504 = vcmask 253952
      %2505 = vst.msk [vmem:[#allocation4] sm:$0x1] %vm2504, %v2503
      %v2507 = vrot.slane %v2503, 2
      %v2510 = vsel %vm1615, %v2503, %v2507
      %v2512 = vrot.slane %v2510, 7
      %v2513 = vrot.slane %v2512, 2
      %s2515 = scalar_lea.vmem [#allocation4], 2
      %2516 = vst.msk [vmem:[%s2515] sm:$0x1] %vm2504, %v2513
      %v2517 = vld [vmem:[#allocation4] sm:$0x1]
      %v2518 = vld [vmem:[#allocation4] sm:$0x3]
      %v2519 = vld [vmem:[%s2515] sm:$0x1]
      %v2520 = vld [vmem:[%s2515] sm:$0x3]
      %2522 = vst [vmem:[#allocation1] ss:$4 sm:$0xff] %v2518
      %v2523 = vld.sshfl [vmem:[#allocation1] sm:$0xff pattern:$0x73625140]
      %v2524 = vshrl.u32 %v2523, 16
      %v2526 = vshll.u32 %v2523, 16
      %v2528 = vrot.slane %v2526, 1
      %v2529 = vor.u32 %v2524, %v2528
      %2530 = vrot.lane.b32.xlu0 %v2529, 32
      %v2531 = vpop.permute.xlu0 %2530
      %2533 = vst [vmem:[#allocation1] ss:$4 sm:$0xff] %v2519
      %v2534 = vld.sshfl [vmem:[#allocation1] sm:$0xff pattern:$0x73625140]
      %2536 = vrot.lane.b32.xlu0 %v2534, 64
      %v2537 = vpop.permute.xlu0 %2536
      %2539 = vst [vmem:[#allocation1] ss:$4 sm:$0xff] %v2520
      %v2540 = vld.sshfl [vmem:[#allocation1] sm:$0xff pattern:$0x73625140]
      %v2541 = vshrl.u32 %v2540, 16
      %v2543 = vshll.u32 %v2540, 16
      %v2545 = vrot.slane %v2543, 1
      %v2546 = vor.u32 %v2541, %v2545
      %2547 = vrot.lane.b32.xlu0 %v2546, 96
      %v2548 = vpop.permute.xlu0 %2547
      %v2551 = vsel %vm1400, %v2517, %v2531
      %v2553 = vsel %vm1404, %v2551, %v2537
      %v2555 = vsel %vm1407, %v2553, %v2548
      %s2556 = scalar_lea.vmem [#allocation4], 4
      %v2557 = vld [vmem:[%s2556] sm:$0x1]
      %v2558 = vld [vmem:[%s2556] sm:$0x3]
      %2559 = vst [vmem:[#allocation1] ss:$4 sm:$0xff] %v2520
      %v2560 = vld.sshfl [vmem:[#allocation1] sm:$0xff pattern:$0x73625140]
      %v2561 = vshrl.u32 %v2560, 16
      %v2563 = vshll.u32 %v2560, 16
      %v2565 = vrot.slane %v2563, 1
      %v2566 = vor.u32 %v2561, %v2565
      %2567 = vrot.lane.b32.xlu0 %v2566, 32
      %v2568 = vpop.permute.xlu0 %2567
      %2570 = vst [vmem:[#allocation1] ss:$4 sm:$0xff] %v2557
      %v2571 = vld.sshfl [vmem:[#allocation1] sm:$0xff pattern:$0x73625140]
      %2573 = vrot.lane.b32.xlu0 %v2571, 64
      %v2574 = vpop.permute.xlu0 %2573
      %2576 = vst [vmem:[#allocation1] ss:$4 sm:$0xff] %v2558
      %v2577 = vld.sshfl [vmem:[#allocation1] sm:$0xff pattern:$0x73625140]
      %v2578 = vshrl.u32 %v2577, 16
      %v2580 = vshll.u32 %v2577, 16
      %v2582 = vrot.slane %v2580, 1
      %v2583 = vor.u32 %v2578, %v2582
      %2584 = vrot.lane.b32.xlu0 %v2583, 96
      %v2585 = vpop.permute.xlu0 %2584
      %v2587 = vsel %vm1400, %v2519, %v2568
      %v2589 = vsel %vm1404, %v2587, %v2574
      %v2591 = vsel %vm1407, %v2589, %v2585
      %v2593 = vrot.slane %v2591, 7
      %v2595 = vsel %vm2121, %v2555, %v2593
      %v2597 = vld [vmem:[%s10] sm:$0xff]
      %v2598 = vld [vmem:[%s10 + $0x8] sm:$0xff]
      %v2599 = vld [vmem:[%s10 + $0x10] sm:$0xff]
      %v2600 = vld [vmem:[%s10 + $0x18] sm:$0xff]
      %v2601 = vld [vmem:[%s10 + $0x20] sm:$0xff]
      %v2602 = vld [vmem:[%s10 + $0x28] sm:$0xff]
      %v2603 = vld [vmem:[%s10 + $0x30] sm:$0xff]
      %v2604 = vld [vmem:[%s10 + $0x38] sm:$0xff]
      %v2605 = vld [vmem:[%s10 + $0x40] sm:$0xff]
      %v2606 = vld [vmem:[%s10 + $0x48] sm:$0xff]
      %v2607 = vld [vmem:[%s10 + $0x50] sm:$0xff]
      %v2608 = vld [vmem:[%s10 + $0x58] sm:$0xff]
      %v2609 = vld [vmem:[%s10 + $0x60] sm:$0xff]
      %v2610 = vld [vmem:[%s10 + $0x68] sm:$0xff]
      %v2611 = vld [vmem:[%s10 + $0x70] sm:$0xff]
      %v2612 = vld [vmem:[%s10 + $0x78] sm:$0xff]
      %v2629 = vunpack.c.l.b16 %v2597
      %v2630 = vunpack.c.h.b16 %v2597
      %v2631 = vunpack.c.l.b16 %v2598
      %v2632 = vunpack.c.h.b16 %v2598
      %v2633 = vunpack.c.l.b16 %v2599
      %v2634 = vunpack.c.h.b16 %v2599
      %v2635 = vunpack.c.l.b16 %v2600
      %v2636 = vunpack.c.h.b16 %v2600
      %v2637 = vunpack.c.l.b16 %v2601
      %v2638 = vunpack.c.h.b16 %v2601
      %v2639 = vunpack.c.l.b16 %v2602
      %v2640 = vunpack.c.h.b16 %v2602
      %v2641 = vunpack.c.l.b16 %v2603
      %v2642 = vunpack.c.h.b16 %v2603
      %v2643 = vunpack.c.l.b16 %v2604
      %v2644 = vunpack.c.h.b16 %v2604
      %v2645 = vunpack.c.l.b16 %v2605
      %v2646 = vunpack.c.h.b16 %v2605
      %v2647 = vunpack.c.l.b16 %v2606
      %v2648 = vunpack.c.h.b16 %v2606
      %v2649 = vunpack.c.l.b16 %v2607
      %v2650 = vunpack.c.h.b16 %v2607
      %v2651 = vunpack.c.l.b16 %v2608
      %v2652 = vunpack.c.h.b16 %v2608
      %v2653 = vunpack.c.l.b16 %v2609
      %v2654 = vunpack.c.h.b16 %v2609
      %v2655 = vunpack.c.l.b16 %v2610
      %v2656 = vunpack.c.h.b16 %v2610
      %v2657 = vunpack.c.l.b16 %v2611
      %v2658 = vunpack.c.h.b16 %v2611
      %v2659 = vunpack.c.l.b16 %v2612
      %v2660 = vunpack.c.h.b16 %v2612
      %v2661 = vpack.c.b16 %v2631, %v2629
      %v2662 = vpack.c.b16 %v2632, %v2630
      %v2663 = vpack.c.b16 %v2635, %v2633
      %v2664 = vpack.c.b16 %v2636, %v2634
      %v2665 = vpack.c.b16 %v2639, %v2637
      %v2666 = vpack.c.b16 %v2640, %v2638
      %v2667 = vpack.c.b16 %v2643, %v2641
      %v2668 = vpack.c.b16 %v2644, %v2642
      %v2669 = vpack.c.b16 %v2647, %v2645
      %v2670 = vpack.c.b16 %v2648, %v2646
      %v2671 = vpack.c.b16 %v2651, %v2649
      %v2672 = vpack.c.b16 %v2652, %v2650
      %v2673 = vpack.c.b16 %v2655, %v2653
      %v2674 = vpack.c.b16 %v2656, %v2654
      %v2675 = vpack.c.b16 %v2659, %v2657
      %v2676 = vpack.c.b16 %v2660, %v2658
      %2693 = vmatpush.bf16.msra.mxu0 %v2675
      %2694 = vmatpush.bf16.msra.mxu0 %v2673
      %2695 = vmatpush.bf16.msra.mxu0 %v2671
      %2696 = vmatpush.bf16.msra.mxu0 %v2669
      %2697 = vmatpush.bf16.msra.mxu0 %v2667
      %2698 = vmatpush.bf16.msra.mxu0 %v2665
      %2699 = vmatpush.bf16.msra.mxu0 %v2663
      %2700 = vmatpush.bf16.msra.mxu0 %v2661
      %2701 = vmatmul.bf16.gmra.mxu0 %v2595
      %v2702 = vpop.f32.mrf.mxu0
      %v2703 = vadd.f32 0.0, %v2702
      %v2704 = vpop.f32.mrf.mxu0
      %2705 = vdwg.mxu0
      %2706 = vmatpush.bf16.msra.mxu0 %v2676
      %2707 = vmatpush.bf16.msra.mxu0 %v2674
      %2708 = vmatpush.bf16.msra.mxu0 %v2672
      %2709 = vmatpush.bf16.msra.mxu0 %v2670
      %2710 = vmatpush.bf16.msra.mxu0 %v2668
      %2711 = vmatpush.bf16.msra.mxu0 %v2666
      %2712 = vmatpush.bf16.msra.mxu0 %v2664
      %2713 = vmatpush.bf16.msra.mxu0 %v2662
      %2714 = vmatmul.bf16.gmra.mxu0 %v2595
      %v2715 = vpop.f32.mrf.mxu0
      %v2716 = vadd.f32 0.0, %v2715
      %v2717 = vpop.f32.mrf.mxu0
      %2718 = vdwg.mxu0
      %v2719 = vld [vmem:[%s11] sm:$0x3]
      %v2721 = vperm.slane %v2719, 0
      %v2722 = vperm.slane %v2719, 1
      %v2725 = vmul.f32 %v2703, %v2721
      %v2726 = vmul.f32 %v2716, %v2722
      %v2727 = vld [vmem:[%s12] sm:$0x3]
      %v2729 = vperm.slane %v2727, 0
      %v2730 = vperm.slane %v2727, 1
      %v2733 = vadd.f32 %v2725, %v2729
      %v2734 = vadd.f32 %v2726, %v2730
      %v2735 = vmax.f32 %v2733, 0.0
      %v2736 = vmax.f32 %v2734, 0.0
      %v2737 = vpack.c.bf16 %v2736, %v2735
      %v2738 = vld [vmem:[#allocation5] sm:$0x1]
      %v2739 = vsel %vm1844, %v2737, %v2738
      %2740 = vst [vmem:[#allocation5] sm:$0x1] %v2739
      %v2742 = vshll.u32 %v2737, 16
      %2744 = vrot.lane.b32.xlu0 %v2742, 64
      %v2745 = vpop.permute.xlu0 %2744
      %v2747 = vld [vmem:[#allocation5] sm:$0x1]
      %v2748 = vsel %vm1849, %v2745, %v2747
      %2749 = vst [vmem:[#allocation5] sm:$0x1] %v2748
      %v2751 = vrot.slane %v2737, 4
      %s2753 = scalar_lea.vmem [#allocation5], 4
      %v2754 = vld [vmem:[%s2753] sm:$0x1]
      %v2755 = vsel %vm1844, %v2751, %v2754
      %2756 = vst [vmem:[%s2753] sm:$0x1] %v2755
      %2757 = vrot.lane.b32.xlu0 %v2737, 64
      %v2758 = vpop.permute.xlu0 %2757
      %v2759 = vrot.slane %v2758, 4
      %v2761 = vshll.u32 %v2759, 16
      %v2764 = vld [vmem:[%s2753] sm:$0x1]
      %v2765 = vsel %vm1849, %v2761, %v2764
      %2766 = vst [vmem:[%s2753] sm:$0x1] %v2765
      %v2767 = vshrl.u32 %v2737, 16
      %v2769 = vrot.slane %v2767, 7
      %v2771 = vld [vmem:[#allocation5] sm:$0x2]
      %v2772 = vsel %vm1872, %v2769, %v2771
      %2773 = vst [vmem:[#allocation5] sm:$0x2] %v2772
      %v2774 = vrot.slane %v2737, 7
      %2775 = vrot.lane.b32.xlu0 %v2774, 64
      %v2776 = vpop.permute.xlu0 %2775
      %vm2778 = vmand %vm1871, %vm988
      %v2779 = vld [vmem:[#allocation5] sm:$0x2]
      %v2780 = vsel %vm2778, %v2776, %v2779
      %2781 = vst [vmem:[#allocation5] sm:$0x2] %v2780
      %v2783 = vshrl.u32 %v2751, 16
      %v2785 = vrot.slane %v2783, 7
      %v2787 = vld [vmem:[%s2753] sm:$0x2]
      %v2788 = vsel %vm1872, %v2785, %v2787
      %2789 = vst [vmem:[%s2753] sm:$0x2] %v2788
      %v2790 = vrot.slane %v2759, 7
      %v2792 = vld [vmem:[%s2753] sm:$0x2]
      %v2793 = vsel %vm2778, %v2790, %v2792
      %2794 = vst [vmem:[%s2753] sm:$0x2] %v2793
      %v2795 = vrot.slane %v2737, 5
      %v2796 = vrot.slane %v2795, 4
      %s2798 = scalar_lea.vmem [#allocation5], 8
      %v2799 = vld [vmem:[%s2798] sm:$0x1]
      %v2800 = vsel %vm1844, %v2796, %v2799
      %2801 = vst [vmem:[%s2798] sm:$0x1] %v2800
      %v2802 = vrot.slane %v2742, 5
      %v2803 = vrot.slane %v2802, 4
      %2804 = vrot.lane.b32.xlu0 %v2803, 64
      %v2805 = vpop.permute.xlu0 %2804
      %v2807 = vld [vmem:[%s2798] sm:$0x1]
      %v2808 = vsel %vm1849, %v2805, %v2807
      %2809 = vst [vmem:[%s2798] sm:$0x1] %v2808
      %v2810 = vrot.slane %v2751, 5
      %v2811 = vrot.slane %v2810, 4
      %s2813 = scalar_lea.vmem [#allocation5], 12
      %v2814 = vld [vmem:[%s2813] sm:$0x1]
      %v2815 = vsel %vm1844, %v2811, %v2814
      %2816 = vst [vmem:[%s2813] sm:$0x1] %v2815
      %v2817 = vrot.slane %v2761, 5
      %v2818 = vrot.slane %v2817, 4
      %v2820 = vld [vmem:[%s2813] sm:$0x1]
      %v2821 = vsel %vm1849, %v2818, %v2820
      %2822 = vst [vmem:[%s2813] sm:$0x1] %v2821
      %v2823 = vrot.slane %v2767, 4
      %v2824 = vrot.slane %v2823, 4
      %v2826 = vld [vmem:[%s2798] sm:$0x2]
      %v2827 = vsel %vm1872, %v2824, %v2826
      %2828 = vst [vmem:[%s2798] sm:$0x2] %v2827
      %v2830 = vld [vmem:[%s2798] sm:$0x2]
      %v2831 = vsel %vm2778, %v2758, %v2830
      %2832 = vst [vmem:[%s2798] sm:$0x2] %v2831
      %v2833 = vrot.slane %v2783, 4
      %v2834 = vrot.slane %v2833, 4
      %v2836 = vld [vmem:[%s2813] sm:$0x2]
      %v2837 = vsel %vm1872, %v2834, %v2836
      %2838 = vst [vmem:[%s2813] sm:$0x2] %v2837
      %v2840 = vld [vmem:[%s2813] sm:$0x2]
      %v2841 = vsel %vm2778, %v2759, %v2840
      %2842 = vst [vmem:[%s2813] sm:$0x2] %v2841
      %v2843 = vld [vmem:[#allocation5] sm:$0x3]
      %v2844 = vld [vmem:[#allocation5] sm:$0x7]
      %v2845 = vld [vmem:[%s2753] sm:$0x3]
      %v2846 = vld [vmem:[%s2753] sm:$0x7]
      %v2848 = vunpack.c.l.b16 %v2844
      %v2849 = vpack.c.b16 %v2848, %v2848
      %v2851 = vshrl.u32 %v2849, 16
      %v2853 = vshll.u32 %v2849, 16
      %v2855 = vrot.slane %v2853, 1
      %v2856 = vor.u32 %v2851, %v2855
      %2857 = vrot.lane.b32.xlu0 %v2856, 64
      %v2858 = vpop.permute.xlu0 %2857
      %v2860 = vunpack.c.l.b16 %v2846
      %v2861 = vpack.c.b16 %v2860, %v2860
      %v2863 = vshrl.u32 %v2861, 16
      %v2865 = vshll.u32 %v2861, 16
      %v2867 = vrot.slane %v2865, 1
      %v2868 = vor.u32 %v2863, %v2867
      %2869 = vrot.lane.b32.xlu0 %v2868, 64
      %v2870 = vpop.permute.xlu0 %2869
      %v2873 = vsel %vm1404, %v2843, %v2858
      %v2876 = vsel %vm1404, %v2845, %v2870
      %v2877 = vld [vmem:[%s2798] sm:$0x3]
      %v2878 = vld [vmem:[%s2798] sm:$0x7]
      %v2880 = vunpack.c.l.b16 %v2878
      %v2881 = vpack.c.b16 %v2880, %v2880
      %v2883 = vshrl.u32 %v2881, 16
      %v2885 = vshll.u32 %v2881, 16
      %v2887 = vrot.slane %v2885, 1
      %v2888 = vor.u32 %v2883, %v2887
      %2889 = vrot.lane.b32.xlu0 %v2888, 64
      %v2890 = vpop.permute.xlu0 %2889
      %v2893 = vsel %vm1404, %v2877, %v2890
      %v2894 = vld [vmem:[%s2813] sm:$0x3]
      %v2895 = vld [vmem:[%s2813] sm:$0x7]
      %v2897 = vunpack.c.l.b16 %v2895
      %v2898 = vpack.c.b16 %v2897, %v2897
      %v2900 = vshrl.u32 %v2898, 16
      %v2902 = vshll.u32 %v2898, 16
      %v2904 = vrot.slane %v2902, 1
      %v2905 = vor.u32 %v2900, %v2904
      %2906 = vrot.lane.b32.xlu0 %v2905, 64
      %v2907 = vpop.permute.xlu0 %2906
      %v2910 = vsel %vm1404, %v2894, %v2907
      %s2911 = scalar_lea.vmem [#allocation5], 16
      %v2912 = vld [vmem:[%s2911] sm:$0x3]
      %v2913 = vld [vmem:[%s2911] sm:$0x7]
      %v2915 = vunpack.c.l.b16 %v2913
      %v2916 = vpack.c.b16 %v2915, %v2915
      %v2918 = vshrl.u32 %v2916, 16
      %v2920 = vshll.u32 %v2916, 16
      %v2922 = vrot.slane %v2920, 1
      %v2923 = vor.u32 %v2918, %v2922
      %2924 = vrot.lane.b32.xlu0 %v2923, 64
      %v2925 = vpop.permute.xlu0 %2924
      %v2928 = vsel %vm1404, %v2912, %v2925
      %v2931 = vrot.slane %v2876, 6
      %v2932 = vrot.slane %v2893, 6
      %v2934 = vrot.slane %v2893, 4
      %v2935 = vrot.slane %v2910, 4
      %v2937 = vrot.slane %v2910, 2
      %v2938 = vrot.slane %v2928, 2
      %v2940 = vsel %vm1615, %v2873, %v2931
      %v2942 = vsel %vm1615, %v2876, %v2932
      %v2944 = vsel %vm876, %v2940, %v2934
      %v2946 = vsel %vm876, %v2942, %v2935
      %v2948 = vsel %vm1629, %v2944, %v2937
      %v2951 = vsel %vm1629, %v2946, %v2938
      %v2953 = vld [vmem:[%s13] sm:$0xf]
      %v2954 = vld [vmem:[%s13 + $0x4] sm:$0xf]
      %v2955 = vld [vmem:[%s13 + $0x8] sm:$0xf]
      %v2956 = vld [vmem:[%s13 + $0xc] sm:$0xf]
      %v2957 = vld [vmem:[%s13 + $0x10] sm:$0xf]
      %v2958 = vld [vmem:[%s13 + $0x14] sm:$0xf]
      %v2959 = vld [vmem:[%s13 + $0x18] sm:$0xf]
      %v2960 = vld [vmem:[%s13 + $0x1c] sm:$0xf]
      %v2961 = vld [vmem:[%s13 + $0x20] sm:$0xf]
      %v2962 = vld [vmem:[%s13 + $0x24] sm:$0xf]
      %v2963 = vld [vmem:[%s13 + $0x28] sm:$0xf]
      %v2964 = vld [vmem:[%s13 + $0x2c] sm:$0xf]
      %v2965 = vld [vmem:[%s13 + $0x30] sm:$0xf]
      %v2966 = vld [vmem:[%s13 + $0x34] sm:$0xf]
      %v2967 = vld [vmem:[%s13 + $0x38] sm:$0xf]
      %v2968 = vld [vmem:[%s13 + $0x3c] sm:$0xf]
      %v2969 = vld [vmem:[%s13 + $0x40] sm:$0xf]
      %v2970 = vld [vmem:[%s13 + $0x44] sm:$0xf]
      %v2971 = vld [vmem:[%s13 + $0x48] sm:$0xf]
      %v2972 = vld [vmem:[%s13 + $0x4c] sm:$0xf]
      %v2973 = vld [vmem:[%s13 + $0x50] sm:$0xf]
      %v2974 = vld [vmem:[%s13 + $0x54] sm:$0xf]
      %v2975 = vld [vmem:[%s13 + $0x58] sm:$0xf]
      %v2976 = vld [vmem:[%s13 + $0x5c] sm:$0xf]
      %v2977 = vld [vmem:[%s13 + $0x60] sm:$0xf]
      %v2978 = vld [vmem:[%s13 + $0x64] sm:$0xf]
      %v2979 = vld [vmem:[%s13 + $0x68] sm:$0xf]
      %v2980 = vld [vmem:[%s13 + $0x6c] sm:$0xf]
      %v2981 = vld [vmem:[%s13 + $0x70] sm:$0xf]
      %v2982 = vld [vmem:[%s13 + $0x74] sm:$0xf]
      %v2983 = vld [vmem:[%s13 + $0x78] sm:$0xf]
      %v2984 = vld [vmem:[%s13 + $0x7c] sm:$0xf]
      %v3017 = vunpack.c.l.b16 %v2953
      %v3018 = vunpack.c.l.b16 %v2954
      %v3019 = vunpack.c.l.b16 %v2955
      %v3020 = vunpack.c.l.b16 %v2956
      %v3021 = vunpack.c.l.b16 %v2957
      %v3022 = vunpack.c.l.b16 %v2958
      %v3023 = vunpack.c.l.b16 %v2959
      %v3024 = vunpack.c.l.b16 %v2960
      %v3025 = vunpack.c.l.b16 %v2961
      %v3026 = vunpack.c.l.b16 %v2962
      %v3027 = vunpack.c.l.b16 %v2963
      %v3028 = vunpack.c.l.b16 %v2964
      %v3029 = vunpack.c.l.b16 %v2965
      %v3030 = vunpack.c.l.b16 %v2966
      %v3031 = vunpack.c.l.b16 %v2967
      %v3032 = vunpack.c.l.b16 %v2968
      %v3033 = vunpack.c.l.b16 %v2969
      %v3034 = vunpack.c.l.b16 %v2970
      %v3035 = vunpack.c.l.b16 %v2971
      %v3036 = vunpack.c.l.b16 %v2972
      %v3037 = vunpack.c.l.b16 %v2973
      %v3038 = vunpack.c.l.b16 %v2974
      %v3039 = vunpack.c.l.b16 %v2975
      %v3040 = vunpack.c.l.b16 %v2976
      %v3041 = vunpack.c.l.b16 %v2977
      %v3042 = vunpack.c.l.b16 %v2978
      %v3043 = vunpack.c.l.b16 %v2979
      %v3044 = vunpack.c.l.b16 %v2980
      %v3045 = vunpack.c.l.b16 %v2981
      %v3046 = vunpack.c.l.b16 %v2982
      %v3047 = vunpack.c.l.b16 %v2983
      %v3048 = vunpack.c.l.b16 %v2984
      %v3049 = vpack.c.b16 %v3018, %v3017
      %v3050 = vpack.c.b16 %v3020, %v3019
      %v3051 = vpack.c.b16 %v3022, %v3021
      %v3052 = vpack.c.b16 %v3024, %v3023
      %v3053 = vpack.c.b16 %v3026, %v3025
      %v3054 = vpack.c.b16 %v3028, %v3027
      %v3055 = vpack.c.b16 %v3030, %v3029
      %v3056 = vpack.c.b16 %v3032, %v3031
      %v3057 = vpack.c.b16 %v3034, %v3033
      %v3058 = vpack.c.b16 %v3036, %v3035
      %v3059 = vpack.c.b16 %v3038, %v3037
      %v3060 = vpack.c.b16 %v3040, %v3039
      %v3061 = vpack.c.b16 %v3042, %v3041
      %v3062 = vpack.c.b16 %v3044, %v3043
      %v3063 = vpack.c.b16 %v3046, %v3045
      %v3064 = vpack.c.b16 %v3048, %v3047
      %3081 = vmatpush.bf16.msra.mxu0 %v3056
      %3082 = vmatpush.bf16.msra.mxu0 %v3055
      %3083 = vmatpush.bf16.msra.mxu0 %v3054
      %3084 = vmatpush.bf16.msra.mxu0 %v3053
      %3085 = vmatpush.bf16.msra.mxu0 %v3052
      %3086 = vmatpush.bf16.msra.mxu0 %v3051
      %3087 = vmatpush.bf16.msra.mxu0 %v3050
      %3088 = vmatpush.bf16.msra.mxu0 %v3049
      %3089 = vmatmul.bf16.gmra.mxu0 %v2948
      %v3090 = vpop.f32.mrf.mxu0
      %v3091 = vadd.f32 0.0, %v3090
      %v3092 = vpop.f32.mrf.mxu0
      %v3093 = vadd.f32 0.0, %v3092
      %3094 = vdwg.mxu0
      %3095 = vmatpush.bf16.msra.mxu0 %v3064
      %3096 = vmatpush.bf16.msra.mxu0 %v3063
      %3097 = vmatpush.bf16.msra.mxu0 %v3062
      %3098 = vmatpush.bf16.msra.mxu0 %v3061
      %3099 = vmatpush.bf16.msra.mxu0 %v3060
      %3100 = vmatpush.bf16.msra.mxu0 %v3059
      %3101 = vmatpush.bf16.msra.mxu0 %v3058
      %3102 = vmatpush.bf16.msra.mxu0 %v3057
      %3103 = vmatmul.bf16.gmra.mxu0 %v2951
      %v3104 = vpop.f32.mrf.mxu0
      %v3105 = vadd.f32 %v3091, %v3104
      %v3106 = vpop.f32.mrf.mxu0
      %v3107 = vadd.f32 %v3093, %v3106
      %3108 = vdwg.mxu0
      %v3109 = vld [vmem:[%s14] sm:$0x1]
      %v3111 = vperm.slane %v3109, 0
      %v3113 = vmul.f32 %v3105, %v3111
      %v3114 = vmul.f32 %v3107, %v3111
      %v3115 = vld [vmem:[%s15] sm:$0x1]
      %v3117 = vperm.slane %v3115, 0
      %v3119 = vadd.f32 %v3113, %v3117
      %v3120 = vadd.f32 %v3114, %v3117
      %v3121 = vmax.f32 %v3119, 0.0
      %v3122 = vmax.f32 %v3120, 0.0
      %v3123 = vpack.c.bf16 %v3121, %v3121
      %v3124 = vpack.c.bf16 %v3122, %v3122
      %v3125 = vld [vmem:[#allocation6] sm:$0x1]
      %v3126 = vsel %vm792, %v3123, %v3125
      %3127 = vst [vmem:[#allocation6] sm:$0x1] %v3126
      %v3129 = vshll.u32 %v3123, 16
      %3131 = vrot.lane.b32.xlu0 %v3129, 96
      %v3132 = vpop.permute.xlu0 %3131
      %v3134 = vld [vmem:[#allocation6] sm:$0x1]
      %v3135 = vsel %vm958, %v3132, %v3134
      %3136 = vst [vmem:[#allocation6] sm:$0x1] %v3135
      %3138 = vrot.lane.b32.xlu0 %v3123, 64
      %v3139 = vpop.permute.xlu0 %3138
      %s3141 = scalar_lea.vmem [#allocation6], 8
      %v3142 = vld [vmem:[%s3141] sm:$0x1]
      %v3143 = vsel %vm792, %v3139, %v3142
      %3144 = vst [vmem:[%s3141] sm:$0x1] %v3143
      %3145 = vrot.lane.b32.xlu0 %v3129, 32
      %v3146 = vpop.permute.xlu0 %3145
      %v3148 = vld [vmem:[%s3141] sm:$0x1]
      %v3149 = vsel %vm958, %v3146, %v3148
      %3150 = vst [vmem:[%s3141] sm:$0x1] %v3149
      %v3151 = vshrl.u32 %v3123, 16
      %v3153 = vrot.slane %v3151, 7
      %v3155 = vld [vmem:[#allocation6] sm:$0x2]
      %v3156 = vsel %vm977, %v3153, %v3155
      %3157 = vst [vmem:[#allocation6] sm:$0x2] %v3156
      %v3158 = vrot.slane %v3123, 7
      %3159 = vrot.lane.b32.xlu0 %v3158, 96
      %v3160 = vpop.permute.xlu0 %3159
      %v3162 = vld [vmem:[#allocation6] sm:$0x2]
      %v3163 = vsel %vm989, %v3160, %v3162
      %3164 = vst [vmem:[#allocation6] sm:$0x2] %v3163
      %3165 = vrot.lane.b32.xlu0 %v3153, 64
      %v3166 = vpop.permute.xlu0 %3165
      %v3168 = vld [vmem:[%s3141] sm:$0x2]
      %v3169 = vsel %vm977, %v3166, %v3168
      %3170 = vst [vmem:[%s3141] sm:$0x2] %v3169
      %3171 = vrot.lane.b32.xlu0 %v3158, 32
      %v3172 = vpop.permute.xlu0 %3171
      %v3174 = vld [vmem:[%s3141] sm:$0x2]
      %v3175 = vsel %vm989, %v3172, %v3174
      %3176 = vst [vmem:[%s3141] sm:$0x2] %v3175
      %v3178 = vld [vmem:[#allocation6] sm:$0x4]
      %v3179 = vsel %vm1003, %v3158, %v3178
      %3180 = vst [vmem:[#allocation6] sm:$0x4] %v3179
      %v3181 = vrot.slane %v3129, 7
      %3182 = vrot.lane.b32.xlu0 %v3181, 96
      %v3183 = vpop.permute.xlu0 %3182
      %vm3185 = vsmask.f32 7946
      %vm3186 = vmand %vm1002, %vm3185
      %v3187 = vld [vmem:[#allocation6] sm:$0x4]
      %v3188 = vsel %vm3186, %v3183, %v3187
      %3189 = vst [vmem:[#allocation6] sm:$0x4] %v3188
      %3190 = vrot.lane.b32.xlu0 %v3158, 64
      %v3191 = vpop.permute.xlu0 %3190
      %v3193 = vld [vmem:[%s3141] sm:$0x4]
      %v3194 = vsel %vm1003, %v3191, %v3193
      %3195 = vst [vmem:[%s3141] sm:$0x4] %v3194
      %3196 = vrot.lane.b32.xlu0 %v3181, 32
      %v3197 = vpop.permute.xlu0 %3196
      %v3199 = vld [vmem:[%s3141] sm:$0x4]
      %v3200 = vsel %vm3186, %v3197, %v3199
      %3201 = vst [vmem:[%s3141] sm:$0x4] %v3200
      %v3202 = vrot.slane %v3151, 6
      %vm3204 = vcmask 257027
      %vm3205 = vsmask.f32 3328
      %vm3206 = vmand %vm3204, %vm3205
      %v3207 = vld [vmem:[#allocation6] sm:$0x8]
      %v3208 = vsel %vm3206, %v3202, %v3207
      %3209 = vst [vmem:[#allocation6] sm:$0x8] %v3208
      %v3210 = vrot.slane %v3123, 6
      %3211 = vrot.lane.b32.xlu0 %v3210, 96
      %v3212 = vpop.permute.xlu0 %3211
      %vm3214 = vsmask.f32 7950
      %vm3215 = vmand %vm3204, %vm3214
      %v3216 = vld [vmem:[#allocation6] sm:$0x8]
      %v3217 = vsel %vm3215, %v3212, %v3216
      %3218 = vst [vmem:[#allocation6] sm:$0x8] %v3217
      %3219 = vrot.lane.b32.xlu0 %v3202, 64
      %v3220 = vpop.permute.xlu0 %3219
      %v3222 = vld [vmem:[%s3141] sm:$0x8]
      %v3223 = vsel %vm3206, %v3220, %v3222
      %3224 = vst [vmem:[%s3141] sm:$0x8] %v3223
      %3225 = vrot.lane.b32.xlu0 %v3210, 32
      %v3226 = vpop.permute.xlu0 %3225
      %v3228 = vld [vmem:[%s3141] sm:$0x8]
      %v3229 = vsel %vm3215, %v3226, %v3228
      %3230 = vst [vmem:[%s3141] sm:$0x8] %v3229
      %v3231 = vrot.slane %v3210, 4
      %s3233 = scalar_lea.vmem [#allocation6], 16
      %v3234 = vld [vmem:[%s3233] sm:$0x1]
      %v3235 = vsel %vm792, %v3231, %v3234
      %3236 = vst [vmem:[%s3233] sm:$0x1] %v3235
      %v3237 = vrot.slane %v3129, 6
      %v3238 = vrot.slane %v3237, 4
      %3239 = vrot.lane.b32.xlu0 %v3238, 96
      %v3240 = vpop.permute.xlu0 %3239
      %v3242 = vld [vmem:[%s3233] sm:$0x1]
      %v3243 = vsel %vm958, %v3240, %v3242
      %3244 = vst [vmem:[%s3233] sm:$0x1] %v3243
      %3245 = vrot.lane.b32.xlu0 %v3231, 64
      %v3246 = vpop.permute.xlu0 %3245
      %s3248 = scalar_lea.vmem [#allocation6], 24
      %v3249 = vld [vmem:[%s3248] sm:$0x1]
      %v3250 = vsel %vm792, %v3246, %v3249
      %3251 = vst [vmem:[%s3248] sm:$0x1] %v3250
      %3252 = vrot.lane.b32.xlu0 %v3238, 32
      %v3253 = vpop.permute.xlu0 %3252
      %v3255 = vld [vmem:[%s3248] sm:$0x1]
      %v3256 = vsel %vm958, %v3253, %v3255
      %3257 = vst [vmem:[%s3248] sm:$0x1] %v3256
      %v3258 = vrot.slane %v3151, 5
      %v3259 = vrot.slane %v3258, 4
      %v3261 = vld [vmem:[%s3233] sm:$0x2]
      %v3262 = vsel %vm977, %v3259, %v3261
      %3263 = vst [vmem:[%s3233] sm:$0x2] %v3262
      %v3264 = vrot.slane %v3123, 5
      %v3265 = vrot.slane %v3264, 4
      %3266 = vrot.lane.b32.xlu0 %v3265, 96
      %v3267 = vpop.permute.xlu0 %3266
      %v3269 = vld [vmem:[%s3233] sm:$0x2]
      %v3270 = vsel %vm989, %v3267, %v3269
      %3271 = vst [vmem:[%s3233] sm:$0x2] %v3270
      %3272 = vrot.lane.b32.xlu0 %v3259, 64
      %v3273 = vpop.permute.xlu0 %3272
      %v3275 = vld [vmem:[%s3248] sm:$0x2]
      %v3276 = vsel %vm977, %v3273, %v3275
      %3277 = vst [vmem:[%s3248] sm:$0x2] %v3276
      %3278 = vrot.lane.b32.xlu0 %v3265, 32
      %v3279 = vpop.permute.xlu0 %3278
      %v3281 = vld [vmem:[%s3248] sm:$0x2]
      %v3282 = vsel %vm989, %v3279, %v3281
      %3283 = vst [vmem:[%s3248] sm:$0x2] %v3282
      %v3285 = vld [vmem:[%s3233] sm:$0x4]
      %v3286 = vsel %vm1003, %v3265, %v3285
      %3287 = vst [vmem:[%s3233] sm:$0x4] %v3286
      %v3288 = vrot.slane %v3129, 5
      %v3289 = vrot.slane %v3288, 4
      %3290 = vrot.lane.b32.xlu0 %v3289, 96
      %v3291 = vpop.permute.xlu0 %3290
      %v3293 = vld [vmem:[%s3233] sm:$0x4]
      %v3294 = vsel %vm3186, %v3291, %v3293
      %3295 = vst [vmem:[%s3233] sm:$0x4] %v3294
      %3296 = vrot.lane.b32.xlu0 %v3265, 64
      %v3297 = vpop.permute.xlu0 %3296
      %v3299 = vld [vmem:[%s3248] sm:$0x4]
      %v3300 = vsel %vm1003, %v3297, %v3299
      %3301 = vst [vmem:[%s3248] sm:$0x4] %v3300
      %3302 = vrot.lane.b32.xlu0 %v3289, 32
      %v3303 = vpop.permute.xlu0 %3302
      %v3305 = vld [vmem:[%s3248] sm:$0x4]
      %v3306 = vsel %vm3186, %v3303, %v3305
      %3307 = vst [vmem:[%s3248] sm:$0x4] %v3306
      %v3308 = vrot.slane %v3151, 4
      %v3309 = vrot.slane %v3308, 4
      %v3311 = vld [vmem:[%s3233] sm:$0x8]
      %v3312 = vsel %vm3206, %v3309, %v3311
      %3313 = vst [vmem:[%s3233] sm:$0x8] %v3312
      %3314 = vrot.lane.b32.xlu0 %v3123, 96
      %v3315 = vpop.permute.xlu0 %3314
      %v3317 = vld [vmem:[%s3233] sm:$0x8]
      %v3318 = vsel %vm3215, %v3315, %v3317
      %3319 = vst [vmem:[%s3233] sm:$0x8] %v3318
      %3320 = vrot.lane.b32.xlu0 %v3309, 64
      %v3321 = vpop.permute.xlu0 %3320
      %v3323 = vld [vmem:[%s3248] sm:$0x8]
      %v3324 = vsel %vm3206, %v3321, %v3323
      %3325 = vst [vmem:[%s3248] sm:$0x8] %v3324
      %3326 = vrot.lane.b32.xlu0 %v3123, 32
      %v3327 = vpop.permute.xlu0 %3326
      %v3329 = vld [vmem:[%s3248] sm:$0x8]
      %v3330 = vsel %vm3215, %v3327, %v3329
      %3331 = vst [vmem:[%s3248] sm:$0x8] %v3330
      %s3332 = scalar_lea.vmem [#allocation6], 32
      %v3333 = vld [vmem:[%s3332] sm:$0x1]
      %v3334 = vsel %vm792, %v3124, %v3333
      %3335 = vst [vmem:[%s3332] sm:$0x1] %v3334
      %v3337 = vshll.u32 %v3124, 16
      %3339 = vrot.lane.b32.xlu0 %v3337, 96
      %v3340 = vpop.permute.xlu0 %3339
      %v3342 = vld [vmem:[%s3332] sm:$0x1]
      %v3343 = vsel %vm958, %v3340, %v3342
      %3344 = vst [vmem:[%s3332] sm:$0x1] %v3343
      %3346 = vrot.lane.b32.xlu0 %v3124, 64
      %v3347 = vpop.permute.xlu0 %3346
      %s3349 = scalar_lea.vmem [#allocation6], 40
      %v3350 = vld [vmem:[%s3349] sm:$0x1]
      %v3351 = vsel %vm792, %v3347, %v3350
      %3352 = vst [vmem:[%s3349] sm:$0x1] %v3351
      %3353 = vrot.lane.b32.xlu0 %v3337, 32
      %v3354 = vpop.permute.xlu0 %3353
      %v3356 = vld [vmem:[%s3349] sm:$0x1]
      %v3357 = vsel %vm958, %v3354, %v3356
      %3358 = vst [vmem:[%s3349] sm:$0x1] %v3357
      %v3359 = vshrl.u32 %v3124, 16
      %v3361 = vrot.slane %v3359, 7
      %v3363 = vld [vmem:[%s3332] sm:$0x2]
      %v3364 = vsel %vm977, %v3361, %v3363
      %3365 = vst [vmem:[%s3332] sm:$0x2] %v3364
      %v3366 = vrot.slane %v3124, 7
      %3367 = vrot.lane.b32.xlu0 %v3366, 96
      %v3368 = vpop.permute.xlu0 %3367
      %v3370 = vld [vmem:[%s3332] sm:$0x2]
      %v3371 = vsel %vm989, %v3368, %v3370
      %3372 = vst [vmem:[%s3332] sm:$0x2] %v3371
      %3373 = vrot.lane.b32.xlu0 %v3361, 64
      %v3374 = vpop.permute.xlu0 %3373
      %v3376 = vld [vmem:[%s3349] sm:$0x2]
      %v3377 = vsel %vm977, %v3374, %v3376
      %3378 = vst [vmem:[%s3349] sm:$0x2] %v3377
      %3379 = vrot.lane.b32.xlu0 %v3366, 32
      %v3380 = vpop.permute.xlu0 %3379
      %v3382 = vld [vmem:[%s3349] sm:$0x2]
      %v3383 = vsel %vm989, %v3380, %v3382
      %3384 = vst [vmem:[%s3349] sm:$0x2] %v3383
      %v3386 = vld [vmem:[%s3332] sm:$0x4]
      %v3387 = vsel %vm1003, %v3366, %v3386
      %3388 = vst [vmem:[%s3332] sm:$0x4] %v3387
      %v3389 = vrot.slane %v3337, 7
      %3390 = vrot.lane.b32.xlu0 %v3389, 96
      %v3391 = vpop.permute.xlu0 %3390
      %v3393 = vld [vmem:[%s3332] sm:$0x4]
      %v3394 = vsel %vm3186, %v3391, %v3393
      %3395 = vst [vmem:[%s3332] sm:$0x4] %v3394
      %3396 = vrot.lane.b32.xlu0 %v3366, 64
      %v3397 = vpop.permute.xlu0 %3396
      %v3399 = vld [vmem:[%s3349] sm:$0x4]
      %v3400 = vsel %vm1003, %v3397, %v3399
      %3401 = vst [vmem:[%s3349] sm:$0x4] %v3400
      %3402 = vrot.lane.b32.xlu0 %v3389, 32
      %v3403 = vpop.permute.xlu0 %3402
      %v3405 = vld [vmem:[%s3349] sm:$0x4]
      %v3406 = vsel %vm3186, %v3403, %v3405
      %3407 = vst [vmem:[%s3349] sm:$0x4] %v3406
      %v3408 = vrot.slane %v3359, 6
      %v3410 = vld [vmem:[%s3332] sm:$0x8]
      %v3411 = vsel %vm3206, %v3408, %v3410
      %3412 = vst [vmem:[%s3332] sm:$0x8] %v3411
      %v3413 = vrot.slane %v3124, 6
      %3414 = vrot.lane.b32.xlu0 %v3413, 96
      %v3415 = vpop.permute.xlu0 %3414
      %v3417 = vld [vmem:[%s3332] sm:$0x8]
      %v3418 = vsel %vm3215, %v3415, %v3417
      %3419 = vst [vmem:[%s3332] sm:$0x8] %v3418
      %3420 = vrot.lane.b32.xlu0 %v3408, 64
      %v3421 = vpop.permute.xlu0 %3420
      %v3423 = vld [vmem:[%s3349] sm:$0x8]
      %v3424 = vsel %vm3206, %v3421, %v3423
      %3425 = vst [vmem:[%s3349] sm:$0x8] %v3424
      %3426 = vrot.lane.b32.xlu0 %v3413, 32
      %v3427 = vpop.permute.xlu0 %3426
      %v3429 = vld [vmem:[%s3349] sm:$0x8]
      %v3430 = vsel %vm3215, %v3427, %v3429
      %3431 = vst [vmem:[%s3349] sm:$0x8] %v3430
      %v3432 = vrot.slane %v3413, 4
      %s3434 = scalar_lea.vmem [#allocation6], 48
      %v3435 = vld [vmem:[%s3434] sm:$0x1]
      %v3436 = vsel %vm792, %v3432, %v3435
      %3437 = vst [vmem:[%s3434] sm:$0x1] %v3436
      %v3438 = vrot.slane %v3337, 6
      %v3439 = vrot.slane %v3438, 4
      %3440 = vrot.lane.b32.xlu0 %v3439, 96
      %v3441 = vpop.permute.xlu0 %3440
      %v3443 = vld [vmem:[%s3434] sm:$0x1]
      %v3444 = vsel %vm958, %v3441, %v3443
      %3445 = vst [vmem:[%s3434] sm:$0x1] %v3444
      %3446 = vrot.lane.b32.xlu0 %v3432, 64
      %v3447 = vpop.permute.xlu0 %3446
      %s3449 = scalar_lea.vmem [#allocation6], 56
      %v3450 = vld [vmem:[%s3449] sm:$0x1]
      %v3451 = vsel %vm792, %v3447, %v3450
      %3452 = vst [vmem:[%s3449] sm:$0x1] %v3451
      %3453 = vrot.lane.b32.xlu0 %v3439, 32
      %v3454 = vpop.permute.xlu0 %3453
      %v3456 = vld [vmem:[%s3449] sm:$0x1]
      %v3457 = vsel %vm958, %v3454, %v3456
      %3458 = vst [vmem:[%s3449] sm:$0x1] %v3457
      %v3459 = vrot.slane %v3359, 5
      %v3460 = vrot.slane %v3459, 4
      %v3462 = vld [vmem:[%s3434] sm:$0x2]
      %v3463 = vsel %vm977, %v3460, %v3462
      %3464 = vst [vmem:[%s3434] sm:$0x2] %v3463
      %v3465 = vrot.slane %v3124, 5
      %v3466 = vrot.slane %v3465, 4
      %3467 = vrot.lane.b32.xlu0 %v3466, 96
      %v3468 = vpop.permute.xlu0 %3467
      %v3470 = vld [vmem:[%s3434] sm:$0x2]
      %v3471 = vsel %vm989, %v3468, %v3470
      %3472 = vst [vmem:[%s3434] sm:$0x2] %v3471
      %3473 = vrot.lane.b32.xlu0 %v3460, 64
      %v3474 = vpop.permute.xlu0 %3473
      %v3476 = vld [vmem:[%s3449] sm:$0x2]
      %v3477 = vsel %vm977, %v3474, %v3476
      %3478 = vst [vmem:[%s3449] sm:$0x2] %v3477
      %3479 = vrot.lane.b32.xlu0 %v3466, 32
      %v3480 = vpop.permute.xlu0 %3479
      %v3482 = vld [vmem:[%s3449] sm:$0x2]
      %v3483 = vsel %vm989, %v3480, %v3482
      %3484 = vst [vmem:[%s3449] sm:$0x2] %v3483
      %v3486 = vld [vmem:[%s3434] sm:$0x4]
      %v3487 = vsel %vm1003, %v3466, %v3486
      %3488 = vst [vmem:[%s3434] sm:$0x4] %v3487
      %v3489 = vrot.slane %v3337, 5
      %v3490 = vrot.slane %v3489, 4
      %3491 = vrot.lane.b32.xlu0 %v3490, 96
      %v3492 = vpop.permute.xlu0 %3491
      %v3494 = vld [vmem:[%s3434] sm:$0x4]
      %v3495 = vsel %vm3186, %v3492, %v3494
      %3496 = vst [vmem:[%s3434] sm:$0x4] %v3495
      %3497 = vrot.lane.b32.xlu0 %v3466, 64
      %v3498 = vpop.permute.xlu0 %3497
      %v3500 = vld [vmem:[%s3449] sm:$0x4]
      %v3501 = vsel %vm1003, %v3498, %v3500
      %3502 = vst [vmem:[%s3449] sm:$0x4] %v3501
      %3503 = vrot.lane.b32.xlu0 %v3490, 32
      %v3504 = vpop.permute.xlu0 %3503
      %v3506 = vld [vmem:[%s3449] sm:$0x4]
      %v3507 = vsel %vm3186, %v3504, %v3506
      %3508 = vst [vmem:[%s3449] sm:$0x4] %v3507
      %v3509 = vrot.slane %v3359, 4
      %v3510 = vrot.slane %v3509, 4
      %v3512 = vld [vmem:[%s3434] sm:$0x8]
      %v3513 = vsel %vm3206, %v3510, %v3512
      %3514 = vst [vmem:[%s3434] sm:$0x8] %v3513
      %3515 = vrot.lane.b32.xlu0 %v3124, 96
      %v3516 = vpop.permute.xlu0 %3515
      %v3518 = vld [vmem:[%s3434] sm:$0x8]
      %v3519 = vsel %vm3215, %v3516, %v3518
      %3520 = vst [vmem:[%s3434] sm:$0x8] %v3519
      %3521 = vrot.lane.b32.xlu0 %v3510, 64
      %v3522 = vpop.permute.xlu0 %3521
      %v3524 = vld [vmem:[%s3449] sm:$0x8]
      %v3525 = vsel %vm3206, %v3522, %v3524
      %3526 = vst [vmem:[%s3449] sm:$0x8] %v3525
      %3527 = vrot.lane.b32.xlu0 %v3124, 32
      %v3528 = vpop.permute.xlu0 %3527
      %v3530 = vld [vmem:[%s3449] sm:$0x8]
      %v3531 = vsel %vm3215, %v3528, %v3530
      %3532 = vst [vmem:[%s3449] sm:$0x8] %v3531
      %v3533 = vld [vmem:[#allocation6] sm:$0xf]
      %v3534 = vld [vmem:[#allocation6 + $0x4] sm:$0x1]
      %v3535 = vld [vmem:[%s3141] sm:$0xf]
      %v3536 = vld [vmem:[%s3141 + $0x4] sm:$0x1]
      %v3539 = vunpack.c.l.b16 %v3533
      %v3540 = vunpack.c.l.b16 %v3534
      %v3541 = vpack.c.b16 %v3540, %v3539
      %v3543 = vshrl.u32 %v3541, 16
      %v3545 = vshll.u32 %v3541, 16
      %v3547 = vrot.slane %v3545, 1
      %v3548 = vor.u32 %v3543, %v3547
      %3549 = vrot.lane.b32.xlu0 %v3548, 32
      %v3550 = vpop.permute.xlu0 %3549
      %v3552 = vunpack.c.l.b16 %v3535
      %v3553 = vpack.c.b16 %v3552, %v3552
      %3554 = vrot.lane.b32.xlu0 %v3553, 64
      %v3555 = vpop.permute.xlu0 %3554
      %v3557 = vunpack.c.l.b16 %v3536
      %v3558 = vpack.c.b16 %v3557, %v3552
      %v3560 = vshrl.u32 %v3558, 16
      %v3562 = vshll.u32 %v3558, 16
      %v3564 = vrot.slane %v3562, 1
      %v3565 = vor.u32 %v3560, %v3564
      %3566 = vrot.lane.b32.xlu0 %v3565, 96
      %v3567 = vpop.permute.xlu0 %3566
      %v3570 = vsel %vm1400, %v3533, %v3550
      %v3572 = vsel %vm1404, %v3570, %v3555
      %v3574 = vsel %vm1407, %v3572, %v3567
      %v3575 = vld [vmem:[%s3233] sm:$0xf]
      %v3576 = vld [vmem:[%s3233 + $0x4] sm:$0x1]
      %3577 = vrot.lane.b32.xlu0 %v3565, 32
      %v3578 = vpop.permute.xlu0 %3577
      %v3580 = vunpack.c.l.b16 %v3575
      %v3581 = vpack.c.b16 %v3580, %v3580
      %3582 = vrot.lane.b32.xlu0 %v3581, 64
      %v3583 = vpop.permute.xlu0 %3582
      %v3585 = vunpack.c.l.b16 %v3576
      %v3586 = vpack.c.b16 %v3585, %v3580
      %v3588 = vshrl.u32 %v3586, 16
      %v3590 = vshll.u32 %v3586, 16
      %v3592 = vrot.slane %v3590, 1
      %v3593 = vor.u32 %v3588, %v3592
      %3594 = vrot.lane.b32.xlu0 %v3593, 96
      %v3595 = vpop.permute.xlu0 %3594
      %v3598 = vsel %vm1400, %v3535, %v3578
      %v3600 = vsel %vm1404, %v3598, %v3583
      %v3602 = vsel %vm1407, %v3600, %v3595
      %v3603 = vld [vmem:[%s3248] sm:$0xf]
      %v3604 = vld [vmem:[%s3248 + $0x4] sm:$0x1]
      %3605 = vrot.lane.b32.xlu0 %v3593, 32
      %v3606 = vpop.permute.xlu0 %3605
      %v3608 = vunpack.c.l.b16 %v3603
      %v3609 = vpack.c.b16 %v3608, %v3608
      %3610 = vrot.lane.b32.xlu0 %v3609, 64
      %v3611 = vpop.permute.xlu0 %3610
      %v3613 = vunpack.c.l.b16 %v3604
      %v3614 = vpack.c.b16 %v3613, %v3608
      %v3616 = vshrl.u32 %v3614, 16
      %v3618 = vshll.u32 %v3614, 16
      %v3620 = vrot.slane %v3618, 1
      %v3621 = vor.u32 %v3616, %v3620
      %3622 = vrot.lane.b32.xlu0 %v3621, 96
      %v3623 = vpop.permute.xlu0 %3622
      %v3626 = vsel %vm1400, %v3575, %v3606
      %v3628 = vsel %vm1404, %v3626, %v3611
      %v3630 = vsel %vm1407, %v3628, %v3623
      %v3631 = vld [vmem:[%s3332] sm:$0xf]
      %v3632 = vld [vmem:[%s3332 + $0x4] sm:$0x1]
      %3633 = vrot.lane.b32.xlu0 %v3621, 32
      %v3634 = vpop.permute.xlu0 %3633
      %v3636 = vunpack.c.l.b16 %v3631
      %v3637 = vpack.c.b16 %v3636, %v3636
      %3638 = vrot.lane.b32.xlu0 %v3637, 64
      %v3639 = vpop.permute.xlu0 %3638
      %v3641 = vunpack.c.l.b16 %v3632
      %v3642 = vpack.c.b16 %v3641, %v3636
      %v3644 = vshrl.u32 %v3642, 16
      %v3646 = vshll.u32 %v3642, 16
      %v3648 = vrot.slane %v3646, 1
      %v3649 = vor.u32 %v3644, %v3648
      %3650 = vrot.lane.b32.xlu0 %v3649, 96
      %v3651 = vpop.permute.xlu0 %3650
      %v3654 = vsel %vm1400, %v3603, %v3634
      %v3656 = vsel %vm1404, %v3654, %v3639
      %v3658 = vsel %vm1407, %v3656, %v3651
      %v3659 = vld [vmem:[%s3349] sm:$0xf]
      %v3660 = vld [vmem:[%s3349 + $0x4] sm:$0x1]
      %3661 = vrot.lane.b32.xlu0 %v3649, 32
      %v3662 = vpop.permute.xlu0 %3661
      %v3664 = vunpack.c.l.b16 %v3659
      %v3665 = vpack.c.b16 %v3664, %v3664
      %3666 = vrot.lane.b32.xlu0 %v3665, 64
      %v3667 = vpop.permute.xlu0 %3666
      %v3669 = vunpack.c.l.b16 %v3660
      %v3670 = vpack.c.b16 %v3669, %v3664
      %v3672 = vshrl.u32 %v3670, 16
      %v3674 = vshll.u32 %v3670, 16
      %v3676 = vrot.slane %v3674, 1
      %v3677 = vor.u32 %v3672, %v3676
      %3678 = vrot.lane.b32.xlu0 %v3677, 96
      %v3679 = vpop.permute.xlu0 %3678
      %v3682 = vsel %vm1400, %v3631, %v3662
      %v3684 = vsel %vm1404, %v3682, %v3667
      %v3686 = vsel %vm1407, %v3684, %v3679
      %v3687 = vld [vmem:[%s3434] sm:$0xf]
      %v3688 = vld [vmem:[%s3434 + $0x4] sm:$0x1]
      %3689 = vrot.lane.b32.xlu0 %v3677, 32
      %v3690 = vpop.permute.xlu0 %3689
      %v3692 = vunpack.c.l.b16 %v3687
      %v3693 = vpack.c.b16 %v3692, %v3692
      %3694 = vrot.lane.b32.xlu0 %v3693, 64
      %v3695 = vpop.permute.xlu0 %3694
      %v3697 = vunpack.c.l.b16 %v3688
      %v3698 = vpack.c.b16 %v3697, %v3692
      %v3700 = vshrl.u32 %v3698, 16
      %v3702 = vshll.u32 %v3698, 16
      %v3704 = vrot.slane %v3702, 1
      %v3705 = vor.u32 %v3700, %v3704
      %3706 = vrot.lane.b32.xlu0 %v3705, 96
      %v3707 = vpop.permute.xlu0 %3706
      %v3710 = vsel %vm1400, %v3659, %v3690
      %v3712 = vsel %vm1404, %v3710, %v3695
      %v3714 = vsel %vm1407, %v3712, %v3707
      %v3715 = vld [vmem:[%s3449] sm:$0xf]
      %v3716 = vld [vmem:[%s3449 + $0x4] sm:$0x1]
      %3717 = vrot.lane.b32.xlu0 %v3705, 32
      %v3718 = vpop.permute.xlu0 %3717
      %v3720 = vunpack.c.l.b16 %v3715
      %v3721 = vpack.c.b16 %v3720, %v3720
      %3722 = vrot.lane.b32.xlu0 %v3721, 64
      %v3723 = vpop.permute.xlu0 %3722
      %v3725 = vunpack.c.l.b16 %v3716
      %v3726 = vpack.c.b16 %v3725, %v3720
      %v3728 = vshrl.u32 %v3726, 16
      %v3730 = vshll.u32 %v3726, 16
      %v3732 = vrot.slane %v3730, 1
      %v3733 = vor.u32 %v3728, %v3732
      %3734 = vrot.lane.b32.xlu0 %v3733, 96
      %v3735 = vpop.permute.xlu0 %3734
      %v3738 = vsel %vm1400, %v3687, %v3718
      %v3740 = vsel %vm1404, %v3738, %v3723
      %v3742 = vsel %vm1407, %v3740, %v3735
      %s3743 = scalar_lea.vmem [#allocation6], 64
      %v3744 = vld [vmem:[%s3743] sm:$0xf]
      %v3745 = vld [vmem:[%s3743 + $0x4] sm:$0x1]
      %3746 = vrot.lane.b32.xlu0 %v3733, 32
      %v3747 = vpop.permute.xlu0 %3746
      %v3749 = vunpack.c.l.b16 %v3744
      %v3750 = vpack.c.b16 %v3749, %v3749
      %3751 = vrot.lane.b32.xlu0 %v3750, 64
      %v3752 = vpop.permute.xlu0 %3751
      %v3754 = vunpack.c.l.b16 %v3745
      %v3755 = vpack.c.b16 %v3754, %v3749
      %v3757 = vshrl.u32 %v3755, 16
      %v3759 = vshll.u32 %v3755, 16
      %v3761 = vrot.slane %v3759, 1
      %v3762 = vor.u32 %v3757, %v3761
      %3763 = vrot.lane.b32.xlu0 %v3762, 96
      %v3764 = vpop.permute.xlu0 %3763
      %v3767 = vsel %vm1400, %v3715, %v3747
      %v3769 = vsel %vm1404, %v3767, %v3752
      %v3771 = vsel %vm1407, %v3769, %v3764
      %v3773 = vrot.slane %v3602, 4
      %v3775 = vrot.slane %v3658, 4
      %v3777 = vrot.slane %v3714, 4
      %v3779 = vrot.slane %v3771, 4
      %v3781 = vsel %vm876, %v3574, %v3773
      %v3784 = vsel %vm876, %v3630, %v3775
      %v3787 = vsel %vm876, %v3686, %v3777
      %v3790 = vsel %vm876, %v3742, %v3779
      %v3792 = vld [vmem:[%s16] sm:$0xf]
      %v3793 = vld [vmem:[%s16 + $0x4] sm:$0xf]
      %v3794 = vld [vmem:[%s16 + $0x8] sm:$0xf]
      %v3795 = vld [vmem:[%s16 + $0xc] sm:$0xf]
      %v3796 = vld [vmem:[%s16 + $0x10] sm:$0xf]
      %v3797 = vld [vmem:[%s16 + $0x14] sm:$0xf]
      %v3798 = vld [vmem:[%s16 + $0x18] sm:$0xf]
      %v3799 = vld [vmem:[%s16 + $0x1c] sm:$0xf]
      %v3800 = vld [vmem:[%s16 + $0x20] sm:$0xf]
      %v3801 = vld [vmem:[%s16 + $0x24] sm:$0xf]
      %v3802 = vld [vmem:[%s16 + $0x28] sm:$0xf]
      %v3803 = vld [vmem:[%s16 + $0x2c] sm:$0xf]
      %v3804 = vld [vmem:[%s16 + $0x30] sm:$0xf]
      %v3805 = vld [vmem:[%s16 + $0x34] sm:$0xf]
      %v3806 = vld [vmem:[%s16 + $0x38] sm:$0xf]
      %v3807 = vld [vmem:[%s16 + $0x3c] sm:$0xf]
      %v3824 = vunpack.c.l.b16 %v3792
      %v3825 = vunpack.c.l.b16 %v3793
      %v3826 = vunpack.c.l.b16 %v3794
      %v3827 = vunpack.c.l.b16 %v3795
      %v3828 = vunpack.c.l.b16 %v3796
      %v3829 = vunpack.c.l.b16 %v3797
      %v3830 = vunpack.c.l.b16 %v3798
      %v3831 = vunpack.c.l.b16 %v3799
      %v3832 = vunpack.c.l.b16 %v3800
      %v3833 = vunpack.c.l.b16 %v3801
      %v3834 = vunpack.c.l.b16 %v3802
      %v3835 = vunpack.c.l.b16 %v3803
      %v3836 = vunpack.c.l.b16 %v3804
      %v3837 = vunpack.c.l.b16 %v3805
      %v3838 = vunpack.c.l.b16 %v3806
      %v3839 = vunpack.c.l.b16 %v3807
      %v3840 = vpack.c.b16 %v3825, %v3824
      %v3841 = vpack.c.b16 %v3827, %v3826
      %v3842 = vpack.c.b16 %v3829, %v3828
      %v3843 = vpack.c.b16 %v3831, %v3830
      %v3844 = vpack.c.b16 %v3833, %v3832
      %v3845 = vpack.c.b16 %v3835, %v3834
      %v3846 = vpack.c.b16 %v3837, %v3836
      %v3847 = vpack.c.b16 %v3839, %v3838
      %3856 = vmatpush.bf16.msra.mxu0 %v3847
      %3857 = vmatpush.bf16.msra.mxu0 %v3846
      %3858 = vmatpush.bf16.msra.mxu0 %v3845
      %3859 = vmatpush.bf16.msra.mxu0 %v3844
      %3860 = vmatpush.bf16.msra.mxu0 %v3843
      %3861 = vmatpush.bf16.msra.mxu0 %v3842
      %3862 = vmatpush.bf16.msra.mxu0 %v3841
      %3863 = vmatpush.bf16.msra.mxu0 %v3840
      %3864 = vmatmul.bf16.gmra.mxu0 %v3781
      %v3865 = vpop.f32.mrf.mxu0
      %v3866 = vadd.f32 0.0, %v3865
      %v3867 = vpop.f32.mrf.mxu0
      %v3868 = vadd.f32 0.0, %v3867
      %3869 = vmatmul.bf16.gmra.mxu0 %v3784
      %v3870 = vpop.f32.mrf.mxu0
      %v3871 = vadd.f32 0.0, %v3870
      %v3872 = vpop.f32.mrf.mxu0
      %v3873 = vadd.f32 0.0, %v3872
      %3874 = vmatmul.bf16.gmra.mxu0 %v3787
      %v3875 = vpop.f32.mrf.mxu0
      %v3876 = vadd.f32 0.0, %v3875
      %v3877 = vpop.f32.mrf.mxu0
      %v3878 = vadd.f32 0.0, %v3877
      %3879 = vmatmul.bf16.gmra.mxu0 %v3790
      %v3880 = vpop.f32.mrf.mxu0
      %v3881 = vadd.f32 0.0, %v3880
      %v3882 = vpop.f32.mrf.mxu0
      %v3883 = vadd.f32 0.0, %v3882
      %3884 = vdwg.mxu0
      %v3885 = vld [vmem:[%s17] sm:$0x1]
      %v3887 = vperm.slane %v3885, 0
      %v3889 = vmul.f32 %v3866, %v3887
      %v3890 = vmul.f32 %v3868, %v3887
      %v3891 = vmul.f32 %v3871, %v3887
      %v3892 = vmul.f32 %v3873, %v3887
      %v3893 = vmul.f32 %v3876, %v3887
      %v3894 = vmul.f32 %v3878, %v3887
      %v3895 = vmul.f32 %v3881, %v3887
      %v3896 = vmul.f32 %v3883, %v3887
      %v3897 = vld [vmem:[%s18] sm:$0x1]
      %v3899 = vperm.slane %v3897, 0
      %v3901 = vadd.f32 %v3889, %v3899
      %v3902 = vadd.f32 %v3890, %v3899
      %v3903 = vadd.f32 %v3891, %v3899
      %v3904 = vadd.f32 %v3892, %v3899
      %v3905 = vadd.f32 %v3893, %v3899
      %v3906 = vadd.f32 %v3894, %v3899
      %v3907 = vadd.f32 %v3895, %v3899
      %v3908 = vadd.f32 %v3896, %v3899
      %v3909 = vmax.f32 %v3901, 0.0
      %v3910 = vmax.f32 %v3902, 0.0
      %v3911 = vmax.f32 %v3903, 0.0
      %v3912 = vmax.f32 %v3904, 0.0
      %v3913 = vmax.f32 %v3905, 0.0
      %v3914 = vmax.f32 %v3906, 0.0
      %v3915 = vmax.f32 %v3907, 0.0
      %v3916 = vmax.f32 %v3908, 0.0
      %v3917 = vpack.c.bf16 %v3910, %v3909
      %v3918 = vpack.c.bf16 %v3912, %v3911
      %v3919 = vpack.c.bf16 %v3914, %v3913
      %v3920 = vpack.c.bf16 %v3916, %v3915
      %v3921 = vld [vmem:[%s19] sm:$0xf]
      %v3922 = vld [vmem:[%s19 + $0x4] sm:$0xf]
      %v3923 = vld [vmem:[%s19 + $0x8] sm:$0xf]
      %v3924 = vld [vmem:[%s19 + $0xc] sm:$0xf]
      %v3925 = vld [vmem:[%s19 + $0x10] sm:$0xf]
      %v3926 = vld [vmem:[%s19 + $0x14] sm:$0xf]
      %v3927 = vld [vmem:[%s19 + $0x18] sm:$0xf]
      %v3928 = vld [vmem:[%s19 + $0x1c] sm:$0xf]
      %v3929 = vld [vmem:[%s20] sm:$0x1]
      %v3931 = vperm.slane %v3929, 0
      %v3941 = vunpack.c.l.b16 %v3921
      %v3942 = vunpack.c.l.b16 %v3922
      %v3943 = vunpack.c.l.b16 %v3923
      %v3944 = vunpack.c.l.b16 %v3924
      %v3945 = vunpack.c.l.b16 %v3925
      %v3946 = vunpack.c.l.b16 %v3926
      %v3947 = vunpack.c.l.b16 %v3927
      %v3948 = vunpack.c.l.b16 %v3928
      %v3949 = vpack.c.b16 %v3942, %v3941
      %v3950 = vpack.c.b16 %v3944, %v3943
      %v3951 = vpack.c.b16 %v3946, %v3945
      %v3952 = vpack.c.b16 %v3948, %v3947
      %v3958 = vsel %vm1404, %v3917, 0
      %v3961 = vsel %vm1404, %v3918, 0
      %v3964 = vsel %vm1404, %v3919, 0
      %v3967 = vsel %vm1404, %v3920, 0
      %3969 = vmatpush.bf16.msra.mxu0 0
      %3970 = vmatpush.bf16.msra.mxu0 0
      %3971 = vmatpush.bf16.msra.mxu0 0
      %3972 = vmatpush.bf16.msra.mxu0 0
      %3973 = vmatpush.bf16.msra.mxu0 %v3952
      %3974 = vmatpush.bf16.msra.mxu0 %v3951
      %3975 = vmatpush.bf16.msra.mxu0 %v3950
      %3976 = vmatpush.bf16.msra.mxu0 %v3949
      %3977 = vmatmul.bf16.gmra.mxu0 %v3958
      %v3978 = vpop.f32.mrf.mxu0
      %v3979 = vadd.f32 %v3931, %v3978
      %v3980 = vpop.f32.mrf.mxu0
      %v3981 = vadd.f32 %v3931, %v3980
      %3982 = vmatmul.bf16.gmra.mxu0 %v3961
      %v3983 = vpop.f32.mrf.mxu0
      %v3984 = vadd.f32 %v3931, %v3983
      %v3985 = vpop.f32.mrf.mxu0
      %v3986 = vadd.f32 %v3931, %v3985
      %3987 = vmatmul.bf16.gmra.mxu0 %v3964
      %v3988 = vpop.f32.mrf.mxu0
      %v3989 = vadd.f32 %v3931, %v3988
      %v3990 = vpop.f32.mrf.mxu0
      %v3991 = vadd.f32 %v3931, %v3990
      %3992 = vmatmul.bf16.gmra.mxu0 %v3967
      %v3993 = vpop.f32.mrf.mxu0
      %v3994 = vadd.f32 %v3931, %v3993
      %v3995 = vpop.f32.mrf.mxu0
      %v3996 = vadd.f32 %v3931, %v3995
      %3997 = vdwg.mxu0
      %v3998 = vsub.f32 0.0, %v3979
      %v3999 = vsub.f32 0.0, %v3981
      %v4000 = vsub.f32 0.0, %v3984
      %v4001 = vsub.f32 0.0, %v3986
      %v4002 = vsub.f32 0.0, %v3989
      %v4003 = vsub.f32 0.0, %v3991
      %v4004 = vsub.f32 0.0, %v3994
      %v4005 = vsub.f32 0.0, %v3996
      %v4006 = vmul.f32 %v3998, 1.442695
      %v4007 = vpow.pop %v4006
      %v4008 = vmul.f32 %v3999, 1.442695
      %v4009 = vpow.pop %v4008
      %v4010 = vmul.f32 %v4000, 1.442695
      %v4011 = vpow.pop %v4010
      %v4012 = vmul.f32 %v4001, 1.442695
      %v4013 = vpow.pop %v4012
      %v4014 = vmul.f32 %v4002, 1.442695
      %v4015 = vpow.pop %v4014
      %v4016 = vmul.f32 %v4003, 1.442695
      %v4017 = vpow.pop %v4016
      %v4018 = vmul.f32 %v4004, 1.442695
      %v4019 = vpow.pop %v4018
      %v4020 = vmul.f32 %v4005, 1.442695
      %v4021 = vpow.pop %v4020
      %v4022 = vadd.f32 %v4007, 1.0
      %v4023 = vadd.f32 %v4009, 1.0
      %v4024 = vadd.f32 %v4011, 1.0
      %v4025 = vadd.f32 %v4013, 1.0
      %v4026 = vadd.f32 %v4015, 1.0
      %v4027 = vadd.f32 %v4017, 1.0
      %v4028 = vadd.f32 %v4019, 1.0
      %v4029 = vadd.f32 %v4021, 1.0
      %v4030 = vrcp.pop %v4022
      %v4031 = vmul.f32 %v4022, %v4030
      %v4032 = vsub.f32 1.0, %v4031
      %v4033 = vmul.f32 %v4030, %v4032
      %v4034 = vadd.f32 %v4030, %v4033
      %vm4035 = vweird.f32 %v4022
      %vm4036 = vweird.f32 %v4030
      %vm4037 = vmor %vm4035, %vm4036
      %v4038 = vsel %vm4037, %v4030, %v4034
      %v4039 = vand.u32 2147483647, %v4022
      %vm4040 = vcmp.eq.f32.partialorder %v4039, 8.507059e+37
      %v4041 = vand.u32 %v4022, 2147483648
      %v4042 = vor.u32 1.1754944e-38, %v4041
      %v4043 = vsel %vm4040, %v4042, %v4038
      %v4044 = vmul.f32 1.0, %v4043
      %v4045 = vrcp.pop %v4023
      %v4046 = vmul.f32 %v4023, %v4045
      %v4047 = vsub.f32 1.0, %v4046
      %v4048 = vmul.f32 %v4045, %v4047
      %v4049 = vadd.f32 %v4045, %v4048
      %vm4050 = vweird.f32 %v4023
      %vm4051 = vweird.f32 %v4045
      %vm4052 = vmor %vm4050, %vm4051
      %v4053 = vsel %vm4052, %v4045, %v4049
      %v4054 = vand.u32 2147483647, %v4023
      %vm4055 = vcmp.eq.f32.partialorder %v4054, 8.507059e+37
      %v4056 = vand.u32 %v4023, 2147483648
      %v4057 = vor.u32 1.1754944e-38, %v4056
      %v4058 = vsel %vm4055, %v4057, %v4053
      %v4059 = vmul.f32 1.0, %v4058
      %v4060 = vrcp.pop %v4024
      %v4061 = vmul.f32 %v4024, %v4060
      %v4062 = vsub.f32 1.0, %v4061
      %v4063 = vmul.f32 %v4060, %v4062
      %v4064 = vadd.f32 %v4060, %v4063
      %vm4065 = vweird.f32 %v4024
      %vm4066 = vweird.f32 %v4060
      %vm4067 = vmor %vm4065, %vm4066
      %v4068 = vsel %vm4067, %v4060, %v4064
      %v4069 = vand.u32 2147483647, %v4024
      %vm4070 = vcmp.eq.f32.partialorder %v4069, 8.507059e+37
      %v4071 = vand.u32 %v4024, 2147483648
      %v4072 = vor.u32 1.1754944e-38, %v4071
      %v4073 = vsel %vm4070, %v4072, %v4068
      %v4074 = vmul.f32 1.0, %v4073
      %v4075 = vrcp.pop %v4025
      %v4076 = vmul.f32 %v4025, %v4075
      %v4077 = vsub.f32 1.0, %v4076
      %v4078 = vmul.f32 %v4075, %v4077
      %v4079 = vadd.f32 %v4075, %v4078
      %vm4080 = vweird.f32 %v4025
      %vm4081 = vweird.f32 %v4075
      %vm4082 = vmor %vm4080, %vm4081
      %v4083 = vsel %vm4082, %v4075, %v4079
      %v4084 = vand.u32 2147483647, %v4025
      %vm4085 = vcmp.eq.f32.partialorder %v4084, 8.507059e+37
      %v4086 = vand.u32 %v4025, 2147483648
      %v4087 = vor.u32 1.1754944e-38, %v4086
      %v4088 = vsel %vm4085, %v4087, %v4083
      %v4089 = vmul.f32 1.0, %v4088
      %v4090 = vrcp.pop %v4026
      %v4091 = vmul.f32 %v4026, %v4090
      %v4092 = vsub.f32 1.0, %v4091
      %v4093 = vmul.f32 %v4090, %v4092
      %v4094 = vadd.f32 %v4090, %v4093
      %vm4095 = vweird.f32 %v4026
      %vm4096 = vweird.f32 %v4090
      %vm4097 = vmor %vm4095, %vm4096
      %v4098 = vsel %vm4097, %v4090, %v4094
      %v4099 = vand.u32 2147483647, %v4026
      %vm4100 = vcmp.eq.f32.partialorder %v4099, 8.507059e+37
      %v4101 = vand.u32 %v4026, 2147483648
      %v4102 = vor.u32 1.1754944e-38, %v4101
      %v4103 = vsel %vm4100, %v4102, %v4098
      %v4104 = vmul.f32 1.0, %v4103
      %v4105 = vrcp.pop %v4027
      %v4106 = vmul.f32 %v4027, %v4105
      %v4107 = vsub.f32 1.0, %v4106
      %v4108 = vmul.f32 %v4105, %v4107
      %v4109 = vadd.f32 %v4105, %v4108
      %vm4110 = vweird.f32 %v4027
      %vm4111 = vweird.f32 %v4105
      %vm4112 = vmor %vm4110, %vm4111
      %v4113 = vsel %vm4112, %v4105, %v4109
      %v4114 = vand.u32 2147483647, %v4027
      %vm4115 = vcmp.eq.f32.partialorder %v4114, 8.507059e+37
      %v4116 = vand.u32 %v4027, 2147483648
      %v4117 = vor.u32 1.1754944e-38, %v4116
      %v4118 = vsel %vm4115, %v4117, %v4113
      %v4119 = vmul.f32 1.0, %v4118
      %v4120 = vrcp.pop %v4028
      %v4121 = vmul.f32 %v4028, %v4120
      %v4122 = vsub.f32 1.0, %v4121
      %v4123 = vmul.f32 %v4120, %v4122
      %v4124 = vadd.f32 %v4120, %v4123
      %vm4125 = vweird.f32 %v4028
      %vm4126 = vweird.f32 %v4120
      %vm4127 = vmor %vm4125, %vm4126
      %v4128 = vsel %vm4127, %v4120, %v4124
      %v4129 = vand.u32 2147483647, %v4028
      %vm4130 = vcmp.eq.f32.partialorder %v4129, 8.507059e+37
      %v4131 = vand.u32 %v4028, 2147483648
      %v4132 = vor.u32 1.1754944e-38, %v4131
      %v4133 = vsel %vm4130, %v4132, %v4128
      %v4134 = vmul.f32 1.0, %v4133
      %v4135 = vrcp.pop %v4029
      %v4136 = vmul.f32 %v4029, %v4135
      %v4137 = vsub.f32 1.0, %v4136
      %v4138 = vmul.f32 %v4135, %v4137
      %v4139 = vadd.f32 %v4135, %v4138
      %vm4140 = vweird.f32 %v4029
      %vm4141 = vweird.f32 %v4135
      %vm4142 = vmor %vm4140, %vm4141
      %v4143 = vsel %vm4142, %v4135, %v4139
      %v4144 = vand.u32 2147483647, %v4029
      %vm4145 = vcmp.eq.f32.partialorder %v4144, 8.507059e+37
      %v4146 = vand.u32 %v4029, 2147483648
      %v4147 = vor.u32 1.1754944e-38, %v4146
      %v4148 = vsel %vm4145, %v4147, %v4143
      %v4149 = vmul.f32 1.0, %v4148
      %vm4150 = vcmask 31744
      %4151 = vst.msk [vmem:[%s656] sm:$0xff] %vm4150, %v4044
      %4152 = vst.msk [vmem:[%s656 + $0x8] sm:$0xff] %vm4150, %v4059
      %4153 = vst.msk [vmem:[%s656 + $0x10] sm:$0xff] %vm4150, %v4074
      %4154 = vst.msk [vmem:[%s656 + $0x18] sm:$0xff] %vm4150, %v4089
      %4155 = vst.msk [vmem:[%s656 + $0x20] sm:$0xff] %vm4150, %v4104
      %4156 = vst.msk [vmem:[%s656 + $0x28] sm:$0xff] %vm4150, %v4119
      %4157 = vst.msk [vmem:[%s656 + $0x30] sm:$0xff] %vm4150, %v4134
      %4158 = vst.msk [vmem:[%s656 + $0x38] sm:$0xff] %vm4150, %v4149
      %p4159 = scmp.lt.s32.totalorder %s32, 1
      %s4160 = scalar_select %p4159, %s32, 1
      %s4161 = smul.addr %s4160, 8
      %s4162 = smul.addr %s4161, 8
      %s4163 = scalar_lea.vmem %s21, %s4162
      // Predicated region
      $region105: #{conv_autoencoder_forward.1} parent=103 // pred_check
        %p4164 = pneg %p496
      $region106: #{conv_autoencoder_forward.1} parent=103 // pred_check_branch
        %4166 = sbr.rel (%p4164) target = $region108
      $region107: #{conv_autoencoder_forward.1} parent=103 // pred_region
        _
      $region108: #{conv_autoencoder_forward.1} parent=103 // pred_fallthru
        _
    $region104: #{conv_autoencoder_forward.1} parent=5 // pred_fallthru
      _
    %p4167 = scmp.le.s32.totalorder 2, %s27
    // Predicated region
    $region109: #{conv_autoencoder_forward.1} parent=5 // pred_check
      %p4168 = pneg %p4167
    $region110: #{conv_autoencoder_forward.1} parent=5 // pred_check_branch
      %4170 = sbr.rel (%p4168) target = $region112
    $region111: #{conv_autoencoder_forward.1} parent=5 // pred_region
      %s4171 = ssub.s32 %s27, 2
      // Predicated region
      $region113: #{conv_autoencoder_forward.1} parent=111 // pred_check
        %p4172 = pneg %p502
      $region114: #{conv_autoencoder_forward.1} parent=111 // pred_check_branch
        %4174 = sbr.rel (%p4172) target = $region116
      $region115: #{conv_autoencoder_forward.1} parent=111 // pred_region
        %p4175 = scmp.lt.s32.totalorder %s33, 1
        %s4176 = scalar_select %p4175, %s33, 1
        %s4177 = smul.addr %s4176, 8
        %s4178 = smul.addr %s4177, 8
        %s4179 = scalar_lea.vmem %s21, %s4178
      $region116: #{conv_autoencoder_forward.1} parent=111 // pred_fallthru
        _
    $region112: #{conv_autoencoder_forward.1} parent=5 // pred_fallthru
      _
  $region6: #{conv_autoencoder_forward.1} parent=0 // loop_footer
    %s31 = sadd.s32 1, %s27
  $region7: #{conv_autoencoder_forward.1} parent=0 // loop_footer_branch
    %26 = sbr.rel target = $region3
  $region8: #{conv_autoencoder_forward.1} parent=0 // loop_exit
    _

</llo_original>
